<compile_context>
chip_gen: v7x
topology: tpu7x:2x2x1
jax: 0.10.0
libtpu: 0.0.40
codegen_flags: <defaults>
</compile_context>

<pallas_src>
import math

import jax
import jax.numpy as jnp
from jax.experimental import pallas as pl
from jax.experimental.pallas import tpu as pltpu


# ------------------------- conv1 im2col (XLA glue) ------------------------- #
def _conv1_patches(x_nchw):
    """im2col for conv1 (k=8, stride 4), rows in parity order.

    Row q = ((h%2)*2 + (w%2))*100 + (h//2)*10 + (w//2) holds the patch for
    conv1 output position (h, w); column = (i*8 + j)*Cin + c (tap-major),
    matching the packed w1.  The parity row order makes conv2's stride-2
    im2col inside the kernel a set of contiguous block copies.
    """
    n, c, hh, ww = x_nchw.shape
    assert hh == 84 and ww == 84, "fc_input_dim = 64*7*7 implies 84x84 input"
    x = jnp.transpose(x_nchw, (0, 2, 3, 1)).astype(jnp.float32)          # NHWC
    taps = [x[:, i:i + 77:4, j:j + 77:4, :] for i in range(8) for j in range(8)]
    p = jnp.stack(taps, axis=3)                       # (N, 20, 20, 64, C)
    p = p.reshape(n, 10, 2, 10, 2, 64 * c)            # (N, a, ph, b, pw, 64C)
    p = jnp.transpose(p, (0, 2, 4, 1, 3, 5))          # (N, ph, pw, a, b, 64C)
    return p.reshape(n, 400, 64 * c).astype(jnp.bfloat16)


# ------------------------------ fused kernel ------------------------------- #
def _policy_cnn_kernel(xp_ref, w1_ref, b1_ref, w2_ref, b2_ref, w3_ref, b3_ref,
                       w4_ref, b4_ref, w5_ref, b5_ref, out_ref,
                       h1_ref, p2_ref, h2_ref, p3_ref, h3_ref, flat_ref):
    f32 = jnp.float32
    bf16 = jnp.bfloat16

    # conv1: one dense matmul over the pre-built parity-ordered patch matrix.
    h1 = jnp.dot(xp_ref[0], w1_ref[...], preferred_element_type=f32)
    h1_ref[...] = jnp.maximum(h1 + b1_ref[...], 0.0)            # (400, 32)

    # conv2 (k=4, stride 2): im2col = 16 contiguous block copies.  h1 rows are
    # in parity order; patch/output rows use pitch 10 (row = oh*10 + ow, the
    # ow==9 rows are dead and never read back).
    for i in range(4):
        for j in range(4):
            t = i * 4 + j
            src = ((i % 2) * 2 + (j % 2)) * 100 + (i // 2) * 10 + (j // 2)
            p2_ref[:, t * 32:(t + 1) * 32] = h1_ref[src:src + 89, :]
    h2 = jnp.dot(p2_ref[...].astype(bf16), w2_ref[...], preferred_element_type=f32)
    h2_ref[...] = jnp.maximum(h2 + b2_ref[...], 0.0)            # (89, 64) pitch 10

    # conv3 (k=3, stride 1): 9 contiguous block copies, pitch-10 in and out.
    for i in range(3):
        for j in range(3):
            t = i * 3 + j
            src = i * 10 + j
            p3_ref[:, t * 64:(t + 1) * 64] = h2_ref[src:src + 67, :]
    h3 = jnp.dot(p3_ref[...].astype(bf16), w3_ref[...], preferred_element_type=f32)
    h3_ref[...] = jnp.maximum(h3 + b3_ref[...], 0.0)            # (67, 64) pitch 10

    # Flatten the 7x7x64 map into one fc row in (h, w, c) order (w4 rows were
    # pre-permuted from PyTorch's (c, h, w) flatten order to match).
    for oh in range(7):
        for ow in range(7):
            r = oh * 7 + ow
            src = oh * 10 + ow
            flat_ref[:, r * 64:(r + 1) * 64] = h3_ref[src:src + 1, :]

    # fc head: fc1 + ReLU + fc2 + exact softmax, all on-chip.
    hid = jnp.dot(flat_ref[...].astype(bf16), w4_ref[...], preferred_element_type=f32)
    hid = jnp.maximum(hid + b4_ref[...], 0.0).astype(bf16)      # (1, 128)
    logits = jnp.dot(hid, w5_ref[...], preferred_element_type=f32) + b5_ref[...]
    logits = logits - jnp.max(logits, axis=-1, keepdims=True)
    p = jnp.exp(logits)
    out_ref[0] = (p / jnp.sum(p, axis=-1, keepdims=True)).astype(out_ref.dtype)


# -------------------------------- forward ---------------------------------- #
def policy_network_cnn_forward(params, x_nchw):
    n, c = x_nchw.shape[0], x_nchw.shape[1]
    k1 = 64 * c
    out_dim = params["b5"].shape[-1]
    patches = _conv1_patches(x_nchw)                            # (N, 400, 64*C) bf16

    out = pl.pallas_call(
        _policy_cnn_kernel,
        out_shape=jax.ShapeDtypeStruct((n, 1, out_dim), jnp.float32),
        grid=(n,),
        in_specs=[
            pl.BlockSpec((1, 400, k1), lambda i: (i, 0, 0)),    # conv1 patches
            pl.BlockSpec((k1, 32), lambda i: (0, 0)),           # w1  (resident)
            pl.BlockSpec((1, 32), lambda i: (0, 0)),            # b1
            pl.BlockSpec((512, 64), lambda i: (0, 0)),          # w2
            pl.BlockSpec((1, 64), lambda i: (0, 0)),            # b2
            pl.BlockSpec((576, 64), lambda i: (0, 0)),          # w3
            pl.BlockSpec((1, 64), lambda i: (0, 0)),            # b3
            pl.BlockSpec((3136, 128), lambda i: (0, 0)),        # w4
            pl.BlockSpec((1, 128), lambda i: (0, 0)),           # b4
            pl.BlockSpec((128, out_dim), lambda i: (0, 0)),     # w5
            pl.BlockSpec((1, out_dim), lambda i: (0, 0)),       # b5
        ],
        out_specs=pl.BlockSpec((1, 1, out_dim), lambda i: (i, 0, 0)),
        scratch_shapes=[
            pltpu.VMEM((400, 32), jnp.float32),    # conv1 out (parity order)
            pltpu.VMEM((89, 512), jnp.float32),    # conv2 im2col patches
            pltpu.VMEM((89, 64), jnp.float32),     # conv2 out (pitch 10)
            pltpu.VMEM((67, 576), jnp.float32),    # conv3 im2col patches
            pltpu.VMEM((67, 64), jnp.float32),     # conv3 out (pitch 10)
            pltpu.VMEM((1, 3136), jnp.float32),    # flattened fc1 input
        ],
        compiler_params=pltpu.CompilerParams(
            dimension_semantics=("parallel",)),
    )(patches, params["w1"], params["b1"], params["w2"], params["b2"],
      params["w3"], params["b3"], params["w4"], params["b4"],
      params["w5"], params["b5"])
    return out.reshape(n, out_dim)


# --------------------------- parameters & packing -------------------------- #
def init_torch_params(key, input_dim, output_dim):
    """PyTorch-layout f32 params, uniform(-1/sqrt(fan_in), 1/sqrt(fan_in))."""
    def u(k, shape, fan_in):
        bound = 1.0 / math.sqrt(fan_in)
        return jax.random.uniform(k, shape, jnp.float32, -bound, bound)

    ks = jax.random.split(key, 10)
    fc_in = 64 * 7 * 7
    return {
        "conv1_w": u(ks[0], (32, input_dim, 8, 8), input_dim * 8 * 8),
        "conv1_b": u(ks[1], (32,), input_dim * 8 * 8),
        "conv2_w": u(ks[2], (64, 32, 4, 4), 32 * 4 * 4),
        "conv2_b": u(ks[3], (64,), 32 * 4 * 4),
        "conv3_w": u(ks[4], (64, 64, 3, 3), 64 * 3 * 3),
        "conv3_b": u(ks[5], (64,), 64 * 3 * 3),
        "fc1_w": u(ks[6], (128, fc_in), fc_in),      # PyTorch Linear: (out, in)
        "fc1_b": u(ks[7], (128,), fc_in),
        "fc2_w": u(ks[8], (output_dim, 128), 128),
        "fc2_b": u(ks[9], (output_dim,), 128),
    }


def _conv_w_to_mat(w_oihw):
    """(Cout, Cin, KH, KW) -> (KH*KW*Cin, Cout), matching the im2col tap order."""
    cout, cin, kh, kw = w_oihw.shape
    return jnp.transpose(w_oihw, (2, 3, 1, 0)).reshape(kh * kw * cin, cout)


def pack_params(tp):
    """All weight reorders done once: conv weights -> matmul matrices (bf16),
    fc1 rows permuted from PyTorch (c,h,w) flatten to our (h,w,c) flatten,
    biases pre-reshaped to (1, N) f32."""
    bf = jnp.bfloat16
    perm = jnp.transpose(jnp.arange(64 * 49).reshape(64, 49)).reshape(-1)
    return {
        "w1": _conv_w_to_mat(tp["conv1_w"]).astype(bf),
        "b1": tp["conv1_b"].reshape(1, -1),
        "w2": _conv_w_to_mat(tp["conv2_w"]).astype(bf),
        "b2": tp["conv2_b"].reshape(1, -1),
        "w3": _conv_w_to_mat(tp["conv3_w"]).astype(bf),
        "b3": tp["conv3_b"].reshape(1, -1),
        "w4": tp["fc1_w"].T[perm].astype(bf),
        "b4": tp["fc1_b"].reshape(1, -1),
        "w5": tp["fc2_w"].T.astype(bf),
        "b5": tp["fc2_b"].reshape(1, -1),
    }


# ---------------------------- pure-JAX reference ---------------------------- #
def forward_reference(tp, x_nchw):
    """f32 reference with PyTorch semantics, from the PyTorch-layout params."""
    h = x_nchw.astype(jnp.float32)
    for name, s in (("conv1", 4), ("conv2", 2), ("conv3", 1)):
        h = jax.lax.conv_general_dilated(
            h, tp[f"{name}_w"], (s, s), "VALID",
            dimension_numbers=("NCHW", "OIHW", "NCHW"))
        h = jax.nn.relu(h + tp[f"{name}_b"][None, :, None, None])
    h = h.reshape(h.shape[0], -1)                     # (N, 64*7*7), (c,h,w) order
    h = jax.nn.relu(h @ tp["fc1_w"].T + tp["fc1_b"])
    return jax.nn.softmax(h @ tp["fc2_w"].T + tp["fc2_b"], axis=-1)


if __name__ == "__main__":
    # fc_input_dim = 64*7*7 forces an 84x84 spatial input (standard Atari shape).
    batch, input_dim, output_dim = 2, 4, 6
    key = jax.random.PRNGKey(0)
    k_param, k_x = jax.random.split(key)
    torch_params = init_torch_params(k_param, input_dim, output_dim)
    params = pack_params(torch_params)
    x = jax.random.normal(k_x, (batch, input_dim, 84, 84), jnp.float32)

    probs = jax.block_until_ready(jax.jit(policy_network_cnn_forward)(params, x))
    ref = jax.block_until_ready(jax.jit(forward_reference)(torch_params, x))

    assert probs.shape == (batch, output_dim)
    assert bool(jnp.all(jnp.abs(jnp.sum(probs, axis=-1) - 1.0) < 1e-3))
    assert bool(jnp.allclose(probs, ref, atol=1e-2, rtol=1e-2))
    print("KERNEL_OK")
</pallas_src>

<mosaic_0001>
module attributes {stable_mosaic.version = 11 : i64} {
  func.func @_policy_cnn_kernel(%arg0: i32, %arg1: memref<1x400x256xbf16, #tpu.memory_space<vmem>>, %arg2: memref<256x32xbf16, #tpu.memory_space<vmem>>, %arg3: memref<1x32xf32, #tpu.memory_space<vmem>>, %arg4: memref<512x64xbf16, #tpu.memory_space<vmem>>, %arg5: memref<1x64xf32, #tpu.memory_space<vmem>>, %arg6: memref<576x64xbf16, #tpu.memory_space<vmem>>, %arg7: memref<1x64xf32, #tpu.memory_space<vmem>>, %arg8: memref<3136x128xbf16, #tpu.memory_space<vmem>>, %arg9: memref<1x128xf32, #tpu.memory_space<vmem>>, %arg10: memref<128x6xbf16, #tpu.memory_space<vmem>>, %arg11: memref<1x6xf32, #tpu.memory_space<vmem>>, %arg12: memref<1x1x6xf32, #tpu.memory_space<vmem>>, %arg13: memref<400x32xf32, #tpu.memory_space<vmem>>, %arg14: memref<89x512xf32, #tpu.memory_space<vmem>>, %arg15: memref<89x64xf32, #tpu.memory_space<vmem>>, %arg16: memref<67x576xf32, #tpu.memory_space<vmem>>, %arg17: memref<67x64xf32, #tpu.memory_space<vmem>>, %arg18: memref<1x3136xf32, #tpu.memory_space<vmem>>) attributes {dimension_semantics = [#tpu.dimension_semantics<parallel>], iteration_bounds = array<i64: 2>, scalar_prefetch = 0 : i64, scratch_operands = 6 : i64, tpu.core_type = #tpu.core_type<tc>, window_params = [{transform_indices = @transform_0, window_bounds = array<i64: 1, 400, 256>}, {pipeline_mode = #tpu.pipeline_mode<synchronous>, transform_indices = @transform_1, window_bounds = array<i64: 256, 32>}, {pipeline_mode = #tpu.pipeline_mode<synchronous>, transform_indices = @transform_2, window_bounds = array<i64: 1, 32>}, {pipeline_mode = #tpu.pipeline_mode<synchronous>, transform_indices = @transform_3, window_bounds = array<i64: 512, 64>}, {pipeline_mode = #tpu.pipeline_mode<synchronous>, transform_indices = @transform_4, window_bounds = array<i64: 1, 64>}, {pipeline_mode = #tpu.pipeline_mode<synchronous>, transform_indices = @transform_5, window_bounds = array<i64: 576, 64>}, {pipeline_mode = #tpu.pipeline_mode<synchronous>, transform_indices = @transform_6, window_bounds = array<i64: 1, 64>}, {pipeline_mode = #tpu.pipeline_mode<synchronous>, transform_indices = @transform_7, window_bounds = array<i64: 3136, 128>}, {pipeline_mode = #tpu.pipeline_mode<synchronous>, transform_indices = @transform_8, window_bounds = array<i64: 1, 128>}, {pipeline_mode = #tpu.pipeline_mode<synchronous>, transform_indices = @transform_9, window_bounds = array<i64: 128, 6>}, {pipeline_mode = #tpu.pipeline_mode<synchronous>, transform_indices = @transform_10, window_bounds = array<i64: 1, 6>}, {transform_indices = @transform_11, window_bounds = array<i64: 1, 1, 6>}]} {
    %c0 = arith.constant 0 : index
    %c0_0 = arith.constant 0 : index
    %c0_1 = arith.constant 0 : index
    %0 = vector.load %arg1[%c0, %c0_0, %c0_1] : memref<1x400x256xbf16, #tpu.memory_space<vmem>>, vector<1x400x256xbf16>
    %1 = vector.shape_cast %0 : vector<1x400x256xbf16> to vector<400x256xbf16>
    %c0_2 = arith.constant 0 : index
    %c0_3 = arith.constant 0 : index
    %2 = vector.load %arg2[%c0_2, %c0_3] : memref<256x32xbf16, #tpu.memory_space<vmem>>, vector<256x32xbf16>
    %cst = arith.constant dense<0.000000e+00> : vector<400x32xf32>
    %3 = tpu.matmul %1, %2, %cst {dimension_numbers = #tpu.dot_dimension_numbers<[1], [0], [0], [1], [0, 0, 1, 1], [], []>} : vector<400x256xbf16>, vector<256x32xbf16>, vector<400x32xf32> -> vector<400x32xf32>
    %c0_4 = arith.constant 0 : index
    %c0_5 = arith.constant 0 : index
    %4 = vector.load %arg3[%c0_4, %c0_5] : memref<1x32xf32, #tpu.memory_space<vmem>>, vector<1x32xf32>
    %5 = vector.broadcast %4 : vector<1x32xf32> to vector<400x32xf32>
    %6 = arith.addf %3, %5 : vector<400x32xf32>
    %cst_6 = arith.constant 0.000000e+00 : f32
    %7 = vector.broadcast %cst_6 : f32 to vector<400x32xf32>
    %8 = arith.maximumf %6, %7 : vector<400x32xf32>
    %c0_7 = arith.constant 0 : index
    %c0_8 = arith.constant 0 : index
    %9 = vector.load %arg13[%c0_7, %c0_8] : memref<400x32xf32, #tpu.memory_space<vmem>>, vector<400x32xf32>
    tpu.vector_store %arg13[%c0_7, %c0_8], %8 {strides = array<i32>} : memref<400x32xf32, #tpu.memory_space<vmem>>, vector<400x32xf32>,
    %c0_9 = arith.constant 0 : index
    %c0_10 = arith.constant 0 : index
    %10 = vector.load %arg13[%c0_9, %c0_10] : memref<400x32xf32, #tpu.memory_space<vmem>>, vector<89x32xf32>
    %c0_11 = arith.constant 0 : index
    %c0_12 = arith.constant 0 : index
    %11 = vector.load %arg14[%c0_11, %c0_12] : memref<89x512xf32, #tpu.memory_space<vmem>>, vector<89x32xf32>
    tpu.vector_store %arg14[%c0_11, %c0_12], %10 {strides = array<i32>} : memref<89x512xf32, #tpu.memory_space<vmem>>, vector<89x32xf32>,
    %c100 = arith.constant 100 : index
    %c0_13 = arith.constant 0 : index
    %12 = vector.load %arg13[%c100, %c0_13] : memref<400x32xf32, #tpu.memory_space<vmem>>, vector<89x32xf32>
    %c0_14 = arith.constant 0 : index
    %c32 = arith.constant 32 : index
    %13 = vector.load %arg14[%c0_14, %c32] : memref<89x512xf32, #tpu.memory_space<vmem>>, vector<89x32xf32>
    tpu.vector_store %arg14[%c0_14, %c32], %12 {strides = array<i32>} : memref<89x512xf32, #tpu.memory_space<vmem>>, vector<89x32xf32>,
    %c1 = arith.constant 1 : index
    %c0_15 = arith.constant 0 : index
    %14 = vector.load %arg13[%c1, %c0_15] : memref<400x32xf32, #tpu.memory_space<vmem>>, vector<89x32xf32>
    %c0_16 = arith.constant 0 : index
    %c64 = arith.constant 64 : index
    %15 = vector.load %arg14[%c0_16, %c64] : memref<89x512xf32, #tpu.memory_space<vmem>>, vector<89x32xf32>
    tpu.vector_store %arg14[%c0_16, %c64], %14 {strides = array<i32>} : memref<89x512xf32, #tpu.memory_space<vmem>>, vector<89x32xf32>,
    %c101 = arith.constant 101 : index
    %c0_17 = arith.constant 0 : index
    %16 = vector.load %arg13[%c101, %c0_17] : memref<400x32xf32, #tpu.memory_space<vmem>>, vector<89x32xf32>
    %c0_18 = arith.constant 0 : index
    %c96 = arith.constant 96 : index
    %17 = vector.load %arg14[%c0_18, %c96] : memref<89x512xf32, #tpu.memory_space<vmem>>, vector<89x32xf32>
    tpu.vector_store %arg14[%c0_18, %c96], %16 {strides = array<i32>} : memref<89x512xf32, #tpu.memory_space<vmem>>, vector<89x32xf32>,
    %c200 = arith.constant 200 : index
    %c0_19 = arith.constant 0 : index
    %18 = vector.load %arg13[%c200, %c0_19] : memref<400x32xf32, #tpu.memory_space<vmem>>, vector<89x32xf32>
    %c0_20 = arith.constant 0 : index
    %c128 = arith.constant 128 : index
    %19 = vector.load %arg14[%c0_20, %c128] : memref<89x512xf32, #tpu.memory_space<vmem>>, vector<89x32xf32>
    tpu.vector_store %arg14[%c0_20, %c128], %18 {strides = array<i32>} : memref<89x512xf32, #tpu.memory_space<vmem>>, vector<89x32xf32>,
    %c300 = arith.constant 300 : index
    %c0_21 = arith.constant 0 : index
    %20 = vector.load %arg13[%c300, %c0_21] : memref<400x32xf32, #tpu.memory_space<vmem>>, vector<89x32xf32>
    %c0_22 = arith.constant 0 : index
    %c160 = arith.constant 160 : index
    %21 = vector.load %arg14[%c0_22, %c160] : memref<89x512xf32, #tpu.memory_space<vmem>>, vector<89x32xf32>
    tpu.vector_store %arg14[%c0_22, %c160], %20 {strides = array<i32>} : memref<89x512xf32, #tpu.memory_space<vmem>>, vector<89x32xf32>,
    %c201 = arith.constant 201 : index
    %c0_23 = arith.constant 0 : index
    %22 = vector.load %arg13[%c201, %c0_23] : memref<400x32xf32, #tpu.memory_space<vmem>>, vector<89x32xf32>
    %c0_24 = arith.constant 0 : index
    %c192 = arith.constant 192 : index
    %23 = vector.load %arg14[%c0_24, %c192] : memref<89x512xf32, #tpu.memory_space<vmem>>, vector<89x32xf32>
    tpu.vector_store %arg14[%c0_24, %c192], %22 {strides = array<i32>} : memref<89x512xf32, #tpu.memory_space<vmem>>, vector<89x32xf32>,
    %c301 = arith.constant 301 : index
    %c0_25 = arith.constant 0 : index
    %24 = vector.load %arg13[%c301, %c0_25] : memref<400x32xf32, #tpu.memory_space<vmem>>, vector<89x32xf32>
    %c0_26 = arith.constant 0 : index
    %c224 = arith.constant 224 : index
    %25 = vector.load %arg14[%c0_26, %c224] : memref<89x512xf32, #tpu.memory_space<vmem>>, vector<89x32xf32>
    tpu.vector_store %arg14[%c0_26, %c224], %24 {strides = array<i32>} : memref<89x512xf32, #tpu.memory_space<vmem>>, vector<89x32xf32>,
    %c10 = arith.constant 10 : index
    %c0_27 = arith.constant 0 : index
    %26 = vector.load %arg13[%c10, %c0_27] : memref<400x32xf32, #tpu.memory_space<vmem>>, vector<89x32xf32>
    %c0_28 = arith.constant 0 : index
    %c256 = arith.constant 256 : index
    %27 = vector.load %arg14[%c0_28, %c256] : memref<89x512xf32, #tpu.memory_space<vmem>>, vector<89x32xf32>
    tpu.vector_store %arg14[%c0_28, %c256], %26 {strides = array<i32>} : memref<89x512xf32, #tpu.memory_space<vmem>>, vector<89x32xf32>,
    %c110 = arith.constant 110 : index
    %c0_29 = arith.constant 0 : index
    %28 = vector.load %arg13[%c110, %c0_29] : memref<400x32xf32, #tpu.memory_space<vmem>>, vector<89x32xf32>
    %c0_30 = arith.constant 0 : index
    %c288 = arith.constant 288 : index
    %29 = vector.load %arg14[%c0_30, %c288] : memref<89x512xf32, #tpu.memory_space<vmem>>, vector<89x32xf32>
    tpu.vector_store %arg14[%c0_30, %c288], %28 {strides = array<i32>} : memref<89x512xf32, #tpu.memory_space<vmem>>, vector<89x32xf32>,
    %c11 = arith.constant 11 : index
    %c0_31 = arith.constant 0 : index
    %30 = vector.load %arg13[%c11, %c0_31] : memref<400x32xf32, #tpu.memory_space<vmem>>, vector<89x32xf32>
    %c0_32 = arith.constant 0 : index
    %c320 = arith.constant 320 : index
    %31 = vector.load %arg14[%c0_32, %c320] : memref<89x512xf32, #tpu.memory_space<vmem>>, vector<89x32xf32>
    tpu.vector_store %arg14[%c0_32, %c320], %30 {strides = array<i32>} : memref<89x512xf32, #tpu.memory_space<vmem>>, vector<89x32xf32>,
    %c111 = arith.constant 111 : index
    %c0_33 = arith.constant 0 : index
    %32 = vector.load %arg13[%c111, %c0_33] : memref<400x32xf32, #tpu.memory_space<vmem>>, vector<89x32xf32>
    %c0_34 = arith.constant 0 : index
    %c352 = arith.constant 352 : index
    %33 = vector.load %arg14[%c0_34, %c352] : memref<89x512xf32, #tpu.memory_space<vmem>>, vector<89x32xf32>
    tpu.vector_store %arg14[%c0_34, %c352], %32 {strides = array<i32>} : memref<89x512xf32, #tpu.memory_space<vmem>>, vector<89x32xf32>,
    %c210 = arith.constant 210 : index
    %c0_35 = arith.constant 0 : index
    %34 = vector.load %arg13[%c210, %c0_35] : memref<400x32xf32, #tpu.memory_space<vmem>>, vector<89x32xf32>
    %c0_36 = arith.constant 0 : index
    %c384 = arith.constant 384 : index
    %35 = vector.load %arg14[%c0_36, %c384] : memref<89x512xf32, #tpu.memory_space<vmem>>, vector<89x32xf32>
    tpu.vector_store %arg14[%c0_36, %c384], %34 {strides = array<i32>} : memref<89x512xf32, #tpu.memory_space<vmem>>, vector<89x32xf32>,
    %c310 = arith.constant 310 : index
    %c0_37 = arith.constant 0 : index
    %36 = vector.load %arg13[%c310, %c0_37] : memref<400x32xf32, #tpu.memory_space<vmem>>, vector<89x32xf32>
    %c0_38 = arith.constant 0 : index
    %c416 = arith.constant 416 : index
    %37 = vector.load %arg14[%c0_38, %c416] : memref<89x512xf32, #tpu.memory_space<vmem>>, vector<89x32xf32>
    tpu.vector_store %arg14[%c0_38, %c416], %36 {strides = array<i32>} : memref<89x512xf32, #tpu.memory_space<vmem>>, vector<89x32xf32>,
    %c211 = arith.constant 211 : index
    %c0_39 = arith.constant 0 : index
    %38 = vector.load %arg13[%c211, %c0_39] : memref<400x32xf32, #tpu.memory_space<vmem>>, vector<89x32xf32>
    %c0_40 = arith.constant 0 : index
    %c448 = arith.constant 448 : index
    %39 = vector.load %arg14[%c0_40, %c448] : memref<89x512xf32, #tpu.memory_space<vmem>>, vector<89x32xf32>
    tpu.vector_store %arg14[%c0_40, %c448], %38 {strides = array<i32>} : memref<89x512xf32, #tpu.memory_space<vmem>>, vector<89x32xf32>,
    %c311 = arith.constant 311 : index
    %c0_41 = arith.constant 0 : index
    %40 = vector.load %arg13[%c311, %c0_41] : memref<400x32xf32, #tpu.memory_space<vmem>>, vector<89x32xf32>
    %c0_42 = arith.constant 0 : index
    %c480 = arith.constant 480 : index
    %41 = vector.load %arg14[%c0_42, %c480] : memref<89x512xf32, #tpu.memory_space<vmem>>, vector<89x32xf32>
    tpu.vector_store %arg14[%c0_42, %c480], %40 {strides = array<i32>} : memref<89x512xf32, #tpu.memory_space<vmem>>, vector<89x32xf32>,
    %c0_43 = arith.constant 0 : index
    %c0_44 = arith.constant 0 : index
    %42 = vector.load %arg14[%c0_43, %c0_44] : memref<89x512xf32, #tpu.memory_space<vmem>>, vector<89x512xf32>
    %43 = arith.truncf %42 : vector<89x512xf32> to vector<89x512xbf16>
    %c0_45 = arith.constant 0 : index
    %c0_46 = arith.constant 0 : index
    %44 = vector.load %arg4[%c0_45, %c0_46] : memref<512x64xbf16, #tpu.memory_space<vmem>>, vector<512x64xbf16>
    %cst_47 = arith.constant dense<0.000000e+00> : vector<89x64xf32>
    %45 = tpu.matmul %43, %44, %cst_47 {dimension_numbers = #tpu.dot_dimension_numbers<[1], [0], [0], [1], [0, 0, 1, 1], [], []>} : vector<89x512xbf16>, vector<512x64xbf16>, vector<89x64xf32> -> vector<89x64xf32>
    %c0_48 = arith.constant 0 : index
    %c0_49 = arith.constant 0 : index
    %46 = vector.load %arg5[%c0_48, %c0_49] : memref<1x64xf32, #tpu.memory_space<vmem>>, vector<1x64xf32>
    %47 = vector.broadcast %46 : vector<1x64xf32> to vector<89x64xf32>
    %48 = arith.addf %45, %47 : vector<89x64xf32>
    %cst_50 = arith.constant 0.000000e+00 : f32
    %49 = vector.broadcast %cst_50 : f32 to vector<89x64xf32>
    %50 = arith.maximumf %48, %49 : vector<89x64xf32>
    %c0_51 = arith.constant 0 : index
    %c0_52 = arith.constant 0 : index
    %51 = vector.load %arg15[%c0_51, %c0_52] : memref<89x64xf32, #tpu.memory_space<vmem>>, vector<89x64xf32>
    tpu.vector_store %arg15[%c0_51, %c0_52], %50 {strides = array<i32>} : memref<89x64xf32, #tpu.memory_space<vmem>>, vector<89x64xf32>,
    %c0_53 = arith.constant 0 : index
    %c0_54 = arith.constant 0 : index
    %52 = vector.load %arg15[%c0_53, %c0_54] : memref<89x64xf32, #tpu.memory_space<vmem>>, vector<67x64xf32>
    %c0_55 = arith.constant 0 : index
    %c0_56 = arith.constant 0 : index
    %53 = vector.load %arg16[%c0_55, %c0_56] : memref<67x576xf32, #tpu.memory_space<vmem>>, vector<67x64xf32>
    tpu.vector_store %arg16[%c0_55, %c0_56], %52 {strides = array<i32>} : memref<67x576xf32, #tpu.memory_space<vmem>>, vector<67x64xf32>,
    %c1_57 = arith.constant 1 : index
    %c0_58 = arith.constant 0 : index
    %54 = vector.load %arg15[%c1_57, %c0_58] : memref<89x64xf32, #tpu.memory_space<vmem>>, vector<67x64xf32>
    %c0_59 = arith.constant 0 : index
    %c64_60 = arith.constant 64 : index
    %55 = vector.load %arg16[%c0_59, %c64_60] : memref<67x576xf32, #tpu.memory_space<vmem>>, vector<67x64xf32>
    tpu.vector_store %arg16[%c0_59, %c64_60], %54 {strides = array<i32>} : memref<67x576xf32, #tpu.memory_space<vmem>>, vector<67x64xf32>,
    %c2 = arith.constant 2 : index
    %c0_61 = arith.constant 0 : index
    %56 = vector.load %arg15[%c2, %c0_61] : memref<89x64xf32, #tpu.memory_space<vmem>>, vector<67x64xf32>
    %c0_62 = arith.constant 0 : index
    %c128_63 = arith.constant 128 : index
    %57 = vector.load %arg16[%c0_62, %c128_63] : memref<67x576xf32, #tpu.memory_space<vmem>>, vector<67x64xf32>
    tpu.vector_store %arg16[%c0_62, %c128_63], %56 {strides = array<i32>} : memref<67x576xf32, #tpu.memory_space<vmem>>, vector<67x64xf32>,
    %c10_64 = arith.constant 10 : index
    %c0_65 = arith.constant 0 : index
    %58 = vector.load %arg15[%c10_64, %c0_65] : memref<89x64xf32, #tpu.memory_space<vmem>>, vector<67x64xf32>
    %c0_66 = arith.constant 0 : index
    %c192_67 = arith.constant 192 : index
    %59 = vector.load %arg16[%c0_66, %c192_67] : memref<67x576xf32, #tpu.memory_space<vmem>>, vector<67x64xf32>
    tpu.vector_store %arg16[%c0_66, %c192_67], %58 {strides = array<i32>} : memref<67x576xf32, #tpu.memory_space<vmem>>, vector<67x64xf32>,
    %c11_68 = arith.constant 11 : index
    %c0_69 = arith.constant 0 : index
    %60 = vector.load %arg15[%c11_68, %c0_69] : memref<89x64xf32, #tpu.memory_space<vmem>>, vector<67x64xf32>
    %c0_70 = arith.constant 0 : index
    %c256_71 = arith.constant 256 : index
    %61 = vector.load %arg16[%c0_70, %c256_71] : memref<67x576xf32, #tpu.memory_space<vmem>>, vector<67x64xf32>
    tpu.vector_store %arg16[%c0_70, %c256_71], %60 {strides = array<i32>} : memref<67x576xf32, #tpu.memory_space<vmem>>, vector<67x64xf32>,
    %c12 = arith.constant 12 : index
    %c0_72 = arith.constant 0 : index
    %62 = vector.load %arg15[%c12, %c0_72] : memref<89x64xf32, #tpu.memory_space<vmem>>, vector<67x64xf32>
    %c0_73 = arith.constant 0 : index
    %c320_74 = arith.constant 320 : index
    %63 = vector.load %arg16[%c0_73, %c320_74] : memref<67x576xf32, #tpu.memory_space<vmem>>, vector<67x64xf32>
    tpu.vector_store %arg16[%c0_73, %c320_74], %62 {strides = array<i32>} : memref<67x576xf32, #tpu.memory_space<vmem>>, vector<67x64xf32>,
    %c20 = arith.constant 20 : index
    %c0_75 = arith.constant 0 : index
    %64 = vector.load %arg15[%c20, %c0_75] : memref<89x64xf32, #tpu.memory_space<vmem>>, vector<67x64xf32>
    %c0_76 = arith.constant 0 : index
    %c384_77 = arith.constant 384 : index
    %65 = vector.load %arg16[%c0_76, %c384_77] : memref<67x576xf32, #tpu.memory_space<vmem>>, vector<67x64xf32>
    tpu.vector_store %arg16[%c0_76, %c384_77], %64 {strides = array<i32>} : memref<67x576xf32, #tpu.memory_space<vmem>>, vector<67x64xf32>,
    %c21 = arith.constant 21 : index
    %c0_78 = arith.constant 0 : index
    %66 = vector.load %arg15[%c21, %c0_78] : memref<89x64xf32, #tpu.memory_space<vmem>>, vector<67x64xf32>
    %c0_79 = arith.constant 0 : index
    %c448_80 = arith.constant 448 : index
    %67 = vector.load %arg16[%c0_79, %c448_80] : memref<67x576xf32, #tpu.memory_space<vmem>>, vector<67x64xf32>
    tpu.vector_store %arg16[%c0_79, %c448_80], %66 {strides = array<i32>} : memref<67x576xf32, #tpu.memory_space<vmem>>, vector<67x64xf32>,
    %c22 = arith.constant 22 : index
    %c0_81 = arith.constant 0 : index
    %68 = vector.load %arg15[%c22, %c0_81] : memref<89x64xf32, #tpu.memory_space<vmem>>, vector<67x64xf32>
    %c0_82 = arith.constant 0 : index
    %c512 = arith.constant 512 : index
    %69 = vector.load %arg16[%c0_82, %c512] : memref<67x576xf32, #tpu.memory_space<vmem>>, vector<67x64xf32>
    tpu.vector_store %arg16[%c0_82, %c512], %68 {strides = array<i32>} : memref<67x576xf32, #tpu.memory_space<vmem>>, vector<67x64xf32>,
    %c0_83 = arith.constant 0 : index
    %c0_84 = arith.constant 0 : index
    %70 = vector.load %arg16[%c0_83, %c0_84] : memref<67x576xf32, #tpu.memory_space<vmem>>, vector<67x576xf32>
    %71 = arith.truncf %70 : vector<67x576xf32> to vector<67x576xbf16>
    %c0_85 = arith.constant 0 : index
    %c0_86 = arith.constant 0 : index
    %72 = vector.load %arg6[%c0_85, %c0_86] : memref<576x64xbf16, #tpu.memory_space<vmem>>, vector<576x64xbf16>
    %cst_87 = arith.constant dense<0.000000e+00> : vector<67x64xf32>
    %73 = tpu.matmul %71, %72, %cst_87 {dimension_numbers = #tpu.dot_dimension_numbers<[1], [0], [0], [1], [0, 0, 1, 1], [], []>} : vector<67x576xbf16>, vector<576x64xbf16>, vector<67x64xf32> -> vector<67x64xf32>
    %c0_88 = arith.constant 0 : index
    %c0_89 = arith.constant 0 : index
    %74 = vector.load %arg7[%c0_88, %c0_89] : memref<1x64xf32, #tpu.memory_space<vmem>>, vector<1x64xf32>
    %75 = vector.broadcast %74 : vector<1x64xf32> to vector<67x64xf32>
    %76 = arith.addf %73, %75 : vector<67x64xf32>
    %cst_90 = arith.constant 0.000000e+00 : f32
    %77 = vector.broadcast %cst_90 : f32 to vector<67x64xf32>
    %78 = arith.maximumf %76, %77 : vector<67x64xf32>
    %c0_91 = arith.constant 0 : index
    %c0_92 = arith.constant 0 : index
    %79 = vector.load %arg17[%c0_91, %c0_92] : memref<67x64xf32, #tpu.memory_space<vmem>>, vector<67x64xf32>
    tpu.vector_store %arg17[%c0_91, %c0_92], %78 {strides = array<i32>} : memref<67x64xf32, #tpu.memory_space<vmem>>, vector<67x64xf32>,
    %c0_93 = arith.constant 0 : index
    %c0_94 = arith.constant 0 : index
    %80 = vector.load %arg17[%c0_93, %c0_94] : memref<67x64xf32, #tpu.memory_space<vmem>>, vector<1x64xf32>
    %c0_95 = arith.constant 0 : index
    %c0_96 = arith.constant 0 : index
    %81 = vector.load %arg18[%c0_95, %c0_96] : memref<1x3136xf32, #tpu.memory_space<vmem>>, vector<1x64xf32>
    tpu.vector_store %arg18[%c0_95, %c0_96], %80 {strides = array<i32>} : memref<1x3136xf32, #tpu.memory_space<vmem>>, vector<1x64xf32>,
    %c1_97 = arith.constant 1 : index
    %c0_98 = arith.constant 0 : index
    %82 = vector.load %arg17[%c1_97, %c0_98] : memref<67x64xf32, #tpu.memory_space<vmem>>, vector<1x64xf32>
    %c0_99 = arith.constant 0 : index
    %c64_100 = arith.constant 64 : index
    %83 = vector.load %arg18[%c0_99, %c64_100] : memref<1x3136xf32, #tpu.memory_space<vmem>>, vector<1x64xf32>
    tpu.vector_store %arg18[%c0_99, %c64_100], %82 {strides = array<i32>} : memref<1x3136xf32, #tpu.memory_space<vmem>>, vector<1x64xf32>,
    %c2_101 = arith.constant 2 : index
    %c0_102 = arith.constant 0 : index
    %84 = vector.load %arg17[%c2_101, %c0_102] : memref<67x64xf32, #tpu.memory_space<vmem>>, vector<1x64xf32>
    %c0_103 = arith.constant 0 : index
    %c128_104 = arith.constant 128 : index
    %85 = vector.load %arg18[%c0_103, %c128_104] : memref<1x3136xf32, #tpu.memory_space<vmem>>, vector<1x64xf32>
    tpu.vector_store %arg18[%c0_103, %c128_104], %84 {strides = array<i32>} : memref<1x3136xf32, #tpu.memory_space<vmem>>, vector<1x64xf32>,
    %c3 = arith.constant 3 : index
    %c0_105 = arith.constant 0 : index
    %86 = vector.load %arg17[%c3, %c0_105] : memref<67x64xf32, #tpu.memory_space<vmem>>, vector<1x64xf32>
    %c0_106 = arith.constant 0 : index
    %c192_107 = arith.constant 192 : index
    %87 = vector.load %arg18[%c0_106, %c192_107] : memref<1x3136xf32, #tpu.memory_space<vmem>>, vector<1x64xf32>
    tpu.vector_store %arg18[%c0_106, %c192_107], %86 {strides = array<i32>} : memref<1x3136xf32, #tpu.memory_space<vmem>>, vector<1x64xf32>,
    %c4 = arith.constant 4 : index
    %c0_108 = arith.constant 0 : index
    %88 = vector.load %arg17[%c4, %c0_108] : memref<67x64xf32, #tpu.memory_space<vmem>>, vector<1x64xf32>
    %c0_109 = arith.constant 0 : index
    %c256_110 = arith.constant 256 : index
    %89 = vector.load %arg18[%c0_109, %c256_110] : memref<1x3136xf32, #tpu.memory_space<vmem>>, vector<1x64xf32>
    tpu.vector_store %arg18[%c0_109, %c256_110], %88 {strides = array<i32>} : memref<1x3136xf32, #tpu.memory_space<vmem>>, vector<1x64xf32>,
    %c5 = arith.constant 5 : index
    %c0_111 = arith.constant 0 : index
    %90 = vector.load %arg17[%c5, %c0_111] : memref<67x64xf32, #tpu.memory_space<vmem>>, vector<1x64xf32>
    %c0_112 = arith.constant 0 : index
    %c320_113 = arith.constant 320 : index
    %91 = vector.load %arg18[%c0_112, %c320_113] : memref<1x3136xf32, #tpu.memory_space<vmem>>, vector<1x64xf32>
    tpu.vector_store %arg18[%c0_112, %c320_113], %90 {strides = array<i32>} : memref<1x3136xf32, #tpu.memory_space<vmem>>, vector<1x64xf32>,
    %c6 = arith.constant 6 : index
    %c0_114 = arith.constant 0 : index
    %92 = vector.load %arg17[%c6, %c0_114] : memref<67x64xf32, #tpu.memory_space<vmem>>, vector<1x64xf32>
    %c0_115 = arith.constant 0 : index
    %c384_116 = arith.constant 384 : index
    %93 = vector.load %arg18[%c0_115, %c384_116] : memref<1x3136xf32, #tpu.memory_space<vmem>>, vector<1x64xf32>
    tpu.vector_store %arg18[%c0_115, %c384_116], %92 {strides = array<i32>} : memref<1x3136xf32, #tpu.memory_space<vmem>>, vector<1x64xf32>,
    %c10_117 = arith.constant 10 : index
    %c0_118 = arith.constant 0 : index
    %94 = vector.load %arg17[%c10_117, %c0_118] : memref<67x64xf32, #tpu.memory_space<vmem>>, vector<1x64xf32>
    %c0_119 = arith.constant 0 : index
    %c448_120 = arith.constant 448 : index
    %95 = vector.load %arg18[%c0_119, %c448_120] : memref<1x3136xf32, #tpu.memory_space<vmem>>, vector<1x64xf32>
    tpu.vector_store %arg18[%c0_119, %c448_120], %94 {strides = array<i32>} : memref<1x3136xf32, #tpu.memory_space<vmem>>, vector<1x64xf32>,
    %c11_121 = arith.constant 11 : index
    %c0_122 = arith.constant 0 : index
    %96 = vector.load %arg17[%c11_121, %c0_122] : memref<67x64xf32, #tpu.memory_space<vmem>>, vector<1x64xf32>
    %c0_123 = arith.constant 0 : index
    %c512_124 = arith.constant 512 : index
    %97 = vector.load %arg18[%c0_123, %c512_124] : memref<1x3136xf32, #tpu.memory_space<vmem>>, vector<1x64xf32>
    tpu.vector_store %arg18[%c0_123, %c512_124], %96 {strides = array<i32>} : memref<1x3136xf32, #tpu.memory_space<vmem>>, vector<1x64xf32>,
    %c12_125 = arith.constant 12 : index
    %c0_126 = arith.constant 0 : index
    %98 = vector.load %arg17[%c12_125, %c0_126] : memref<67x64xf32, #tpu.memory_space<vmem>>, vector<1x64xf32>
    %c0_127 = arith.constant 0 : index
    %c576 = arith.constant 576 : index
    %99 = vector.load %arg18[%c0_127, %c576] : memref<1x3136xf32, #tpu.memory_space<vmem>>, vector<1x64xf32>
    tpu.vector_store %arg18[%c0_127, %c576], %98 {strides = array<i32>} : memref<1x3136xf32, #tpu.memory_space<vmem>>, vector<1x64xf32>,
    %c13 = arith.constant 13 : index
    %c0_128 = arith.constant 0 : index
    %100 = vector.load %arg17[%c13, %c0_128] : memref<67x64xf32, #tpu.memory_space<vmem>>, vector<1x64xf32>
    %c0_129 = arith.constant 0 : index
    %c640 = arith.constant 640 : index
    %101 = vector.load %arg18[%c0_129, %c640] : memref<1x3136xf32, #tpu.memory_space<vmem>>, vector<1x64xf32>
    tpu.vector_store %arg18[%c0_129, %c640], %100 {strides = array<i32>} : memref<1x3136xf32, #tpu.memory_space<vmem>>, vector<1x64xf32>,
    %c14 = arith.constant 14 : index
    %c0_130 = arith.constant 0 : index
    %102 = vector.load %arg17[%c14, %c0_130] : memref<67x64xf32, #tpu.memory_space<vmem>>, vector<1x64xf32>
    %c0_131 = arith.constant 0 : index
    %c704 = arith.constant 704 : index
    %103 = vector.load %arg18[%c0_131, %c704] : memref<1x3136xf32, #tpu.memory_space<vmem>>, vector<1x64xf32>
    tpu.vector_store %arg18[%c0_131, %c704], %102 {strides = array<i32>} : memref<1x3136xf32, #tpu.memory_space<vmem>>, vector<1x64xf32>,
    %c15 = arith.constant 15 : index
    %c0_132 = arith.constant 0 : index
    %104 = vector.load %arg17[%c15, %c0_132] : memref<67x64xf32, #tpu.memory_space<vmem>>, vector<1x64xf32>
    %c0_133 = arith.constant 0 : index
    %c768 = arith.constant 768 : index
    %105 = vector.load %arg18[%c0_133, %c768] : memref<1x3136xf32, #tpu.memory_space<vmem>>, vector<1x64xf32>
    tpu.vector_store %arg18[%c0_133, %c768], %104 {strides = array<i32>} : memref<1x3136xf32, #tpu.memory_space<vmem>>, vector<1x64xf32>,
    %c16 = arith.constant 16 : index
    %c0_134 = arith.constant 0 : index
    %106 = vector.load %arg17[%c16, %c0_134] : memref<67x64xf32, #tpu.memory_space<vmem>>, vector<1x64xf32>
    %c0_135 = arith.constant 0 : index
    %c832 = arith.constant 832 : index
    %107 = vector.load %arg18[%c0_135, %c832] : memref<1x3136xf32, #tpu.memory_space<vmem>>, vector<1x64xf32>
    tpu.vector_store %arg18[%c0_135, %c832], %106 {strides = array<i32>} : memref<1x3136xf32, #tpu.memory_space<vmem>>, vector<1x64xf32>,
    %c20_136 = arith.constant 20 : index
    %c0_137 = arith.constant 0 : index
    %108 = vector.load %arg17[%c20_136, %c0_137] : memref<67x64xf32, #tpu.memory_space<vmem>>, vector<1x64xf32>
    %c0_138 = arith.constant 0 : index
    %c896 = arith.constant 896 : index
    %109 = vector.load %arg18[%c0_138, %c896] : memref<1x3136xf32, #tpu.memory_space<vmem>>, vector<1x64xf32>
    tpu.vector_store %arg18[%c0_138, %c896], %108 {strides = array<i32>} : memref<1x3136xf32, #tpu.memory_space<vmem>>, vector<1x64xf32>,
    %c21_139 = arith.constant 21 : index
    %c0_140 = arith.constant 0 : index
    %110 = vector.load %arg17[%c21_139, %c0_140] : memref<67x64xf32, #tpu.memory_space<vmem>>, vector<1x64xf32>
    %c0_141 = arith.constant 0 : index
    %c960 = arith.constant 960 : index
    %111 = vector.load %arg18[%c0_141, %c960] : memref<1x3136xf32, #tpu.memory_space<vmem>>, vector<1x64xf32>
    tpu.vector_store %arg18[%c0_141, %c960], %110 {strides = array<i32>} : memref<1x3136xf32, #tpu.memory_space<vmem>>, vector<1x64xf32>,
    %c22_142 = arith.constant 22 : index
    %c0_143 = arith.constant 0 : index
    %112 = vector.load %arg17[%c22_142, %c0_143] : memref<67x64xf32, #tpu.memory_space<vmem>>, vector<1x64xf32>
    %c0_144 = arith.constant 0 : index
    %c1024 = arith.constant 1024 : index
    %113 = vector.load %arg18[%c0_144, %c1024] : memref<1x3136xf32, #tpu.memory_space<vmem>>, vector<1x64xf32>
    tpu.vector_store %arg18[%c0_144, %c1024], %112 {strides = array<i32>} : memref<1x3136xf32, #tpu.memory_space<vmem>>, vector<1x64xf32>,
    %c23 = arith.constant 23 : index
    %c0_145 = arith.constant 0 : index
    %114 = vector.load %arg17[%c23, %c0_145] : memref<67x64xf32, #tpu.memory_space<vmem>>, vector<1x64xf32>
    %c0_146 = arith.constant 0 : index
    %c1088 = arith.constant 1088 : index
    %115 = vector.load %arg18[%c0_146, %c1088] : memref<1x3136xf32, #tpu.memory_space<vmem>>, vector<1x64xf32>
    tpu.vector_store %arg18[%c0_146, %c1088], %114 {strides = array<i32>} : memref<1x3136xf32, #tpu.memory_space<vmem>>, vector<1x64xf32>,
    %c24 = arith.constant 24 : index
    %c0_147 = arith.constant 0 : index
    %116 = vector.load %arg17[%c24, %c0_147] : memref<67x64xf32, #tpu.memory_space<vmem>>, vector<1x64xf32>
    %c0_148 = arith.constant 0 : index
    %c1152 = arith.constant 1152 : index
    %117 = vector.load %arg18[%c0_148, %c1152] : memref<1x3136xf32, #tpu.memory_space<vmem>>, vector<1x64xf32>
    tpu.vector_store %arg18[%c0_148, %c1152], %116 {strides = array<i32>} : memref<1x3136xf32, #tpu.memory_space<vmem>>, vector<1x64xf32>,
    %c25 = arith.constant 25 : index
    %c0_149 = arith.constant 0 : index
    %118 = vector.load %arg17[%c25, %c0_149] : memref<67x64xf32, #tpu.memory_space<vmem>>, vector<1x64xf32>
    %c0_150 = arith.constant 0 : index
    %c1216 = arith.constant 1216 : index
    %119 = vector.load %arg18[%c0_150, %c1216] : memref<1x3136xf32, #tpu.memory_space<vmem>>, vector<1x64xf32>
    tpu.vector_store %arg18[%c0_150, %c1216], %118 {strides = array<i32>} : memref<1x3136xf32, #tpu.memory_space<vmem>>, vector<1x64xf32>,
    %c26 = arith.constant 26 : index
    %c0_151 = arith.constant 0 : index
    %120 = vector.load %arg17[%c26, %c0_151] : memref<67x64xf32, #tpu.memory_space<vmem>>, vector<1x64xf32>
    %c0_152 = arith.constant 0 : index
    %c1280 = arith.constant 1280 : index
    %121 = vector.load %arg18[%c0_152, %c1280] : memref<1x3136xf32, #tpu.memory_space<vmem>>, vector<1x64xf32>
    tpu.vector_store %arg18[%c0_152, %c1280], %120 {strides = array<i32>} : memref<1x3136xf32, #tpu.memory_space<vmem>>, vector<1x64xf32>,
    %c30 = arith.constant 30 : index
    %c0_153 = arith.constant 0 : index
    %122 = vector.load %arg17[%c30, %c0_153] : memref<67x64xf32, #tpu.memory_space<vmem>>, vector<1x64xf32>
    %c0_154 = arith.constant 0 : index
    %c1344 = arith.constant 1344 : index
    %123 = vector.load %arg18[%c0_154, %c1344] : memref<1x3136xf32, #tpu.memory_space<vmem>>, vector<1x64xf32>
    tpu.vector_store %arg18[%c0_154, %c1344], %122 {strides = array<i32>} : memref<1x3136xf32, #tpu.memory_space<vmem>>, vector<1x64xf32>,
    %c31 = arith.constant 31 : index
    %c0_155 = arith.constant 0 : index
    %124 = vector.load %arg17[%c31, %c0_155] : memref<67x64xf32, #tpu.memory_space<vmem>>, vector<1x64xf32>
    %c0_156 = arith.constant 0 : index
    %c1408 = arith.constant 1408 : index
    %125 = vector.load %arg18[%c0_156, %c1408] : memref<1x3136xf32, #tpu.memory_space<vmem>>, vector<1x64xf32>
    tpu.vector_store %arg18[%c0_156, %c1408], %124 {strides = array<i32>} : memref<1x3136xf32, #tpu.memory_space<vmem>>, vector<1x64xf32>,
    %c32_157 = arith.constant 32 : index
    %c0_158 = arith.constant 0 : index
    %126 = vector.load %arg17[%c32_157, %c0_158] : memref<67x64xf32, #tpu.memory_space<vmem>>, vector<1x64xf32>
    %c0_159 = arith.constant 0 : index
    %c1472 = arith.constant 1472 : index
    %127 = vector.load %arg18[%c0_159, %c1472] : memref<1x3136xf32, #tpu.memory_space<vmem>>, vector<1x64xf32>
    tpu.vector_store %arg18[%c0_159, %c1472], %126 {strides = array<i32>} : memref<1x3136xf32, #tpu.memory_space<vmem>>, vector<1x64xf32>,
    %c33 = arith.constant 33 : index
    %c0_160 = arith.constant 0 : index
    %128 = vector.load %arg17[%c33, %c0_160] : memref<67x64xf32, #tpu.memory_space<vmem>>, vector<1x64xf32>
    %c0_161 = arith.constant 0 : index
    %c1536 = arith.constant 1536 : index
    %129 = vector.load %arg18[%c0_161, %c1536] : memref<1x3136xf32, #tpu.memory_space<vmem>>, vector<1x64xf32>
    tpu.vector_store %arg18[%c0_161, %c1536], %128 {strides = array<i32>} : memref<1x3136xf32, #tpu.memory_space<vmem>>, vector<1x64xf32>,
    %c34 = arith.constant 34 : index
    %c0_162 = arith.constant 0 : index
    %130 = vector.load %arg17[%c34, %c0_162] : memref<67x64xf32, #tpu.memory_space<vmem>>, vector<1x64xf32>
    %c0_163 = arith.constant 0 : index
    %c1600 = arith.constant 1600 : index
    %131 = vector.load %arg18[%c0_163, %c1600] : memref<1x3136xf32, #tpu.memory_space<vmem>>, vector<1x64xf32>
    tpu.vector_store %arg18[%c0_163, %c1600], %130 {strides = array<i32>} : memref<1x3136xf32, #tpu.memory_space<vmem>>, vector<1x64xf32>,
    %c35 = arith.constant 35 : index
    %c0_164 = arith.constant 0 : index
    %132 = vector.load %arg17[%c35, %c0_164] : memref<67x64xf32, #tpu.memory_space<vmem>>, vector<1x64xf32>
    %c0_165 = arith.constant 0 : index
    %c1664 = arith.constant 1664 : index
    %133 = vector.load %arg18[%c0_165, %c1664] : memref<1x3136xf32, #tpu.memory_space<vmem>>, vector<1x64xf32>
    tpu.vector_store %arg18[%c0_165, %c1664], %132 {strides = array<i32>} : memref<1x3136xf32, #tpu.memory_space<vmem>>, vector<1x64xf32>,
    %c36 = arith.constant 36 : index
    %c0_166 = arith.constant 0 : index
    %134 = vector.load %arg17[%c36, %c0_166] : memref<67x64xf32, #tpu.memory_space<vmem>>, vector<1x64xf32>
    %c0_167 = arith.constant 0 : index
    %c1728 = arith.constant 1728 : index
    %135 = vector.load %arg18[%c0_167, %c1728] : memref<1x3136xf32, #tpu.memory_space<vmem>>, vector<1x64xf32>
    tpu.vector_store %arg18[%c0_167, %c1728], %134 {strides = array<i32>} : memref<1x3136xf32, #tpu.memory_space<vmem>>, vector<1x64xf32>,
    %c40 = arith.constant 40 : index
    %c0_168 = arith.constant 0 : index
    %136 = vector.load %arg17[%c40, %c0_168] : memref<67x64xf32, #tpu.memory_space<vmem>>, vector<1x64xf32>
    %c0_169 = arith.constant 0 : index
    %c1792 = arith.constant 1792 : index
    %137 = vector.load %arg18[%c0_169, %c1792] : memref<1x3136xf32, #tpu.memory_space<vmem>>, vector<1x64xf32>
    tpu.vector_store %arg18[%c0_169, %c1792], %136 {strides = array<i32>} : memref<1x3136xf32, #tpu.memory_space<vmem>>, vector<1x64xf32>,
    %c41 = arith.constant 41 : index
    %c0_170 = arith.constant 0 : index
    %138 = vector.load %arg17[%c41, %c0_170] : memref<67x64xf32, #tpu.memory_space<vmem>>, vector<1x64xf32>
    %c0_171 = arith.constant 0 : index
    %c1856 = arith.constant 1856 : index
    %139 = vector.load %arg18[%c0_171, %c1856] : memref<1x3136xf32, #tpu.memory_space<vmem>>, vector<1x64xf32>
    tpu.vector_store %arg18[%c0_171, %c1856], %138 {strides = array<i32>} : memref<1x3136xf32, #tpu.memory_space<vmem>>, vector<1x64xf32>,
    %c42 = arith.constant 42 : index
    %c0_172 = arith.constant 0 : index
    %140 = vector.load %arg17[%c42, %c0_172] : memref<67x64xf32, #tpu.memory_space<vmem>>, vector<1x64xf32>
    %c0_173 = arith.constant 0 : index
    %c1920 = arith.constant 1920 : index
    %141 = vector.load %arg18[%c0_173, %c1920] : memref<1x3136xf32, #tpu.memory_space<vmem>>, vector<1x64xf32>
    tpu.vector_store %arg18[%c0_173, %c1920], %140 {strides = array<i32>} : memref<1x3136xf32, #tpu.memory_space<vmem>>, vector<1x64xf32>,
    %c43 = arith.constant 43 : index
    %c0_174 = arith.constant 0 : index
    %142 = vector.load %arg17[%c43, %c0_174] : memref<67x64xf32, #tpu.memory_space<vmem>>, vector<1x64xf32>
    %c0_175 = arith.constant 0 : index
    %c1984 = arith.constant 1984 : index
    %143 = vector.load %arg18[%c0_175, %c1984] : memref<1x3136xf32, #tpu.memory_space<vmem>>, vector<1x64xf32>
    tpu.vector_store %arg18[%c0_175, %c1984], %142 {strides = array<i32>} : memref<1x3136xf32, #tpu.memory_space<vmem>>, vector<1x64xf32>,
    %c44 = arith.constant 44 : index
    %c0_176 = arith.constant 0 : index
    %144 = vector.load %arg17[%c44, %c0_176] : memref<67x64xf32, #tpu.memory_space<vmem>>, vector<1x64xf32>
    %c0_177 = arith.constant 0 : index
    %c2048 = arith.constant 2048 : index
    %145 = vector.load %arg18[%c0_177, %c2048] : memref<1x3136xf32, #tpu.memory_space<vmem>>, vector<1x64xf32>
    tpu.vector_store %arg18[%c0_177, %c2048], %144 {strides = array<i32>} : memref<1x3136xf32, #tpu.memory_space<vmem>>, vector<1x64xf32>,
    %c45 = arith.constant 45 : index
    %c0_178 = arith.constant 0 : index
    %146 = vector.load %arg17[%c45, %c0_178] : memref<67x64xf32, #tpu.memory_space<vmem>>, vector<1x64xf32>
    %c0_179 = arith.constant 0 : index
    %c2112 = arith.constant 2112 : index
    %147 = vector.load %arg18[%c0_179, %c2112] : memref<1x3136xf32, #tpu.memory_space<vmem>>, vector<1x64xf32>
    tpu.vector_store %arg18[%c0_179, %c2112], %146 {strides = array<i32>} : memref<1x3136xf32, #tpu.memory_space<vmem>>, vector<1x64xf32>,
    %c46 = arith.constant 46 : index
    %c0_180 = arith.constant 0 : index
    %148 = vector.load %arg17[%c46, %c0_180] : memref<67x64xf32, #tpu.memory_space<vmem>>, vector<1x64xf32>
    %c0_181 = arith.constant 0 : index
    %c2176 = arith.constant 2176 : index
    %149 = vector.load %arg18[%c0_181, %c2176] : memref<1x3136xf32, #tpu.memory_space<vmem>>, vector<1x64xf32>
    tpu.vector_store %arg18[%c0_181, %c2176], %148 {strides = array<i32>} : memref<1x3136xf32, #tpu.memory_space<vmem>>, vector<1x64xf32>,
    %c50 = arith.constant 50 : index
    %c0_182 = arith.constant 0 : index
    %150 = vector.load %arg17[%c50, %c0_182] : memref<67x64xf32, #tpu.memory_space<vmem>>, vector<1x64xf32>
    %c0_183 = arith.constant 0 : index
    %c2240 = arith.constant 2240 : index
    %151 = vector.load %arg18[%c0_183, %c2240] : memref<1x3136xf32, #tpu.memory_space<vmem>>, vector<1x64xf32>
    tpu.vector_store %arg18[%c0_183, %c2240], %150 {strides = array<i32>} : memref<1x3136xf32, #tpu.memory_space<vmem>>, vector<1x64xf32>,
    %c51 = arith.constant 51 : index
    %c0_184 = arith.constant 0 : index
    %152 = vector.load %arg17[%c51, %c0_184] : memref<67x64xf32, #tpu.memory_space<vmem>>, vector<1x64xf32>
    %c0_185 = arith.constant 0 : index
    %c2304 = arith.constant 2304 : index
    %153 = vector.load %arg18[%c0_185, %c2304] : memref<1x3136xf32, #tpu.memory_space<vmem>>, vector<1x64xf32>
    tpu.vector_store %arg18[%c0_185, %c2304], %152 {strides = array<i32>} : memref<1x3136xf32, #tpu.memory_space<vmem>>, vector<1x64xf32>,
    %c52 = arith.constant 52 : index
    %c0_186 = arith.constant 0 : index
    %154 = vector.load %arg17[%c52, %c0_186] : memref<67x64xf32, #tpu.memory_space<vmem>>, vector<1x64xf32>
    %c0_187 = arith.constant 0 : index
    %c2368 = arith.constant 2368 : index
    %155 = vector.load %arg18[%c0_187, %c2368] : memref<1x3136xf32, #tpu.memory_space<vmem>>, vector<1x64xf32>
    tpu.vector_store %arg18[%c0_187, %c2368], %154 {strides = array<i32>} : memref<1x3136xf32, #tpu.memory_space<vmem>>, vector<1x64xf32>,
    %c53 = arith.constant 53 : index
    %c0_188 = arith.constant 0 : index
    %156 = vector.load %arg17[%c53, %c0_188] : memref<67x64xf32, #tpu.memory_space<vmem>>, vector<1x64xf32>
    %c0_189 = arith.constant 0 : index
    %c2432 = arith.constant 2432 : index
    %157 = vector.load %arg18[%c0_189, %c2432] : memref<1x3136xf32, #tpu.memory_space<vmem>>, vector<1x64xf32>
    tpu.vector_store %arg18[%c0_189, %c2432], %156 {strides = array<i32>} : memref<1x3136xf32, #tpu.memory_space<vmem>>, vector<1x64xf32>,
    %c54 = arith.constant 54 : index
    %c0_190 = arith.constant 0 : index
    %158 = vector.load %arg17[%c54, %c0_190] : memref<67x64xf32, #tpu.memory_space<vmem>>, vector<1x64xf32>
    %c0_191 = arith.constant 0 : index
    %c2496 = arith.constant 2496 : index
    %159 = vector.load %arg18[%c0_191, %c2496] : memref<1x3136xf32, #tpu.memory_space<vmem>>, vector<1x64xf32>
    tpu.vector_store %arg18[%c0_191, %c2496], %158 {strides = array<i32>} : memref<1x3136xf32, #tpu.memory_space<vmem>>, vector<1x64xf32>,
    %c55 = arith.constant 55 : index
    %c0_192 = arith.constant 0 : index
    %160 = vector.load %arg17[%c55, %c0_192] : memref<67x64xf32, #tpu.memory_space<vmem>>, vector<1x64xf32>
    %c0_193 = arith.constant 0 : index
    %c2560 = arith.constant 2560 : index
    %161 = vector.load %arg18[%c0_193, %c2560] : memref<1x3136xf32, #tpu.memory_space<vmem>>, vector<1x64xf32>
    tpu.vector_store %arg18[%c0_193, %c2560], %160 {strides = array<i32>} : memref<1x3136xf32, #tpu.memory_space<vmem>>, vector<1x64xf32>,
    %c56 = arith.constant 56 : index
    %c0_194 = arith.constant 0 : index
    %162 = vector.load %arg17[%c56, %c0_194] : memref<67x64xf32, #tpu.memory_space<vmem>>, vector<1x64xf32>
    %c0_195 = arith.constant 0 : index
    %c2624 = arith.constant 2624 : index
    %163 = vector.load %arg18[%c0_195, %c2624] : memref<1x3136xf32, #tpu.memory_space<vmem>>, vector<1x64xf32>
    tpu.vector_store %arg18[%c0_195, %c2624], %162 {strides = array<i32>} : memref<1x3136xf32, #tpu.memory_space<vmem>>, vector<1x64xf32>,
    %c60 = arith.constant 60 : index
    %c0_196 = arith.constant 0 : index
    %164 = vector.load %arg17[%c60, %c0_196] : memref<67x64xf32, #tpu.memory_space<vmem>>, vector<1x64xf32>
    %c0_197 = arith.constant 0 : index
    %c2688 = arith.constant 2688 : index
    %165 = vector.load %arg18[%c0_197, %c2688] : memref<1x3136xf32, #tpu.memory_space<vmem>>, vector<1x64xf32>
    tpu.vector_store %arg18[%c0_197, %c2688], %164 {strides = array<i32>} : memref<1x3136xf32, #tpu.memory_space<vmem>>, vector<1x64xf32>,
    %c61 = arith.constant 61 : index
    %c0_198 = arith.constant 0 : index
    %166 = vector.load %arg17[%c61, %c0_198] : memref<67x64xf32, #tpu.memory_space<vmem>>, vector<1x64xf32>
    %c0_199 = arith.constant 0 : index
    %c2752 = arith.constant 2752 : index
    %167 = vector.load %arg18[%c0_199, %c2752] : memref<1x3136xf32, #tpu.memory_space<vmem>>, vector<1x64xf32>
    tpu.vector_store %arg18[%c0_199, %c2752], %166 {strides = array<i32>} : memref<1x3136xf32, #tpu.memory_space<vmem>>, vector<1x64xf32>,
    %c62 = arith.constant 62 : index
    %c0_200 = arith.constant 0 : index
    %168 = vector.load %arg17[%c62, %c0_200] : memref<67x64xf32, #tpu.memory_space<vmem>>, vector<1x64xf32>
    %c0_201 = arith.constant 0 : index
    %c2816 = arith.constant 2816 : index
    %169 = vector.load %arg18[%c0_201, %c2816] : memref<1x3136xf32, #tpu.memory_space<vmem>>, vector<1x64xf32>
    tpu.vector_store %arg18[%c0_201, %c2816], %168 {strides = array<i32>} : memref<1x3136xf32, #tpu.memory_space<vmem>>, vector<1x64xf32>,
    %c63 = arith.constant 63 : index
    %c0_202 = arith.constant 0 : index
    %170 = vector.load %arg17[%c63, %c0_202] : memref<67x64xf32, #tpu.memory_space<vmem>>, vector<1x64xf32>
    %c0_203 = arith.constant 0 : index
    %c2880 = arith.constant 2880 : index
    %171 = vector.load %arg18[%c0_203, %c2880] : memref<1x3136xf32, #tpu.memory_space<vmem>>, vector<1x64xf32>
    tpu.vector_store %arg18[%c0_203, %c2880], %170 {strides = array<i32>} : memref<1x3136xf32, #tpu.memory_space<vmem>>, vector<1x64xf32>,
    %c64_204 = arith.constant 64 : index
    %c0_205 = arith.constant 0 : index
    %172 = vector.load %arg17[%c64_204, %c0_205] : memref<67x64xf32, #tpu.memory_space<vmem>>, vector<1x64xf32>
    %c0_206 = arith.constant 0 : index
    %c2944 = arith.constant 2944 : index
    %173 = vector.load %arg18[%c0_206, %c2944] : memref<1x3136xf32, #tpu.memory_space<vmem>>, vector<1x64xf32>
    tpu.vector_store %arg18[%c0_206, %c2944], %172 {strides = array<i32>} : memref<1x3136xf32, #tpu.memory_space<vmem>>, vector<1x64xf32>,
    %c65 = arith.constant 65 : index
    %c0_207 = arith.constant 0 : index
    %174 = vector.load %arg17[%c65, %c0_207] : memref<67x64xf32, #tpu.memory_space<vmem>>, vector<1x64xf32>
    %c0_208 = arith.constant 0 : index
    %c3008 = arith.constant 3008 : index
    %175 = vector.load %arg18[%c0_208, %c3008] : memref<1x3136xf32, #tpu.memory_space<vmem>>, vector<1x64xf32>
    tpu.vector_store %arg18[%c0_208, %c3008], %174 {strides = array<i32>} : memref<1x3136xf32, #tpu.memory_space<vmem>>, vector<1x64xf32>,
    %c66 = arith.constant 66 : index
    %c0_209 = arith.constant 0 : index
    %176 = vector.load %arg17[%c66, %c0_209] : memref<67x64xf32, #tpu.memory_space<vmem>>, vector<1x64xf32>
    %c0_210 = arith.constant 0 : index
    %c3072 = arith.constant 3072 : index
    %177 = vector.load %arg18[%c0_210, %c3072] : memref<1x3136xf32, #tpu.memory_space<vmem>>, vector<1x64xf32>
    tpu.vector_store %arg18[%c0_210, %c3072], %176 {strides = array<i32>} : memref<1x3136xf32, #tpu.memory_space<vmem>>, vector<1x64xf32>,
    %c0_211 = arith.constant 0 : index
    %c0_212 = arith.constant 0 : index
    %178 = vector.load %arg18[%c0_211, %c0_212] : memref<1x3136xf32, #tpu.memory_space<vmem>>, vector<1x3136xf32>
    %179 = arith.truncf %178 : vector<1x3136xf32> to vector<1x3136xbf16>
    %c0_213 = arith.constant 0 : index
    %c0_214 = arith.constant 0 : index
    %180 = vector.load %arg8[%c0_213, %c0_214] : memref<3136x128xbf16, #tpu.memory_space<vmem>>, vector<3136x128xbf16>
    %cst_215 = arith.constant dense<0.000000e+00> : vector<1x128xf32>
    %181 = tpu.matmul %179, %180, %cst_215 {dimension_numbers = #tpu.dot_dimension_numbers<[1], [0], [0], [1], [0, 0, 1, 1], [], []>} : vector<1x3136xbf16>, vector<3136x128xbf16>, vector<1x128xf32> -> vector<1x128xf32>
    %c0_216 = arith.constant 0 : index
    %c0_217 = arith.constant 0 : index
    %182 = vector.load %arg9[%c0_216, %c0_217] : memref<1x128xf32, #tpu.memory_space<vmem>>, vector<1x128xf32>
    %183 = arith.addf %181, %182 : vector<1x128xf32>
    %cst_218 = arith.constant 0.000000e+00 : f32
    %184 = vector.broadcast %cst_218 : f32 to vector<1x128xf32>
    %185 = arith.maximumf %183, %184 : vector<1x128xf32>
    %186 = arith.truncf %185 : vector<1x128xf32> to vector<1x128xbf16>
    %c0_219 = arith.constant 0 : index
    %c0_220 = arith.constant 0 : index
    %187 = vector.load %arg10[%c0_219, %c0_220] : memref<128x6xbf16, #tpu.memory_space<vmem>>, vector<128x6xbf16>
    %cst_221 = arith.constant dense<0.000000e+00> : vector<1x6xf32>
    %188 = tpu.matmul %186, %187, %cst_221 {dimension_numbers = #tpu.dot_dimension_numbers<[1], [0], [0], [1], [0, 0, 1, 1], [], []>} : vector<1x128xbf16>, vector<128x6xbf16>, vector<1x6xf32> -> vector<1x6xf32>
    %c0_222 = arith.constant 0 : index
    %c0_223 = arith.constant 0 : index
    %189 = vector.load %arg11[%c0_222, %c0_223] : memref<1x6xf32, #tpu.memory_space<vmem>>, vector<1x6xf32>
    %190 = arith.addf %188, %189 : vector<1x6xf32>
    %cst_224 = arith.constant dense<0xFF800000> : vector<1xf32>
    %191 = vector.multi_reduction <maximumf>, %190, %cst_224 [1] : vector<1x6xf32> to vector<1xf32>
    %192 = vector.shape_cast %191 : vector<1xf32> to vector<1x1xf32>
    %193 = vector.broadcast %192 : vector<1x1xf32> to vector<1x6xf32>
    %194 = arith.subf %190, %193 : vector<1x6xf32>
    %195 = math.exp %194 : vector<1x6xf32>
    %cst_225 = arith.constant dense<0.000000e+00> : vector<1xf32>
    %196 = vector.multi_reduction <add>, %195, %cst_225 [1] : vector<1x6xf32> to vector<1xf32>
    %197 = vector.shape_cast %196 : vector<1xf32> to vector<1x1xf32>
    %198 = vector.broadcast %197 : vector<1x1xf32> to vector<1x6xf32>
    %199 = arith.divf %195, %198 : vector<1x6xf32>
    %c0_226 = arith.constant 0 : index
    %c0_227 = arith.constant 0 : index
    %c0_228 = arith.constant 0 : index
    %200 = vector.load %arg12[%c0_226, %c0_227, %c0_228] : memref<1x1x6xf32, #tpu.memory_space<vmem>>, vector<1x1x6xf32>
    %201 = vector.shape_cast %200 : vector<1x1x6xf32> to vector<1x6xf32>
    %202 = vector.shape_cast %199 : vector<1x6xf32> to vector<1x1x6xf32>
    tpu.vector_store %arg12[%c0_226, %c0_227, %c0_228], %202 {strides = array<i32>} : memref<1x1x6xf32, #tpu.memory_space<vmem>>, vector<1x1x6xf32>,
    return
  }
  func.func @transform_0(%arg0: i32) -> (i32, i32, i32) {
    %c0_i32 = arith.constant 0 : i32
    %c0_i32_0 = arith.constant 0 : i32
    %c0_i32_1 = arith.constant 0 : i32
    return %arg0, %c0_i32, %c0_i32_0 : i32, i32, i32
  }
  func.func @transform_1(%arg0: i32) -> (i32, i32) {
    %c0_i32 = arith.constant 0 : i32
    %c0_i32_0 = arith.constant 0 : i32
    %c0_i32_1 = arith.constant 0 : i32
    return %c0_i32, %c0_i32_0 : i32, i32
  }
  func.func @transform_2(%arg0: i32) -> (i32, i32) {
    %c0_i32 = arith.constant 0 : i32
    %c0_i32_0 = arith.constant 0 : i32
    %c0_i32_1 = arith.constant 0 : i32
    return %c0_i32, %c0_i32_0 : i32, i32
  }
  func.func @transform_3(%arg0: i32) -> (i32, i32) {
    %c0_i32 = arith.constant 0 : i32
    %c0_i32_0 = arith.constant 0 : i32
    %c0_i32_1 = arith.constant 0 : i32
    return %c0_i32, %c0_i32_0 : i32, i32
  }
  func.func @transform_4(%arg0: i32) -> (i32, i32) {
    %c0_i32 = arith.constant 0 : i32
    %c0_i32_0 = arith.constant 0 : i32
    %c0_i32_1 = arith.constant 0 : i32
    return %c0_i32, %c0_i32_0 : i32, i32
  }
  func.func @transform_5(%arg0: i32) -> (i32, i32) {
    %c0_i32 = arith.constant 0 : i32
    %c0_i32_0 = arith.constant 0 : i32
    %c0_i32_1 = arith.constant 0 : i32
    return %c0_i32, %c0_i32_0 : i32, i32
  }
  func.func @transform_6(%arg0: i32) -> (i32, i32) {
    %c0_i32 = arith.constant 0 : i32
    %c0_i32_0 = arith.constant 0 : i32
    %c0_i32_1 = arith.constant 0 : i32
    return %c0_i32, %c0_i32_0 : i32, i32
  }
  func.func @transform_7(%arg0: i32) -> (i32, i32) {
    %c0_i32 = arith.constant 0 : i32
    %c0_i32_0 = arith.constant 0 : i32
    %c0_i32_1 = arith.constant 0 : i32
    return %c0_i32, %c0_i32_0 : i32, i32
  }
  func.func @transform_8(%arg0: i32) -> (i32, i32) {
    %c0_i32 = arith.constant 0 : i32
    %c0_i32_0 = arith.constant 0 : i32
    %c0_i32_1 = arith.constant 0 : i32
    return %c0_i32, %c0_i32_0 : i32, i32
  }
  func.func @transform_9(%arg0: i32) -> (i32, i32) {
    %c0_i32 = arith.constant 0 : i32
    %c0_i32_0 = arith.constant 0 : i32
    %c0_i32_1 = arith.constant 0 : i32
    return %c0_i32, %c0_i32_0 : i32, i32
  }
  func.func @transform_10(%arg0: i32) -> (i32, i32) {
    %c0_i32 = arith.constant 0 : i32
    %c0_i32_0 = arith.constant 0 : i32
    %c0_i32_1 = arith.constant 0 : i32
    return %c0_i32, %c0_i32_0 : i32, i32
  }
  func.func @transform_11(%arg0: i32) -> (i32, i32, i32) {
    %c0_i32 = arith.constant 0 : i32
    %c0_i32_0 = arith.constant 0 : i32
    %c0_i32_1 = arith.constant 0 : i32
    return %arg0, %c0_i32, %c0_i32_0 : i32, i32, i32
  }
}

</mosaic_0001>

<llo_original>
// kernel: policy_network_cnn_forward.1
$region0: #{policy_network_cnn_forward.1}
  #allocation0 [shape = 'u32[]', space=smem, size = 0x4, offset = 0x4, fixed_abs, tag = 'smem constant byte address 0x4 - core index']
  #allocation1 [shape = 'u32[144,128]{1,0:T(1,128)}', space=vmem, size = 0x12000, scoped, tag = 'internal scratch']
  #allocation2 [shape = 'f32[400,32]{1,0:T(8,128)}', space=vmem, size = 0x32000, scoped, tag = 'scratch operand']
  #allocation3 [shape = 'f32[89,512]{1,0:T(8,128)}', space=vmem, size = 0x30000, scoped, tag = 'scratch operand']
  #allocation4 [shape = 'f32[89,64]{1,0:T(8,128)}', space=vmem, size = 0xc000, scoped, tag = 'scratch operand']
  #allocation5 [shape = 'f32[67,576]{1,0:T(8,128)}', space=vmem, size = 0x2d000, scoped, tag = 'scratch operand']
  #allocation6 [shape = 'f32[67,64]{1,0:T(8,128)}', space=vmem, size = 0x9000, scoped, tag = 'scratch operand']
  #allocation7 [shape = 'f32[1,3136]{1,0:T(1,128)}', space=vmem, size = 0x3200, scoped, tag = 'scratch operand']
  %s0 = inlined_call_operand.vmem [shape: bf16[2,400,256], index: 0, kind: input, shape index: {}]
  %s1 = inlined_call_operand.vmem [shape: bf16[256,32], index: 1, kind: input, shape index: {}]
  %s2 = inlined_call_operand.vmem [shape: f32[1,32], index: 2, kind: input, shape index: {}]
  %s3 = inlined_call_operand.vmem [shape: bf16[512,64], index: 3, kind: input, shape index: {}]
  %s4 = inlined_call_operand.vmem [shape: f32[1,64], index: 4, kind: input, shape index: {}]
  %s5 = inlined_call_operand.vmem [shape: bf16[576,64], index: 5, kind: input, shape index: {}]
  %s6 = inlined_call_operand.vmem [shape: f32[1,64], index: 6, kind: input, shape index: {}]
  %s7 = inlined_call_operand.vmem [shape: bf16[3136,128], index: 7, kind: input, shape index: {}]
  %s8 = inlined_call_operand.vmem [shape: f32[1,128], index: 8, kind: input, shape index: {}]
  %s9 = inlined_call_operand.vmem [shape: bf16[128,6], index: 9, kind: input, shape index: {}]
  %s10 = inlined_call_operand.vmem [shape: f32[1,6], index: 10, kind: input, shape index: {}]
  %s11 = inlined_call_operand.hbm [shape: f32[2,1,6], index: 11, kind: output, shape index: {}]
  %s12 = sld [smem:[#allocation0]]
  $region77: #{policy_network_cnn_forward.1} parent=0
    _
  %s14 = ssub.s32 1, %s12
  %s15 = scalar_select 0, %s14, %s12
  $region1: #{policy_network_cnn_forward.1} parent=0
    #allocation8 [shape = 'u8[1024]{0}', space=vmem, size = 0x400, scoped, tag = 'output window, operand 0']
    #allocation9 [shape = 's32[2]{0}', space=sflag, size = 0x8, scoped, tag = 'scoped memory for policy_network_cnn_forward.1']
    %16 = vsyncpa [#allocation9], 0
    %s17 = scalar_lea.sflag [#allocation9], 1
    %18 = vsyncpa %s17, 0
    loop: start=0, step=1, limit=4
    $region2: #{policy_network_cnn_forward.1} parent=1 // loop_pre_header
      _
    $region3: #{policy_network_cnn_forward.1} parent=1 // loop_header
      %s20 = sphi 0, %s24
      %p21 = scmp.ge.s32.totalorder %s20, 4
      %s30 = sphi 0, %s32
      %s33 = sphi 0, %s30
      %s34 = sphi 0, %s33
      %s50 = sphi 0, %s34
      %s54 = sphi 0, %s54
      %s56 = sphi 0, %s54
      %s57 = sphi 0, %s56
      %s71 = sphi 0, %s57
      %s75 = sphi 0, %s75
      %s77 = sphi 0, %s75
      %s78 = sphi 0, %s77
      %s92 = sphi 0, %s78
      %s96 = sphi 0, %s96
      %s98 = sphi 0, %s96
      %s99 = sphi 0, %s98
      %s113 = sphi 0, %s99
      %s117 = sphi 0, %s117
      %s119 = sphi 0, %s117
      %s120 = sphi 0, %s119
      %s134 = sphi 0, %s120
      %s138 = sphi 0, %s138
      %s140 = sphi 0, %s138
      %s141 = sphi 0, %s140
      %s155 = sphi 0, %s141
      %s159 = sphi 0, %s159
      %s161 = sphi 0, %s159
      %s162 = sphi 0, %s161
      %s176 = sphi 0, %s162
      %s180 = sphi 0, %s180
      %s182 = sphi 0, %s180
      %s183 = sphi 0, %s182
      %s197 = sphi 0, %s183
      %s201 = sphi 0, %s201
      %s203 = sphi 0, %s201
      %s204 = sphi 0, %s203
      %s218 = sphi 0, %s204
      %s222 = sphi 0, %s222
      %s224 = sphi 0, %s222
      %s225 = sphi 0, %s224
      %s239 = sphi 0, %s225
      %s243 = sphi 0, %s243
      %s245 = sphi 0, %s243
      %s246 = sphi 0, %s245
      %s260 = sphi 0, %s246
      %s266 = sphi 0, %s268
      %s269 = sphi 0, %s266
      %s270 = sphi 0, %s269
      %s286 = sphi 0, %s270
    $region4: #{policy_network_cnn_forward.1} parent=1 // loop_header_branch
      %23 = sbr.rel (%p21) target = $region8
    $region5: #{policy_network_cnn_forward.1} parent=1 // loop_body
      %s25 = ssub.s32 %s20, 1
      %s26 = ssub.s32 %s20, 2
      %s27 = sadd.s32 %s20, 1
      %s28 = ssub.s32 %s20, %s27
      %p29 = scmp.eq.s32.totalorder %s28, 0
      %s31 = sadd.s32 %s30, 1
      %s32 = scalar_select %p29, %s30, %s31
      %p35 = pneg %p29
      %p36 = scmp.eq.s32.totalorder %s20, 1
      %p37 = por %p35, %p36
      %p38 = scmp.ne.s32.totalorder %s30, %s33
      %p39 = scmp.eq.s32.totalorder %s20, 0
      %p40 = por %p38, %p39
      %p41 = scmp.ne.s32.totalorder %s30, %s33
      %p42 = scmp.eq.s32.totalorder %s25, 1
      %p43 = por %p41, %p42
      %p44 = scmp.ne.s32.totalorder %s33, %s34
      %p45 = scmp.eq.s32.totalorder %s25, 0
      %p46 = por %p44, %p45
      %p47 = scmp.ne.s32.totalorder %s33, %s34
      %p48 = scmp.eq.s32.totalorder %s26, 1
      %p49 = por %p47, %p48
      %p51 = scmp.ne.s32.totalorder %s34, %s50
      %p52 = scmp.eq.s32.totalorder %s26, 0
      %p53 = por %p51, %p52
      %s55 = sadd.s32 %s54, 1
      %p58 = scmp.eq.s32.totalorder %s20, 1
      %p59 = scmp.ne.s32.totalorder %s54, %s56
      %p60 = scmp.eq.s32.totalorder %s20, 0
      %p61 = por %p59, %p60
      %p62 = scmp.ne.s32.totalorder %s54, %s56
      %p63 = scmp.eq.s32.totalorder %s25, 1
      %p64 = por %p62, %p63
      %p65 = scmp.ne.s32.totalorder %s56, %s57
      %p66 = scmp.eq.s32.totalorder %s25, 0
      %p67 = por %p65, %p66
      %p68 = scmp.ne.s32.totalorder %s56, %s57
      %p69 = scmp.eq.s32.totalorder %s26, 1
      %p70 = por %p68, %p69
      %p72 = scmp.ne.s32.totalorder %s57, %s71
      %p73 = scmp.eq.s32.totalorder %s26, 0
      %p74 = por %p72, %p73
      %s76 = sadd.s32 %s75, 1
      %p79 = scmp.eq.s32.totalorder %s20, 1
      %p80 = scmp.ne.s32.totalorder %s75, %s77
      %p81 = scmp.eq.s32.totalorder %s20, 0
      %p82 = por %p80, %p81
      %p83 = scmp.ne.s32.totalorder %s75, %s77
      %p84 = scmp.eq.s32.totalorder %s25, 1
      %p85 = por %p83, %p84
      %p86 = scmp.ne.s32.totalorder %s77, %s78
      %p87 = scmp.eq.s32.totalorder %s25, 0
      %p88 = por %p86, %p87
      %p89 = scmp.ne.s32.totalorder %s77, %s78
      %p90 = scmp.eq.s32.totalorder %s26, 1
      %p91 = por %p89, %p90
      %p93 = scmp.ne.s32.totalorder %s78, %s92
      %p94 = scmp.eq.s32.totalorder %s26, 0
      %p95 = por %p93, %p94
      %s97 = sadd.s32 %s96, 1
      %p100 = scmp.eq.s32.totalorder %s20, 1
      %p101 = scmp.ne.s32.totalorder %s96, %s98
      %p102 = scmp.eq.s32.totalorder %s20, 0
      %p103 = por %p101, %p102
      %p104 = scmp.ne.s32.totalorder %s96, %s98
      %p105 = scmp.eq.s32.totalorder %s25, 1
      %p106 = por %p104, %p105
      %p107 = scmp.ne.s32.totalorder %s98, %s99
      %p108 = scmp.eq.s32.totalorder %s25, 0
      %p109 = por %p107, %p108
      %p110 = scmp.ne.s32.totalorder %s98, %s99
      %p111 = scmp.eq.s32.totalorder %s26, 1
      %p112 = por %p110, %p111
      %p114 = scmp.ne.s32.totalorder %s99, %s113
      %p115 = scmp.eq.s32.totalorder %s26, 0
      %p116 = por %p114, %p115
      %s118 = sadd.s32 %s117, 1
      %p121 = scmp.eq.s32.totalorder %s20, 1
      %p122 = scmp.ne.s32.totalorder %s117, %s119
      %p123 = scmp.eq.s32.totalorder %s20, 0
      %p124 = por %p122, %p123
      %p125 = scmp.ne.s32.totalorder %s117, %s119
      %p126 = scmp.eq.s32.totalorder %s25, 1
      %p127 = por %p125, %p126
      %p128 = scmp.ne.s32.totalorder %s119, %s120
      %p129 = scmp.eq.s32.totalorder %s25, 0
      %p130 = por %p128, %p129
      %p131 = scmp.ne.s32.totalorder %s119, %s120
      %p132 = scmp.eq.s32.totalorder %s26, 1
      %p133 = por %p131, %p132
      %p135 = scmp.ne.s32.totalorder %s120, %s134
      %p136 = scmp.eq.s32.totalorder %s26, 0
      %p137 = por %p135, %p136
      %s139 = sadd.s32 %s138, 1
      %p142 = scmp.eq.s32.totalorder %s20, 1
      %p143 = scmp.ne.s32.totalorder %s138, %s140
      %p144 = scmp.eq.s32.totalorder %s20, 0
      %p145 = por %p143, %p144
      %p146 = scmp.ne.s32.totalorder %s138, %s140
      %p147 = scmp.eq.s32.totalorder %s25, 1
      %p148 = por %p146, %p147
      %p149 = scmp.ne.s32.totalorder %s140, %s141
      %p150 = scmp.eq.s32.totalorder %s25, 0
      %p151 = por %p149, %p150
      %p152 = scmp.ne.s32.totalorder %s140, %s141
      %p153 = scmp.eq.s32.totalorder %s26, 1
      %p154 = por %p152, %p153
      %p156 = scmp.ne.s32.totalorder %s141, %s155
      %p157 = scmp.eq.s32.totalorder %s26, 0
      %p158 = por %p156, %p157
      %s160 = sadd.s32 %s159, 1
      %p163 = scmp.eq.s32.totalorder %s20, 1
      %p164 = scmp.ne.s32.totalorder %s159, %s161
      %p165 = scmp.eq.s32.totalorder %s20, 0
      %p166 = por %p164, %p165
      %p167 = scmp.ne.s32.totalorder %s159, %s161
      %p168 = scmp.eq.s32.totalorder %s25, 1
      %p169 = por %p167, %p168
      %p170 = scmp.ne.s32.totalorder %s161, %s162
      %p171 = scmp.eq.s32.totalorder %s25, 0
      %p172 = por %p170, %p171
      %p173 = scmp.ne.s32.totalorder %s161, %s162
      %p174 = scmp.eq.s32.totalorder %s26, 1
      %p175 = por %p173, %p174
      %p177 = scmp.ne.s32.totalorder %s162, %s176
      %p178 = scmp.eq.s32.totalorder %s26, 0
      %p179 = por %p177, %p178
      %s181 = sadd.s32 %s180, 1
      %p184 = scmp.eq.s32.totalorder %s20, 1
      %p185 = scmp.ne.s32.totalorder %s180, %s182
      %p186 = scmp.eq.s32.totalorder %s20, 0
      %p187 = por %p185, %p186
      %p188 = scmp.ne.s32.totalorder %s180, %s182
      %p189 = scmp.eq.s32.totalorder %s25, 1
      %p190 = por %p188, %p189
      %p191 = scmp.ne.s32.totalorder %s182, %s183
      %p192 = scmp.eq.s32.totalorder %s25, 0
      %p193 = por %p191, %p192
      %p194 = scmp.ne.s32.totalorder %s182, %s183
      %p195 = scmp.eq.s32.totalorder %s26, 1
      %p196 = por %p194, %p195
      %p198 = scmp.ne.s32.totalorder %s183, %s197
      %p199 = scmp.eq.s32.totalorder %s26, 0
      %p200 = por %p198, %p199
      %s202 = sadd.s32 %s201, 1
      %p205 = scmp.eq.s32.totalorder %s20, 1
      %p206 = scmp.ne.s32.totalorder %s201, %s203
      %p207 = scmp.eq.s32.totalorder %s20, 0
      %p208 = por %p206, %p207
      %p209 = scmp.ne.s32.totalorder %s201, %s203
      %p210 = scmp.eq.s32.totalorder %s25, 1
      %p211 = por %p209, %p210
      %p212 = scmp.ne.s32.totalorder %s203, %s204
      %p213 = scmp.eq.s32.totalorder %s25, 0
      %p214 = por %p212, %p213
      %p215 = scmp.ne.s32.totalorder %s203, %s204
      %p216 = scmp.eq.s32.totalorder %s26, 1
      %p217 = por %p215, %p216
      %p219 = scmp.ne.s32.totalorder %s204, %s218
      %p220 = scmp.eq.s32.totalorder %s26, 0
      %p221 = por %p219, %p220
      %s223 = sadd.s32 %s222, 1
      %p226 = scmp.eq.s32.totalorder %s20, 1
      %p227 = scmp.ne.s32.totalorder %s222, %s224
      %p228 = scmp.eq.s32.totalorder %s20, 0
      %p229 = por %p227, %p228
      %p230 = scmp.ne.s32.totalorder %s222, %s224
      %p231 = scmp.eq.s32.totalorder %s25, 1
      %p232 = por %p230, %p231
      %p233 = scmp.ne.s32.totalorder %s224, %s225
      %p234 = scmp.eq.s32.totalorder %s25, 0
      %p235 = por %p233, %p234
      %p236 = scmp.ne.s32.totalorder %s224, %s225
      %p237 = scmp.eq.s32.totalorder %s26, 1
      %p238 = por %p236, %p237
      %p240 = scmp.ne.s32.totalorder %s225, %s239
      %p241 = scmp.eq.s32.totalorder %s26, 0
      %p242 = por %p240, %p241
      %s244 = sadd.s32 %s243, 1
      %p247 = scmp.eq.s32.totalorder %s20, 1
      %p248 = scmp.ne.s32.totalorder %s243, %s245
      %p249 = scmp.eq.s32.totalorder %s20, 0
      %p250 = por %p248, %p249
      %p251 = scmp.ne.s32.totalorder %s243, %s245
      %p252 = scmp.eq.s32.totalorder %s25, 1
      %p253 = por %p251, %p252
      %p254 = scmp.ne.s32.totalorder %s245, %s246
      %p255 = scmp.eq.s32.totalorder %s25, 0
      %p256 = por %p254, %p255
      %p257 = scmp.ne.s32.totalorder %s245, %s246
      %p258 = scmp.eq.s32.totalorder %s26, 1
      %p259 = por %p257, %p258
      %p261 = scmp.ne.s32.totalorder %s246, %s260
      %p262 = scmp.eq.s32.totalorder %s26, 0
      %p263 = por %p261, %p262
      %s264 = ssub.s32 %s20, %s27
      %p265 = scmp.eq.s32.totalorder %s264, 0
      %s267 = sadd.s32 %s266, 1
      %s268 = scalar_select %p265, %s266, %s267
      %p271 = pneg %p265
      %p272 = scmp.eq.s32.totalorder %s20, 1
      %p273 = por %p271, %p272
      %p274 = scmp.ne.s32.totalorder %s266, %s269
      %p275 = scmp.eq.s32.totalorder %s20, 0
      %p276 = por %p274, %p275
      %p277 = scmp.ne.s32.totalorder %s266, %s269
      %p278 = scmp.eq.s32.totalorder %s25, 1
      %p279 = por %p277, %p278
      %p280 = scmp.ne.s32.totalorder %s269, %s270
      %p281 = scmp.eq.s32.totalorder %s25, 0
      %p282 = por %p280, %p281
      %p283 = scmp.ne.s32.totalorder %s269, %s270
      %p284 = scmp.eq.s32.totalorder %s26, 1
      %p285 = por %p283, %p284
      %p287 = scmp.ne.s32.totalorder %s270, %s286
      %p288 = scmp.eq.s32.totalorder %s26, 0
      %p289 = por %p287, %p288
      %p290 = scmp.le.s32.totalorder 1, %s20
      %p291 = scmp.lt.s32.totalorder %s20, 3
      %p292 = pnand %p290, %p291
      %p293 = pneg %p292
      // Predicated region
      $region9: #{policy_network_cnn_forward.1} parent=5 // pred_check
        _
      $region10: #{policy_network_cnn_forward.1} parent=5 // pred_check_branch
        %295 = sbr.rel (%p292) target = $region12
      $region11: #{policy_network_cnn_forward.1} parent=5 // pred_region
        %s296 = ssub.s32 %s20, 1
        // Predicated region
        $region13: #{policy_network_cnn_forward.1} parent=11 // pred_check
          %p297 = pneg %p67
        $region14: #{policy_network_cnn_forward.1} parent=11 // pred_check_branch
          %299 = sbr.rel (%p297) target = $region16
        $region15: #{policy_network_cnn_forward.1} parent=11 // pred_region
          _
        $region16: #{policy_network_cnn_forward.1} parent=11 // pred_fallthru
          _
        // Predicated region
        $region17: #{policy_network_cnn_forward.1} parent=11 // pred_check
          %p300 = pneg %p88
        $region18: #{policy_network_cnn_forward.1} parent=11 // pred_check_branch
          %302 = sbr.rel (%p300) target = $region20
        $region19: #{policy_network_cnn_forward.1} parent=11 // pred_region
          _
        $region20: #{policy_network_cnn_forward.1} parent=11 // pred_fallthru
          _
        // Predicated region
        $region21: #{policy_network_cnn_forward.1} parent=11 // pred_check
          %p303 = pneg %p109
        $region22: #{policy_network_cnn_forward.1} parent=11 // pred_check_branch
          %305 = sbr.rel (%p303) target = $region24
        $region23: #{policy_network_cnn_forward.1} parent=11 // pred_region
          _
        $region24: #{policy_network_cnn_forward.1} parent=11 // pred_fallthru
          _
        // Predicated region
        $region25: #{policy_network_cnn_forward.1} parent=11 // pred_check
          %p306 = pneg %p130
        $region26: #{policy_network_cnn_forward.1} parent=11 // pred_check_branch
          %308 = sbr.rel (%p306) target = $region28
        $region27: #{policy_network_cnn_forward.1} parent=11 // pred_region
          _
        $region28: #{policy_network_cnn_forward.1} parent=11 // pred_fallthru
          _
        // Predicated region
        $region29: #{policy_network_cnn_forward.1} parent=11 // pred_check
          %p309 = pneg %p151
        $region30: #{policy_network_cnn_forward.1} parent=11 // pred_check_branch
          %311 = sbr.rel (%p309) target = $region32
        $region31: #{policy_network_cnn_forward.1} parent=11 // pred_region
          _
        $region32: #{policy_network_cnn_forward.1} parent=11 // pred_fallthru
          _
        // Predicated region
        $region33: #{policy_network_cnn_forward.1} parent=11 // pred_check
          %p312 = pneg %p172
        $region34: #{policy_network_cnn_forward.1} parent=11 // pred_check_branch
          %314 = sbr.rel (%p312) target = $region36
        $region35: #{policy_network_cnn_forward.1} parent=11 // pred_region
          _
        $region36: #{policy_network_cnn_forward.1} parent=11 // pred_fallthru
          _
        // Predicated region
        $region37: #{policy_network_cnn_forward.1} parent=11 // pred_check
          %p315 = pneg %p193
        $region38: #{policy_network_cnn_forward.1} parent=11 // pred_check_branch
          %317 = sbr.rel (%p315) target = $region40
        $region39: #{policy_network_cnn_forward.1} parent=11 // pred_region
          _
        $region40: #{policy_network_cnn_forward.1} parent=11 // pred_fallthru
          _
        // Predicated region
        $region41: #{policy_network_cnn_forward.1} parent=11 // pred_check
          %p318 = pneg %p214
        $region42: #{policy_network_cnn_forward.1} parent=11 // pred_check_branch
          %320 = sbr.rel (%p318) target = $region44
        $region43: #{policy_network_cnn_forward.1} parent=11 // pred_region
          _
        $region44: #{policy_network_cnn_forward.1} parent=11 // pred_fallthru
          _
        // Predicated region
        $region45: #{policy_network_cnn_forward.1} parent=11 // pred_check
          %p321 = pneg %p235
        $region46: #{policy_network_cnn_forward.1} parent=11 // pred_check_branch
          %323 = sbr.rel (%p321) target = $region48
        $region47: #{policy_network_cnn_forward.1} parent=11 // pred_region
          _
        $region48: #{policy_network_cnn_forward.1} parent=11 // pred_fallthru
          _
        // Predicated region
        $region49: #{policy_network_cnn_forward.1} parent=11 // pred_check
          %p324 = pneg %p256
        $region50: #{policy_network_cnn_forward.1} parent=11 // pred_check_branch
          %326 = sbr.rel (%p324) target = $region52
        $region51: #{policy_network_cnn_forward.1} parent=11 // pred_region
          _
        $region52: #{policy_network_cnn_forward.1} parent=11 // pred_fallthru
          _
      $region12: #{policy_network_cnn_forward.1} parent=5 // pred_fallthru
        _
      %p327 = scmp.lt.s32.totalorder %s20, 2
      // Predicated region
      $region53: #{policy_network_cnn_forward.1} parent=5 // pred_check
        %p328 = pneg %p327
      $region54: #{policy_network_cnn_forward.1} parent=5 // pred_check_branch
        %330 = sbr.rel (%p328) target = $region56
      $region55: #{policy_network_cnn_forward.1} parent=5 // pred_region
        // Predicated region
        $region57: #{policy_network_cnn_forward.1} parent=55 // pred_check
          %p331 = pneg %p40
        $region58: #{policy_network_cnn_forward.1} parent=55 // pred_check_branch
          %333 = sbr.rel (%p331) target = $region60
        $region59: #{policy_network_cnn_forward.1} parent=55 // pred_region
          %p334 = scmp.lt.s32.totalorder %s20, 1
          %s335 = scalar_select %p334, %s20, 1
          %s336 = smul.addr %s335, 100
          %s337 = smul.addr %s336, 4
          %s338 = scalar_lea.vmem %s0, %s337
        $region60: #{policy_network_cnn_forward.1} parent=55 // pred_fallthru
          _
      $region56: #{policy_network_cnn_forward.1} parent=5 // pred_fallthru
        _
      %p339 = scmp.le.s32.totalorder 1, %s20
      %p340 = scmp.lt.s32.totalorder %s20, 3
      %p341 = pnand %p339, %p340
      %p342 = pneg %p341
      // Predicated region
      $region61: #{policy_network_cnn_forward.1} parent=5 // pred_check
        _
      $region62: #{policy_network_cnn_forward.1} parent=5 // pred_check_branch
        %344 = sbr.rel (%p341) target = $region64
      $region63: #{policy_network_cnn_forward.1} parent=5 // pred_region
        %s345 = ssub.s32 %s20, 1
        %p346 = scmp.lt.s32.totalorder %s25, 1
        %s347 = scalar_select %p346, %s25, 1
        %s348 = smul.addr %s347, 100
        %s349 = smul.addr %s348, 4
        %s350 = scalar_lea.vmem %s0, %s349
        %p351 = pneg %p46
        %p352 = pneg %p43
        %p353 = pneg %p67
        %p354 = pneg %p64
        %p355 = pneg %p88
        %p356 = pneg %p85
        %p357 = pneg %p109
        %p358 = pneg %p106
        %p359 = pneg %p130
        %p360 = pneg %p127
        %p361 = pneg %p151
        %p362 = pneg %p148
        %p363 = pneg %p172
        %p364 = pneg %p169
        %p365 = pneg %p193
        %p366 = pneg %p190
        %p367 = pneg %p214
        %p368 = pneg %p211
        %p369 = pneg %p235
        %p370 = pneg %p232
        %p371 = pneg %p256
        %p372 = pneg %p253
        %p373 = pneg %p282
        %p374 = pneg %p279
        %s375 = sand.u32 %s269, 1
        %s376 = scalar_lea.sflag [#allocation9], %s375
        %s377 = sand.u32 %s269, 1
        %s378 = scalar_lea.vmem [#allocation8], %s377
        %p379 = scmp.lt.s32.totalorder %s25, 1
        %s380 = scalar_select %p379, %s25, 1
        %s381 = smul.addr %s380, 100
        %s382 = smul.addr %s381, 4
        %s383 = scalar_lea.vmem %s0, %s382
        %v385 = vld [vmem:[%s383] sm:$0xff]
        %v386 = vld [vmem:[%s383 + $0x8] sm:$0xff]
        %v387 = vld [vmem:[%s383 + $0x10] sm:$0xff]
        %v388 = vld [vmem:[%s383 + $0x18] sm:$0xff]
        %v389 = vld [vmem:[%s383 + $0x20] sm:$0xff]
        %v390 = vld [vmem:[%s383 + $0x28] sm:$0xff]
        %v391 = vld [vmem:[%s383 + $0x30] sm:$0xff]
        %v392 = vld [vmem:[%s383 + $0x38] sm:$0xff]
        %v393 = vld [vmem:[%s383 + $0x40] sm:$0xff]
        %v394 = vld [vmem:[%s383 + $0x48] sm:$0xff]
        %v395 = vld [vmem:[%s383 + $0x50] sm:$0xff]
        %v396 = vld [vmem:[%s383 + $0x58] sm:$0xff]
        %v397 = vld [vmem:[%s383 + $0x60] sm:$0xff]
        %v398 = vld [vmem:[%s383 + $0x68] sm:$0xff]
        %v399 = vld [vmem:[%s383 + $0x70] sm:$0xff]
        %v400 = vld [vmem:[%s383 + $0x78] sm:$0xff]
        %v401 = vld [vmem:[%s383 + $0x80] sm:$0xff]
        %v402 = vld [vmem:[%s383 + $0x88] sm:$0xff]
        %v403 = vld [vmem:[%s383 + $0x90] sm:$0xff]
        %v404 = vld [vmem:[%s383 + $0x98] sm:$0xff]
        %v405 = vld [vmem:[%s383 + $0xa0] sm:$0xff]
        %v406 = vld [vmem:[%s383 + $0xa8] sm:$0xff]
        %v407 = vld [vmem:[%s383 + $0xb0] sm:$0xff]
        %v408 = vld [vmem:[%s383 + $0xb8] sm:$0xff]
        %v409 = vld [vmem:[%s383 + $0xc0] sm:$0xff]
        %v410 = vld [vmem:[%s383 + $0xc8] sm:$0xff]
        %v411 = vld [vmem:[%s383 + $0xd0] sm:$0xff]
        %v412 = vld [vmem:[%s383 + $0xd8] sm:$0xff]
        %v413 = vld [vmem:[%s383 + $0xe0] sm:$0xff]
        %v414 = vld [vmem:[%s383 + $0xe8] sm:$0xff]
        %v415 = vld [vmem:[%s383 + $0xf0] sm:$0xff]
        %v416 = vld [vmem:[%s383 + $0xf8] sm:$0xff]
        %v417 = vld [vmem:[%s383 + $0x100] sm:$0xff]
        %v418 = vld [vmem:[%s383 + $0x108] sm:$0xff]
        %v419 = vld [vmem:[%s383 + $0x110] sm:$0xff]
        %v420 = vld [vmem:[%s383 + $0x118] sm:$0xff]
        %v421 = vld [vmem:[%s383 + $0x120] sm:$0xff]
        %v422 = vld [vmem:[%s383 + $0x128] sm:$0xff]
        %v423 = vld [vmem:[%s383 + $0x130] sm:$0xff]
        %v424 = vld [vmem:[%s383 + $0x138] sm:$0xff]
        %v425 = vld [vmem:[%s383 + $0x140] sm:$0xff]
        %v426 = vld [vmem:[%s383 + $0x148] sm:$0xff]
        %v427 = vld [vmem:[%s383 + $0x150] sm:$0xff]
        %v428 = vld [vmem:[%s383 + $0x158] sm:$0xff]
        %v429 = vld [vmem:[%s383 + $0x160] sm:$0xff]
        %v430 = vld [vmem:[%s383 + $0x168] sm:$0xff]
        %v431 = vld [vmem:[%s383 + $0x170] sm:$0xff]
        %v432 = vld [vmem:[%s383 + $0x178] sm:$0xff]
        %v433 = vld [vmem:[%s383 + $0x180] sm:$0xff]
        %v434 = vld [vmem:[%s383 + $0x188] sm:$0xff]
        %v435 = vld [vmem:[%s1] sm:$0xf]
        %v436 = vld [vmem:[%s1 + $0x4] sm:$0xf]
        %v437 = vld [vmem:[%s1 + $0x8] sm:$0xf]
        %v438 = vld [vmem:[%s1 + $0xc] sm:$0xf]
        %v439 = vld [vmem:[%s1 + $0x10] sm:$0xf]
        %v440 = vld [vmem:[%s1 + $0x14] sm:$0xf]
        %v441 = vld [vmem:[%s1 + $0x18] sm:$0xf]
        %v442 = vld [vmem:[%s1 + $0x1c] sm:$0xf]
        %v443 = vld [vmem:[%s1 + $0x20] sm:$0xf]
        %v444 = vld [vmem:[%s1 + $0x24] sm:$0xf]
        %v445 = vld [vmem:[%s1 + $0x28] sm:$0xf]
        %v446 = vld [vmem:[%s1 + $0x2c] sm:$0xf]
        %v447 = vld [vmem:[%s1 + $0x30] sm:$0xf]
        %v448 = vld [vmem:[%s1 + $0x34] sm:$0xf]
        %v449 = vld [vmem:[%s1 + $0x38] sm:$0xf]
        %v450 = vld [vmem:[%s1 + $0x3c] sm:$0xf]
        %v451 = vld [vmem:[%s1 + $0x40] sm:$0xf]
        %v452 = vld [vmem:[%s1 + $0x44] sm:$0xf]
        %v453 = vld [vmem:[%s1 + $0x48] sm:$0xf]
        %v454 = vld [vmem:[%s1 + $0x4c] sm:$0xf]
        %v455 = vld [vmem:[%s1 + $0x50] sm:$0xf]
        %v456 = vld [vmem:[%s1 + $0x54] sm:$0xf]
        %v457 = vld [vmem:[%s1 + $0x58] sm:$0xf]
        %v458 = vld [vmem:[%s1 + $0x5c] sm:$0xf]
        %v459 = vld [vmem:[%s1 + $0x60] sm:$0xf]
        %v460 = vld [vmem:[%s1 + $0x64] sm:$0xf]
        %v461 = vld [vmem:[%s1 + $0x68] sm:$0xf]
        %v462 = vld [vmem:[%s1 + $0x6c] sm:$0xf]
        %v463 = vld [vmem:[%s1 + $0x70] sm:$0xf]
        %v464 = vld [vmem:[%s1 + $0x74] sm:$0xf]
        %v465 = vld [vmem:[%s1 + $0x78] sm:$0xf]
        %v466 = vld [vmem:[%s1 + $0x7c] sm:$0xf]
        %v467 = vld [vmem:[%s2] sm:$0x1]
        %v469 = vlaneseq
        %v470 = vshrl.u32 %v469, 7
        %v471 = vsub.s32 0, %v470
        %v472 = vrot.slane %v467, %v471
        %v524 = vunpack.c.l.b16 %v385
        %v525 = vunpack.c.h.b16 %v385
        %v526 = vunpack.c.l.b16 %v386
        %v527 = vunpack.c.h.b16 %v386
        %v528 = vunpack.c.l.b16 %v387
        %v529 = vunpack.c.h.b16 %v387
        %v530 = vunpack.c.l.b16 %v388
        %v531 = vunpack.c.h.b16 %v388
        %v532 = vunpack.c.l.b16 %v389
        %v533 = vunpack.c.h.b16 %v389
        %v534 = vunpack.c.l.b16 %v390
        %v535 = vunpack.c.h.b16 %v390
        %v536 = vunpack.c.l.b16 %v391
        %v537 = vunpack.c.h.b16 %v391
        %v538 = vunpack.c.l.b16 %v392
        %v539 = vunpack.c.h.b16 %v392
        %v540 = vunpack.c.l.b16 %v393
        %v541 = vunpack.c.h.b16 %v393
        %v542 = vunpack.c.l.b16 %v394
        %v543 = vunpack.c.h.b16 %v394
        %v544 = vunpack.c.l.b16 %v395
        %v545 = vunpack.c.h.b16 %v395
        %v546 = vunpack.c.l.b16 %v396
        %v547 = vunpack.c.h.b16 %v396
        %v548 = vunpack.c.l.b16 %v397
        %v549 = vunpack.c.h.b16 %v397
        %v550 = vunpack.c.l.b16 %v398
        %v551 = vunpack.c.h.b16 %v398
        %v552 = vunpack.c.l.b16 %v399
        %v553 = vunpack.c.h.b16 %v399
        %v554 = vunpack.c.l.b16 %v400
        %v555 = vunpack.c.h.b16 %v400
        %v556 = vunpack.c.l.b16 %v401
        %v557 = vunpack.c.h.b16 %v401
        %v558 = vunpack.c.l.b16 %v402
        %v559 = vunpack.c.h.b16 %v402
        %v560 = vunpack.c.l.b16 %v403
        %v561 = vunpack.c.h.b16 %v403
        %v562 = vunpack.c.l.b16 %v404
        %v563 = vunpack.c.h.b16 %v404
        %v564 = vunpack.c.l.b16 %v405
        %v565 = vunpack.c.h.b16 %v405
        %v566 = vunpack.c.l.b16 %v406
        %v567 = vunpack.c.h.b16 %v406
        %v568 = vunpack.c.l.b16 %v407
        %v569 = vunpack.c.h.b16 %v407
        %v570 = vunpack.c.l.b16 %v408
        %v571 = vunpack.c.h.b16 %v408
        %v572 = vunpack.c.l.b16 %v409
        %v573 = vunpack.c.h.b16 %v409
        %v574 = vunpack.c.l.b16 %v410
        %v575 = vunpack.c.h.b16 %v410
        %v576 = vunpack.c.l.b16 %v411
        %v577 = vunpack.c.h.b16 %v411
        %v578 = vunpack.c.l.b16 %v412
        %v579 = vunpack.c.h.b16 %v412
        %v580 = vunpack.c.l.b16 %v413
        %v581 = vunpack.c.h.b16 %v413
        %v582 = vunpack.c.l.b16 %v414
        %v583 = vunpack.c.h.b16 %v414
        %v584 = vunpack.c.l.b16 %v415
        %v585 = vunpack.c.h.b16 %v415
        %v586 = vunpack.c.l.b16 %v416
        %v587 = vunpack.c.h.b16 %v416
        %v588 = vunpack.c.l.b16 %v417
        %v589 = vunpack.c.h.b16 %v417
        %v590 = vunpack.c.l.b16 %v418
        %v591 = vunpack.c.h.b16 %v418
        %v592 = vunpack.c.l.b16 %v419
        %v593 = vunpack.c.h.b16 %v419
        %v594 = vunpack.c.l.b16 %v420
        %v595 = vunpack.c.h.b16 %v420
        %v596 = vunpack.c.l.b16 %v421
        %v597 = vunpack.c.h.b16 %v421
        %v598 = vunpack.c.l.b16 %v422
        %v599 = vunpack.c.h.b16 %v422
        %v600 = vunpack.c.l.b16 %v423
        %v601 = vunpack.c.h.b16 %v423
        %v602 = vunpack.c.l.b16 %v424
        %v603 = vunpack.c.h.b16 %v424
        %v604 = vunpack.c.l.b16 %v425
        %v605 = vunpack.c.h.b16 %v425
        %v606 = vunpack.c.l.b16 %v426
        %v607 = vunpack.c.h.b16 %v426
        %v608 = vunpack.c.l.b16 %v427
        %v609 = vunpack.c.h.b16 %v427
        %v610 = vunpack.c.l.b16 %v428
        %v611 = vunpack.c.h.b16 %v428
        %v612 = vunpack.c.l.b16 %v429
        %v613 = vunpack.c.h.b16 %v429
        %v614 = vunpack.c.l.b16 %v430
        %v615 = vunpack.c.h.b16 %v430
        %v616 = vunpack.c.l.b16 %v431
        %v617 = vunpack.c.h.b16 %v431
        %v618 = vunpack.c.l.b16 %v432
        %v619 = vunpack.c.h.b16 %v432
        %v620 = vunpack.c.l.b16 %v433
        %v621 = vunpack.c.h.b16 %v433
        %v622 = vunpack.c.l.b16 %v434
        %v623 = vunpack.c.h.b16 %v434
        %v624 = vpack.c.b16 %v526, %v524
        %v625 = vpack.c.b16 %v527, %v525
        %v626 = vpack.c.b16 %v530, %v528
        %v627 = vpack.c.b16 %v531, %v529
        %v628 = vpack.c.b16 %v534, %v532
        %v629 = vpack.c.b16 %v535, %v533
        %v630 = vpack.c.b16 %v538, %v536
        %v631 = vpack.c.b16 %v539, %v537
        %v632 = vpack.c.b16 %v542, %v540
        %v633 = vpack.c.b16 %v543, %v541
        %v634 = vpack.c.b16 %v546, %v544
        %v635 = vpack.c.b16 %v547, %v545
        %v636 = vpack.c.b16 %v550, %v548
        %v637 = vpack.c.b16 %v551, %v549
        %v638 = vpack.c.b16 %v554, %v552
        %v639 = vpack.c.b16 %v555, %v553
        %v640 = vpack.c.b16 %v558, %v556
        %v641 = vpack.c.b16 %v559, %v557
        %v642 = vpack.c.b16 %v562, %v560
        %v643 = vpack.c.b16 %v563, %v561
        %v644 = vpack.c.b16 %v566, %v564
        %v645 = vpack.c.b16 %v567, %v565
        %v646 = vpack.c.b16 %v570, %v568
        %v647 = vpack.c.b16 %v571, %v569
        %v648 = vpack.c.b16 %v574, %v572
        %v649 = vpack.c.b16 %v575, %v573
        %v650 = vpack.c.b16 %v578, %v576
        %v651 = vpack.c.b16 %v579, %v577
        %v652 = vpack.c.b16 %v582, %v580
        %v653 = vpack.c.b16 %v583, %v581
        %v654 = vpack.c.b16 %v586, %v584
        %v655 = vpack.c.b16 %v587, %v585
        %v656 = vpack.c.b16 %v590, %v588
        %v657 = vpack.c.b16 %v591, %v589
        %v658 = vpack.c.b16 %v594, %v592
        %v659 = vpack.c.b16 %v595, %v593
        %v660 = vpack.c.b16 %v598, %v596
        %v661 = vpack.c.b16 %v599, %v597
        %v662 = vpack.c.b16 %v602, %v600
        %v663 = vpack.c.b16 %v603, %v601
        %v664 = vpack.c.b16 %v606, %v604
        %v665 = vpack.c.b16 %v607, %v605
        %v666 = vpack.c.b16 %v610, %v608
        %v667 = vpack.c.b16 %v611, %v609
        %v668 = vpack.c.b16 %v614, %v612
        %v669 = vpack.c.b16 %v615, %v613
        %v670 = vpack.c.b16 %v618, %v616
        %v671 = vpack.c.b16 %v619, %v617
        %v672 = vpack.c.b16 %v622, %v620
        %v673 = vpack.c.b16 %v623, %v621
        %v756 = vunpack.c.l.b16 %v435
        %v757 = vunpack.c.l.b16 %v436
        %v758 = vunpack.c.l.b16 %v437
        %v759 = vunpack.c.l.b16 %v438
        %v760 = vunpack.c.l.b16 %v439
        %v761 = vunpack.c.l.b16 %v440
        %v762 = vunpack.c.l.b16 %v441
        %v763 = vunpack.c.l.b16 %v442
        %v764 = vunpack.c.l.b16 %v443
        %v765 = vunpack.c.l.b16 %v444
        %v766 = vunpack.c.l.b16 %v445
        %v767 = vunpack.c.l.b16 %v446
        %v768 = vunpack.c.l.b16 %v447
        %v769 = vunpack.c.l.b16 %v448
        %v770 = vunpack.c.l.b16 %v449
        %v771 = vunpack.c.l.b16 %v450
        %v772 = vunpack.c.l.b16 %v451
        %v773 = vunpack.c.l.b16 %v452
        %v774 = vunpack.c.l.b16 %v453
        %v775 = vunpack.c.l.b16 %v454
        %v776 = vunpack.c.l.b16 %v455
        %v777 = vunpack.c.l.b16 %v456
        %v778 = vunpack.c.l.b16 %v457
        %v779 = vunpack.c.l.b16 %v458
        %v780 = vunpack.c.l.b16 %v459
        %v781 = vunpack.c.l.b16 %v460
        %v782 = vunpack.c.l.b16 %v461
        %v783 = vunpack.c.l.b16 %v462
        %v784 = vunpack.c.l.b16 %v463
        %v785 = vunpack.c.l.b16 %v464
        %v786 = vunpack.c.l.b16 %v465
        %v787 = vunpack.c.l.b16 %v466
        %v788 = vpack.c.b16 %v757, %v756
        %v789 = vpack.c.b16 %v759, %v758
        %v790 = vpack.c.b16 %v761, %v760
        %v791 = vpack.c.b16 %v763, %v762
        %v792 = vpack.c.b16 %v765, %v764
        %v793 = vpack.c.b16 %v767, %v766
        %v794 = vpack.c.b16 %v769, %v768
        %v795 = vpack.c.b16 %v771, %v770
        %v796 = vpack.c.b16 %v773, %v772
        %v797 = vpack.c.b16 %v775, %v774
        %v798 = vpack.c.b16 %v777, %v776
        %v799 = vpack.c.b16 %v779, %v778
        %v800 = vpack.c.b16 %v781, %v780
        %v801 = vpack.c.b16 %v783, %v782
        %v802 = vpack.c.b16 %v785, %v784
        %v803 = vpack.c.b16 %v787, %v786
        %820 = vmatprep.subr.bf16.mxu0 0
        %821 = vmatpush1.bf16.msra.mxu0 %v788
        %822 = vmatprep.subr.bf16.mxu0 0
        %823 = vmatpush1.bf16.msra.mxu0 %v789
        %824 = vmatprep.subr.bf16.mxu0 0
        %825 = vmatpush1.bf16.msra.mxu0 %v790
        %826 = vmatprep.subr.bf16.mxu0 0
        %827 = vmatpush1.bf16.msra.mxu0 %v791
        %828 = vmatprep.subr.bf16.mxu0 0
        %829 = vmatpush1.bf16.msra.mxu0 %v792
        %830 = vmatprep.subr.bf16.mxu0 0
        %831 = vmatpush1.bf16.msra.mxu0 %v793
        %832 = vmatprep.subr.bf16.mxu0 0
        %833 = vmatpush1.bf16.msra.mxu0 %v794
        %834 = vmatprep.subr.bf16.mxu0 0
        %835 = vmatpush1.bf16.msra.mxu0 %v795
        %836 = vmatprep.subr.bf16.mxu0 0
        %837 = vmatpush1.bf16.msra.mxu0 %v796
        %838 = vmatprep.subr.bf16.mxu0 0
        %839 = vmatpush1.bf16.msra.mxu0 %v797
        %840 = vmatprep.subr.bf16.mxu0 0
        %841 = vmatpush1.bf16.msra.mxu0 %v798
        %842 = vmatprep.subr.bf16.mxu0 0
        %843 = vmatpush1.bf16.msra.mxu0 %v799
        %844 = vmatprep.subr.bf16.mxu0 0
        %845 = vmatpush1.bf16.msra.mxu0 %v800
        %846 = vmatprep.subr.bf16.mxu0 0
        %847 = vmatpush1.bf16.msra.mxu0 %v801
        %848 = vmatprep.subr.bf16.mxu0 0
        %849 = vmatpush1.bf16.msra.mxu0 %v802
        %850 = vmatprep.subr.bf16.mxu0 0
        %851 = vmatpush1.bf16.msra.mxu0 %v803
        %852 = vmatprep.mubr.bf16.mxu0 %v625
        %853 = vmatmul.mubr.bf16.gmra.mrb[0].mxu0 %v624
        %v854 = vpop.f32.mrb[0].mxu0
        %v855 = vadd.f32 %v472, %v854
        %v856 = vpop.f32.mrb[0].mxu0
        %v857 = vpop.f32.mrb[0].mxu0
        %v858 = vadd.f32 %v472, %v857
        %v859 = vpop.f32.mrb[0].mxu0
        %860 = vmatprep.mubr.bf16.mxu0 %v627
        %861 = vmatmul.mubr.bf16.gmra.mrb[0].mxu0 %v626
        %v862 = vpop.f32.mrb[0].mxu0
        %v863 = vadd.f32 %v472, %v862
        %v864 = vpop.f32.mrb[0].mxu0
        %v865 = vpop.f32.mrb[0].mxu0
        %v866 = vadd.f32 %v472, %v865
        %v867 = vpop.f32.mrb[0].mxu0
        %868 = vmatprep.mubr.bf16.mxu0 %v629
        %869 = vmatmul.mubr.bf16.gmra.mrb[0].mxu0 %v628
        %v870 = vpop.f32.mrb[0].mxu0
        %v871 = vadd.f32 %v472, %v870
        %v872 = vpop.f32.mrb[0].mxu0
        %v873 = vpop.f32.mrb[0].mxu0
        %v874 = vadd.f32 %v472, %v873
        %v875 = vpop.f32.mrb[0].mxu0
        %876 = vmatprep.mubr.bf16.mxu0 %v631
        %877 = vmatmul.mubr.bf16.gmra.mrb[0].mxu0 %v630
        %v878 = vpop.f32.mrb[0].mxu0
        %v879 = vadd.f32 %v472, %v878
        %v880 = vpop.f32.mrb[0].mxu0
        %v881 = vpop.f32.mrb[0].mxu0
        %v882 = vadd.f32 %v472, %v881
        %v883 = vpop.f32.mrb[0].mxu0
        %884 = vmatprep.mubr.bf16.mxu0 %v633
        %885 = vmatmul.mubr.bf16.gmra.mrb[0].mxu0 %v632
        %v886 = vpop.f32.mrb[0].mxu0
        %v887 = vadd.f32 %v472, %v886
        %v888 = vpop.f32.mrb[0].mxu0
        %v889 = vpop.f32.mrb[0].mxu0
        %v890 = vadd.f32 %v472, %v889
        %v891 = vpop.f32.mrb[0].mxu0
        %892 = vmatprep.mubr.bf16.mxu0 %v635
        %893 = vmatmul.mubr.bf16.gmra.mrb[0].mxu0 %v634
        %v894 = vpop.f32.mrb[0].mxu0
        %v895 = vadd.f32 %v472, %v894
        %v896 = vpop.f32.mrb[0].mxu0
        %v897 = vpop.f32.mrb[0].mxu0
        %v898 = vadd.f32 %v472, %v897
        %v899 = vpop.f32.mrb[0].mxu0
        %900 = vmatprep.mubr.bf16.mxu0 %v637
        %901 = vmatmul.mubr.bf16.gmra.mrb[0].mxu0 %v636
        %v902 = vpop.f32.mrb[0].mxu0
        %v903 = vadd.f32 %v472, %v902
        %v904 = vpop.f32.mrb[0].mxu0
        %v905 = vpop.f32.mrb[0].mxu0
        %v906 = vadd.f32 %v472, %v905
        %v907 = vpop.f32.mrb[0].mxu0
        %908 = vmatprep.mubr.bf16.mxu0 %v639
        %909 = vmatmul.mubr.bf16.gmra.mrb[0].mxu0 %v638
        %v910 = vpop.f32.mrb[0].mxu0
        %v911 = vadd.f32 %v472, %v910
        %v912 = vpop.f32.mrb[0].mxu0
        %v913 = vpop.f32.mrb[0].mxu0
        %v914 = vadd.f32 %v472, %v913
        %v915 = vpop.f32.mrb[0].mxu0
        %916 = vmatprep.mubr.bf16.mxu0 %v641
        %917 = vmatmul.mubr.bf16.gmra.mrb[0].mxu0 %v640
        %v918 = vpop.f32.mrb[0].mxu0
        %v919 = vadd.f32 %v472, %v918
        %v920 = vpop.f32.mrb[0].mxu0
        %v921 = vpop.f32.mrb[0].mxu0
        %v922 = vadd.f32 %v472, %v921
        %v923 = vpop.f32.mrb[0].mxu0
        %924 = vmatprep.mubr.bf16.mxu0 %v643
        %925 = vmatmul.mubr.bf16.gmra.mrb[0].mxu0 %v642
        %v926 = vpop.f32.mrb[0].mxu0
        %v927 = vadd.f32 %v472, %v926
        %v928 = vpop.f32.mrb[0].mxu0
        %v929 = vpop.f32.mrb[0].mxu0
        %v930 = vadd.f32 %v472, %v929
        %v931 = vpop.f32.mrb[0].mxu0
        %932 = vmatprep.mubr.bf16.mxu0 %v645
        %933 = vmatmul.mubr.bf16.gmra.mrb[0].mxu0 %v644
        %v934 = vpop.f32.mrb[0].mxu0
        %v935 = vadd.f32 %v472, %v934
        %v936 = vpop.f32.mrb[0].mxu0
        %v937 = vpop.f32.mrb[0].mxu0
        %v938 = vadd.f32 %v472, %v937
        %v939 = vpop.f32.mrb[0].mxu0
        %940 = vmatprep.mubr.bf16.mxu0 %v647
        %941 = vmatmul.mubr.bf16.gmra.mrb[0].mxu0 %v646
        %v942 = vpop.f32.mrb[0].mxu0
        %v943 = vadd.f32 %v472, %v942
        %v944 = vpop.f32.mrb[0].mxu0
        %v945 = vpop.f32.mrb[0].mxu0
        %v946 = vadd.f32 %v472, %v945
        %v947 = vpop.f32.mrb[0].mxu0
        %948 = vmatprep.mubr.bf16.mxu0 %v649
        %949 = vmatmul.mubr.bf16.gmra.mrb[0].mxu0 %v648
        %v950 = vpop.f32.mrb[0].mxu0
        %v951 = vadd.f32 %v472, %v950
        %v952 = vpop.f32.mrb[0].mxu0
        %v953 = vpop.f32.mrb[0].mxu0
        %v954 = vadd.f32 %v472, %v953
        %v955 = vpop.f32.mrb[0].mxu0
        %956 = vmatprep.mubr.bf16.mxu0 %v651
        %957 = vmatmul.mubr.bf16.gmra.mrb[0].mxu0 %v650
        %v958 = vpop.f32.mrb[0].mxu0
        %v959 = vadd.f32 %v472, %v958
        %v960 = vpop.f32.mrb[0].mxu0
        %v961 = vpop.f32.mrb[0].mxu0
        %v962 = vadd.f32 %v472, %v961
        %v963 = vpop.f32.mrb[0].mxu0
        %964 = vmatprep.mubr.bf16.mxu0 %v653
        %965 = vmatmul.mubr.bf16.gmra.mrb[0].mxu0 %v652
        %v966 = vpop.f32.mrb[0].mxu0
        %v967 = vadd.f32 %v472, %v966
        %v968 = vpop.f32.mrb[0].mxu0
        %v969 = vpop.f32.mrb[0].mxu0
        %v970 = vadd.f32 %v472, %v969
        %v971 = vpop.f32.mrb[0].mxu0
        %972 = vmatprep.mubr.bf16.mxu0 %v655
        %973 = vmatmul.mubr.bf16.gmra.mrb[0].mxu0 %v654
        %v974 = vpop.f32.mrb[0].mxu0
        %v975 = vadd.f32 %v472, %v974
        %v976 = vpop.f32.mrb[0].mxu0
        %v977 = vpop.f32.mrb[0].mxu0
        %v978 = vadd.f32 %v472, %v977
        %v979 = vpop.f32.mrb[0].mxu0
        %980 = vmatprep.mubr.bf16.mxu0 %v657
        %981 = vmatmul.mubr.bf16.gmra.mrb[0].mxu0 %v656
        %v982 = vpop.f32.mrb[0].mxu0
        %v983 = vadd.f32 %v472, %v982
        %v984 = vpop.f32.mrb[0].mxu0
        %v985 = vpop.f32.mrb[0].mxu0
        %v986 = vadd.f32 %v472, %v985
        %v987 = vpop.f32.mrb[0].mxu0
        %988 = vmatprep.mubr.bf16.mxu0 %v659
        %989 = vmatmul.mubr.bf16.gmra.mrb[0].mxu0 %v658
        %v990 = vpop.f32.mrb[0].mxu0
        %v991 = vadd.f32 %v472, %v990
        %v992 = vpop.f32.mrb[0].mxu0
        %v993 = vpop.f32.mrb[0].mxu0
        %v994 = vadd.f32 %v472, %v993
        %v995 = vpop.f32.mrb[0].mxu0
        %996 = vmatprep.mubr.bf16.mxu0 %v661
        %997 = vmatmul.mubr.bf16.gmra.mrb[0].mxu0 %v660
        %v998 = vpop.f32.mrb[0].mxu0
        %v999 = vadd.f32 %v472, %v998
        %v1000 = vpop.f32.mrb[0].mxu0
        %v1001 = vpop.f32.mrb[0].mxu0
        %v1002 = vadd.f32 %v472, %v1001
        %v1003 = vpop.f32.mrb[0].mxu0
        %1004 = vmatprep.mubr.bf16.mxu0 %v663
        %1005 = vmatmul.mubr.bf16.gmra.mrb[0].mxu0 %v662
        %v1006 = vpop.f32.mrb[0].mxu0
        %v1007 = vadd.f32 %v472, %v1006
        %v1008 = vpop.f32.mrb[0].mxu0
        %v1009 = vpop.f32.mrb[0].mxu0
        %v1010 = vadd.f32 %v472, %v1009
        %v1011 = vpop.f32.mrb[0].mxu0
        %1012 = vmatprep.mubr.bf16.mxu0 %v665
        %1013 = vmatmul.mubr.bf16.gmra.mrb[0].mxu0 %v664
        %v1014 = vpop.f32.mrb[0].mxu0
        %v1015 = vadd.f32 %v472, %v1014
        %v1016 = vpop.f32.mrb[0].mxu0
        %v1017 = vpop.f32.mrb[0].mxu0
        %v1018 = vadd.f32 %v472, %v1017
        %v1019 = vpop.f32.mrb[0].mxu0
        %1020 = vmatprep.mubr.bf16.mxu0 %v667
        %1021 = vmatmul.mubr.bf16.gmra.mrb[0].mxu0 %v666
        %v1022 = vpop.f32.mrb[0].mxu0
        %v1023 = vadd.f32 %v472, %v1022
        %v1024 = vpop.f32.mrb[0].mxu0
        %v1025 = vpop.f32.mrb[0].mxu0
        %v1026 = vadd.f32 %v472, %v1025
        %v1027 = vpop.f32.mrb[0].mxu0
        %1028 = vmatprep.mubr.bf16.mxu0 %v669
        %1029 = vmatmul.mubr.bf16.gmra.mrb[0].mxu0 %v668
        %v1030 = vpop.f32.mrb[0].mxu0
        %v1031 = vadd.f32 %v472, %v1030
        %v1032 = vpop.f32.mrb[0].mxu0
        %v1033 = vpop.f32.mrb[0].mxu0
        %v1034 = vadd.f32 %v472, %v1033
        %v1035 = vpop.f32.mrb[0].mxu0
        %1036 = vmatprep.mubr.bf16.mxu0 %v671
        %1037 = vmatmul.mubr.bf16.gmra.mrb[0].mxu0 %v670
        %v1038 = vpop.f32.mrb[0].mxu0
        %v1039 = vadd.f32 %v472, %v1038
        %v1040 = vpop.f32.mrb[0].mxu0
        %v1041 = vpop.f32.mrb[0].mxu0
        %v1042 = vadd.f32 %v472, %v1041
        %v1043 = vpop.f32.mrb[0].mxu0
        %1044 = vmatprep.mubr.bf16.mxu0 %v673
        %1045 = vmatmul.mubr.bf16.gmra.mrb[0].mxu0 %v672
        %v1046 = vpop.f32.mrb[0].mxu0
        %v1047 = vadd.f32 %v472, %v1046
        %v1048 = vpop.f32.mrb[0].mxu0
        %v1049 = vpop.f32.mrb[0].mxu0
        %v1050 = vadd.f32 %v472, %v1049
        %v1051 = vpop.f32.mrb[0].mxu0
        %1052 = vdwg.mxu0
        %v1053 = vmax.f32 %v855, 0.0
        %v1054 = vmax.f32 %v858, 0.0
        %v1055 = vmax.f32 %v863, 0.0
        %v1056 = vmax.f32 %v866, 0.0
        %v1057 = vmax.f32 %v871, 0.0
        %v1058 = vmax.f32 %v874, 0.0
        %v1059 = vmax.f32 %v879, 0.0
        %v1060 = vmax.f32 %v882, 0.0
        %v1061 = vmax.f32 %v887, 0.0
        %v1062 = vmax.f32 %v890, 0.0
        %v1063 = vmax.f32 %v895, 0.0
        %v1064 = vmax.f32 %v898, 0.0
        %v1065 = vmax.f32 %v903, 0.0
        %v1066 = vmax.f32 %v906, 0.0
        %v1067 = vmax.f32 %v911, 0.0
        %v1068 = vmax.f32 %v914, 0.0
        %v1069 = vmax.f32 %v919, 0.0
        %v1070 = vmax.f32 %v922, 0.0
        %v1071 = vmax.f32 %v927, 0.0
        %v1072 = vmax.f32 %v930, 0.0
        %v1073 = vmax.f32 %v935, 0.0
        %v1074 = vmax.f32 %v938, 0.0
        %v1075 = vmax.f32 %v943, 0.0
        %v1076 = vmax.f32 %v946, 0.0
        %v1077 = vmax.f32 %v951, 0.0
        %v1078 = vmax.f32 %v954, 0.0
        %v1079 = vmax.f32 %v959, 0.0
        %v1080 = vmax.f32 %v962, 0.0
        %v1081 = vmax.f32 %v967, 0.0
        %v1082 = vmax.f32 %v970, 0.0
        %v1083 = vmax.f32 %v975, 0.0
        %v1084 = vmax.f32 %v978, 0.0
        %v1085 = vmax.f32 %v983, 0.0
        %v1086 = vmax.f32 %v986, 0.0
        %v1087 = vmax.f32 %v991, 0.0
        %v1088 = vmax.f32 %v994, 0.0
        %v1089 = vmax.f32 %v999, 0.0
        %v1090 = vmax.f32 %v1002, 0.0
        %v1091 = vmax.f32 %v1007, 0.0
        %v1092 = vmax.f32 %v1010, 0.0
        %v1093 = vmax.f32 %v1015, 0.0
        %v1094 = vmax.f32 %v1018, 0.0
        %v1095 = vmax.f32 %v1023, 0.0
        %v1096 = vmax.f32 %v1026, 0.0
        %v1097 = vmax.f32 %v1031, 0.0
        %v1098 = vmax.f32 %v1034, 0.0
        %v1099 = vmax.f32 %v1039, 0.0
        %v1100 = vmax.f32 %v1042, 0.0
        %v1101 = vmax.f32 %v1047, 0.0
        %v1102 = vmax.f32 %v1050, 0.0
        %vm1103 = vcmask 261120
        %1104 = vst.msk [vmem:[#allocation2] sm:$0xff] %vm1103, %v1053
        %1105 = vst.msk [vmem:[#allocation2 + $0x8] sm:$0xff] %vm1103, %v1054
        %1106 = vst.msk [vmem:[#allocation2 + $0x10] sm:$0xff] %vm1103, %v1055
        %1107 = vst.msk [vmem:[#allocation2 + $0x18] sm:$0xff] %vm1103, %v1056
        %1108 = vst.msk [vmem:[#allocation2 + $0x20] sm:$0xff] %vm1103, %v1057
        %1109 = vst.msk [vmem:[#allocation2 + $0x28] sm:$0xff] %vm1103, %v1058
        %1110 = vst.msk [vmem:[#allocation2 + $0x30] sm:$0xff] %vm1103, %v1059
        %1111 = vst.msk [vmem:[#allocation2 + $0x38] sm:$0xff] %vm1103, %v1060
        %1112 = vst.msk [vmem:[#allocation2 + $0x40] sm:$0xff] %vm1103, %v1061
        %1113 = vst.msk [vmem:[#allocation2 + $0x48] sm:$0xff] %vm1103, %v1062
        %1114 = vst.msk [vmem:[#allocation2 + $0x50] sm:$0xff] %vm1103, %v1063
        %1115 = vst.msk [vmem:[#allocation2 + $0x58] sm:$0xff] %vm1103, %v1064
        %1116 = vst.msk [vmem:[#allocation2 + $0x60] sm:$0xff] %vm1103, %v1065
        %1117 = vst.msk [vmem:[#allocation2 + $0x68] sm:$0xff] %vm1103, %v1066
        %1118 = vst.msk [vmem:[#allocation2 + $0x70] sm:$0xff] %vm1103, %v1067
        %1119 = vst.msk [vmem:[#allocation2 + $0x78] sm:$0xff] %vm1103, %v1068
        %1120 = vst.msk [vmem:[#allocation2 + $0x80] sm:$0xff] %vm1103, %v1069
        %1121 = vst.msk [vmem:[#allocation2 + $0x88] sm:$0xff] %vm1103, %v1070
        %1122 = vst.msk [vmem:[#allocation2 + $0x90] sm:$0xff] %vm1103, %v1071
        %1123 = vst.msk [vmem:[#allocation2 + $0x98] sm:$0xff] %vm1103, %v1072
        %1124 = vst.msk [vmem:[#allocation2 + $0xa0] sm:$0xff] %vm1103, %v1073
        %1125 = vst.msk [vmem:[#allocation2 + $0xa8] sm:$0xff] %vm1103, %v1074
        %1126 = vst.msk [vmem:[#allocation2 + $0xb0] sm:$0xff] %vm1103, %v1075
        %1127 = vst.msk [vmem:[#allocation2 + $0xb8] sm:$0xff] %vm1103, %v1076
        %1128 = vst.msk [vmem:[#allocation2 + $0xc0] sm:$0xff] %vm1103, %v1077
        %1129 = vst.msk [vmem:[#allocation2 + $0xc8] sm:$0xff] %vm1103, %v1078
        %1130 = vst.msk [vmem:[#allocation2 + $0xd0] sm:$0xff] %vm1103, %v1079
        %1131 = vst.msk [vmem:[#allocation2 + $0xd8] sm:$0xff] %vm1103, %v1080
        %1132 = vst.msk [vmem:[#allocation2 + $0xe0] sm:$0xff] %vm1103, %v1081
        %1133 = vst.msk [vmem:[#allocation2 + $0xe8] sm:$0xff] %vm1103, %v1082
        %1134 = vst.msk [vmem:[#allocation2 + $0xf0] sm:$0xff] %vm1103, %v1083
        %1135 = vst.msk [vmem:[#allocation2 + $0xf8] sm:$0xff] %vm1103, %v1084
        %1136 = vst.msk [vmem:[#allocation2 + $0x100] sm:$0xff] %vm1103, %v1085
        %1137 = vst.msk [vmem:[#allocation2 + $0x108] sm:$0xff] %vm1103, %v1086
        %1138 = vst.msk [vmem:[#allocation2 + $0x110] sm:$0xff] %vm1103, %v1087
        %1139 = vst.msk [vmem:[#allocation2 + $0x118] sm:$0xff] %vm1103, %v1088
        %1140 = vst.msk [vmem:[#allocation2 + $0x120] sm:$0xff] %vm1103, %v1089
        %1141 = vst.msk [vmem:[#allocation2 + $0x128] sm:$0xff] %vm1103, %v1090
        %1142 = vst.msk [vmem:[#allocation2 + $0x130] sm:$0xff] %vm1103, %v1091
        %1143 = vst.msk [vmem:[#allocation2 + $0x138] sm:$0xff] %vm1103, %v1092
        %1144 = vst.msk [vmem:[#allocation2 + $0x140] sm:$0xff] %vm1103, %v1093
        %1145 = vst.msk [vmem:[#allocation2 + $0x148] sm:$0xff] %vm1103, %v1094
        %1146 = vst.msk [vmem:[#allocation2 + $0x150] sm:$0xff] %vm1103, %v1095
        %1147 = vst.msk [vmem:[#allocation2 + $0x158] sm:$0xff] %vm1103, %v1096
        %1148 = vst.msk [vmem:[#allocation2 + $0x160] sm:$0xff] %vm1103, %v1097
        %1149 = vst.msk [vmem:[#allocation2 + $0x168] sm:$0xff] %vm1103, %v1098
        %1150 = vst.msk [vmem:[#allocation2 + $0x170] sm:$0xff] %vm1103, %v1099
        %1151 = vst.msk [vmem:[#allocation2 + $0x178] sm:$0xff] %vm1103, %v1100
        %1152 = vst.msk [vmem:[#allocation2 + $0x180] sm:$0xff] %vm1103, %v1101
        %1153 = vst.msk [vmem:[#allocation2 + $0x188] sm:$0xff] %vm1103, %v1102
        %v1154 = vld [vmem:[#allocation2] sm:$0xff]
        %v1155 = vld [vmem:[#allocation2 + $0x8] sm:$0xff]
        %v1156 = vld [vmem:[#allocation2 + $0x10] sm:$0xff]
        %v1157 = vld [vmem:[#allocation2 + $0x18] sm:$0xff]
        %v1158 = vld [vmem:[#allocation2 + $0x20] sm:$0xff]
        %v1159 = vld [vmem:[#allocation2 + $0x28] sm:$0xff]
        %v1160 = vld [vmem:[#allocation2 + $0x30] sm:$0xff]
        %v1161 = vld [vmem:[#allocation2 + $0x38] sm:$0xff]
        %v1162 = vld [vmem:[#allocation2 + $0x40] sm:$0xff]
        %v1163 = vld [vmem:[#allocation2 + $0x48] sm:$0xff]
        %v1164 = vld [vmem:[#allocation2 + $0x50] sm:$0xff]
        %v1165 = vld [vmem:[#allocation2 + $0x58] sm:$0x1]
        %1166 = vst.msk [vmem:[#allocation3] sm:$0xff] %vm1103, %v1154
        %1167 = vst.msk [vmem:[#allocation3 + $0x20] sm:$0xff] %vm1103, %v1155
        %1168 = vst.msk [vmem:[#allocation3 + $0x40] sm:$0xff] %vm1103, %v1156
        %1169 = vst.msk [vmem:[#allocation3 + $0x60] sm:$0xff] %vm1103, %v1157
        %1170 = vst.msk [vmem:[#allocation3 + $0x80] sm:$0xff] %vm1103, %v1158
        %1171 = vst.msk [vmem:[#allocation3 + $0xa0] sm:$0xff] %vm1103, %v1159
        %1172 = vst.msk [vmem:[#allocation3 + $0xc0] sm:$0xff] %vm1103, %v1160
        %1173 = vst.msk [vmem:[#allocation3 + $0xe0] sm:$0xff] %vm1103, %v1161
        %1174 = vst.msk [vmem:[#allocation3 + $0x100] sm:$0xff] %vm1103, %v1162
        %1175 = vst.msk [vmem:[#allocation3 + $0x120] sm:$0xff] %vm1103, %v1163
        %1176 = vst.msk [vmem:[#allocation3 + $0x140] sm:$0xff] %vm1103, %v1164
        %vm1177 = vcmask 253952
        %1178 = vst.msk [vmem:[#allocation3 + $0x160] sm:$0x1] %vm1177, %v1165
        %v1179 = vld [vmem:[#allocation2 + $0x64] sm:$0xff]
        %v1180 = vld [vmem:[#allocation2 + $0x6c] sm:$0xff]
        %v1181 = vld [vmem:[#allocation2 + $0x74] sm:$0xff]
        %v1182 = vld [vmem:[#allocation2 + $0x7c] sm:$0xff]
        %v1183 = vld [vmem:[#allocation2 + $0x84] sm:$0xff]
        %v1184 = vld [vmem:[#allocation2 + $0x8c] sm:$0xff]
        %v1185 = vld [vmem:[#allocation2 + $0x94] sm:$0xff]
        %v1186 = vld [vmem:[#allocation2 + $0x9c] sm:$0xff]
        %v1187 = vld [vmem:[#allocation2 + $0xa4] sm:$0xff]
        %v1188 = vld [vmem:[#allocation2 + $0xac] sm:$0xff]
        %v1189 = vld [vmem:[#allocation2 + $0xb4] sm:$0xff]
        %v1190 = vld [vmem:[#allocation2 + $0xbc] sm:$0x1]
        %1203 = vrot.lane.b32.xlu0 %v1179, 32
        %v1204 = vpop.permute.xlu0 %1203
        %1205 = vrot.lane.b32.xlu0 %v1180, 32
        %v1206 = vpop.permute.xlu0 %1205
        %1207 = vrot.lane.b32.xlu0 %v1181, 32
        %v1208 = vpop.permute.xlu0 %1207
        %1209 = vrot.lane.b32.xlu0 %v1182, 32
        %v1210 = vpop.permute.xlu0 %1209
        %1211 = vrot.lane.b32.xlu0 %v1183, 32
        %v1212 = vpop.permute.xlu0 %1211
        %1213 = vrot.lane.b32.xlu0 %v1184, 32
        %v1214 = vpop.permute.xlu0 %1213
        %1215 = vrot.lane.b32.xlu0 %v1185, 32
        %v1216 = vpop.permute.xlu0 %1215
        %1217 = vrot.lane.b32.xlu0 %v1186, 32
        %v1218 = vpop.permute.xlu0 %1217
        %1219 = vrot.lane.b32.xlu0 %v1187, 32
        %v1220 = vpop.permute.xlu0 %1219
        %1221 = vrot.lane.b32.xlu0 %v1188, 32
        %v1222 = vpop.permute.xlu0 %1221
        %1223 = vrot.lane.b32.xlu0 %v1189, 32
        %v1224 = vpop.permute.xlu0 %1223
        %1225 = vrot.lane.b32.xlu0 %v1190, 32
        %v1226 = vpop.permute.xlu0 %1225
        %vm1239 = vcmask 523520
        %1240 = vst.msk [vmem:[#allocation3] sm:$0xff] %vm1239, %v1204
        %1241 = vst.msk [vmem:[#allocation3 + $0x20] sm:$0xff] %vm1239, %v1206
        %1242 = vst.msk [vmem:[#allocation3 + $0x40] sm:$0xff] %vm1239, %v1208
        %1243 = vst.msk [vmem:[#allocation3 + $0x60] sm:$0xff] %vm1239, %v1210
        %1244 = vst.msk [vmem:[#allocation3 + $0x80] sm:$0xff] %vm1239, %v1212
        %1245 = vst.msk [vmem:[#allocation3 + $0xa0] sm:$0xff] %vm1239, %v1214
        %1246 = vst.msk [vmem:[#allocation3 + $0xc0] sm:$0xff] %vm1239, %v1216
        %1247 = vst.msk [vmem:[#allocation3 + $0xe0] sm:$0xff] %vm1239, %v1218
        %1248 = vst.msk [vmem:[#allocation3 + $0x100] sm:$0xff] %vm1239, %v1220
        %1249 = vst.msk [vmem:[#allocation3 + $0x120] sm:$0xff] %vm1239, %v1222
        %1250 = vst.msk [vmem:[#allocation3 + $0x140] sm:$0xff] %vm1239, %v1224
        %vm1251 = vcmask 516352
        %1252 = vst.msk [vmem:[#allocation3 + $0x160] sm:$0x1] %vm1251, %v1226
        %v1253 = vld [vmem:[#allocation2 + $0x1] sm:$0xff]
        %v1254 = vld [vmem:[#allocation2 + $0x9] sm:$0xff]
        %v1255 = vld [vmem:[#allocation2 + $0x11] sm:$0xff]
        %v1256 = vld [vmem:[#allocation2 + $0x19] sm:$0xff]
        %v1257 = vld [vmem:[#allocation2 + $0x21] sm:$0xff]
        %v1258 = vld [vmem:[#allocation2 + $0x29] sm:$0xff]
        %v1259 = vld [vmem:[#allocation2 + $0x31] sm:$0xff]
        %v1260 = vld [vmem:[#allocation2 + $0x39] sm:$0xff]
        %v1261 = vld [vmem:[#allocation2 + $0x41] sm:$0xff]
        %v1262 = vld [vmem:[#allocation2 + $0x49] sm:$0xff]
        %v1263 = vld [vmem:[#allocation2 + $0x51] sm:$0xff]
        %v1264 = vld [vmem:[#allocation2 + $0x59] sm:$0x1]
        %1277 = vrot.lane.b32.xlu0 %v1253, 64
        %v1278 = vpop.permute.xlu0 %1277
        %1279 = vrot.lane.b32.xlu0 %v1254, 64
        %v1280 = vpop.permute.xlu0 %1279
        %1281 = vrot.lane.b32.xlu0 %v1255, 64
        %v1282 = vpop.permute.xlu0 %1281
        %1283 = vrot.lane.b32.xlu0 %v1256, 64
        %v1284 = vpop.permute.xlu0 %1283
        %1285 = vrot.lane.b32.xlu0 %v1257, 64
        %v1286 = vpop.permute.xlu0 %1285
        %1287 = vrot.lane.b32.xlu0 %v1258, 64
        %v1288 = vpop.permute.xlu0 %1287
        %1289 = vrot.lane.b32.xlu0 %v1259, 64
        %v1290 = vpop.permute.xlu0 %1289
        %1291 = vrot.lane.b32.xlu0 %v1260, 64
        %v1292 = vpop.permute.xlu0 %1291
        %1293 = vrot.lane.b32.xlu0 %v1261, 64
        %v1294 = vpop.permute.xlu0 %1293
        %1295 = vrot.lane.b32.xlu0 %v1262, 64
        %v1296 = vpop.permute.xlu0 %1295
        %1297 = vrot.lane.b32.xlu0 %v1263, 64
        %v1298 = vpop.permute.xlu0 %1297
        %1299 = vrot.lane.b32.xlu0 %v1264, 64
        %v1300 = vpop.permute.xlu0 %1299
        %vm1313 = vcmask 785920
        %1314 = vst.msk [vmem:[#allocation3] sm:$0xff] %vm1313, %v1278
        %1315 = vst.msk [vmem:[#allocation3 + $0x20] sm:$0xff] %vm1313, %v1280
        %1316 = vst.msk [vmem:[#allocation3 + $0x40] sm:$0xff] %vm1313, %v1282
        %1317 = vst.msk [vmem:[#allocation3 + $0x60] sm:$0xff] %vm1313, %v1284
        %1318 = vst.msk [vmem:[#allocation3 + $0x80] sm:$0xff] %vm1313, %v1286
        %1319 = vst.msk [vmem:[#allocation3 + $0xa0] sm:$0xff] %vm1313, %v1288
        %1320 = vst.msk [vmem:[#allocation3 + $0xc0] sm:$0xff] %vm1313, %v1290
        %1321 = vst.msk [vmem:[#allocation3 + $0xe0] sm:$0xff] %vm1313, %v1292
        %1322 = vst.msk [vmem:[#allocation3 + $0x100] sm:$0xff] %vm1313, %v1294
        %1323 = vst.msk [vmem:[#allocation3 + $0x120] sm:$0xff] %vm1313, %v1296
        %1324 = vst.msk [vmem:[#allocation3 + $0x140] sm:$0xff] %vm1313, %v1298
        %vm1325 = vcmask 778752
        %1326 = vst.msk [vmem:[#allocation3 + $0x160] sm:$0x1] %vm1325, %v1300
        %v1327 = vld [vmem:[#allocation2 + $0x65] sm:$0xff]
        %v1328 = vld [vmem:[#allocation2 + $0x6d] sm:$0xff]
        %v1329 = vld [vmem:[#allocation2 + $0x75] sm:$0xff]
        %v1330 = vld [vmem:[#allocation2 + $0x7d] sm:$0xff]
        %v1331 = vld [vmem:[#allocation2 + $0x85] sm:$0xff]
        %v1332 = vld [vmem:[#allocation2 + $0x8d] sm:$0xff]
        %v1333 = vld [vmem:[#allocation2 + $0x95] sm:$0xff]
        %v1334 = vld [vmem:[#allocation2 + $0x9d] sm:$0xff]
        %v1335 = vld [vmem:[#allocation2 + $0xa5] sm:$0xff]
        %v1336 = vld [vmem:[#allocation2 + $0xad] sm:$0xff]
        %v1337 = vld [vmem:[#allocation2 + $0xb5] sm:$0xff]
        %v1338 = vld [vmem:[#allocation2 + $0xbd] sm:$0x1]
        %1351 = vrot.lane.b32.xlu0 %v1327, 96
        %v1352 = vpop.permute.xlu0 %1351
        %1353 = vrot.lane.b32.xlu0 %v1328, 96
        %v1354 = vpop.permute.xlu0 %1353
        %1355 = vrot.lane.b32.xlu0 %v1329, 96
        %v1356 = vpop.permute.xlu0 %1355
        %1357 = vrot.lane.b32.xlu0 %v1330, 96
        %v1358 = vpop.permute.xlu0 %1357
        %1359 = vrot.lane.b32.xlu0 %v1331, 96
        %v1360 = vpop.permute.xlu0 %1359
        %1361 = vrot.lane.b32.xlu0 %v1332, 96
        %v1362 = vpop.permute.xlu0 %1361
        %1363 = vrot.lane.b32.xlu0 %v1333, 96
        %v1364 = vpop.permute.xlu0 %1363
        %1365 = vrot.lane.b32.xlu0 %v1334, 96
        %v1366 = vpop.permute.xlu0 %1365
        %1367 = vrot.lane.b32.xlu0 %v1335, 96
        %v1368 = vpop.permute.xlu0 %1367
        %1369 = vrot.lane.b32.xlu0 %v1336, 96
        %v1370 = vpop.permute.xlu0 %1369
        %1371 = vrot.lane.b32.xlu0 %v1337, 96
        %v1372 = vpop.permute.xlu0 %1371
        %1373 = vrot.lane.b32.xlu0 %v1338, 96
        %v1374 = vpop.permute.xlu0 %1373
        %vm1387 = vcmask 1048320
        %1388 = vst.msk [vmem:[#allocation3] sm:$0xff] %vm1387, %v1352
        %1389 = vst.msk [vmem:[#allocation3 + $0x20] sm:$0xff] %vm1387, %v1354
        %1390 = vst.msk [vmem:[#allocation3 + $0x40] sm:$0xff] %vm1387, %v1356
        %1391 = vst.msk [vmem:[#allocation3 + $0x60] sm:$0xff] %vm1387, %v1358
        %1392 = vst.msk [vmem:[#allocation3 + $0x80] sm:$0xff] %vm1387, %v1360
        %1393 = vst.msk [vmem:[#allocation3 + $0xa0] sm:$0xff] %vm1387, %v1362
        %1394 = vst.msk [vmem:[#allocation3 + $0xc0] sm:$0xff] %vm1387, %v1364
        %1395 = vst.msk [vmem:[#allocation3 + $0xe0] sm:$0xff] %vm1387, %v1366
        %1396 = vst.msk [vmem:[#allocation3 + $0x100] sm:$0xff] %vm1387, %v1368
        %1397 = vst.msk [vmem:[#allocation3 + $0x120] sm:$0xff] %vm1387, %v1370
        %1398 = vst.msk [vmem:[#allocation3 + $0x140] sm:$0xff] %vm1387, %v1372
        %vm1399 = vcmask 1041152
        %1400 = vst.msk [vmem:[#allocation3 + $0x160] sm:$0x1] %vm1399, %v1374
        %v1401 = vld [vmem:[#allocation2 + $0xc8] sm:$0xff]
        %v1402 = vld [vmem:[#allocation2 + $0xd0] sm:$0xff]
        %v1403 = vld [vmem:[#allocation2 + $0xd8] sm:$0xff]
        %v1404 = vld [vmem:[#allocation2 + $0xe0] sm:$0xff]
        %v1405 = vld [vmem:[#allocation2 + $0xe8] sm:$0xff]
        %v1406 = vld [vmem:[#allocation2 + $0xf0] sm:$0xff]
        %v1407 = vld [vmem:[#allocation2 + $0xf8] sm:$0xff]
        %v1408 = vld [vmem:[#allocation2 + $0x100] sm:$0xff]
        %v1409 = vld [vmem:[#allocation2 + $0x108] sm:$0xff]
        %v1410 = vld [vmem:[#allocation2 + $0x110] sm:$0xff]
        %v1411 = vld [vmem:[#allocation2 + $0x118] sm:$0xff]
        %v1412 = vld [vmem:[#allocation2 + $0x120] sm:$0x1]
        %1413 = vst.msk [vmem:[#allocation3 + $0x8] sm:$0xff] %vm1103, %v1401
        %1414 = vst.msk [vmem:[#allocation3 + $0x28] sm:$0xff] %vm1103, %v1402
        %1415 = vst.msk [vmem:[#allocation3 + $0x48] sm:$0xff] %vm1103, %v1403
        %1416 = vst.msk [vmem:[#allocation3 + $0x68] sm:$0xff] %vm1103, %v1404
        %1417 = vst.msk [vmem:[#allocation3 + $0x88] sm:$0xff] %vm1103, %v1405
        %1418 = vst.msk [vmem:[#allocation3 + $0xa8] sm:$0xff] %vm1103, %v1406
        %1419 = vst.msk [vmem:[#allocation3 + $0xc8] sm:$0xff] %vm1103, %v1407
        %1420 = vst.msk [vmem:[#allocation3 + $0xe8] sm:$0xff] %vm1103, %v1408
        %1421 = vst.msk [vmem:[#allocation3 + $0x108] sm:$0xff] %vm1103, %v1409
        %1422 = vst.msk [vmem:[#allocation3 + $0x128] sm:$0xff] %vm1103, %v1410
        %1423 = vst.msk [vmem:[#allocation3 + $0x148] sm:$0xff] %vm1103, %v1411
        %1424 = vst.msk [vmem:[#allocation3 + $0x168] sm:$0x1] %vm1177, %v1412
        %v1425 = vld [vmem:[#allocation2 + $0x12c] sm:$0xff]
        %v1426 = vld [vmem:[#allocation2 + $0x134] sm:$0xff]
        %v1427 = vld [vmem:[#allocation2 + $0x13c] sm:$0xff]
        %v1428 = vld [vmem:[#allocation2 + $0x144] sm:$0xff]
        %v1429 = vld [vmem:[#allocation2 + $0x14c] sm:$0xff]
        %v1430 = vld [vmem:[#allocation2 + $0x154] sm:$0xff]
        %v1431 = vld [vmem:[#allocation2 + $0x15c] sm:$0xff]
        %v1432 = vld [vmem:[#allocation2 + $0x164] sm:$0xff]
        %v1433 = vld [vmem:[#allocation2 + $0x16c] sm:$0xff]
        %v1434 = vld [vmem:[#allocation2 + $0x174] sm:$0xff]
        %v1435 = vld [vmem:[#allocation2 + $0x17c] sm:$0xff]
        %v1436 = vld [vmem:[#allocation2 + $0x184] sm:$0x1]
        %1449 = vrot.lane.b32.xlu0 %v1425, 32
        %v1450 = vpop.permute.xlu0 %1449
        %1451 = vrot.lane.b32.xlu0 %v1426, 32
        %v1452 = vpop.permute.xlu0 %1451
        %1453 = vrot.lane.b32.xlu0 %v1427, 32
        %v1454 = vpop.permute.xlu0 %1453
        %1455 = vrot.lane.b32.xlu0 %v1428, 32
        %v1456 = vpop.permute.xlu0 %1455
        %1457 = vrot.lane.b32.xlu0 %v1429, 32
        %v1458 = vpop.permute.xlu0 %1457
        %1459 = vrot.lane.b32.xlu0 %v1430, 32
        %v1460 = vpop.permute.xlu0 %1459
        %1461 = vrot.lane.b32.xlu0 %v1431, 32
        %v1462 = vpop.permute.xlu0 %1461
        %1463 = vrot.lane.b32.xlu0 %v1432, 32
        %v1464 = vpop.permute.xlu0 %1463
        %1465 = vrot.lane.b32.xlu0 %v1433, 32
        %v1466 = vpop.permute.xlu0 %1465
        %1467 = vrot.lane.b32.xlu0 %v1434, 32
        %v1468 = vpop.permute.xlu0 %1467
        %1469 = vrot.lane.b32.xlu0 %v1435, 32
        %v1470 = vpop.permute.xlu0 %1469
        %1471 = vrot.lane.b32.xlu0 %v1436, 32
        %v1472 = vpop.permute.xlu0 %1471
        %1485 = vst.msk [vmem:[#allocation3 + $0x8] sm:$0xff] %vm1239, %v1450
        %1486 = vst.msk [vmem:[#allocation3 + $0x28] sm:$0xff] %vm1239, %v1452
        %1487 = vst.msk [vmem:[#allocation3 + $0x48] sm:$0xff] %vm1239, %v1454
        %1488 = vst.msk [vmem:[#allocation3 + $0x68] sm:$0xff] %vm1239, %v1456
        %1489 = vst.msk [vmem:[#allocation3 + $0x88] sm:$0xff] %vm1239, %v1458
        %1490 = vst.msk [vmem:[#allocation3 + $0xa8] sm:$0xff] %vm1239, %v1460
        %1491 = vst.msk [vmem:[#allocation3 + $0xc8] sm:$0xff] %vm1239, %v1462
        %1492 = vst.msk [vmem:[#allocation3 + $0xe8] sm:$0xff] %vm1239, %v1464
        %1493 = vst.msk [vmem:[#allocation3 + $0x108] sm:$0xff] %vm1239, %v1466
        %1494 = vst.msk [vmem:[#allocation3 + $0x128] sm:$0xff] %vm1239, %v1468
        %1495 = vst.msk [vmem:[#allocation3 + $0x148] sm:$0xff] %vm1239, %v1470
        %1496 = vst.msk [vmem:[#allocation3 + $0x168] sm:$0x1] %vm1251, %v1472
        %v1497 = vld [vmem:[#allocation2 + $0xc9] sm:$0xff]
        %v1498 = vld [vmem:[#allocation2 + $0xd1] sm:$0xff]
        %v1499 = vld [vmem:[#allocation2 + $0xd9] sm:$0xff]
        %v1500 = vld [vmem:[#allocation2 + $0xe1] sm:$0xff]
        %v1501 = vld [vmem:[#allocation2 + $0xe9] sm:$0xff]
        %v1502 = vld [vmem:[#allocation2 + $0xf1] sm:$0xff]
        %v1503 = vld [vmem:[#allocation2 + $0xf9] sm:$0xff]
        %v1504 = vld [vmem:[#allocation2 + $0x101] sm:$0xff]
        %v1505 = vld [vmem:[#allocation2 + $0x109] sm:$0xff]
        %v1506 = vld [vmem:[#allocation2 + $0x111] sm:$0xff]
        %v1507 = vld [vmem:[#allocation2 + $0x119] sm:$0xff]
        %v1508 = vld [vmem:[#allocation2 + $0x121] sm:$0x1]
        %1521 = vrot.lane.b32.xlu0 %v1497, 64
        %v1522 = vpop.permute.xlu0 %1521
        %1523 = vrot.lane.b32.xlu0 %v1498, 64
        %v1524 = vpop.permute.xlu0 %1523
        %1525 = vrot.lane.b32.xlu0 %v1499, 64
        %v1526 = vpop.permute.xlu0 %1525
        %1527 = vrot.lane.b32.xlu0 %v1500, 64
        %v1528 = vpop.permute.xlu0 %1527
        %1529 = vrot.lane.b32.xlu0 %v1501, 64
        %v1530 = vpop.permute.xlu0 %1529
        %1531 = vrot.lane.b32.xlu0 %v1502, 64
        %v1532 = vpop.permute.xlu0 %1531
        %1533 = vrot.lane.b32.xlu0 %v1503, 64
        %v1534 = vpop.permute.xlu0 %1533
        %1535 = vrot.lane.b32.xlu0 %v1504, 64
        %v1536 = vpop.permute.xlu0 %1535
        %1537 = vrot.lane.b32.xlu0 %v1505, 64
        %v1538 = vpop.permute.xlu0 %1537
        %1539 = vrot.lane.b32.xlu0 %v1506, 64
        %v1540 = vpop.permute.xlu0 %1539
        %1541 = vrot.lane.b32.xlu0 %v1507, 64
        %v1542 = vpop.permute.xlu0 %1541
        %1543 = vrot.lane.b32.xlu0 %v1508, 64
        %v1544 = vpop.permute.xlu0 %1543
        %1557 = vst.msk [vmem:[#allocation3 + $0x8] sm:$0xff] %vm1313, %v1522
        %1558 = vst.msk [vmem:[#allocation3 + $0x28] sm:$0xff] %vm1313, %v1524
        %1559 = vst.msk [vmem:[#allocation3 + $0x48] sm:$0xff] %vm1313, %v1526
        %1560 = vst.msk [vmem:[#allocation3 + $0x68] sm:$0xff] %vm1313, %v1528
        %1561 = vst.msk [vmem:[#allocation3 + $0x88] sm:$0xff] %vm1313, %v1530
        %1562 = vst.msk [vmem:[#allocation3 + $0xa8] sm:$0xff] %vm1313, %v1532
        %1563 = vst.msk [vmem:[#allocation3 + $0xc8] sm:$0xff] %vm1313, %v1534
        %1564 = vst.msk [vmem:[#allocation3 + $0xe8] sm:$0xff] %vm1313, %v1536
        %1565 = vst.msk [vmem:[#allocation3 + $0x108] sm:$0xff] %vm1313, %v1538
        %1566 = vst.msk [vmem:[#allocation3 + $0x128] sm:$0xff] %vm1313, %v1540
        %1567 = vst.msk [vmem:[#allocation3 + $0x148] sm:$0xff] %vm1313, %v1542
        %1568 = vst.msk [vmem:[#allocation3 + $0x168] sm:$0x1] %vm1325, %v1544
        %v1569 = vld [vmem:[#allocation2 + $0x12d] sm:$0xff]
        %v1570 = vld [vmem:[#allocation2 + $0x135] sm:$0xff]
        %v1571 = vld [vmem:[#allocation2 + $0x13d] sm:$0xff]
        %v1572 = vld [vmem:[#allocation2 + $0x145] sm:$0xff]
        %v1573 = vld [vmem:[#allocation2 + $0x14d] sm:$0xff]
        %v1574 = vld [vmem:[#allocation2 + $0x155] sm:$0xff]
        %v1575 = vld [vmem:[#allocation2 + $0x15d] sm:$0xff]
        %v1576 = vld [vmem:[#allocation2 + $0x165] sm:$0xff]
        %v1577 = vld [vmem:[#allocation2 + $0x16d] sm:$0xff]
        %v1578 = vld [vmem:[#allocation2 + $0x175] sm:$0xff]
        %v1579 = vld [vmem:[#allocation2 + $0x17d] sm:$0xff]
        %v1580 = vld [vmem:[#allocation2 + $0x185] sm:$0x1]
        %1593 = vrot.lane.b32.xlu0 %v1569, 96
        %v1594 = vpop.permute.xlu0 %1593
        %1595 = vrot.lane.b32.xlu0 %v1570, 96
        %v1596 = vpop.permute.xlu0 %1595
        %1597 = vrot.lane.b32.xlu0 %v1571, 96
        %v1598 = vpop.permute.xlu0 %1597
        %1599 = vrot.lane.b32.xlu0 %v1572, 96
        %v1600 = vpop.permute.xlu0 %1599
        %1601 = vrot.lane.b32.xlu0 %v1573, 96
        %v1602 = vpop.permute.xlu0 %1601
        %1603 = vrot.lane.b32.xlu0 %v1574, 96
        %v1604 = vpop.permute.xlu0 %1603
        %1605 = vrot.lane.b32.xlu0 %v1575, 96
        %v1606 = vpop.permute.xlu0 %1605
        %1607 = vrot.lane.b32.xlu0 %v1576, 96
        %v1608 = vpop.permute.xlu0 %1607
        %1609 = vrot.lane.b32.xlu0 %v1577, 96
        %v1610 = vpop.permute.xlu0 %1609
        %1611 = vrot.lane.b32.xlu0 %v1578, 96
        %v1612 = vpop.permute.xlu0 %1611
        %1613 = vrot.lane.b32.xlu0 %v1579, 96
        %v1614 = vpop.permute.xlu0 %1613
        %1615 = vrot.lane.b32.xlu0 %v1580, 96
        %v1616 = vpop.permute.xlu0 %1615
        %1629 = vst.msk [vmem:[#allocation3 + $0x8] sm:$0xff] %vm1387, %v1594
        %1630 = vst.msk [vmem:[#allocation3 + $0x28] sm:$0xff] %vm1387, %v1596
        %1631 = vst.msk [vmem:[#allocation3 + $0x48] sm:$0xff] %vm1387, %v1598
        %1632 = vst.msk [vmem:[#allocation3 + $0x68] sm:$0xff] %vm1387, %v1600
        %1633 = vst.msk [vmem:[#allocation3 + $0x88] sm:$0xff] %vm1387, %v1602
        %1634 = vst.msk [vmem:[#allocation3 + $0xa8] sm:$0xff] %vm1387, %v1604
        %1635 = vst.msk [vmem:[#allocation3 + $0xc8] sm:$0xff] %vm1387, %v1606
        %1636 = vst.msk [vmem:[#allocation3 + $0xe8] sm:$0xff] %vm1387, %v1608
        %1637 = vst.msk [vmem:[#allocation3 + $0x108] sm:$0xff] %vm1387, %v1610
        %1638 = vst.msk [vmem:[#allocation3 + $0x128] sm:$0xff] %vm1387, %v1612
        %1639 = vst.msk [vmem:[#allocation3 + $0x148] sm:$0xff] %vm1387, %v1614
        %1640 = vst.msk [vmem:[#allocation3 + $0x168] sm:$0x1] %vm1399, %v1616
        %v1641 = vld [vmem:[#allocation2 + $0xa] sm:$0xff]
        %v1642 = vld [vmem:[#allocation2 + $0x12] sm:$0xff]
        %v1643 = vld [vmem:[#allocation2 + $0x1a] sm:$0xff]
        %v1644 = vld [vmem:[#allocation2 + $0x22] sm:$0xff]
        %v1645 = vld [vmem:[#allocation2 + $0x2a] sm:$0xff]
        %v1646 = vld [vmem:[#allocation2 + $0x32] sm:$0xff]
        %v1647 = vld [vmem:[#allocation2 + $0x3a] sm:$0xff]
        %v1648 = vld [vmem:[#allocation2 + $0x42] sm:$0xff]
        %v1649 = vld [vmem:[#allocation2 + $0x4a] sm:$0xff]
        %v1650 = vld [vmem:[#allocation2 + $0x52] sm:$0xff]
        %v1651 = vld [vmem:[#allocation2 + $0x5a] sm:$0xff]
        %v1652 = vld [vmem:[#allocation2 + $0x62] sm:$0x1]
        %1653 = vst.msk [vmem:[#allocation3 + $0x10] sm:$0xff] %vm1103, %v1641
        %1654 = vst.msk [vmem:[#allocation3 + $0x30] sm:$0xff] %vm1103, %v1642
        %1655 = vst.msk [vmem:[#allocation3 + $0x50] sm:$0xff] %vm1103, %v1643
        %1656 = vst.msk [vmem:[#allocation3 + $0x70] sm:$0xff] %vm1103, %v1644
        %1657 = vst.msk [vmem:[#allocation3 + $0x90] sm:$0xff] %vm1103, %v1645
        %1658 = vst.msk [vmem:[#allocation3 + $0xb0] sm:$0xff] %vm1103, %v1646
        %1659 = vst.msk [vmem:[#allocation3 + $0xd0] sm:$0xff] %vm1103, %v1647
        %1660 = vst.msk [vmem:[#allocation3 + $0xf0] sm:$0xff] %vm1103, %v1648
        %1661 = vst.msk [vmem:[#allocation3 + $0x110] sm:$0xff] %vm1103, %v1649
        %1662 = vst.msk [vmem:[#allocation3 + $0x130] sm:$0xff] %vm1103, %v1650
        %1663 = vst.msk [vmem:[#allocation3 + $0x150] sm:$0xff] %vm1103, %v1651
        %1664 = vst.msk [vmem:[#allocation3 + $0x170] sm:$0x1] %vm1177, %v1652
        %v1665 = vld [vmem:[#allocation2 + $0x6e] sm:$0xff]
        %v1666 = vld [vmem:[#allocation2 + $0x76] sm:$0xff]
        %v1667 = vld [vmem:[#allocation2 + $0x7e] sm:$0xff]
        %v1668 = vld [vmem:[#allocation2 + $0x86] sm:$0xff]
        %v1669 = vld [vmem:[#allocation2 + $0x8e] sm:$0xff]
        %v1670 = vld [vmem:[#allocation2 + $0x96] sm:$0xff]
        %v1671 = vld [vmem:[#allocation2 + $0x9e] sm:$0xff]
        %v1672 = vld [vmem:[#allocation2 + $0xa6] sm:$0xff]
        %v1673 = vld [vmem:[#allocation2 + $0xae] sm:$0xff]
        %v1674 = vld [vmem:[#allocation2 + $0xb6] sm:$0xff]
        %v1675 = vld [vmem:[#allocation2 + $0xbe] sm:$0xff]
        %v1676 = vld [vmem:[#allocation2 + $0xc6] sm:$0x1]
        %1689 = vrot.lane.b32.xlu0 %v1665, 32
        %v1690 = vpop.permute.xlu0 %1689
        %1691 = vrot.lane.b32.xlu0 %v1666, 32
        %v1692 = vpop.permute.xlu0 %1691
        %1693 = vrot.lane.b32.xlu0 %v1667, 32
        %v1694 = vpop.permute.xlu0 %1693
        %1695 = vrot.lane.b32.xlu0 %v1668, 32
        %v1696 = vpop.permute.xlu0 %1695
        %1697 = vrot.lane.b32.xlu0 %v1669, 32
        %v1698 = vpop.permute.xlu0 %1697
        %1699 = vrot.lane.b32.xlu0 %v1670, 32
        %v1700 = vpop.permute.xlu0 %1699
        %1701 = vrot.lane.b32.xlu0 %v1671, 32
        %v1702 = vpop.permute.xlu0 %1701
        %1703 = vrot.lane.b32.xlu0 %v1672, 32
        %v1704 = vpop.permute.xlu0 %1703
        %1705 = vrot.lane.b32.xlu0 %v1673, 32
        %v1706 = vpop.permute.xlu0 %1705
        %1707 = vrot.lane.b32.xlu0 %v1674, 32
        %v1708 = vpop.permute.xlu0 %1707
        %1709 = vrot.lane.b32.xlu0 %v1675, 32
        %v1710 = vpop.permute.xlu0 %1709
        %1711 = vrot.lane.b32.xlu0 %v1676, 32
        %v1712 = vpop.permute.xlu0 %1711
        %1725 = vst.msk [vmem:[#allocation3 + $0x10] sm:$0xff] %vm1239, %v1690
        %1726 = vst.msk [vmem:[#allocation3 + $0x30] sm:$0xff] %vm1239, %v1692
        %1727 = vst.msk [vmem:[#allocation3 + $0x50] sm:$0xff] %vm1239, %v1694
        %1728 = vst.msk [vmem:[#allocation3 + $0x70] sm:$0xff] %vm1239, %v1696
        %1729 = vst.msk [vmem:[#allocation3 + $0x90] sm:$0xff] %vm1239, %v1698
        %1730 = vst.msk [vmem:[#allocation3 + $0xb0] sm:$0xff] %vm1239, %v1700
        %1731 = vst.msk [vmem:[#allocation3 + $0xd0] sm:$0xff] %vm1239, %v1702
        %1732 = vst.msk [vmem:[#allocation3 + $0xf0] sm:$0xff] %vm1239, %v1704
        %1733 = vst.msk [vmem:[#allocation3 + $0x110] sm:$0xff] %vm1239, %v1706
        %1734 = vst.msk [vmem:[#allocation3 + $0x130] sm:$0xff] %vm1239, %v1708
        %1735 = vst.msk [vmem:[#allocation3 + $0x150] sm:$0xff] %vm1239, %v1710
        %1736 = vst.msk [vmem:[#allocation3 + $0x170] sm:$0x1] %vm1251, %v1712
        %v1737 = vld [vmem:[#allocation2 + $0xb] sm:$0xff]
        %v1738 = vld [vmem:[#allocation2 + $0x13] sm:$0xff]
        %v1739 = vld [vmem:[#allocation2 + $0x1b] sm:$0xff]
        %v1740 = vld [vmem:[#allocation2 + $0x23] sm:$0xff]
        %v1741 = vld [vmem:[#allocation2 + $0x2b] sm:$0xff]
        %v1742 = vld [vmem:[#allocation2 + $0x33] sm:$0xff]
        %v1743 = vld [vmem:[#allocation2 + $0x3b] sm:$0xff]
        %v1744 = vld [vmem:[#allocation2 + $0x43] sm:$0xff]
        %v1745 = vld [vmem:[#allocation2 + $0x4b] sm:$0xff]
        %v1746 = vld [vmem:[#allocation2 + $0x53] sm:$0xff]
        %v1747 = vld [vmem:[#allocation2 + $0x5b] sm:$0xff]
        %v1748 = vld [vmem:[#allocation2 + $0x63] sm:$0x1]
        %1761 = vrot.lane.b32.xlu0 %v1737, 64
        %v1762 = vpop.permute.xlu0 %1761
        %1763 = vrot.lane.b32.xlu0 %v1738, 64
        %v1764 = vpop.permute.xlu0 %1763
        %1765 = vrot.lane.b32.xlu0 %v1739, 64
        %v1766 = vpop.permute.xlu0 %1765
        %1767 = vrot.lane.b32.xlu0 %v1740, 64
        %v1768 = vpop.permute.xlu0 %1767
        %1769 = vrot.lane.b32.xlu0 %v1741, 64
        %v1770 = vpop.permute.xlu0 %1769
        %1771 = vrot.lane.b32.xlu0 %v1742, 64
        %v1772 = vpop.permute.xlu0 %1771
        %1773 = vrot.lane.b32.xlu0 %v1743, 64
        %v1774 = vpop.permute.xlu0 %1773
        %1775 = vrot.lane.b32.xlu0 %v1744, 64
        %v1776 = vpop.permute.xlu0 %1775
        %1777 = vrot.lane.b32.xlu0 %v1745, 64
        %v1778 = vpop.permute.xlu0 %1777
        %1779 = vrot.lane.b32.xlu0 %v1746, 64
        %v1780 = vpop.permute.xlu0 %1779
        %1781 = vrot.lane.b32.xlu0 %v1747, 64
        %v1782 = vpop.permute.xlu0 %1781
        %1783 = vrot.lane.b32.xlu0 %v1748, 64
        %v1784 = vpop.permute.xlu0 %1783
        %1797 = vst.msk [vmem:[#allocation3 + $0x10] sm:$0xff] %vm1313, %v1762
        %1798 = vst.msk [vmem:[#allocation3 + $0x30] sm:$0xff] %vm1313, %v1764
        %1799 = vst.msk [vmem:[#allocation3 + $0x50] sm:$0xff] %vm1313, %v1766
        %1800 = vst.msk [vmem:[#allocation3 + $0x70] sm:$0xff] %vm1313, %v1768
        %1801 = vst.msk [vmem:[#allocation3 + $0x90] sm:$0xff] %vm1313, %v1770
        %1802 = vst.msk [vmem:[#allocation3 + $0xb0] sm:$0xff] %vm1313, %v1772
        %1803 = vst.msk [vmem:[#allocation3 + $0xd0] sm:$0xff] %vm1313, %v1774
        %1804 = vst.msk [vmem:[#allocation3 + $0xf0] sm:$0xff] %vm1313, %v1776
        %1805 = vst.msk [vmem:[#allocation3 + $0x110] sm:$0xff] %vm1313, %v1778
        %1806 = vst.msk [vmem:[#allocation3 + $0x130] sm:$0xff] %vm1313, %v1780
        %1807 = vst.msk [vmem:[#allocation3 + $0x150] sm:$0xff] %vm1313, %v1782
        %1808 = vst.msk [vmem:[#allocation3 + $0x170] sm:$0x1] %vm1325, %v1784
        %v1809 = vld [vmem:[#allocation2 + $0x6f] sm:$0xff]
        %v1810 = vld [vmem:[#allocation2 + $0x77] sm:$0xff]
        %v1811 = vld [vmem:[#allocation2 + $0x7f] sm:$0xff]
        %v1812 = vld [vmem:[#allocation2 + $0x87] sm:$0xff]
        %v1813 = vld [vmem:[#allocation2 + $0x8f] sm:$0xff]
        %v1814 = vld [vmem:[#allocation2 + $0x97] sm:$0xff]
        %v1815 = vld [vmem:[#allocation2 + $0x9f] sm:$0xff]
        %v1816 = vld [vmem:[#allocation2 + $0xa7] sm:$0xff]
        %v1817 = vld [vmem:[#allocation2 + $0xaf] sm:$0xff]
        %v1818 = vld [vmem:[#allocation2 + $0xb7] sm:$0xff]
        %v1819 = vld [vmem:[#allocation2 + $0xbf] sm:$0xff]
        %v1820 = vld [vmem:[#allocation2 + $0xc7] sm:$0x1]
        %1833 = vrot.lane.b32.xlu0 %v1809, 96
        %v1834 = vpop.permute.xlu0 %1833
        %1835 = vrot.lane.b32.xlu0 %v1810, 96
        %v1836 = vpop.permute.xlu0 %1835
        %1837 = vrot.lane.b32.xlu0 %v1811, 96
        %v1838 = vpop.permute.xlu0 %1837
        %1839 = vrot.lane.b32.xlu0 %v1812, 96
        %v1840 = vpop.permute.xlu0 %1839
        %1841 = vrot.lane.b32.xlu0 %v1813, 96
        %v1842 = vpop.permute.xlu0 %1841
        %1843 = vrot.lane.b32.xlu0 %v1814, 96
        %v1844 = vpop.permute.xlu0 %1843
        %1845 = vrot.lane.b32.xlu0 %v1815, 96
        %v1846 = vpop.permute.xlu0 %1845
        %1847 = vrot.lane.b32.xlu0 %v1816, 96
        %v1848 = vpop.permute.xlu0 %1847
        %1849 = vrot.lane.b32.xlu0 %v1817, 96
        %v1850 = vpop.permute.xlu0 %1849
        %1851 = vrot.lane.b32.xlu0 %v1818, 96
        %v1852 = vpop.permute.xlu0 %1851
        %1853 = vrot.lane.b32.xlu0 %v1819, 96
        %v1854 = vpop.permute.xlu0 %1853
        %1855 = vrot.lane.b32.xlu0 %v1820, 96
        %v1856 = vpop.permute.xlu0 %1855
        %1869 = vst.msk [vmem:[#allocation3 + $0x10] sm:$0xff] %vm1387, %v1834
        %1870 = vst.msk [vmem:[#allocation3 + $0x30] sm:$0xff] %vm1387, %v1836
        %1871 = vst.msk [vmem:[#allocation3 + $0x50] sm:$0xff] %vm1387, %v1838
        %1872 = vst.msk [vmem:[#allocation3 + $0x70] sm:$0xff] %vm1387, %v1840
        %1873 = vst.msk [vmem:[#allocation3 + $0x90] sm:$0xff] %vm1387, %v1842
        %1874 = vst.msk [vmem:[#allocation3 + $0xb0] sm:$0xff] %vm1387, %v1844
        %1875 = vst.msk [vmem:[#allocation3 + $0xd0] sm:$0xff] %vm1387, %v1846
        %1876 = vst.msk [vmem:[#allocation3 + $0xf0] sm:$0xff] %vm1387, %v1848
        %1877 = vst.msk [vmem:[#allocation3 + $0x110] sm:$0xff] %vm1387, %v1850
        %1878 = vst.msk [vmem:[#allocation3 + $0x130] sm:$0xff] %vm1387, %v1852
        %1879 = vst.msk [vmem:[#allocation3 + $0x150] sm:$0xff] %vm1387, %v1854
        %1880 = vst.msk [vmem:[#allocation3 + $0x170] sm:$0x1] %vm1399, %v1856
        %v1881 = vld [vmem:[#allocation2 + $0xd2] sm:$0xff]
        %v1882 = vld [vmem:[#allocation2 + $0xda] sm:$0xff]
        %v1883 = vld [vmem:[#allocation2 + $0xe2] sm:$0xff]
        %v1884 = vld [vmem:[#allocation2 + $0xea] sm:$0xff]
        %v1885 = vld [vmem:[#allocation2 + $0xf2] sm:$0xff]
        %v1886 = vld [vmem:[#allocation2 + $0xfa] sm:$0xff]
        %v1887 = vld [vmem:[#allocation2 + $0x102] sm:$0xff]
        %v1888 = vld [vmem:[#allocation2 + $0x10a] sm:$0xff]
        %v1889 = vld [vmem:[#allocation2 + $0x112] sm:$0xff]
        %v1890 = vld [vmem:[#allocation2 + $0x11a] sm:$0xff]
        %v1891 = vld [vmem:[#allocation2 + $0x122] sm:$0xff]
        %v1892 = vld [vmem:[#allocation2 + $0x12a] sm:$0x1]
        %1893 = vst.msk [vmem:[#allocation3 + $0x18] sm:$0xff] %vm1103, %v1881
        %1894 = vst.msk [vmem:[#allocation3 + $0x38] sm:$0xff] %vm1103, %v1882
        %1895 = vst.msk [vmem:[#allocation3 + $0x58] sm:$0xff] %vm1103, %v1883
        %1896 = vst.msk [vmem:[#allocation3 + $0x78] sm:$0xff] %vm1103, %v1884
        %1897 = vst.msk [vmem:[#allocation3 + $0x98] sm:$0xff] %vm1103, %v1885
        %1898 = vst.msk [vmem:[#allocation3 + $0xb8] sm:$0xff] %vm1103, %v1886
        %1899 = vst.msk [vmem:[#allocation3 + $0xd8] sm:$0xff] %vm1103, %v1887
        %1900 = vst.msk [vmem:[#allocation3 + $0xf8] sm:$0xff] %vm1103, %v1888
        %1901 = vst.msk [vmem:[#allocation3 + $0x118] sm:$0xff] %vm1103, %v1889
        %1902 = vst.msk [vmem:[#allocation3 + $0x138] sm:$0xff] %vm1103, %v1890
        %1903 = vst.msk [vmem:[#allocation3 + $0x158] sm:$0xff] %vm1103, %v1891
        %1904 = vst.msk [vmem:[#allocation3 + $0x178] sm:$0x1] %vm1177, %v1892
        %v1905 = vld [vmem:[#allocation2 + $0x136] sm:$0xff]
        %v1906 = vld [vmem:[#allocation2 + $0x13e] sm:$0xff]
        %v1907 = vld [vmem:[#allocation2 + $0x146] sm:$0xff]
        %v1908 = vld [vmem:[#allocation2 + $0x14e] sm:$0xff]
        %v1909 = vld [vmem:[#allocation2 + $0x156] sm:$0xff]
        %v1910 = vld [vmem:[#allocation2 + $0x15e] sm:$0xff]
        %v1911 = vld [vmem:[#allocation2 + $0x166] sm:$0xff]
        %v1912 = vld [vmem:[#allocation2 + $0x16e] sm:$0xff]
        %v1913 = vld [vmem:[#allocation2 + $0x176] sm:$0xff]
        %v1914 = vld [vmem:[#allocation2 + $0x17e] sm:$0xff]
        %v1915 = vld [vmem:[#allocation2 + $0x186] sm:$0xff]
        %v1916 = vld [vmem:[#allocation2 + $0x18e] sm:$0x1]
        %1929 = vrot.lane.b32.xlu0 %v1905, 32
        %v1930 = vpop.permute.xlu0 %1929
        %1931 = vrot.lane.b32.xlu0 %v1906, 32
        %v1932 = vpop.permute.xlu0 %1931
        %1933 = vrot.lane.b32.xlu0 %v1907, 32
        %v1934 = vpop.permute.xlu0 %1933
        %1935 = vrot.lane.b32.xlu0 %v1908, 32
        %v1936 = vpop.permute.xlu0 %1935
        %1937 = vrot.lane.b32.xlu0 %v1909, 32
        %v1938 = vpop.permute.xlu0 %1937
        %1939 = vrot.lane.b32.xlu0 %v1910, 32
        %v1940 = vpop.permute.xlu0 %1939
        %1941 = vrot.lane.b32.xlu0 %v1911, 32
        %v1942 = vpop.permute.xlu0 %1941
        %1943 = vrot.lane.b32.xlu0 %v1912, 32
        %v1944 = vpop.permute.xlu0 %1943
        %1945 = vrot.lane.b32.xlu0 %v1913, 32
        %v1946 = vpop.permute.xlu0 %1945
        %1947 = vrot.lane.b32.xlu0 %v1914, 32
        %v1948 = vpop.permute.xlu0 %1947
        %1949 = vrot.lane.b32.xlu0 %v1915, 32
        %v1950 = vpop.permute.xlu0 %1949
        %1951 = vrot.lane.b32.xlu0 %v1916, 32
        %v1952 = vpop.permute.xlu0 %1951
        %1965 = vst.msk [vmem:[#allocation3 + $0x18] sm:$0xff] %vm1239, %v1930
        %1966 = vst.msk [vmem:[#allocation3 + $0x38] sm:$0xff] %vm1239, %v1932
        %1967 = vst.msk [vmem:[#allocation3 + $0x58] sm:$0xff] %vm1239, %v1934
        %1968 = vst.msk [vmem:[#allocation3 + $0x78] sm:$0xff] %vm1239, %v1936
        %1969 = vst.msk [vmem:[#allocation3 + $0x98] sm:$0xff] %vm1239, %v1938
        %1970 = vst.msk [vmem:[#allocation3 + $0xb8] sm:$0xff] %vm1239, %v1940
        %1971 = vst.msk [vmem:[#allocation3 + $0xd8] sm:$0xff] %vm1239, %v1942
        %1972 = vst.msk [vmem:[#allocation3 + $0xf8] sm:$0xff] %vm1239, %v1944
        %1973 = vst.msk [vmem:[#allocation3 + $0x118] sm:$0xff] %vm1239, %v1946
        %1974 = vst.msk [vmem:[#allocation3 + $0x138] sm:$0xff] %vm1239, %v1948
        %1975 = vst.msk [vmem:[#allocation3 + $0x158] sm:$0xff] %vm1239, %v1950
        %1976 = vst.msk [vmem:[#allocation3 + $0x178] sm:$0x1] %vm1251, %v1952
        %v1977 = vld [vmem:[#allocation2 + $0xd3] sm:$0xff]
        %v1978 = vld [vmem:[#allocation2 + $0xdb] sm:$0xff]
        %v1979 = vld [vmem:[#allocation2 + $0xe3] sm:$0xff]
        %v1980 = vld [vmem:[#allocation2 + $0xeb] sm:$0xff]
        %v1981 = vld [vmem:[#allocation2 + $0xf3] sm:$0xff]
        %v1982 = vld [vmem:[#allocation2 + $0xfb] sm:$0xff]
        %v1983 = vld [vmem:[#allocation2 + $0x103] sm:$0xff]
        %v1984 = vld [vmem:[#allocation2 + $0x10b] sm:$0xff]
        %v1985 = vld [vmem:[#allocation2 + $0x113] sm:$0xff]
        %v1986 = vld [vmem:[#allocation2 + $0x11b] sm:$0xff]
        %v1987 = vld [vmem:[#allocation2 + $0x123] sm:$0xff]
        %v1988 = vld [vmem:[#allocation2 + $0x12b] sm:$0x1]
        %2001 = vrot.lane.b32.xlu0 %v1977, 64
        %v2002 = vpop.permute.xlu0 %2001
        %2003 = vrot.lane.b32.xlu0 %v1978, 64
        %v2004 = vpop.permute.xlu0 %2003
        %2005 = vrot.lane.b32.xlu0 %v1979, 64
        %v2006 = vpop.permute.xlu0 %2005
        %2007 = vrot.lane.b32.xlu0 %v1980, 64
        %v2008 = vpop.permute.xlu0 %2007
        %2009 = vrot.lane.b32.xlu0 %v1981, 64
        %v2010 = vpop.permute.xlu0 %2009
        %2011 = vrot.lane.b32.xlu0 %v1982, 64
        %v2012 = vpop.permute.xlu0 %2011
        %2013 = vrot.lane.b32.xlu0 %v1983, 64
        %v2014 = vpop.permute.xlu0 %2013
        %2015 = vrot.lane.b32.xlu0 %v1984, 64
        %v2016 = vpop.permute.xlu0 %2015
        %2017 = vrot.lane.b32.xlu0 %v1985, 64
        %v2018 = vpop.permute.xlu0 %2017
        %2019 = vrot.lane.b32.xlu0 %v1986, 64
        %v2020 = vpop.permute.xlu0 %2019
        %2021 = vrot.lane.b32.xlu0 %v1987, 64
        %v2022 = vpop.permute.xlu0 %2021
        %2023 = vrot.lane.b32.xlu0 %v1988, 64
        %v2024 = vpop.permute.xlu0 %2023
        %2037 = vst.msk [vmem:[#allocation3 + $0x18] sm:$0xff] %vm1313, %v2002
        %2038 = vst.msk [vmem:[#allocation3 + $0x38] sm:$0xff] %vm1313, %v2004
        %2039 = vst.msk [vmem:[#allocation3 + $0x58] sm:$0xff] %vm1313, %v2006
        %2040 = vst.msk [vmem:[#allocation3 + $0x78] sm:$0xff] %vm1313, %v2008
        %2041 = vst.msk [vmem:[#allocation3 + $0x98] sm:$0xff] %vm1313, %v2010
        %2042 = vst.msk [vmem:[#allocation3 + $0xb8] sm:$0xff] %vm1313, %v2012
        %2043 = vst.msk [vmem:[#allocation3 + $0xd8] sm:$0xff] %vm1313, %v2014
        %2044 = vst.msk [vmem:[#allocation3 + $0xf8] sm:$0xff] %vm1313, %v2016
        %2045 = vst.msk [vmem:[#allocation3 + $0x118] sm:$0xff] %vm1313, %v2018
        %2046 = vst.msk [vmem:[#allocation3 + $0x138] sm:$0xff] %vm1313, %v2020
        %2047 = vst.msk [vmem:[#allocation3 + $0x158] sm:$0xff] %vm1313, %v2022
        %2048 = vst.msk [vmem:[#allocation3 + $0x178] sm:$0x1] %vm1325, %v2024
        %v2049 = vld [vmem:[#allocation2 + $0x137] sm:$0xff]
        %v2050 = vld [vmem:[#allocation2 + $0x13f] sm:$0xff]
        %v2051 = vld [vmem:[#allocation2 + $0x147] sm:$0xff]
        %v2052 = vld [vmem:[#allocation2 + $0x14f] sm:$0xff]
        %v2053 = vld [vmem:[#allocation2 + $0x157] sm:$0xff]
        %v2054 = vld [vmem:[#allocation2 + $0x15f] sm:$0xff]
        %v2055 = vld [vmem:[#allocation2 + $0x167] sm:$0xff]
        %v2056 = vld [vmem:[#allocation2 + $0x16f] sm:$0xff]
        %v2057 = vld [vmem:[#allocation2 + $0x177] sm:$0xff]
        %v2058 = vld [vmem:[#allocation2 + $0x17f] sm:$0xff]
        %v2059 = vld [vmem:[#allocation2 + $0x187] sm:$0xff]
        %v2060 = vld [vmem:[#allocation2 + $0x18f] sm:$0x1]
        %2073 = vrot.lane.b32.xlu0 %v2049, 96
        %v2074 = vpop.permute.xlu0 %2073
        %2075 = vrot.lane.b32.xlu0 %v2050, 96
        %v2076 = vpop.permute.xlu0 %2075
        %2077 = vrot.lane.b32.xlu0 %v2051, 96
        %v2078 = vpop.permute.xlu0 %2077
        %2079 = vrot.lane.b32.xlu0 %v2052, 96
        %v2080 = vpop.permute.xlu0 %2079
        %2081 = vrot.lane.b32.xlu0 %v2053, 96
        %v2082 = vpop.permute.xlu0 %2081
        %2083 = vrot.lane.b32.xlu0 %v2054, 96
        %v2084 = vpop.permute.xlu0 %2083
        %2085 = vrot.lane.b32.xlu0 %v2055, 96
        %v2086 = vpop.permute.xlu0 %2085
        %2087 = vrot.lane.b32.xlu0 %v2056, 96
        %v2088 = vpop.permute.xlu0 %2087
        %2089 = vrot.lane.b32.xlu0 %v2057, 96
        %v2090 = vpop.permute.xlu0 %2089
        %2091 = vrot.lane.b32.xlu0 %v2058, 96
        %v2092 = vpop.permute.xlu0 %2091
        %2093 = vrot.lane.b32.xlu0 %v2059, 96
        %v2094 = vpop.permute.xlu0 %2093
        %2095 = vrot.lane.b32.xlu0 %v2060, 96
        %v2096 = vpop.permute.xlu0 %2095
        %2109 = vst.msk [vmem:[#allocation3 + $0x18] sm:$0xff] %vm1387, %v2074
        %2110 = vst.msk [vmem:[#allocation3 + $0x38] sm:$0xff] %vm1387, %v2076
        %2111 = vst.msk [vmem:[#allocation3 + $0x58] sm:$0xff] %vm1387, %v2078
        %2112 = vst.msk [vmem:[#allocation3 + $0x78] sm:$0xff] %vm1387, %v2080
        %2113 = vst.msk [vmem:[#allocation3 + $0x98] sm:$0xff] %vm1387, %v2082
        %2114 = vst.msk [vmem:[#allocation3 + $0xb8] sm:$0xff] %vm1387, %v2084
        %2115 = vst.msk [vmem:[#allocation3 + $0xd8] sm:$0xff] %vm1387, %v2086
        %2116 = vst.msk [vmem:[#allocation3 + $0xf8] sm:$0xff] %vm1387, %v2088
        %2117 = vst.msk [vmem:[#allocation3 + $0x118] sm:$0xff] %vm1387, %v2090
        %2118 = vst.msk [vmem:[#allocation3 + $0x138] sm:$0xff] %vm1387, %v2092
        %2119 = vst.msk [vmem:[#allocation3 + $0x158] sm:$0xff] %vm1387, %v2094
        %2120 = vst.msk [vmem:[#allocation3 + $0x178] sm:$0x1] %vm1399, %v2096
        %v2121 = vld [vmem:[#allocation3] sm:$0xff]
        %v2122 = vld [vmem:[#allocation3 + $0x8] sm:$0xff]
        %v2123 = vld [vmem:[#allocation3 + $0x10] sm:$0xff]
        %v2124 = vld [vmem:[#allocation3 + $0x18] sm:$0xff]
        %v2125 = vld [vmem:[#allocation3 + $0x20] sm:$0xff]
        %v2126 = vld [vmem:[#allocation3 + $0x28] sm:$0xff]
        %v2127 = vld [vmem:[#allocation3 + $0x30] sm:$0xff]
        %v2128 = vld [vmem:[#allocation3 + $0x38] sm:$0xff]
        %v2129 = vld [vmem:[#allocation3 + $0x40] sm:$0xff]
        %v2130 = vld [vmem:[#allocation3 + $0x48] sm:$0xff]
        %v2131 = vld [vmem:[#allocation3 + $0x50] sm:$0xff]
        %v2132 = vld [vmem:[#allocation3 + $0x58] sm:$0xff]
        %v2133 = vld [vmem:[#allocation3 + $0x60] sm:$0xff]
        %v2134 = vld [vmem:[#allocation3 + $0x68] sm:$0xff]
        %v2135 = vld [vmem:[#allocation3 + $0x70] sm:$0xff]
        %v2136 = vld [vmem:[#allocation3 + $0x78] sm:$0xff]
        %v2137 = vld [vmem:[#allocation3 + $0x80] sm:$0xff]
        %v2138 = vld [vmem:[#allocation3 + $0x88] sm:$0xff]
        %v2139 = vld [vmem:[#allocation3 + $0x90] sm:$0xff]
        %v2140 = vld [vmem:[#allocation3 + $0x98] sm:$0xff]
        %v2141 = vld [vmem:[#allocation3 + $0xa0] sm:$0xff]
        %v2142 = vld [vmem:[#allocation3 + $0xa8] sm:$0xff]
        %v2143 = vld [vmem:[#allocation3 + $0xb0] sm:$0xff]
        %v2144 = vld [vmem:[#allocation3 + $0xb8] sm:$0xff]
        %v2145 = vld [vmem:[#allocation3 + $0xc0] sm:$0xff]
        %v2146 = vld [vmem:[#allocation3 + $0xc8] sm:$0xff]
        %v2147 = vld [vmem:[#allocation3 + $0xd0] sm:$0xff]
        %v2148 = vld [vmem:[#allocation3 + $0xd8] sm:$0xff]
        %v2149 = vld [vmem:[#allocation3 + $0xe0] sm:$0xff]
        %v2150 = vld [vmem:[#allocation3 + $0xe8] sm:$0xff]
        %v2151 = vld [vmem:[#allocation3 + $0xf0] sm:$0xff]
        %v2152 = vld [vmem:[#allocation3 + $0xf8] sm:$0xff]
        %v2153 = vld [vmem:[#allocation3 + $0x100] sm:$0xff]
        %v2154 = vld [vmem:[#allocation3 + $0x108] sm:$0xff]
        %v2155 = vld [vmem:[#allocation3 + $0x110] sm:$0xff]
        %v2156 = vld [vmem:[#allocation3 + $0x118] sm:$0xff]
        %v2157 = vld [vmem:[#allocation3 + $0x120] sm:$0xff]
        %v2158 = vld [vmem:[#allocation3 + $0x128] sm:$0xff]
        %v2159 = vld [vmem:[#allocation3 + $0x130] sm:$0xff]
        %v2160 = vld [vmem:[#allocation3 + $0x138] sm:$0xff]
        %v2161 = vld [vmem:[#allocation3 + $0x140] sm:$0xff]
        %v2162 = vld [vmem:[#allocation3 + $0x148] sm:$0xff]
        %v2163 = vld [vmem:[#allocation3 + $0x150] sm:$0xff]
        %v2164 = vld [vmem:[#allocation3 + $0x158] sm:$0xff]
        %v2165 = vld [vmem:[#allocation3 + $0x160] sm:$0x1]
        %v2166 = vld [vmem:[#allocation3 + $0x168] sm:$0x1]
        %v2167 = vld [vmem:[#allocation3 + $0x170] sm:$0x1]
        %v2168 = vld [vmem:[#allocation3 + $0x178] sm:$0x1]
        %v2169 = vpack.c.bf16 %v2125, %v2121
        %v2170 = vpack.c.bf16 %v2126, %v2122
        %v2171 = vpack.c.bf16 %v2127, %v2123
        %v2172 = vpack.c.bf16 %v2128, %v2124
        %v2173 = vpack.c.bf16 %v2133, %v2129
        %v2174 = vpack.c.bf16 %v2134, %v2130
        %v2175 = vpack.c.bf16 %v2135, %v2131
        %v2176 = vpack.c.bf16 %v2136, %v2132
        %v2177 = vpack.c.bf16 %v2141, %v2137
        %v2178 = vpack.c.bf16 %v2142, %v2138
        %v2179 = vpack.c.bf16 %v2143, %v2139
        %v2180 = vpack.c.bf16 %v2144, %v2140
        %v2181 = vpack.c.bf16 %v2149, %v2145
        %v2182 = vpack.c.bf16 %v2150, %v2146
        %v2183 = vpack.c.bf16 %v2151, %v2147
        %v2184 = vpack.c.bf16 %v2152, %v2148
        %v2185 = vpack.c.bf16 %v2157, %v2153
        %v2186 = vpack.c.bf16 %v2158, %v2154
        %v2187 = vpack.c.bf16 %v2159, %v2155
        %v2188 = vpack.c.bf16 %v2160, %v2156
        %v2189 = vpack.c.bf16 %v2165, %v2161
        %v2190 = vpack.c.bf16 %v2166, %v2162
        %v2191 = vpack.c.bf16 %v2167, %v2163
        %v2192 = vpack.c.bf16 %v2168, %v2164
        %v2193 = vld [vmem:[%s3] sm:$0xf]
        %v2194 = vld [vmem:[%s3 + $0x4] sm:$0xf]
        %v2195 = vld [vmem:[%s3 + $0x8] sm:$0xf]
        %v2196 = vld [vmem:[%s3 + $0xc] sm:$0xf]
        %v2197 = vld [vmem:[%s3 + $0x10] sm:$0xf]
        %v2198 = vld [vmem:[%s3 + $0x14] sm:$0xf]
        %v2199 = vld [vmem:[%s3 + $0x18] sm:$0xf]
        %v2200 = vld [vmem:[%s3 + $0x1c] sm:$0xf]
        %v2201 = vld [vmem:[%s3 + $0x20] sm:$0xf]
        %v2202 = vld [vmem:[%s3 + $0x24] sm:$0xf]
        %v2203 = vld [vmem:[%s3 + $0x28] sm:$0xf]
        %v2204 = vld [vmem:[%s3 + $0x2c] sm:$0xf]
        %v2205 = vld [vmem:[%s3 + $0x30] sm:$0xf]
        %v2206 = vld [vmem:[%s3 + $0x34] sm:$0xf]
        %v2207 = vld [vmem:[%s3 + $0x38] sm:$0xf]
        %v2208 = vld [vmem:[%s3 + $0x3c] sm:$0xf]
        %v2209 = vld [vmem:[%s3 + $0x40] sm:$0xf]
        %v2210 = vld [vmem:[%s3 + $0x44] sm:$0xf]
        %v2211 = vld [vmem:[%s3 + $0x48] sm:$0xf]
        %v2212 = vld [vmem:[%s3 + $0x4c] sm:$0xf]
        %v2213 = vld [vmem:[%s3 + $0x50] sm:$0xf]
        %v2214 = vld [vmem:[%s3 + $0x54] sm:$0xf]
        %v2215 = vld [vmem:[%s3 + $0x58] sm:$0xf]
        %v2216 = vld [vmem:[%s3 + $0x5c] sm:$0xf]
        %v2217 = vld [vmem:[%s3 + $0x60] sm:$0xf]
        %v2218 = vld [vmem:[%s3 + $0x64] sm:$0xf]
        %v2219 = vld [vmem:[%s3 + $0x68] sm:$0xf]
        %v2220 = vld [vmem:[%s3 + $0x6c] sm:$0xf]
        %v2221 = vld [vmem:[%s3 + $0x70] sm:$0xf]
        %v2222 = vld [vmem:[%s3 + $0x74] sm:$0xf]
        %v2223 = vld [vmem:[%s3 + $0x78] sm:$0xf]
        %v2224 = vld [vmem:[%s3 + $0x7c] sm:$0xf]
        %v2225 = vld [vmem:[%s3 + $0x80] sm:$0xf]
        %v2226 = vld [vmem:[%s3 + $0x84] sm:$0xf]
        %v2227 = vld [vmem:[%s3 + $0x88] sm:$0xf]
        %v2228 = vld [vmem:[%s3 + $0x8c] sm:$0xf]
        %v2229 = vld [vmem:[%s3 + $0x90] sm:$0xf]
        %v2230 = vld [vmem:[%s3 + $0x94] sm:$0xf]
        %v2231 = vld [vmem:[%s3 + $0x98] sm:$0xf]
        %v2232 = vld [vmem:[%s3 + $0x9c] sm:$0xf]
        %v2233 = vld [vmem:[%s3 + $0xa0] sm:$0xf]
        %v2234 = vld [vmem:[%s3 + $0xa4] sm:$0xf]
        %v2235 = vld [vmem:[%s3 + $0xa8] sm:$0xf]
        %v2236 = vld [vmem:[%s3 + $0xac] sm:$0xf]
        %v2237 = vld [vmem:[%s3 + $0xb0] sm:$0xf]
        %v2238 = vld [vmem:[%s3 + $0xb4] sm:$0xf]
        %v2239 = vld [vmem:[%s3 + $0xb8] sm:$0xf]
        %v2240 = vld [vmem:[%s3 + $0xbc] sm:$0xf]
        %v2241 = vld [vmem:[%s3 + $0xc0] sm:$0xf]
        %v2242 = vld [vmem:[%s3 + $0xc4] sm:$0xf]
        %v2243 = vld [vmem:[%s3 + $0xc8] sm:$0xf]
        %v2244 = vld [vmem:[%s3 + $0xcc] sm:$0xf]
        %v2245 = vld [vmem:[%s3 + $0xd0] sm:$0xf]
        %v2246 = vld [vmem:[%s3 + $0xd4] sm:$0xf]
        %v2247 = vld [vmem:[%s3 + $0xd8] sm:$0xf]
        %v2248 = vld [vmem:[%s3 + $0xdc] sm:$0xf]
        %v2249 = vld [vmem:[%s3 + $0xe0] sm:$0xf]
        %v2250 = vld [vmem:[%s3 + $0xe4] sm:$0xf]
        %v2251 = vld [vmem:[%s3 + $0xe8] sm:$0xf]
        %v2252 = vld [vmem:[%s3 + $0xec] sm:$0xf]
        %v2253 = vld [vmem:[%s3 + $0xf0] sm:$0xf]
        %v2254 = vld [vmem:[%s3 + $0xf4] sm:$0xf]
        %v2255 = vld [vmem:[%s3 + $0xf8] sm:$0xf]
        %v2256 = vld [vmem:[%s3 + $0xfc] sm:$0xf]
        %v2257 = vld [vmem:[%s4] sm:$0x1]
        %v2259 = vlaneseq
        %v2260 = vshrl.u32 %v2259, 7
        %v2261 = vsub.s32 0, %v2260
        %v2262 = vrot.slane %v2257, %v2261
        %v2328 = vunpack.c.l.b16 %v2193
        %v2329 = vunpack.c.l.b16 %v2194
        %v2330 = vunpack.c.l.b16 %v2195
        %v2331 = vunpack.c.l.b16 %v2196
        %v2332 = vunpack.c.l.b16 %v2197
        %v2333 = vunpack.c.l.b16 %v2198
        %v2334 = vunpack.c.l.b16 %v2199
        %v2335 = vunpack.c.l.b16 %v2200
        %v2336 = vunpack.c.l.b16 %v2201
        %v2337 = vunpack.c.l.b16 %v2202
        %v2338 = vunpack.c.l.b16 %v2203
        %v2339 = vunpack.c.l.b16 %v2204
        %v2340 = vunpack.c.l.b16 %v2205
        %v2341 = vunpack.c.l.b16 %v2206
        %v2342 = vunpack.c.l.b16 %v2207
        %v2343 = vunpack.c.l.b16 %v2208
        %v2344 = vunpack.c.l.b16 %v2209
        %v2345 = vunpack.c.l.b16 %v2210
        %v2346 = vunpack.c.l.b16 %v2211
        %v2347 = vunpack.c.l.b16 %v2212
        %v2348 = vunpack.c.l.b16 %v2213
        %v2349 = vunpack.c.l.b16 %v2214
        %v2350 = vunpack.c.l.b16 %v2215
        %v2351 = vunpack.c.l.b16 %v2216
        %v2352 = vunpack.c.l.b16 %v2217
        %v2353 = vunpack.c.l.b16 %v2218
        %v2354 = vunpack.c.l.b16 %v2219
        %v2355 = vunpack.c.l.b16 %v2220
        %v2356 = vunpack.c.l.b16 %v2221
        %v2357 = vunpack.c.l.b16 %v2222
        %v2358 = vunpack.c.l.b16 %v2223
        %v2359 = vunpack.c.l.b16 %v2224
        %v2360 = vunpack.c.l.b16 %v2225
        %v2361 = vunpack.c.l.b16 %v2226
        %v2362 = vunpack.c.l.b16 %v2227
        %v2363 = vunpack.c.l.b16 %v2228
        %v2364 = vunpack.c.l.b16 %v2229
        %v2365 = vunpack.c.l.b16 %v2230
        %v2366 = vunpack.c.l.b16 %v2231
        %v2367 = vunpack.c.l.b16 %v2232
        %v2368 = vunpack.c.l.b16 %v2233
        %v2369 = vunpack.c.l.b16 %v2234
        %v2370 = vunpack.c.l.b16 %v2235
        %v2371 = vunpack.c.l.b16 %v2236
        %v2372 = vunpack.c.l.b16 %v2237
        %v2373 = vunpack.c.l.b16 %v2238
        %v2374 = vunpack.c.l.b16 %v2239
        %v2375 = vunpack.c.l.b16 %v2240
        %v2376 = vunpack.c.l.b16 %v2241
        %v2377 = vunpack.c.l.b16 %v2242
        %v2378 = vunpack.c.l.b16 %v2243
        %v2379 = vunpack.c.l.b16 %v2244
        %v2380 = vunpack.c.l.b16 %v2245
        %v2381 = vunpack.c.l.b16 %v2246
        %v2382 = vunpack.c.l.b16 %v2247
        %v2383 = vunpack.c.l.b16 %v2248
        %v2384 = vunpack.c.l.b16 %v2249
        %v2385 = vunpack.c.l.b16 %v2250
        %v2386 = vunpack.c.l.b16 %v2251
        %v2387 = vunpack.c.l.b16 %v2252
        %v2388 = vunpack.c.l.b16 %v2253
        %v2389 = vunpack.c.l.b16 %v2254
        %v2390 = vunpack.c.l.b16 %v2255
        %v2391 = vunpack.c.l.b16 %v2256
        %v2392 = vpack.c.b16 %v2329, %v2328
        %v2393 = vpack.c.b16 %v2331, %v2330
        %v2394 = vpack.c.b16 %v2333, %v2332
        %v2395 = vpack.c.b16 %v2335, %v2334
        %v2396 = vpack.c.b16 %v2337, %v2336
        %v2397 = vpack.c.b16 %v2339, %v2338
        %v2398 = vpack.c.b16 %v2341, %v2340
        %v2399 = vpack.c.b16 %v2343, %v2342
        %v2400 = vpack.c.b16 %v2345, %v2344
        %v2401 = vpack.c.b16 %v2347, %v2346
        %v2402 = vpack.c.b16 %v2349, %v2348
        %v2403 = vpack.c.b16 %v2351, %v2350
        %v2404 = vpack.c.b16 %v2353, %v2352
        %v2405 = vpack.c.b16 %v2355, %v2354
        %v2406 = vpack.c.b16 %v2357, %v2356
        %v2407 = vpack.c.b16 %v2359, %v2358
        %v2408 = vpack.c.b16 %v2361, %v2360
        %v2409 = vpack.c.b16 %v2363, %v2362
        %v2410 = vpack.c.b16 %v2365, %v2364
        %v2411 = vpack.c.b16 %v2367, %v2366
        %v2412 = vpack.c.b16 %v2369, %v2368
        %v2413 = vpack.c.b16 %v2371, %v2370
        %v2414 = vpack.c.b16 %v2373, %v2372
        %v2415 = vpack.c.b16 %v2375, %v2374
        %v2416 = vpack.c.b16 %v2377, %v2376
        %v2417 = vpack.c.b16 %v2379, %v2378
        %v2418 = vpack.c.b16 %v2381, %v2380
        %v2419 = vpack.c.b16 %v2383, %v2382
        %v2420 = vpack.c.b16 %v2385, %v2384
        %v2421 = vpack.c.b16 %v2387, %v2386
        %v2422 = vpack.c.b16 %v2389, %v2388
        %v2423 = vpack.c.b16 %v2391, %v2390
        %2456 = vmatprep.subr.bf16.mxu0 0
        %2457 = vmatpush1.bf16.msra.mxu0 %v2392
        %2458 = vmatprep.subr.bf16.mxu0 0
        %2459 = vmatpush1.bf16.msra.mxu0 %v2393
        %2460 = vmatprep.subr.bf16.mxu0 0
        %2461 = vmatpush1.bf16.msra.mxu0 %v2394
        %2462 = vmatprep.subr.bf16.mxu0 0
        %2463 = vmatpush1.bf16.msra.mxu0 %v2395
        %2464 = vmatprep.subr.bf16.mxu0 0
        %2465 = vmatpush1.bf16.msra.mxu0 %v2396
        %2466 = vmatprep.subr.bf16.mxu0 0
        %2467 = vmatpush1.bf16.msra.mxu0 %v2397
        %2468 = vmatprep.subr.bf16.mxu0 0
        %2469 = vmatpush1.bf16.msra.mxu0 %v2398
        %2470 = vmatprep.subr.bf16.mxu0 0
        %2471 = vmatpush1.bf16.msra.mxu0 %v2399
        %2472 = vmatprep.subr.bf16.mxu0 0
        %2473 = vmatpush1.bf16.msra.mxu0 %v2400
        %2474 = vmatprep.subr.bf16.mxu0 0
        %2475 = vmatpush1.bf16.msra.mxu0 %v2401
        %2476 = vmatprep.subr.bf16.mxu0 0
        %2477 = vmatpush1.bf16.msra.mxu0 %v2402
        %2478 = vmatprep.subr.bf16.mxu0 0
        %2479 = vmatpush1.bf16.msra.mxu0 %v2403
        %2480 = vmatprep.subr.bf16.mxu0 0
        %2481 = vmatpush1.bf16.msra.mxu0 %v2404
        %2482 = vmatprep.subr.bf16.mxu0 0
        %2483 = vmatpush1.bf16.msra.mxu0 %v2405
        %2484 = vmatprep.subr.bf16.mxu0 0
        %2485 = vmatpush1.bf16.msra.mxu0 %v2406
        %2486 = vmatprep.subr.bf16.mxu0 0
        %2487 = vmatpush1.bf16.msra.mxu0 %v2407
        %2488 = vmatprep.mubr.bf16.mxu0 %v2170
        %2489 = vmatmul.mubr.bf16.gmra.mrb[0].mxu0 %v2169
        %v2490 = vpop.f32.mrb[0].mxu0
        %v2491 = vadd.f32 %v2262, %v2490
        %v2492 = vpop.f32.mrb[0].mxu0
        %v2493 = vpop.f32.mrb[0].mxu0
        %v2494 = vadd.f32 %v2262, %v2493
        %v2495 = vpop.f32.mrb[0].mxu0
        %2496 = vmatprep.mubr.bf16.mxu0 %v2174
        %2497 = vmatmul.mubr.bf16.gmra.mrb[0].mxu0 %v2173
        %v2498 = vpop.f32.mrb[0].mxu0
        %v2499 = vadd.f32 %v2262, %v2498
        %v2500 = vpop.f32.mrb[0].mxu0
        %v2501 = vpop.f32.mrb[0].mxu0
        %v2502 = vadd.f32 %v2262, %v2501
        %v2503 = vpop.f32.mrb[0].mxu0
        %2504 = vmatprep.mubr.bf16.mxu0 %v2178
        %2505 = vmatmul.mubr.bf16.gmra.mrb[0].mxu0 %v2177
        %v2506 = vpop.f32.mrb[0].mxu0
        %v2507 = vadd.f32 %v2262, %v2506
        %v2508 = vpop.f32.mrb[0].mxu0
        %v2509 = vpop.f32.mrb[0].mxu0
        %v2510 = vadd.f32 %v2262, %v2509
        %v2511 = vpop.f32.mrb[0].mxu0
        %2512 = vmatprep.mubr.bf16.mxu0 %v2182
        %2513 = vmatmul.mubr.bf16.gmra.mrb[0].mxu0 %v2181
        %v2514 = vpop.f32.mrb[0].mxu0
        %v2515 = vadd.f32 %v2262, %v2514
        %v2516 = vpop.f32.mrb[0].mxu0
        %v2517 = vpop.f32.mrb[0].mxu0
        %v2518 = vadd.f32 %v2262, %v2517
        %v2519 = vpop.f32.mrb[0].mxu0
        %2520 = vmatprep.mubr.bf16.mxu0 %v2186
        %2521 = vmatmul.mubr.bf16.gmra.mrb[0].mxu0 %v2185
        %v2522 = vpop.f32.mrb[0].mxu0
        %v2523 = vadd.f32 %v2262, %v2522
        %v2524 = vpop.f32.mrb[0].mxu0
        %v2525 = vpop.f32.mrb[0].mxu0
        %v2526 = vadd.f32 %v2262, %v2525
        %v2527 = vpop.f32.mrb[0].mxu0
        %2528 = vmatprep.mubr.bf16.mxu0 %v2190
        %2529 = vmatmul.mubr.bf16.gmra.mrb[0].mxu0 %v2189
        %v2530 = vpop.f32.mrb[0].mxu0
        %v2531 = vadd.f32 %v2262, %v2530
        %v2532 = vpop.f32.mrb[0].mxu0
        %v2533 = vpop.f32.mrb[0].mxu0
        %v2534 = vadd.f32 %v2262, %v2533
        %v2535 = vpop.f32.mrb[0].mxu0
        %2536 = vdwg.mxu0
        %2537 = vmatprep.subr.bf16.mxu0 0
        %2538 = vmatpush1.bf16.msra.mxu0 %v2408
        %2539 = vmatprep.subr.bf16.mxu0 0
        %2540 = vmatpush1.bf16.msra.mxu0 %v2409
        %2541 = vmatprep.subr.bf16.mxu0 0
        %2542 = vmatpush1.bf16.msra.mxu0 %v2410
        %2543 = vmatprep.subr.bf16.mxu0 0
        %2544 = vmatpush1.bf16.msra.mxu0 %v2411
        %2545 = vmatprep.subr.bf16.mxu0 0
        %2546 = vmatpush1.bf16.msra.mxu0 %v2412
        %2547 = vmatprep.subr.bf16.mxu0 0
        %2548 = vmatpush1.bf16.msra.mxu0 %v2413
        %2549 = vmatprep.subr.bf16.mxu0 0
        %2550 = vmatpush1.bf16.msra.mxu0 %v2414
        %2551 = vmatprep.subr.bf16.mxu0 0
        %2552 = vmatpush1.bf16.msra.mxu0 %v2415
        %2553 = vmatprep.subr.bf16.mxu0 0
        %2554 = vmatpush1.bf16.msra.mxu0 %v2416
        %2555 = vmatprep.subr.bf16.mxu0 0
        %2556 = vmatpush1.bf16.msra.mxu0 %v2417
        %2557 = vmatprep.subr.bf16.mxu0 0
        %2558 = vmatpush1.bf16.msra.mxu0 %v2418
        %2559 = vmatprep.subr.bf16.mxu0 0
        %2560 = vmatpush1.bf16.msra.mxu0 %v2419
        %2561 = vmatprep.subr.bf16.mxu0 0
        %2562 = vmatpush1.bf16.msra.mxu0 %v2420
        %2563 = vmatprep.subr.bf16.mxu0 0
        %2564 = vmatpush1.bf16.msra.mxu0 %v2421
        %2565 = vmatprep.subr.bf16.mxu0 0
        %2566 = vmatpush1.bf16.msra.mxu0 %v2422
        %2567 = vmatprep.subr.bf16.mxu0 0
        %2568 = vmatpush1.bf16.msra.mxu0 %v2423
        %2569 = vmatprep.mubr.bf16.mxu0 %v2172
        %2570 = vmatmul.mubr.bf16.gmra.mrb[0].mxu0 %v2171
        %v2571 = vpop.f32.mrb[0].mxu0
        %v2572 = vadd.f32 %v2491, %v2571
        %v2573 = vpop.f32.mrb[0].mxu0
        %v2574 = vpop.f32.mrb[0].mxu0
        %v2575 = vadd.f32 %v2494, %v2574
        %v2576 = vpop.f32.mrb[0].mxu0
        %2577 = vmatprep.mubr.bf16.mxu0 %v2176
        %2578 = vmatmul.mubr.bf16.gmra.mrb[0].mxu0 %v2175
        %v2579 = vpop.f32.mrb[0].mxu0
        %v2580 = vadd.f32 %v2499, %v2579
        %v2581 = vpop.f32.mrb[0].mxu0
        %v2582 = vpop.f32.mrb[0].mxu0
        %v2583 = vadd.f32 %v2502, %v2582
        %v2584 = vpop.f32.mrb[0].mxu0
        %2585 = vmatprep.mubr.bf16.mxu0 %v2180
        %2586 = vmatmul.mubr.bf16.gmra.mrb[0].mxu0 %v2179
        %v2587 = vpop.f32.mrb[0].mxu0
        %v2588 = vadd.f32 %v2507, %v2587
        %v2589 = vpop.f32.mrb[0].mxu0
        %v2590 = vpop.f32.mrb[0].mxu0
        %v2591 = vadd.f32 %v2510, %v2590
        %v2592 = vpop.f32.mrb[0].mxu0
        %2593 = vmatprep.mubr.bf16.mxu0 %v2184
        %2594 = vmatmul.mubr.bf16.gmra.mrb[0].mxu0 %v2183
        %v2595 = vpop.f32.mrb[0].mxu0
        %v2596 = vadd.f32 %v2515, %v2595
        %v2597 = vpop.f32.mrb[0].mxu0
        %v2598 = vpop.f32.mrb[0].mxu0
        %v2599 = vadd.f32 %v2518, %v2598
        %v2600 = vpop.f32.mrb[0].mxu0
        %2601 = vmatprep.mubr.bf16.mxu0 %v2188
        %2602 = vmatmul.mubr.bf16.gmra.mrb[0].mxu0 %v2187
        %v2603 = vpop.f32.mrb[0].mxu0
        %v2604 = vadd.f32 %v2523, %v2603
        %v2605 = vpop.f32.mrb[0].mxu0
        %v2606 = vpop.f32.mrb[0].mxu0
        %v2607 = vadd.f32 %v2526, %v2606
        %v2608 = vpop.f32.mrb[0].mxu0
        %2609 = vmatprep.mubr.bf16.mxu0 %v2192
        %2610 = vmatmul.mubr.bf16.gmra.mrb[0].mxu0 %v2191
        %v2611 = vpop.f32.mrb[0].mxu0
        %v2612 = vadd.f32 %v2531, %v2611
        %v2613 = vpop.f32.mrb[0].mxu0
        %v2614 = vpop.f32.mrb[0].mxu0
        %v2615 = vadd.f32 %v2534, %v2614
        %v2616 = vpop.f32.mrb[0].mxu0
        %2617 = vdwg.mxu0
        %v2618 = vmax.f32 %v2572, 0.0
        %v2619 = vmax.f32 %v2575, 0.0
        %v2620 = vmax.f32 %v2580, 0.0
        %v2621 = vmax.f32 %v2583, 0.0
        %v2622 = vmax.f32 %v2588, 0.0
        %v2623 = vmax.f32 %v2591, 0.0
        %v2624 = vmax.f32 %v2596, 0.0
        %v2625 = vmax.f32 %v2599, 0.0
        %v2626 = vmax.f32 %v2604, 0.0
        %v2627 = vmax.f32 %v2607, 0.0
        %v2628 = vmax.f32 %v2612, 0.0
        %v2629 = vmax.f32 %v2615, 0.0
        %vm2630 = vcmask 523264
        %2631 = vst.msk [vmem:[#allocation4] sm:$0xff] %vm2630, %v2618
        %2632 = vst.msk [vmem:[#allocation4 + $0x8] sm:$0xff] %vm2630, %v2619
        %2633 = vst.msk [vmem:[#allocation4 + $0x10] sm:$0xff] %vm2630, %v2620
        %2634 = vst.msk [vmem:[#allocation4 + $0x18] sm:$0xff] %vm2630, %v2621
        %2635 = vst.msk [vmem:[#allocation4 + $0x20] sm:$0xff] %vm2630, %v2622
        %2636 = vst.msk [vmem:[#allocation4 + $0x28] sm:$0xff] %vm2630, %v2623
        %2637 = vst.msk [vmem:[#allocation4 + $0x30] sm:$0xff] %vm2630, %v2624
        %2638 = vst.msk [vmem:[#allocation4 + $0x38] sm:$0xff] %vm2630, %v2625
        %2639 = vst.msk [vmem:[#allocation4 + $0x40] sm:$0xff] %vm2630, %v2626
        %2640 = vst.msk [vmem:[#allocation4 + $0x48] sm:$0xff] %vm2630, %v2627
        %2641 = vst.msk [vmem:[#allocation4 + $0x50] sm:$0xff] %vm2630, %v2628
        %vm2642 = vcmask 516096
        %2643 = vst.msk [vmem:[#allocation4 + $0x58] sm:$0x1] %vm2642, %v2629
        %v2644 = vld [vmem:[#allocation4] sm:$0xff]
        %v2645 = vld [vmem:[#allocation4 + $0x8] sm:$0xff]
        %v2646 = vld [vmem:[#allocation4 + $0x10] sm:$0xff]
        %v2647 = vld [vmem:[#allocation4 + $0x18] sm:$0xff]
        %v2648 = vld [vmem:[#allocation4 + $0x20] sm:$0xff]
        %v2649 = vld [vmem:[#allocation4 + $0x28] sm:$0xff]
        %v2650 = vld [vmem:[#allocation4 + $0x30] sm:$0xff]
        %v2651 = vld [vmem:[#allocation4 + $0x38] sm:$0xff]
        %v2652 = vld [vmem:[#allocation4 + $0x40] sm:$0x7]
        %2653 = vst.msk [vmem:[#allocation5] sm:$0xff] %vm2630, %v2644
        %2654 = vst.msk [vmem:[#allocation5 + $0x28] sm:$0xff] %vm2630, %v2645
        %2655 = vst.msk [vmem:[#allocation5 + $0x50] sm:$0xff] %vm2630, %v2646
        %2656 = vst.msk [vmem:[#allocation5 + $0x78] sm:$0xff] %vm2630, %v2647
        %2657 = vst.msk [vmem:[#allocation5 + $0xa0] sm:$0xff] %vm2630, %v2648
        %2658 = vst.msk [vmem:[#allocation5 + $0xc8] sm:$0xff] %vm2630, %v2649
        %2659 = vst.msk [vmem:[#allocation5 + $0xf0] sm:$0xff] %vm2630, %v2650
        %2660 = vst.msk [vmem:[#allocation5 + $0x118] sm:$0xff] %vm2630, %v2651
        %vm2661 = vcmask 518144
        %2662 = vst.msk [vmem:[#allocation5 + $0x140] sm:$0x7] %vm2661, %v2652
        %v2663 = vld [vmem:[#allocation4 + $0x1] sm:$0xff]
        %v2664 = vld [vmem:[#allocation4 + $0x9] sm:$0xff]
        %v2665 = vld [vmem:[#allocation4 + $0x11] sm:$0xff]
        %v2666 = vld [vmem:[#allocation4 + $0x19] sm:$0xff]
        %v2667 = vld [vmem:[#allocation4 + $0x21] sm:$0xff]
        %v2668 = vld [vmem:[#allocation4 + $0x29] sm:$0xff]
        %v2669 = vld [vmem:[#allocation4 + $0x31] sm:$0xff]
        %v2670 = vld [vmem:[#allocation4 + $0x39] sm:$0xff]
        %v2671 = vld [vmem:[#allocation4 + $0x41] sm:$0x7]
        %2681 = vrot.lane.b32.xlu0 %v2663, 64
        %v2682 = vpop.permute.xlu0 %2681
        %2683 = vrot.lane.b32.xlu0 %v2664, 64
        %v2684 = vpop.permute.xlu0 %2683
        %2685 = vrot.lane.b32.xlu0 %v2665, 64
        %v2686 = vpop.permute.xlu0 %2685
        %2687 = vrot.lane.b32.xlu0 %v2666, 64
        %v2688 = vpop.permute.xlu0 %2687
        %2689 = vrot.lane.b32.xlu0 %v2667, 64
        %v2690 = vpop.permute.xlu0 %2689
        %2691 = vrot.lane.b32.xlu0 %v2668, 64
        %v2692 = vpop.permute.xlu0 %2691
        %2693 = vrot.lane.b32.xlu0 %v2669, 64
        %v2694 = vpop.permute.xlu0 %2693
        %2695 = vrot.lane.b32.xlu0 %v2670, 64
        %v2696 = vpop.permute.xlu0 %2695
        %2697 = vrot.lane.b32.xlu0 %v2671, 64
        %v2698 = vpop.permute.xlu0 %2697
        %vm2708 = vcmask 1048064
        %2709 = vst.msk [vmem:[#allocation5] sm:$0xff] %vm2708, %v2682
        %2710 = vst.msk [vmem:[#allocation5 + $0x28] sm:$0xff] %vm2708, %v2684
        %2711 = vst.msk [vmem:[#allocation5 + $0x50] sm:$0xff] %vm2708, %v2686
        %2712 = vst.msk [vmem:[#allocation5 + $0x78] sm:$0xff] %vm2708, %v2688
        %2713 = vst.msk [vmem:[#allocation5 + $0xa0] sm:$0xff] %vm2708, %v2690
        %2714 = vst.msk [vmem:[#allocation5 + $0xc8] sm:$0xff] %vm2708, %v2692
        %2715 = vst.msk [vmem:[#allocation5 + $0xf0] sm:$0xff] %vm2708, %v2694
        %2716 = vst.msk [vmem:[#allocation5 + $0x118] sm:$0xff] %vm2708, %v2696
        %vm2717 = vcmask 1042944
        %2718 = vst.msk [vmem:[#allocation5 + $0x140] sm:$0x7] %vm2717, %v2698
        %v2719 = vld [vmem:[#allocation4 + $0x2] sm:$0xff]
        %v2720 = vld [vmem:[#allocation4 + $0xa] sm:$0xff]
        %v2721 = vld [vmem:[#allocation4 + $0x12] sm:$0xff]
        %v2722 = vld [vmem:[#allocation4 + $0x1a] sm:$0xff]
        %v2723 = vld [vmem:[#allocation4 + $0x22] sm:$0xff]
        %v2724 = vld [vmem:[#allocation4 + $0x2a] sm:$0xff]
        %v2725 = vld [vmem:[#allocation4 + $0x32] sm:$0xff]
        %v2726 = vld [vmem:[#allocation4 + $0x3a] sm:$0xff]
        %v2727 = vld [vmem:[#allocation4 + $0x42] sm:$0x7]
        %2728 = vst.msk [vmem:[#allocation5 + $0x8] sm:$0xff] %vm2630, %v2719
        %2729 = vst.msk [vmem:[#allocation5 + $0x30] sm:$0xff] %vm2630, %v2720
        %2730 = vst.msk [vmem:[#allocation5 + $0x58] sm:$0xff] %vm2630, %v2721
        %2731 = vst.msk [vmem:[#allocation5 + $0x80] sm:$0xff] %vm2630, %v2722
        %2732 = vst.msk [vmem:[#allocation5 + $0xa8] sm:$0xff] %vm2630, %v2723
        %2733 = vst.msk [vmem:[#allocation5 + $0xd0] sm:$0xff] %vm2630, %v2724
        %2734 = vst.msk [vmem:[#allocation5 + $0xf8] sm:$0xff] %vm2630, %v2725
        %2735 = vst.msk [vmem:[#allocation5 + $0x120] sm:$0xff] %vm2630, %v2726
        %2736 = vst.msk [vmem:[#allocation5 + $0x148] sm:$0x7] %vm2661, %v2727
        %v2737 = vld [vmem:[#allocation4 + $0xa] sm:$0xff]
        %v2738 = vld [vmem:[#allocation4 + $0x12] sm:$0xff]
        %v2739 = vld [vmem:[#allocation4 + $0x1a] sm:$0xff]
        %v2740 = vld [vmem:[#allocation4 + $0x22] sm:$0xff]
        %v2741 = vld [vmem:[#allocation4 + $0x2a] sm:$0xff]
        %v2742 = vld [vmem:[#allocation4 + $0x32] sm:$0xff]
        %v2743 = vld [vmem:[#allocation4 + $0x3a] sm:$0xff]
        %v2744 = vld [vmem:[#allocation4 + $0x42] sm:$0xff]
        %v2745 = vld [vmem:[#allocation4 + $0x4a] sm:$0x7]
        %2755 = vrot.lane.b32.xlu0 %v2737, 64
        %v2756 = vpop.permute.xlu0 %2755
        %2757 = vrot.lane.b32.xlu0 %v2738, 64
        %v2758 = vpop.permute.xlu0 %2757
        %2759 = vrot.lane.b32.xlu0 %v2739, 64
        %v2760 = vpop.permute.xlu0 %2759
        %2761 = vrot.lane.b32.xlu0 %v2740, 64
        %v2762 = vpop.permute.xlu0 %2761
        %2763 = vrot.lane.b32.xlu0 %v2741, 64
        %v2764 = vpop.permute.xlu0 %2763
        %2765 = vrot.lane.b32.xlu0 %v2742, 64
        %v2766 = vpop.permute.xlu0 %2765
        %2767 = vrot.lane.b32.xlu0 %v2743, 64
        %v2768 = vpop.permute.xlu0 %2767
        %2769 = vrot.lane.b32.xlu0 %v2744, 64
        %v2770 = vpop.permute.xlu0 %2769
        %2771 = vrot.lane.b32.xlu0 %v2745, 64
        %v2772 = vpop.permute.xlu0 %2771
        %2782 = vst.msk [vmem:[#allocation5 + $0x8] sm:$0xff] %vm2708, %v2756
        %2783 = vst.msk [vmem:[#allocation5 + $0x30] sm:$0xff] %vm2708, %v2758
        %2784 = vst.msk [vmem:[#allocation5 + $0x58] sm:$0xff] %vm2708, %v2760
        %2785 = vst.msk [vmem:[#allocation5 + $0x80] sm:$0xff] %vm2708, %v2762
        %2786 = vst.msk [vmem:[#allocation5 + $0xa8] sm:$0xff] %vm2708, %v2764
        %2787 = vst.msk [vmem:[#allocation5 + $0xd0] sm:$0xff] %vm2708, %v2766
        %2788 = vst.msk [vmem:[#allocation5 + $0xf8] sm:$0xff] %vm2708, %v2768
        %2789 = vst.msk [vmem:[#allocation5 + $0x120] sm:$0xff] %vm2708, %v2770
        %2790 = vst.msk [vmem:[#allocation5 + $0x148] sm:$0x7] %vm2717, %v2772
        %v2791 = vld [vmem:[#allocation4 + $0xb] sm:$0xff]
        %v2792 = vld [vmem:[#allocation4 + $0x13] sm:$0xff]
        %v2793 = vld [vmem:[#allocation4 + $0x1b] sm:$0xff]
        %v2794 = vld [vmem:[#allocation4 + $0x23] sm:$0xff]
        %v2795 = vld [vmem:[#allocation4 + $0x2b] sm:$0xff]
        %v2796 = vld [vmem:[#allocation4 + $0x33] sm:$0xff]
        %v2797 = vld [vmem:[#allocation4 + $0x3b] sm:$0xff]
        %v2798 = vld [vmem:[#allocation4 + $0x43] sm:$0xff]
        %v2799 = vld [vmem:[#allocation4 + $0x4b] sm:$0x7]
        %2800 = vst.msk [vmem:[#allocation5 + $0x10] sm:$0xff] %vm2630, %v2791
        %2801 = vst.msk [vmem:[#allocation5 + $0x38] sm:$0xff] %vm2630, %v2792
        %2802 = vst.msk [vmem:[#allocation5 + $0x60] sm:$0xff] %vm2630, %v2793
        %2803 = vst.msk [vmem:[#allocation5 + $0x88] sm:$0xff] %vm2630, %v2794
        %2804 = vst.msk [vmem:[#allocation5 + $0xb0] sm:$0xff] %vm2630, %v2795
        %2805 = vst.msk [vmem:[#allocation5 + $0xd8] sm:$0xff] %vm2630, %v2796
        %2806 = vst.msk [vmem:[#allocation5 + $0x100] sm:$0xff] %vm2630, %v2797
        %2807 = vst.msk [vmem:[#allocation5 + $0x128] sm:$0xff] %vm2630, %v2798
        %2808 = vst.msk [vmem:[#allocation5 + $0x150] sm:$0x7] %vm2661, %v2799
        %v2809 = vld [vmem:[#allocation4 + $0xc] sm:$0xff]
        %v2810 = vld [vmem:[#allocation4 + $0x14] sm:$0xff]
        %v2811 = vld [vmem:[#allocation4 + $0x1c] sm:$0xff]
        %v2812 = vld [vmem:[#allocation4 + $0x24] sm:$0xff]
        %v2813 = vld [vmem:[#allocation4 + $0x2c] sm:$0xff]
        %v2814 = vld [vmem:[#allocation4 + $0x34] sm:$0xff]
        %v2815 = vld [vmem:[#allocation4 + $0x3c] sm:$0xff]
        %v2816 = vld [vmem:[#allocation4 + $0x44] sm:$0xff]
        %v2817 = vld [vmem:[#allocation4 + $0x4c] sm:$0x7]
        %2827 = vrot.lane.b32.xlu0 %v2809, 64
        %v2828 = vpop.permute.xlu0 %2827
        %2829 = vrot.lane.b32.xlu0 %v2810, 64
        %v2830 = vpop.permute.xlu0 %2829
        %2831 = vrot.lane.b32.xlu0 %v2811, 64
        %v2832 = vpop.permute.xlu0 %2831
        %2833 = vrot.lane.b32.xlu0 %v2812, 64
        %v2834 = vpop.permute.xlu0 %2833
        %2835 = vrot.lane.b32.xlu0 %v2813, 64
        %v2836 = vpop.permute.xlu0 %2835
        %2837 = vrot.lane.b32.xlu0 %v2814, 64
        %v2838 = vpop.permute.xlu0 %2837
        %2839 = vrot.lane.b32.xlu0 %v2815, 64
        %v2840 = vpop.permute.xlu0 %2839
        %2841 = vrot.lane.b32.xlu0 %v2816, 64
        %v2842 = vpop.permute.xlu0 %2841
        %2843 = vrot.lane.b32.xlu0 %v2817, 64
        %v2844 = vpop.permute.xlu0 %2843
        %2854 = vst.msk [vmem:[#allocation5 + $0x10] sm:$0xff] %vm2708, %v2828
        %2855 = vst.msk [vmem:[#allocation5 + $0x38] sm:$0xff] %vm2708, %v2830
        %2856 = vst.msk [vmem:[#allocation5 + $0x60] sm:$0xff] %vm2708, %v2832
        %2857 = vst.msk [vmem:[#allocation5 + $0x88] sm:$0xff] %vm2708, %v2834
        %2858 = vst.msk [vmem:[#allocation5 + $0xb0] sm:$0xff] %vm2708, %v2836
        %2859 = vst.msk [vmem:[#allocation5 + $0xd8] sm:$0xff] %vm2708, %v2838
        %2860 = vst.msk [vmem:[#allocation5 + $0x100] sm:$0xff] %vm2708, %v2840
        %2861 = vst.msk [vmem:[#allocation5 + $0x128] sm:$0xff] %vm2708, %v2842
        %2862 = vst.msk [vmem:[#allocation5 + $0x150] sm:$0x7] %vm2717, %v2844
        %v2863 = vld [vmem:[#allocation4 + $0x14] sm:$0xff]
        %v2864 = vld [vmem:[#allocation4 + $0x1c] sm:$0xff]
        %v2865 = vld [vmem:[#allocation4 + $0x24] sm:$0xff]
        %v2866 = vld [vmem:[#allocation4 + $0x2c] sm:$0xff]
        %v2867 = vld [vmem:[#allocation4 + $0x34] sm:$0xff]
        %v2868 = vld [vmem:[#allocation4 + $0x3c] sm:$0xff]
        %v2869 = vld [vmem:[#allocation4 + $0x44] sm:$0xff]
        %v2870 = vld [vmem:[#allocation4 + $0x4c] sm:$0xff]
        %v2871 = vld [vmem:[#allocation4 + $0x54] sm:$0x7]
        %2872 = vst.msk [vmem:[#allocation5 + $0x18] sm:$0xff] %vm2630, %v2863
        %2873 = vst.msk [vmem:[#allocation5 + $0x40] sm:$0xff] %vm2630, %v2864
        %2874 = vst.msk [vmem:[#allocation5 + $0x68] sm:$0xff] %vm2630, %v2865
        %2875 = vst.msk [vmem:[#allocation5 + $0x90] sm:$0xff] %vm2630, %v2866
        %2876 = vst.msk [vmem:[#allocation5 + $0xb8] sm:$0xff] %vm2630, %v2867
        %2877 = vst.msk [vmem:[#allocation5 + $0xe0] sm:$0xff] %vm2630, %v2868
        %2878 = vst.msk [vmem:[#allocation5 + $0x108] sm:$0xff] %vm2630, %v2869
        %2879 = vst.msk [vmem:[#allocation5 + $0x130] sm:$0xff] %vm2630, %v2870
        %2880 = vst.msk [vmem:[#allocation5 + $0x158] sm:$0x7] %vm2661, %v2871
        %v2881 = vld [vmem:[#allocation4 + $0x15] sm:$0xff]
        %v2882 = vld [vmem:[#allocation4 + $0x1d] sm:$0xff]
        %v2883 = vld [vmem:[#allocation4 + $0x25] sm:$0xff]
        %v2884 = vld [vmem:[#allocation4 + $0x2d] sm:$0xff]
        %v2885 = vld [vmem:[#allocation4 + $0x35] sm:$0xff]
        %v2886 = vld [vmem:[#allocation4 + $0x3d] sm:$0xff]
        %v2887 = vld [vmem:[#allocation4 + $0x45] sm:$0xff]
        %v2888 = vld [vmem:[#allocation4 + $0x4d] sm:$0xff]
        %v2889 = vld [vmem:[#allocation4 + $0x55] sm:$0x7]
        %2899 = vrot.lane.b32.xlu0 %v2881, 64
        %v2900 = vpop.permute.xlu0 %2899
        %2901 = vrot.lane.b32.xlu0 %v2882, 64
        %v2902 = vpop.permute.xlu0 %2901
        %2903 = vrot.lane.b32.xlu0 %v2883, 64
        %v2904 = vpop.permute.xlu0 %2903
        %2905 = vrot.lane.b32.xlu0 %v2884, 64
        %v2906 = vpop.permute.xlu0 %2905
        %2907 = vrot.lane.b32.xlu0 %v2885, 64
        %v2908 = vpop.permute.xlu0 %2907
        %2909 = vrot.lane.b32.xlu0 %v2886, 64
        %v2910 = vpop.permute.xlu0 %2909
        %2911 = vrot.lane.b32.xlu0 %v2887, 64
        %v2912 = vpop.permute.xlu0 %2911
        %2913 = vrot.lane.b32.xlu0 %v2888, 64
        %v2914 = vpop.permute.xlu0 %2913
        %2915 = vrot.lane.b32.xlu0 %v2889, 64
        %v2916 = vpop.permute.xlu0 %2915
        %2926 = vst.msk [vmem:[#allocation5 + $0x18] sm:$0xff] %vm2708, %v2900
        %2927 = vst.msk [vmem:[#allocation5 + $0x40] sm:$0xff] %vm2708, %v2902
        %2928 = vst.msk [vmem:[#allocation5 + $0x68] sm:$0xff] %vm2708, %v2904
        %2929 = vst.msk [vmem:[#allocation5 + $0x90] sm:$0xff] %vm2708, %v2906
        %2930 = vst.msk [vmem:[#allocation5 + $0xb8] sm:$0xff] %vm2708, %v2908
        %2931 = vst.msk [vmem:[#allocation5 + $0xe0] sm:$0xff] %vm2708, %v2910
        %2932 = vst.msk [vmem:[#allocation5 + $0x108] sm:$0xff] %vm2708, %v2912
        %2933 = vst.msk [vmem:[#allocation5 + $0x130] sm:$0xff] %vm2708, %v2914
        %2934 = vst.msk [vmem:[#allocation5 + $0x158] sm:$0x7] %vm2717, %v2916
        %v2935 = vld [vmem:[#allocation4 + $0x16] sm:$0xff]
        %v2936 = vld [vmem:[#allocation4 + $0x1e] sm:$0xff]
        %v2937 = vld [vmem:[#allocation4 + $0x26] sm:$0xff]
        %v2938 = vld [vmem:[#allocation4 + $0x2e] sm:$0xff]
        %v2939 = vld [vmem:[#allocation4 + $0x36] sm:$0xff]
        %v2940 = vld [vmem:[#allocation4 + $0x3e] sm:$0xff]
        %v2941 = vld [vmem:[#allocation4 + $0x46] sm:$0xff]
        %v2942 = vld [vmem:[#allocation4 + $0x4e] sm:$0xff]
        %v2943 = vld [vmem:[#allocation4 + $0x56] sm:$0x7]
        %2944 = vst.msk [vmem:[#allocation5 + $0x20] sm:$0xff] %vm2630, %v2935
        %2945 = vst.msk [vmem:[#allocation5 + $0x48] sm:$0xff] %vm2630, %v2936
        %2946 = vst.msk [vmem:[#allocation5 + $0x70] sm:$0xff] %vm2630, %v2937
        %2947 = vst.msk [vmem:[#allocation5 + $0x98] sm:$0xff] %vm2630, %v2938
        %2948 = vst.msk [vmem:[#allocation5 + $0xc0] sm:$0xff] %vm2630, %v2939
        %2949 = vst.msk [vmem:[#allocation5 + $0xe8] sm:$0xff] %vm2630, %v2940
        %2950 = vst.msk [vmem:[#allocation5 + $0x110] sm:$0xff] %vm2630, %v2941
        %2951 = vst.msk [vmem:[#allocation5 + $0x138] sm:$0xff] %vm2630, %v2942
        %2952 = vst.msk [vmem:[#allocation5 + $0x160] sm:$0x7] %vm2661, %v2943
        %v2953 = vld [vmem:[#allocation5] sm:$0xff]
        %v2954 = vld [vmem:[#allocation5 + $0x8] sm:$0xff]
        %v2955 = vld [vmem:[#allocation5 + $0x10] sm:$0xff]
        %v2956 = vld [vmem:[#allocation5 + $0x18] sm:$0xff]
        %v2957 = vld [vmem:[#allocation5 + $0x20] sm:$0xff]
        %v2958 = vld [vmem:[#allocation5 + $0x28] sm:$0xff]
        %v2959 = vld [vmem:[#allocation5 + $0x30] sm:$0xff]
        %v2960 = vld [vmem:[#allocation5 + $0x38] sm:$0xff]
        %v2961 = vld [vmem:[#allocation5 + $0x40] sm:$0xff]
        %v2962 = vld [vmem:[#allocation5 + $0x48] sm:$0xff]
        %v2963 = vld [vmem:[#allocation5 + $0x50] sm:$0xff]
        %v2964 = vld [vmem:[#allocation5 + $0x58] sm:$0xff]
        %v2965 = vld [vmem:[#allocation5 + $0x60] sm:$0xff]
        %v2966 = vld [vmem:[#allocation5 + $0x68] sm:$0xff]
        %v2967 = vld [vmem:[#allocation5 + $0x70] sm:$0xff]
        %v2968 = vld [vmem:[#allocation5 + $0x78] sm:$0xff]
        %v2969 = vld [vmem:[#allocation5 + $0x80] sm:$0xff]
        %v2970 = vld [vmem:[#allocation5 + $0x88] sm:$0xff]
        %v2971 = vld [vmem:[#allocation5 + $0x90] sm:$0xff]
        %v2972 = vld [vmem:[#allocation5 + $0x98] sm:$0xff]
        %v2973 = vld [vmem:[#allocation5 + $0xa0] sm:$0xff]
        %v2974 = vld [vmem:[#allocation5 + $0xa8] sm:$0xff]
        %v2975 = vld [vmem:[#allocation5 + $0xb0] sm:$0xff]
        %v2976 = vld [vmem:[#allocation5 + $0xb8] sm:$0xff]
        %v2977 = vld [vmem:[#allocation5 + $0xc0] sm:$0xff]
        %v2978 = vld [vmem:[#allocation5 + $0xc8] sm:$0xff]
        %v2979 = vld [vmem:[#allocation5 + $0xd0] sm:$0xff]
        %v2980 = vld [vmem:[#allocation5 + $0xd8] sm:$0xff]
        %v2981 = vld [vmem:[#allocation5 + $0xe0] sm:$0xff]
        %v2982 = vld [vmem:[#allocation5 + $0xe8] sm:$0xff]
        %v2983 = vld [vmem:[#allocation5 + $0xf0] sm:$0xff]
        %v2984 = vld [vmem:[#allocation5 + $0xf8] sm:$0xff]
        %v2985 = vld [vmem:[#allocation5 + $0x100] sm:$0xff]
        %v2986 = vld [vmem:[#allocation5 + $0x108] sm:$0xff]
        %v2987 = vld [vmem:[#allocation5 + $0x110] sm:$0xff]
        %v2988 = vld [vmem:[#allocation5 + $0x118] sm:$0xff]
        %v2989 = vld [vmem:[#allocation5 + $0x120] sm:$0xff]
        %v2990 = vld [vmem:[#allocation5 + $0x128] sm:$0xff]
        %v2991 = vld [vmem:[#allocation5 + $0x130] sm:$0xff]
        %v2992 = vld [vmem:[#allocation5 + $0x138] sm:$0xff]
        %v2993 = vld [vmem:[#allocation5 + $0x140] sm:$0x7]
        %v2994 = vld [vmem:[#allocation5 + $0x148] sm:$0x7]
        %v2995 = vld [vmem:[#allocation5 + $0x150] sm:$0x7]
        %v2996 = vld [vmem:[#allocation5 + $0x158] sm:$0x7]
        %v2997 = vld [vmem:[#allocation5 + $0x160] sm:$0x7]
        %v2998 = vpack.c.bf16 %v2958, %v2953
        %v2999 = vpack.c.bf16 %v2959, %v2954
        %v3000 = vpack.c.bf16 %v2960, %v2955
        %v3001 = vpack.c.bf16 %v2961, %v2956
        %v3002 = vpack.c.bf16 %v2962, %v2957
        %v3003 = vpack.c.bf16 %v2968, %v2963
        %v3004 = vpack.c.bf16 %v2969, %v2964
        %v3005 = vpack.c.bf16 %v2970, %v2965
        %v3006 = vpack.c.bf16 %v2971, %v2966
        %v3007 = vpack.c.bf16 %v2972, %v2967
        %v3008 = vpack.c.bf16 %v2978, %v2973
        %v3009 = vpack.c.bf16 %v2979, %v2974
        %v3010 = vpack.c.bf16 %v2980, %v2975
        %v3011 = vpack.c.bf16 %v2981, %v2976
        %v3012 = vpack.c.bf16 %v2982, %v2977
        %v3013 = vpack.c.bf16 %v2988, %v2983
        %v3014 = vpack.c.bf16 %v2989, %v2984
        %v3015 = vpack.c.bf16 %v2990, %v2985
        %v3016 = vpack.c.bf16 %v2991, %v2986
        %v3017 = vpack.c.bf16 %v2992, %v2987
        %v3018 = vpack.c.bf16 %v2993, %v2993
        %v3019 = vpack.c.bf16 %v2994, %v2994
        %v3020 = vpack.c.bf16 %v2995, %v2995
        %v3021 = vpack.c.bf16 %v2996, %v2996
        %v3022 = vpack.c.bf16 %v2997, %v2997
        %v3023 = vld [vmem:[%s5] sm:$0xf]
        %v3024 = vld [vmem:[%s5 + $0x4] sm:$0xf]
        %v3025 = vld [vmem:[%s5 + $0x8] sm:$0xf]
        %v3026 = vld [vmem:[%s5 + $0xc] sm:$0xf]
        %v3027 = vld [vmem:[%s5 + $0x10] sm:$0xf]
        %v3028 = vld [vmem:[%s5 + $0x14] sm:$0xf]
        %v3029 = vld [vmem:[%s5 + $0x18] sm:$0xf]
        %v3030 = vld [vmem:[%s5 + $0x1c] sm:$0xf]
        %v3031 = vld [vmem:[%s5 + $0x20] sm:$0xf]
        %v3032 = vld [vmem:[%s5 + $0x24] sm:$0xf]
        %v3033 = vld [vmem:[%s5 + $0x28] sm:$0xf]
        %v3034 = vld [vmem:[%s5 + $0x2c] sm:$0xf]
        %v3035 = vld [vmem:[%s5 + $0x30] sm:$0xf]
        %v3036 = vld [vmem:[%s5 + $0x34] sm:$0xf]
        %v3037 = vld [vmem:[%s5 + $0x38] sm:$0xf]
        %v3038 = vld [vmem:[%s5 + $0x3c] sm:$0xf]
        %v3039 = vld [vmem:[%s5 + $0x40] sm:$0xf]
        %v3040 = vld [vmem:[%s5 + $0x44] sm:$0xf]
        %v3041 = vld [vmem:[%s5 + $0x48] sm:$0xf]
        %v3042 = vld [vmem:[%s5 + $0x4c] sm:$0xf]
        %v3043 = vld [vmem:[%s5 + $0x50] sm:$0xf]
        %v3044 = vld [vmem:[%s5 + $0x54] sm:$0xf]
        %v3045 = vld [vmem:[%s5 + $0x58] sm:$0xf]
        %v3046 = vld [vmem:[%s5 + $0x5c] sm:$0xf]
        %v3047 = vld [vmem:[%s5 + $0x60] sm:$0xf]
        %v3048 = vld [vmem:[%s5 + $0x64] sm:$0xf]
        %v3049 = vld [vmem:[%s5 + $0x68] sm:$0xf]
        %v3050 = vld [vmem:[%s5 + $0x6c] sm:$0xf]
        %v3051 = vld [vmem:[%s5 + $0x70] sm:$0xf]
        %v3052 = vld [vmem:[%s5 + $0x74] sm:$0xf]
        %v3053 = vld [vmem:[%s5 + $0x78] sm:$0xf]
        %v3054 = vld [vmem:[%s5 + $0x7c] sm:$0xf]
        %v3055 = vld [vmem:[%s5 + $0x80] sm:$0xf]
        %v3056 = vld [vmem:[%s5 + $0x84] sm:$0xf]
        %v3057 = vld [vmem:[%s5 + $0x88] sm:$0xf]
        %v3058 = vld [vmem:[%s5 + $0x8c] sm:$0xf]
        %v3059 = vld [vmem:[%s5 + $0x90] sm:$0xf]
        %v3060 = vld [vmem:[%s5 + $0x94] sm:$0xf]
        %v3061 = vld [vmem:[%s5 + $0x98] sm:$0xf]
        %v3062 = vld [vmem:[%s5 + $0x9c] sm:$0xf]
        %v3063 = vld [vmem:[%s5 + $0xa0] sm:$0xf]
        %v3064 = vld [vmem:[%s5 + $0xa4] sm:$0xf]
        %v3065 = vld [vmem:[%s5 + $0xa8] sm:$0xf]
        %v3066 = vld [vmem:[%s5 + $0xac] sm:$0xf]
        %v3067 = vld [vmem:[%s5 + $0xb0] sm:$0xf]
        %v3068 = vld [vmem:[%s5 + $0xb4] sm:$0xf]
        %v3069 = vld [vmem:[%s5 + $0xb8] sm:$0xf]
        %v3070 = vld [vmem:[%s5 + $0xbc] sm:$0xf]
        %v3071 = vld [vmem:[%s5 + $0xc0] sm:$0xf]
        %v3072 = vld [vmem:[%s5 + $0xc4] sm:$0xf]
        %v3073 = vld [vmem:[%s5 + $0xc8] sm:$0xf]
        %v3074 = vld [vmem:[%s5 + $0xcc] sm:$0xf]
        %v3075 = vld [vmem:[%s5 + $0xd0] sm:$0xf]
        %v3076 = vld [vmem:[%s5 + $0xd4] sm:$0xf]
        %v3077 = vld [vmem:[%s5 + $0xd8] sm:$0xf]
        %v3078 = vld [vmem:[%s5 + $0xdc] sm:$0xf]
        %v3079 = vld [vmem:[%s5 + $0xe0] sm:$0xf]
        %v3080 = vld [vmem:[%s5 + $0xe4] sm:$0xf]
        %v3081 = vld [vmem:[%s5 + $0xe8] sm:$0xf]
        %v3082 = vld [vmem:[%s5 + $0xec] sm:$0xf]
        %v3083 = vld [vmem:[%s5 + $0xf0] sm:$0xf]
        %v3084 = vld [vmem:[%s5 + $0xf4] sm:$0xf]
        %v3085 = vld [vmem:[%s5 + $0xf8] sm:$0xf]
        %v3086 = vld [vmem:[%s5 + $0xfc] sm:$0xf]
        %v3087 = vld [vmem:[%s5 + $0x100] sm:$0xf]
        %v3088 = vld [vmem:[%s5 + $0x104] sm:$0xf]
        %v3089 = vld [vmem:[%s5 + $0x108] sm:$0xf]
        %v3090 = vld [vmem:[%s5 + $0x10c] sm:$0xf]
        %v3091 = vld [vmem:[%s5 + $0x110] sm:$0xf]
        %v3092 = vld [vmem:[%s5 + $0x114] sm:$0xf]
        %v3093 = vld [vmem:[%s5 + $0x118] sm:$0xf]
        %v3094 = vld [vmem:[%s5 + $0x11c] sm:$0xf]
        %v3095 = vld [vmem:[%s6] sm:$0x1]
        %v3097 = vlaneseq
        %v3098 = vshrl.u32 %v3097, 7
        %v3099 = vsub.s32 0, %v3098
        %v3100 = vrot.slane %v3095, %v3099
        %v3174 = vunpack.c.l.b16 %v3023
        %v3175 = vunpack.c.l.b16 %v3024
        %v3176 = vunpack.c.l.b16 %v3025
        %v3177 = vunpack.c.l.b16 %v3026
        %v3178 = vunpack.c.l.b16 %v3027
        %v3179 = vunpack.c.l.b16 %v3028
        %v3180 = vunpack.c.l.b16 %v3029
        %v3181 = vunpack.c.l.b16 %v3030
        %v3182 = vunpack.c.l.b16 %v3031
        %v3183 = vunpack.c.l.b16 %v3032
        %v3184 = vunpack.c.l.b16 %v3033
        %v3185 = vunpack.c.l.b16 %v3034
        %v3186 = vunpack.c.l.b16 %v3035
        %v3187 = vunpack.c.l.b16 %v3036
        %v3188 = vunpack.c.l.b16 %v3037
        %v3189 = vunpack.c.l.b16 %v3038
        %v3190 = vunpack.c.l.b16 %v3039
        %v3191 = vunpack.c.l.b16 %v3040
        %v3192 = vunpack.c.l.b16 %v3041
        %v3193 = vunpack.c.l.b16 %v3042
        %v3194 = vunpack.c.l.b16 %v3043
        %v3195 = vunpack.c.l.b16 %v3044
        %v3196 = vunpack.c.l.b16 %v3045
        %v3197 = vunpack.c.l.b16 %v3046
        %v3198 = vunpack.c.l.b16 %v3047
        %v3199 = vunpack.c.l.b16 %v3048
        %v3200 = vunpack.c.l.b16 %v3049
        %v3201 = vunpack.c.l.b16 %v3050
        %v3202 = vunpack.c.l.b16 %v3051
        %v3203 = vunpack.c.l.b16 %v3052
        %v3204 = vunpack.c.l.b16 %v3053
        %v3205 = vunpack.c.l.b16 %v3054
        %v3206 = vunpack.c.l.b16 %v3055
        %v3207 = vunpack.c.l.b16 %v3056
        %v3208 = vunpack.c.l.b16 %v3057
        %v3209 = vunpack.c.l.b16 %v3058
        %v3210 = vunpack.c.l.b16 %v3059
        %v3211 = vunpack.c.l.b16 %v3060
        %v3212 = vunpack.c.l.b16 %v3061
        %v3213 = vunpack.c.l.b16 %v3062
        %v3214 = vunpack.c.l.b16 %v3063
        %v3215 = vunpack.c.l.b16 %v3064
        %v3216 = vunpack.c.l.b16 %v3065
        %v3217 = vunpack.c.l.b16 %v3066
        %v3218 = vunpack.c.l.b16 %v3067
        %v3219 = vunpack.c.l.b16 %v3068
        %v3220 = vunpack.c.l.b16 %v3069
        %v3221 = vunpack.c.l.b16 %v3070
        %v3222 = vunpack.c.l.b16 %v3071
        %v3223 = vunpack.c.l.b16 %v3072
        %v3224 = vunpack.c.l.b16 %v3073
        %v3225 = vunpack.c.l.b16 %v3074
        %v3226 = vunpack.c.l.b16 %v3075
        %v3227 = vunpack.c.l.b16 %v3076
        %v3228 = vunpack.c.l.b16 %v3077
        %v3229 = vunpack.c.l.b16 %v3078
        %v3230 = vunpack.c.l.b16 %v3079
        %v3231 = vunpack.c.l.b16 %v3080
        %v3232 = vunpack.c.l.b16 %v3081
        %v3233 = vunpack.c.l.b16 %v3082
        %v3234 = vunpack.c.l.b16 %v3083
        %v3235 = vunpack.c.l.b16 %v3084
        %v3236 = vunpack.c.l.b16 %v3085
        %v3237 = vunpack.c.l.b16 %v3086
        %v3238 = vunpack.c.l.b16 %v3087
        %v3239 = vunpack.c.l.b16 %v3088
        %v3240 = vunpack.c.l.b16 %v3089
        %v3241 = vunpack.c.l.b16 %v3090
        %v3242 = vunpack.c.l.b16 %v3091
        %v3243 = vunpack.c.l.b16 %v3092
        %v3244 = vunpack.c.l.b16 %v3093
        %v3245 = vunpack.c.l.b16 %v3094
        %v3246 = vpack.c.b16 %v3175, %v3174
        %v3247 = vpack.c.b16 %v3177, %v3176
        %v3248 = vpack.c.b16 %v3179, %v3178
        %v3249 = vpack.c.b16 %v3181, %v3180
        %v3250 = vpack.c.b16 %v3183, %v3182
        %v3251 = vpack.c.b16 %v3185, %v3184
        %v3252 = vpack.c.b16 %v3187, %v3186
        %v3253 = vpack.c.b16 %v3189, %v3188
        %v3254 = vpack.c.b16 %v3191, %v3190
        %v3255 = vpack.c.b16 %v3193, %v3192
        %v3256 = vpack.c.b16 %v3195, %v3194
        %v3257 = vpack.c.b16 %v3197, %v3196
        %v3258 = vpack.c.b16 %v3199, %v3198
        %v3259 = vpack.c.b16 %v3201, %v3200
        %v3260 = vpack.c.b16 %v3203, %v3202
        %v3261 = vpack.c.b16 %v3205, %v3204
        %v3262 = vpack.c.b16 %v3207, %v3206
        %v3263 = vpack.c.b16 %v3209, %v3208
        %v3264 = vpack.c.b16 %v3211, %v3210
        %v3265 = vpack.c.b16 %v3213, %v3212
        %v3266 = vpack.c.b16 %v3215, %v3214
        %v3267 = vpack.c.b16 %v3217, %v3216
        %v3268 = vpack.c.b16 %v3219, %v3218
        %v3269 = vpack.c.b16 %v3221, %v3220
        %v3270 = vpack.c.b16 %v3223, %v3222
        %v3271 = vpack.c.b16 %v3225, %v3224
        %v3272 = vpack.c.b16 %v3227, %v3226
        %v3273 = vpack.c.b16 %v3229, %v3228
        %v3274 = vpack.c.b16 %v3231, %v3230
        %v3275 = vpack.c.b16 %v3233, %v3232
        %v3276 = vpack.c.b16 %v3235, %v3234
        %v3277 = vpack.c.b16 %v3237, %v3236
        %v3278 = vpack.c.b16 %v3239, %v3238
        %v3279 = vpack.c.b16 %v3241, %v3240
        %v3280 = vpack.c.b16 %v3243, %v3242
        %v3281 = vpack.c.b16 %v3245, %v3244
        %v3319 = vsel %vm2630, %v3002, 0
        %v3322 = vsel %vm2630, %v3007, 0
        %v3325 = vsel %vm2630, %v3012, 0
        %v3328 = vsel %vm2630, %v3017, 0
        %v3331 = vsel %vm2630, %v3022, 0
        %3333 = vmatprep.subr.bf16.mxu0 0
        %3334 = vmatpush1.bf16.msra.mxu0 %v3246
        %3335 = vmatprep.subr.bf16.mxu0 0
        %3336 = vmatpush1.bf16.msra.mxu0 %v3247
        %3337 = vmatprep.subr.bf16.mxu0 0
        %3338 = vmatpush1.bf16.msra.mxu0 %v3248
        %3339 = vmatprep.subr.bf16.mxu0 0
        %3340 = vmatpush1.bf16.msra.mxu0 %v3249
        %3341 = vmatprep.subr.bf16.mxu0 0
        %3342 = vmatpush1.bf16.msra.mxu0 %v3250
        %3343 = vmatprep.subr.bf16.mxu0 0
        %3344 = vmatpush1.bf16.msra.mxu0 %v3251
        %3345 = vmatprep.subr.bf16.mxu0 0
        %3346 = vmatpush1.bf16.msra.mxu0 %v3252
        %3347 = vmatprep.subr.bf16.mxu0 0
        %3348 = vmatpush1.bf16.msra.mxu0 %v3253
        %3349 = vmatprep.subr.bf16.mxu0 0
        %3350 = vmatpush1.bf16.msra.mxu0 %v3254
        %3351 = vmatprep.subr.bf16.mxu0 0
        %3352 = vmatpush1.bf16.msra.mxu0 %v3255
        %3353 = vmatprep.subr.bf16.mxu0 0
        %3354 = vmatpush1.bf16.msra.mxu0 %v3256
        %3355 = vmatprep.subr.bf16.mxu0 0
        %3356 = vmatpush1.bf16.msra.mxu0 %v3257
        %3357 = vmatprep.subr.bf16.mxu0 0
        %3358 = vmatpush1.bf16.msra.mxu0 %v3258
        %3359 = vmatprep.subr.bf16.mxu0 0
        %3360 = vmatpush1.bf16.msra.mxu0 %v3259
        %3361 = vmatprep.subr.bf16.mxu0 0
        %3362 = vmatpush1.bf16.msra.mxu0 %v3260
        %3363 = vmatprep.subr.bf16.mxu0 0
        %3364 = vmatpush1.bf16.msra.mxu0 %v3261
        %3365 = vmatprep.mubr.bf16.mxu0 %v2999
        %3366 = vmatmul.mubr.bf16.gmra.mrb[0].mxu0 %v2998
        %v3367 = vpop.f32.mrb[0].mxu0
        %v3368 = vadd.f32 %v3100, %v3367
        %v3369 = vpop.f32.mrb[0].mxu0
        %v3370 = vpop.f32.mrb[0].mxu0
        %v3371 = vadd.f32 %v3100, %v3370
        %v3372 = vpop.f32.mrb[0].mxu0
        %3373 = vmatprep.mubr.bf16.mxu0 %v3004
        %3374 = vmatmul.mubr.bf16.gmra.mrb[0].mxu0 %v3003
        %v3375 = vpop.f32.mrb[0].mxu0
        %v3376 = vadd.f32 %v3100, %v3375
        %v3377 = vpop.f32.mrb[0].mxu0
        %v3378 = vpop.f32.mrb[0].mxu0
        %v3379 = vadd.f32 %v3100, %v3378
        %v3380 = vpop.f32.mrb[0].mxu0
        %3381 = vmatprep.mubr.bf16.mxu0 %v3009
        %3382 = vmatmul.mubr.bf16.gmra.mrb[0].mxu0 %v3008
        %v3383 = vpop.f32.mrb[0].mxu0
        %v3384 = vadd.f32 %v3100, %v3383
        %v3385 = vpop.f32.mrb[0].mxu0
        %v3386 = vpop.f32.mrb[0].mxu0
        %v3387 = vadd.f32 %v3100, %v3386
        %v3388 = vpop.f32.mrb[0].mxu0
        %3389 = vmatprep.mubr.bf16.mxu0 %v3014
        %3390 = vmatmul.mubr.bf16.gmra.mrb[0].mxu0 %v3013
        %v3391 = vpop.f32.mrb[0].mxu0
        %v3392 = vadd.f32 %v3100, %v3391
        %v3393 = vpop.f32.mrb[0].mxu0
        %v3394 = vpop.f32.mrb[0].mxu0
        %v3395 = vadd.f32 %v3100, %v3394
        %v3396 = vpop.f32.mrb[0].mxu0
        %3397 = vmatprep.mubr.bf16.mxu0 %v3019
        %3398 = vmatmul.mubr.bf16.gmra.mrb[0].mxu0 %v3018
        %v3399 = vpop.f32.mrb[0].mxu0
        %v3400 = vadd.f32 %v3100, %v3399
        %v3401 = vpop.f32.mrb[0].mxu0
        %v3402 = vpop.f32.mrb[0].mxu0
        %v3403 = vpop.f32.mrb[0].mxu0
        %3404 = vdwg.mxu0
        %3405 = vmatprep.subr.bf16.mxu0 0
        %3406 = vmatpush1.bf16.msra.mxu0 %v3262
        %3407 = vmatprep.subr.bf16.mxu0 0
        %3408 = vmatpush1.bf16.msra.mxu0 %v3263
        %3409 = vmatprep.subr.bf16.mxu0 0
        %3410 = vmatpush1.bf16.msra.mxu0 %v3264
        %3411 = vmatprep.subr.bf16.mxu0 0
        %3412 = vmatpush1.bf16.msra.mxu0 %v3265
        %3413 = vmatprep.subr.bf16.mxu0 0
        %3414 = vmatpush1.bf16.msra.mxu0 %v3266
        %3415 = vmatprep.subr.bf16.mxu0 0
        %3416 = vmatpush1.bf16.msra.mxu0 %v3267
        %3417 = vmatprep.subr.bf16.mxu0 0
        %3418 = vmatpush1.bf16.msra.mxu0 %v3268
        %3419 = vmatprep.subr.bf16.mxu0 0
        %3420 = vmatpush1.bf16.msra.mxu0 %v3269
        %3421 = vmatprep.subr.bf16.mxu0 0
        %3422 = vmatpush1.bf16.msra.mxu0 %v3270
        %3423 = vmatprep.subr.bf16.mxu0 0
        %3424 = vmatpush1.bf16.msra.mxu0 %v3271
        %3425 = vmatprep.subr.bf16.mxu0 0
        %3426 = vmatpush1.bf16.msra.mxu0 %v3272
        %3427 = vmatprep.subr.bf16.mxu0 0
        %3428 = vmatpush1.bf16.msra.mxu0 %v3273
        %3429 = vmatprep.subr.bf16.mxu0 0
        %3430 = vmatpush1.bf16.msra.mxu0 %v3274
        %3431 = vmatprep.subr.bf16.mxu0 0
        %3432 = vmatpush1.bf16.msra.mxu0 %v3275
        %3433 = vmatprep.subr.bf16.mxu0 0
        %3434 = vmatpush1.bf16.msra.mxu0 %v3276
        %3435 = vmatprep.subr.bf16.mxu0 0
        %3436 = vmatpush1.bf16.msra.mxu0 %v3277
        %3437 = vmatprep.mubr.bf16.mxu0 %v3001
        %3438 = vmatmul.mubr.bf16.gmra.mrb[0].mxu0 %v3000
        %v3439 = vpop.f32.mrb[0].mxu0
        %v3440 = vadd.f32 %v3368, %v3439
        %v3441 = vpop.f32.mrb[0].mxu0
        %v3442 = vpop.f32.mrb[0].mxu0
        %v3443 = vadd.f32 %v3371, %v3442
        %v3444 = vpop.f32.mrb[0].mxu0
        %3445 = vmatprep.mubr.bf16.mxu0 %v3006
        %3446 = vmatmul.mubr.bf16.gmra.mrb[0].mxu0 %v3005
        %v3447 = vpop.f32.mrb[0].mxu0
        %v3448 = vadd.f32 %v3376, %v3447
        %v3449 = vpop.f32.mrb[0].mxu0
        %v3450 = vpop.f32.mrb[0].mxu0
        %v3451 = vadd.f32 %v3379, %v3450
        %v3452 = vpop.f32.mrb[0].mxu0
        %3453 = vmatprep.mubr.bf16.mxu0 %v3011
        %3454 = vmatmul.mubr.bf16.gmra.mrb[0].mxu0 %v3010
        %v3455 = vpop.f32.mrb[0].mxu0
        %v3456 = vadd.f32 %v3384, %v3455
        %v3457 = vpop.f32.mrb[0].mxu0
        %v3458 = vpop.f32.mrb[0].mxu0
        %v3459 = vadd.f32 %v3387, %v3458
        %v3460 = vpop.f32.mrb[0].mxu0
        %3461 = vmatprep.mubr.bf16.mxu0 %v3016
        %3462 = vmatmul.mubr.bf16.gmra.mrb[0].mxu0 %v3015
        %v3463 = vpop.f32.mrb[0].mxu0
        %v3464 = vadd.f32 %v3392, %v3463
        %v3465 = vpop.f32.mrb[0].mxu0
        %v3466 = vpop.f32.mrb[0].mxu0
        %v3467 = vadd.f32 %v3395, %v3466
        %v3468 = vpop.f32.mrb[0].mxu0
        %3469 = vmatprep.mubr.bf16.mxu0 %v3021
        %3470 = vmatmul.mubr.bf16.gmra.mrb[0].mxu0 %v3020
        %v3471 = vpop.f32.mrb[0].mxu0
        %v3472 = vadd.f32 %v3400, %v3471
        %v3473 = vpop.f32.mrb[0].mxu0
        %v3474 = vpop.f32.mrb[0].mxu0
        %v3475 = vpop.f32.mrb[0].mxu0
        %3476 = vdwg.mxu0
        %3477 = vmatprep.subr.bf16.mxu0 0
        %3478 = vmatpush1.bf16.msra.mxu0 %v3278
        %3479 = vmatprep.subr.bf16.mxu0 0
        %3480 = vmatpush1.bf16.msra.mxu0 %v3279
        %3481 = vmatprep.subr.bf16.mxu0 0
        %3482 = vmatpush1.bf16.msra.mxu0 %v3280
        %3483 = vmatprep.subr.bf16.mxu0 0
        %3484 = vmatpush1.bf16.msra.mxu0 %v3281
        %3485 = vmatprep.subr.bf16.mxu0 0
        %3486 = vmatpush1.bf16.msra.mxu0 0
        %3487 = vmatprep.subr.bf16.mxu0 0
        %3488 = vmatpush1.bf16.msra.mxu0 0
        %3489 = vmatprep.subr.bf16.mxu0 0
        %3490 = vmatpush1.bf16.msra.mxu0 0
        %3491 = vmatprep.subr.bf16.mxu0 0
        %3492 = vmatpush1.bf16.msra.mxu0 0
        %3493 = vmatprep.subr.bf16.mxu0 0
        %3494 = vmatpush1.bf16.msra.mxu0 0
        %3495 = vmatprep.subr.bf16.mxu0 0
        %3496 = vmatpush1.bf16.msra.mxu0 0
        %3497 = vmatprep.subr.bf16.mxu0 0
        %3498 = vmatpush1.bf16.msra.mxu0 0
        %3499 = vmatprep.subr.bf16.mxu0 0
        %3500 = vmatpush1.bf16.msra.mxu0 0
        %3501 = vmatprep.subr.bf16.mxu0 0
        %3502 = vmatpush1.bf16.msra.mxu0 0
        %3503 = vmatprep.subr.bf16.mxu0 0
        %3504 = vmatpush1.bf16.msra.mxu0 0
        %3505 = vmatprep.subr.bf16.mxu0 0
        %3506 = vmatpush1.bf16.msra.mxu0 0
        %3507 = vmatprep.subr.bf16.mxu0 0
        %3508 = vmatpush1.bf16.msra.mxu0 0
        %3509 = vmatprep.mubr.bf16.mxu0 0
        %3510 = vmatmul.mubr.bf16.gmra.mrb[0].mxu0 %v3319
        %v3511 = vpop.f32.mrb[0].mxu0
        %v3512 = vadd.f32 %v3440, %v3511
        %v3513 = vpop.f32.mrb[0].mxu0
        %v3514 = vpop.f32.mrb[0].mxu0
        %v3515 = vadd.f32 %v3443, %v3514
        %v3516 = vpop.f32.mrb[0].mxu0
        %3517 = vmatprep.mubr.bf16.mxu0 0
        %3518 = vmatmul.mubr.bf16.gmra.mrb[0].mxu0 %v3322
        %v3519 = vpop.f32.mrb[0].mxu0
        %v3520 = vadd.f32 %v3448, %v3519
        %v3521 = vpop.f32.mrb[0].mxu0
        %v3522 = vpop.f32.mrb[0].mxu0
        %v3523 = vadd.f32 %v3451, %v3522
        %v3524 = vpop.f32.mrb[0].mxu0
        %3525 = vmatprep.mubr.bf16.mxu0 0
        %3526 = vmatmul.mubr.bf16.gmra.mrb[0].mxu0 %v3325
        %v3527 = vpop.f32.mrb[0].mxu0
        %v3528 = vadd.f32 %v3456, %v3527
        %v3529 = vpop.f32.mrb[0].mxu0
        %v3530 = vpop.f32.mrb[0].mxu0
        %v3531 = vadd.f32 %v3459, %v3530
        %v3532 = vpop.f32.mrb[0].mxu0
        %3533 = vmatprep.mubr.bf16.mxu0 0
        %3534 = vmatmul.mubr.bf16.gmra.mrb[0].mxu0 %v3328
        %v3535 = vpop.f32.mrb[0].mxu0
        %v3536 = vadd.f32 %v3464, %v3535
        %v3537 = vpop.f32.mrb[0].mxu0
        %v3538 = vpop.f32.mrb[0].mxu0
        %v3539 = vadd.f32 %v3467, %v3538
        %v3540 = vpop.f32.mrb[0].mxu0
        %3541 = vmatprep.mubr.bf16.mxu0 0
        %3542 = vmatmul.mubr.bf16.gmra.mrb[0].mxu0 %v3331
        %v3543 = vpop.f32.mrb[0].mxu0
        %v3544 = vadd.f32 %v3472, %v3543
        %v3545 = vpop.f32.mrb[0].mxu0
        %v3546 = vpop.f32.mrb[0].mxu0
        %v3547 = vpop.f32.mrb[0].mxu0
        %3548 = vdwg.mxu0
        %v3549 = vmax.f32 %v3512, 0.0
        %v3550 = vmax.f32 %v3515, 0.0
        %v3551 = vmax.f32 %v3520, 0.0
        %v3552 = vmax.f32 %v3523, 0.0
        %v3553 = vmax.f32 %v3528, 0.0
        %v3554 = vmax.f32 %v3531, 0.0
        %v3555 = vmax.f32 %v3536, 0.0
        %v3556 = vmax.f32 %v3539, 0.0
        %v3557 = vmax.f32 %v3544, 0.0
        %3558 = vst.msk [vmem:[#allocation6] sm:$0xff] %vm2630, %v3549
        %3559 = vst.msk [vmem:[#allocation6 + $0x8] sm:$0xff] %vm2630, %v3550
        %3560 = vst.msk [vmem:[#allocation6 + $0x10] sm:$0xff] %vm2630, %v3551
        %3561 = vst.msk [vmem:[#allocation6 + $0x18] sm:$0xff] %vm2630, %v3552
        %3562 = vst.msk [vmem:[#allocation6 + $0x20] sm:$0xff] %vm2630, %v3553
        %3563 = vst.msk [vmem:[#allocation6 + $0x28] sm:$0xff] %vm2630, %v3554
        %3564 = vst.msk [vmem:[#allocation6 + $0x30] sm:$0xff] %vm2630, %v3555
        %3565 = vst.msk [vmem:[#allocation6 + $0x38] sm:$0xff] %vm2630, %v3556
        %3566 = vst.msk [vmem:[#allocation6 + $0x40] sm:$0x7] %vm2661, %v3557
        %v3567 = vld [vmem:[#allocation6] sm:$0x1]
        %v3568 = vlaneseq
        %vm3569 = vcmp.ge.s32.totalorder %v3568, 0
        %vm3570 = vcmp.lt.s32.totalorder %v3568, 64
        %vm3571 = vmand %vm3569, %vm3570
        %3572 = vst.msk [vmem:[#allocation7] sm:$0x1] %vm3571, %v3567
        %v3573 = vld [vmem:[#allocation6 + $0x1] sm:$0x1]
        %v3576 = vunpack.c.l.s4 1966171168
        %v3577 = vunpack.c.0.s8 %v3576
        %v3578 = vlaneseq
        %v3579 = vshrl.u32 %v3578, 7
        %v3580 = vsub.s32 %v3577, %v3579
        %v3581 = vrot.slane %v3573, %v3580
        %v3583 = vunpack.c.l.s4 1966171168
        %v3584 = vunpack.c.0.s8 %v3583
        %v3585 = vlaneseq
        %v3586 = vshrl.u32 %v3585, 7
        %v3587 = vsub.s32 %v3584, %v3586
        %v3588 = vrot.slane %v3581, %v3587
        %3589 = vrot.lane.b32.xlu0 %v3588, 64
        %v3590 = vpop.permute.xlu0 %3589
        %vm3592 = vcmp.ge.s32.totalorder %v3568, 64
        %vm3593 = vcmp.lt.s32.totalorder %v3568, 128
        %vm3594 = vmand %vm3592, %vm3593
        %3595 = vst.msk [vmem:[#allocation7] sm:$0x1] %vm3594, %v3590
        %v3596 = vld [vmem:[#allocation6 + $0x2] sm:$0x1]
        %3597 = vst.msk [vmem:[#allocation7 + $0x1] sm:$0x1] %vm3571, %v3596
        %v3598 = vld [vmem:[#allocation6 + $0x3] sm:$0x1]
        %v3601 = vunpack.c.l.s4 1966171168
        %v3602 = vunpack.c.0.s8 %v3601
        %v3603 = vlaneseq
        %v3604 = vshrl.u32 %v3603, 7
        %v3605 = vsub.s32 %v3602, %v3604
        %v3606 = vrot.slane %v3598, %v3605
        %v3608 = vunpack.c.l.s4 1966171168
        %v3609 = vunpack.c.0.s8 %v3608
        %v3610 = vlaneseq
        %v3611 = vshrl.u32 %v3610, 7
        %v3612 = vsub.s32 %v3609, %v3611
        %v3613 = vrot.slane %v3606, %v3612
        %3614 = vrot.lane.b32.xlu0 %v3613, 64
        %v3615 = vpop.permute.xlu0 %3614
        %3617 = vst.msk [vmem:[#allocation7 + $0x1] sm:$0x1] %vm3594, %v3615
        %v3618 = vld [vmem:[#allocation6 + $0x4] sm:$0x1]
        %3619 = vst.msk [vmem:[#allocation7 + $0x2] sm:$0x1] %vm3571, %v3618
        %v3620 = vld [vmem:[#allocation6 + $0x5] sm:$0x1]
        %v3623 = vunpack.c.l.s4 1966171168
        %v3624 = vunpack.c.0.s8 %v3623
        %v3625 = vlaneseq
        %v3626 = vshrl.u32 %v3625, 7
        %v3627 = vsub.s32 %v3624, %v3626
        %v3628 = vrot.slane %v3620, %v3627
        %v3630 = vunpack.c.l.s4 1966171168
        %v3631 = vunpack.c.0.s8 %v3630
        %v3632 = vlaneseq
        %v3633 = vshrl.u32 %v3632, 7
        %v3634 = vsub.s32 %v3631, %v3633
        %v3635 = vrot.slane %v3628, %v3634
        %3636 = vrot.lane.b32.xlu0 %v3635, 64
        %v3637 = vpop.permute.xlu0 %3636
        %3639 = vst.msk [vmem:[#allocation7 + $0x2] sm:$0x1] %vm3594, %v3637
        %v3640 = vld [vmem:[#allocation6 + $0x6] sm:$0x1]
        %3641 = vst.msk [vmem:[#allocation7 + $0x3] sm:$0x1] %vm3571, %v3640
        %v3642 = vld [vmem:[#allocation6 + $0xa] sm:$0x1]
        %v3645 = vunpack.c.l.s4 1966171168
        %v3646 = vunpack.c.0.s8 %v3645
        %v3647 = vlaneseq
        %v3648 = vshrl.u32 %v3647, 7
        %v3649 = vsub.s32 %v3646, %v3648
        %v3650 = vrot.slane %v3642, %v3649
        %v3652 = vunpack.c.l.s4 1966171168
        %v3653 = vunpack.c.0.s8 %v3652
        %v3654 = vlaneseq
        %v3655 = vshrl.u32 %v3654, 7
        %v3656 = vsub.s32 %v3653, %v3655
        %v3657 = vrot.slane %v3650, %v3656
        %3658 = vrot.lane.b32.xlu0 %v3657, 64
        %v3659 = vpop.permute.xlu0 %3658
        %3661 = vst.msk [vmem:[#allocation7 + $0x3] sm:$0x1] %vm3594, %v3659
        %v3662 = vld [vmem:[#allocation6 + $0xb] sm:$0x1]
        %3663 = vst.msk [vmem:[#allocation7 + $0x4] sm:$0x1] %vm3571, %v3662
        %v3664 = vld [vmem:[#allocation6 + $0xc] sm:$0x1]
        %v3667 = vunpack.c.l.s4 1966171168
        %v3668 = vunpack.c.0.s8 %v3667
        %v3669 = vlaneseq
        %v3670 = vshrl.u32 %v3669, 7
        %v3671 = vsub.s32 %v3668, %v3670
        %v3672 = vrot.slane %v3664, %v3671
        %v3674 = vunpack.c.l.s4 1966171168
        %v3675 = vunpack.c.0.s8 %v3674
        %v3676 = vlaneseq
        %v3677 = vshrl.u32 %v3676, 7
        %v3678 = vsub.s32 %v3675, %v3677
        %v3679 = vrot.slane %v3672, %v3678
        %3680 = vrot.lane.b32.xlu0 %v3679, 64
        %v3681 = vpop.permute.xlu0 %3680
        %3683 = vst.msk [vmem:[#allocation7 + $0x4] sm:$0x1] %vm3594, %v3681
        %v3684 = vld [vmem:[#allocation6 + $0xd] sm:$0x1]
        %3685 = vst.msk [vmem:[#allocation7 + $0x5] sm:$0x1] %vm3571, %v3684
        %v3686 = vld [vmem:[#allocation6 + $0xe] sm:$0x1]
        %v3689 = vunpack.c.l.s4 1966171168
        %v3690 = vunpack.c.0.s8 %v3689
        %v3691 = vlaneseq
        %v3692 = vshrl.u32 %v3691, 7
        %v3693 = vsub.s32 %v3690, %v3692
        %v3694 = vrot.slane %v3686, %v3693
        %v3696 = vunpack.c.l.s4 1966171168
        %v3697 = vunpack.c.0.s8 %v3696
        %v3698 = vlaneseq
        %v3699 = vshrl.u32 %v3698, 7
        %v3700 = vsub.s32 %v3697, %v3699
        %v3701 = vrot.slane %v3694, %v3700
        %3702 = vrot.lane.b32.xlu0 %v3701, 64
        %v3703 = vpop.permute.xlu0 %3702
        %3705 = vst.msk [vmem:[#allocation7 + $0x5] sm:$0x1] %vm3594, %v3703
        %v3706 = vld [vmem:[#allocation6 + $0xf] sm:$0x1]
        %3707 = vst.msk [vmem:[#allocation7 + $0x6] sm:$0x1] %vm3571, %v3706
        %v3708 = vld [vmem:[#allocation6 + $0x10] sm:$0x1]
        %v3711 = vunpack.c.l.s4 1966171168
        %v3712 = vunpack.c.0.s8 %v3711
        %v3713 = vlaneseq
        %v3714 = vshrl.u32 %v3713, 7
        %v3715 = vsub.s32 %v3712, %v3714
        %v3716 = vrot.slane %v3708, %v3715
        %v3718 = vunpack.c.l.s4 1966171168
        %v3719 = vunpack.c.0.s8 %v3718
        %v3720 = vlaneseq
        %v3721 = vshrl.u32 %v3720, 7
        %v3722 = vsub.s32 %v3719, %v3721
        %v3723 = vrot.slane %v3716, %v3722
        %3724 = vrot.lane.b32.xlu0 %v3723, 64
        %v3725 = vpop.permute.xlu0 %3724
        %3727 = vst.msk [vmem:[#allocation7 + $0x6] sm:$0x1] %vm3594, %v3725
        %v3728 = vld [vmem:[#allocation6 + $0x14] sm:$0x1]
        %3729 = vst.msk [vmem:[#allocation7 + $0x7] sm:$0x1] %vm3571, %v3728
        %v3730 = vld [vmem:[#allocation6 + $0x15] sm:$0x1]
        %v3733 = vunpack.c.l.s4 1966171168
        %v3734 = vunpack.c.0.s8 %v3733
        %v3735 = vlaneseq
        %v3736 = vshrl.u32 %v3735, 7
        %v3737 = vsub.s32 %v3734, %v3736
        %v3738 = vrot.slane %v3730, %v3737
        %v3740 = vunpack.c.l.s4 1966171168
        %v3741 = vunpack.c.0.s8 %v3740
        %v3742 = vlaneseq
        %v3743 = vshrl.u32 %v3742, 7
        %v3744 = vsub.s32 %v3741, %v3743
        %v3745 = vrot.slane %v3738, %v3744
        %3746 = vrot.lane.b32.xlu0 %v3745, 64
        %v3747 = vpop.permute.xlu0 %3746
        %3749 = vst.msk [vmem:[#allocation7 + $0x7] sm:$0x1] %vm3594, %v3747
        %v3750 = vld [vmem:[#allocation6 + $0x16] sm:$0x1]
        %3751 = vst.msk [vmem:[#allocation7 + $0x8] sm:$0x1] %vm3571, %v3750
        %v3752 = vld [vmem:[#allocation6 + $0x17] sm:$0x1]
        %v3755 = vunpack.c.l.s4 1966171168
        %v3756 = vunpack.c.0.s8 %v3755
        %v3757 = vlaneseq
        %v3758 = vshrl.u32 %v3757, 7
        %v3759 = vsub.s32 %v3756, %v3758
        %v3760 = vrot.slane %v3752, %v3759
        %v3762 = vunpack.c.l.s4 1966171168
        %v3763 = vunpack.c.0.s8 %v3762
        %v3764 = vlaneseq
        %v3765 = vshrl.u32 %v3764, 7
        %v3766 = vsub.s32 %v3763, %v3765
        %v3767 = vrot.slane %v3760, %v3766
        %3768 = vrot.lane.b32.xlu0 %v3767, 64
        %v3769 = vpop.permute.xlu0 %3768
        %3771 = vst.msk [vmem:[#allocation7 + $0x8] sm:$0x1] %vm3594, %v3769
        %v3772 = vld [vmem:[#allocation6 + $0x18] sm:$0x1]
        %3773 = vst.msk [vmem:[#allocation7 + $0x9] sm:$0x1] %vm3571, %v3772
        %v3774 = vld [vmem:[#allocation6 + $0x19] sm:$0x1]
        %v3777 = vunpack.c.l.s4 1966171168
        %v3778 = vunpack.c.0.s8 %v3777
        %v3779 = vlaneseq
        %v3780 = vshrl.u32 %v3779, 7
        %v3781 = vsub.s32 %v3778, %v3780
        %v3782 = vrot.slane %v3774, %v3781
        %v3784 = vunpack.c.l.s4 1966171168
        %v3785 = vunpack.c.0.s8 %v3784
        %v3786 = vlaneseq
        %v3787 = vshrl.u32 %v3786, 7
        %v3788 = vsub.s32 %v3785, %v3787
        %v3789 = vrot.slane %v3782, %v3788
        %3790 = vrot.lane.b32.xlu0 %v3789, 64
        %v3791 = vpop.permute.xlu0 %3790
        %3793 = vst.msk [vmem:[#allocation7 + $0x9] sm:$0x1] %vm3594, %v3791
        %v3794 = vld [vmem:[#allocation6 + $0x1a] sm:$0x1]
        %3795 = vst.msk [vmem:[#allocation7 + $0xa] sm:$0x1] %vm3571, %v3794
        %v3796 = vld [vmem:[#allocation6 + $0x1e] sm:$0x1]
        %v3799 = vunpack.c.l.s4 1966171168
        %v3800 = vunpack.c.0.s8 %v3799
        %v3801 = vlaneseq
        %v3802 = vshrl.u32 %v3801, 7
        %v3803 = vsub.s32 %v3800, %v3802
        %v3804 = vrot.slane %v3796, %v3803
        %v3806 = vunpack.c.l.s4 1966171168
        %v3807 = vunpack.c.0.s8 %v3806
        %v3808 = vlaneseq
        %v3809 = vshrl.u32 %v3808, 7
        %v3810 = vsub.s32 %v3807, %v3809
        %v3811 = vrot.slane %v3804, %v3810
        %3812 = vrot.lane.b32.xlu0 %v3811, 64
        %v3813 = vpop.permute.xlu0 %3812
        %3815 = vst.msk [vmem:[#allocation7 + $0xa] sm:$0x1] %vm3594, %v3813
        %v3816 = vld [vmem:[#allocation6 + $0x1f] sm:$0x1]
        %3817 = vst.msk [vmem:[#allocation7 + $0xb] sm:$0x1] %vm3571, %v3816
        %v3818 = vld [vmem:[#allocation6 + $0x20] sm:$0x1]
        %v3821 = vunpack.c.l.s4 1966171168
        %v3822 = vunpack.c.0.s8 %v3821
        %v3823 = vlaneseq
        %v3824 = vshrl.u32 %v3823, 7
        %v3825 = vsub.s32 %v3822, %v3824
        %v3826 = vrot.slane %v3818, %v3825
        %v3828 = vunpack.c.l.s4 1966171168
        %v3829 = vunpack.c.0.s8 %v3828
        %v3830 = vlaneseq
        %v3831 = vshrl.u32 %v3830, 7
        %v3832 = vsub.s32 %v3829, %v3831
        %v3833 = vrot.slane %v3826, %v3832
        %3834 = vrot.lane.b32.xlu0 %v3833, 64
        %v3835 = vpop.permute.xlu0 %3834
        %3837 = vst.msk [vmem:[#allocation7 + $0xb] sm:$0x1] %vm3594, %v3835
        %v3838 = vld [vmem:[#allocation6 + $0x21] sm:$0x1]
        %3839 = vst.msk [vmem:[#allocation7 + $0xc] sm:$0x1] %vm3571, %v3838
        %v3840 = vld [vmem:[#allocation6 + $0x22] sm:$0x1]
        %v3843 = vunpack.c.l.s4 1966171168
        %v3844 = vunpack.c.0.s8 %v3843
        %v3845 = vlaneseq
        %v3846 = vshrl.u32 %v3845, 7
        %v3847 = vsub.s32 %v3844, %v3846
        %v3848 = vrot.slane %v3840, %v3847
        %v3850 = vunpack.c.l.s4 1966171168
        %v3851 = vunpack.c.0.s8 %v3850
        %v3852 = vlaneseq
        %v3853 = vshrl.u32 %v3852, 7
        %v3854 = vsub.s32 %v3851, %v3853
        %v3855 = vrot.slane %v3848, %v3854
        %3856 = vrot.lane.b32.xlu0 %v3855, 64
        %v3857 = vpop.permute.xlu0 %3856
        %3859 = vst.msk [vmem:[#allocation7 + $0xc] sm:$0x1] %vm3594, %v3857
        %v3860 = vld [vmem:[#allocation6 + $0x23] sm:$0x1]
        %3861 = vst.msk [vmem:[#allocation7 + $0xd] sm:$0x1] %vm3571, %v3860
        %v3862 = vld [vmem:[#allocation6 + $0x24] sm:$0x1]
        %v3865 = vunpack.c.l.s4 1966171168
        %v3866 = vunpack.c.0.s8 %v3865
        %v3867 = vlaneseq
        %v3868 = vshrl.u32 %v3867, 7
        %v3869 = vsub.s32 %v3866, %v3868
        %v3870 = vrot.slane %v3862, %v3869
        %v3872 = vunpack.c.l.s4 1966171168
        %v3873 = vunpack.c.0.s8 %v3872
        %v3874 = vlaneseq
        %v3875 = vshrl.u32 %v3874, 7
        %v3876 = vsub.s32 %v3873, %v3875
        %v3877 = vrot.slane %v3870, %v3876
        %3878 = vrot.lane.b32.xlu0 %v3877, 64
        %v3879 = vpop.permute.xlu0 %3878
        %3881 = vst.msk [vmem:[#allocation7 + $0xd] sm:$0x1] %vm3594, %v3879
        %v3882 = vld [vmem:[#allocation6 + $0x28] sm:$0x1]
        %3883 = vst.msk [vmem:[#allocation7 + $0xe] sm:$0x1] %vm3571, %v3882
        %v3884 = vld [vmem:[#allocation6 + $0x29] sm:$0x1]
        %v3887 = vunpack.c.l.s4 1966171168
        %v3888 = vunpack.c.0.s8 %v3887
        %v3889 = vlaneseq
        %v3890 = vshrl.u32 %v3889, 7
        %v3891 = vsub.s32 %v3888, %v3890
        %v3892 = vrot.slane %v3884, %v3891
        %v3894 = vunpack.c.l.s4 1966171168
        %v3895 = vunpack.c.0.s8 %v3894
        %v3896 = vlaneseq
        %v3897 = vshrl.u32 %v3896, 7
        %v3898 = vsub.s32 %v3895, %v3897
        %v3899 = vrot.slane %v3892, %v3898
        %3900 = vrot.lane.b32.xlu0 %v3899, 64
        %v3901 = vpop.permute.xlu0 %3900
        %3903 = vst.msk [vmem:[#allocation7 + $0xe] sm:$0x1] %vm3594, %v3901
        %v3904 = vld [vmem:[#allocation6 + $0x2a] sm:$0x1]
        %3905 = vst.msk [vmem:[#allocation7 + $0xf] sm:$0x1] %vm3571, %v3904
        %v3906 = vld [vmem:[#allocation6 + $0x2b] sm:$0x1]
        %v3909 = vunpack.c.l.s4 1966171168
        %v3910 = vunpack.c.0.s8 %v3909
        %v3911 = vlaneseq
        %v3912 = vshrl.u32 %v3911, 7
        %v3913 = vsub.s32 %v3910, %v3912
        %v3914 = vrot.slane %v3906, %v3913
        %v3916 = vunpack.c.l.s4 1966171168
        %v3917 = vunpack.c.0.s8 %v3916
        %v3918 = vlaneseq
        %v3919 = vshrl.u32 %v3918, 7
        %v3920 = vsub.s32 %v3917, %v3919
        %v3921 = vrot.slane %v3914, %v3920
        %3922 = vrot.lane.b32.xlu0 %v3921, 64
        %v3923 = vpop.permute.xlu0 %3922
        %3925 = vst.msk [vmem:[#allocation7 + $0xf] sm:$0x1] %vm3594, %v3923
        %v3926 = vld [vmem:[#allocation6 + $0x2c] sm:$0x1]
        %3927 = vst.msk [vmem:[#allocation7 + $0x10] sm:$0x1] %vm3571, %v3926
        %v3928 = vld [vmem:[#allocation6 + $0x2d] sm:$0x1]
        %v3931 = vunpack.c.l.s4 1966171168
        %v3932 = vunpack.c.0.s8 %v3931
        %v3933 = vlaneseq
        %v3934 = vshrl.u32 %v3933, 7
        %v3935 = vsub.s32 %v3932, %v3934
        %v3936 = vrot.slane %v3928, %v3935
        %v3938 = vunpack.c.l.s4 1966171168
        %v3939 = vunpack.c.0.s8 %v3938
        %v3940 = vlaneseq
        %v3941 = vshrl.u32 %v3940, 7
        %v3942 = vsub.s32 %v3939, %v3941
        %v3943 = vrot.slane %v3936, %v3942
        %3944 = vrot.lane.b32.xlu0 %v3943, 64
        %v3945 = vpop.permute.xlu0 %3944
        %3947 = vst.msk [vmem:[#allocation7 + $0x10] sm:$0x1] %vm3594, %v3945
        %v3948 = vld [vmem:[#allocation6 + $0x2e] sm:$0x1]
        %3949 = vst.msk [vmem:[#allocation7 + $0x11] sm:$0x1] %vm3571, %v3948
        %v3950 = vld [vmem:[#allocation6 + $0x32] sm:$0x1]
        %v3953 = vunpack.c.l.s4 1966171168
        %v3954 = vunpack.c.0.s8 %v3953
        %v3955 = vlaneseq
        %v3956 = vshrl.u32 %v3955, 7
        %v3957 = vsub.s32 %v3954, %v3956
        %v3958 = vrot.slane %v3950, %v3957
        %v3960 = vunpack.c.l.s4 1966171168
        %v3961 = vunpack.c.0.s8 %v3960
        %v3962 = vlaneseq
        %v3963 = vshrl.u32 %v3962, 7
        %v3964 = vsub.s32 %v3961, %v3963
        %v3965 = vrot.slane %v3958, %v3964
        %3966 = vrot.lane.b32.xlu0 %v3965, 64
        %v3967 = vpop.permute.xlu0 %3966
        %3969 = vst.msk [vmem:[#allocation7 + $0x11] sm:$0x1] %vm3594, %v3967
        %v3970 = vld [vmem:[#allocation6 + $0x33] sm:$0x1]
        %3971 = vst.msk [vmem:[#allocation7 + $0x12] sm:$0x1] %vm3571, %v3970
        %v3972 = vld [vmem:[#allocation6 + $0x34] sm:$0x1]
        %v3975 = vunpack.c.l.s4 1966171168
        %v3976 = vunpack.c.0.s8 %v3975
        %v3977 = vlaneseq
        %v3978 = vshrl.u32 %v3977, 7
        %v3979 = vsub.s32 %v3976, %v3978
        %v3980 = vrot.slane %v3972, %v3979
        %v3982 = vunpack.c.l.s4 1966171168
        %v3983 = vunpack.c.0.s8 %v3982
        %v3984 = vlaneseq
        %v3985 = vshrl.u32 %v3984, 7
        %v3986 = vsub.s32 %v3983, %v3985
        %v3987 = vrot.slane %v3980, %v3986
        %3988 = vrot.lane.b32.xlu0 %v3987, 64
        %v3989 = vpop.permute.xlu0 %3988
        %3991 = vst.msk [vmem:[#allocation7 + $0x12] sm:$0x1] %vm3594, %v3989
        %v3992 = vld [vmem:[#allocation6 + $0x35] sm:$0x1]
        %3993 = vst.msk [vmem:[#allocation7 + $0x13] sm:$0x1] %vm3571, %v3992
        %v3994 = vld [vmem:[#allocation6 + $0x36] sm:$0x1]
        %v3997 = vunpack.c.l.s4 1966171168
        %v3998 = vunpack.c.0.s8 %v3997
        %v3999 = vlaneseq
        %v4000 = vshrl.u32 %v3999, 7
        %v4001 = vsub.s32 %v3998, %v4000
        %v4002 = vrot.slane %v3994, %v4001
        %v4004 = vunpack.c.l.s4 1966171168
        %v4005 = vunpack.c.0.s8 %v4004
        %v4006 = vlaneseq
        %v4007 = vshrl.u32 %v4006, 7
        %v4008 = vsub.s32 %v4005, %v4007
        %v4009 = vrot.slane %v4002, %v4008
        %4010 = vrot.lane.b32.xlu0 %v4009, 64
        %v4011 = vpop.permute.xlu0 %4010
        %4013 = vst.msk [vmem:[#allocation7 + $0x13] sm:$0x1] %vm3594, %v4011
        %v4014 = vld [vmem:[#allocation6 + $0x37] sm:$0x1]
        %4015 = vst.msk [vmem:[#allocation7 + $0x14] sm:$0x1] %vm3571, %v4014
        %v4016 = vld [vmem:[#allocation6 + $0x38] sm:$0x1]
        %v4019 = vunpack.c.l.s4 1966171168
        %v4020 = vunpack.c.0.s8 %v4019
        %v4021 = vlaneseq
        %v4022 = vshrl.u32 %v4021, 7
        %v4023 = vsub.s32 %v4020, %v4022
        %v4024 = vrot.slane %v4016, %v4023
        %v4026 = vunpack.c.l.s4 1966171168
        %v4027 = vunpack.c.0.s8 %v4026
        %v4028 = vlaneseq
        %v4029 = vshrl.u32 %v4028, 7
        %v4030 = vsub.s32 %v4027, %v4029
        %v4031 = vrot.slane %v4024, %v4030
        %4032 = vrot.lane.b32.xlu0 %v4031, 64
        %v4033 = vpop.permute.xlu0 %4032
        %4035 = vst.msk [vmem:[#allocation7 + $0x14] sm:$0x1] %vm3594, %v4033
        %v4036 = vld [vmem:[#allocation6 + $0x3c] sm:$0x1]
        %4037 = vst.msk [vmem:[#allocation7 + $0x15] sm:$0x1] %vm3571, %v4036
        %v4038 = vld [vmem:[#allocation6 + $0x3d] sm:$0x1]
        %v4041 = vunpack.c.l.s4 1966171168
        %v4042 = vunpack.c.0.s8 %v4041
        %v4043 = vlaneseq
        %v4044 = vshrl.u32 %v4043, 7
        %v4045 = vsub.s32 %v4042, %v4044
        %v4046 = vrot.slane %v4038, %v4045
        %v4048 = vunpack.c.l.s4 1966171168
        %v4049 = vunpack.c.0.s8 %v4048
        %v4050 = vlaneseq
        %v4051 = vshrl.u32 %v4050, 7
        %v4052 = vsub.s32 %v4049, %v4051
        %v4053 = vrot.slane %v4046, %v4052
        %4054 = vrot.lane.b32.xlu0 %v4053, 64
        %v4055 = vpop.permute.xlu0 %4054
        %4057 = vst.msk [vmem:[#allocation7 + $0x15] sm:$0x1] %vm3594, %v4055
        %v4058 = vld [vmem:[#allocation6 + $0x3e] sm:$0x1]
        %4059 = vst.msk [vmem:[#allocation7 + $0x16] sm:$0x1] %vm3571, %v4058
        %v4060 = vld [vmem:[#allocation6 + $0x3f] sm:$0x1]
        %v4063 = vunpack.c.l.s4 1966171168
        %v4064 = vunpack.c.0.s8 %v4063
        %v4065 = vlaneseq
        %v4066 = vshrl.u32 %v4065, 7
        %v4067 = vsub.s32 %v4064, %v4066
        %v4068 = vrot.slane %v4060, %v4067
        %v4070 = vunpack.c.l.s4 1966171168
        %v4071 = vunpack.c.0.s8 %v4070
        %v4072 = vlaneseq
        %v4073 = vshrl.u32 %v4072, 7
        %v4074 = vsub.s32 %v4071, %v4073
        %v4075 = vrot.slane %v4068, %v4074
        %4076 = vrot.lane.b32.xlu0 %v4075, 64
        %v4077 = vpop.permute.xlu0 %4076
        %4079 = vst.msk [vmem:[#allocation7 + $0x16] sm:$0x1] %vm3594, %v4077
        %v4080 = vld [vmem:[#allocation6 + $0x40] sm:$0x1]
        %4081 = vst.msk [vmem:[#allocation7 + $0x17] sm:$0x1] %vm3571, %v4080
        %v4082 = vld [vmem:[#allocation6 + $0x41] sm:$0x1]
        %v4085 = vunpack.c.l.s4 1966171168
        %v4086 = vunpack.c.0.s8 %v4085
        %v4087 = vlaneseq
        %v4088 = vshrl.u32 %v4087, 7
        %v4089 = vsub.s32 %v4086, %v4088
        %v4090 = vrot.slane %v4082, %v4089
        %v4092 = vunpack.c.l.s4 1966171168
        %v4093 = vunpack.c.0.s8 %v4092
        %v4094 = vlaneseq
        %v4095 = vshrl.u32 %v4094, 7
        %v4096 = vsub.s32 %v4093, %v4095
        %v4097 = vrot.slane %v4090, %v4096
        %4098 = vrot.lane.b32.xlu0 %v4097, 64
        %v4099 = vpop.permute.xlu0 %4098
        %4101 = vst.msk [vmem:[#allocation7 + $0x17] sm:$0x1] %vm3594, %v4099
        %v4102 = vld [vmem:[#allocation6 + $0x42] sm:$0x1]
        %4103 = vst.msk [vmem:[#allocation7 + $0x18] sm:$0x1] %vm3571, %v4102
        %v4104 = vld [vmem:[#allocation7] sm:$0xff]
        %v4105 = vld [vmem:[#allocation7 + $0x8] sm:$0xff]
        %v4106 = vld [vmem:[#allocation7 + $0x10] sm:$0xff]
        %v4107 = vld [vmem:[#allocation7 + $0x18] sm:$0x1]
        %v4112 = vlaneseq
        %v4113 = vshrl.u32 %v4112, 7
        %v4114 = vsub.s32 0, %v4113
        %v4115 = vrot.slane %v4104, %v4114
        %v4116 = vlaneseq
        %v4117 = vshrl.u32 %v4116, 7
        %v4118 = vsub.s32 1, %v4117
        %v4119 = vrot.slane %v4104, %v4118
        %v4120 = vlaneseq
        %v4121 = vshrl.u32 %v4120, 7
        %v4122 = vsub.s32 2, %v4121
        %v4123 = vrot.slane %v4104, %v4122
        %v4124 = vlaneseq
        %v4125 = vshrl.u32 %v4124, 7
        %v4126 = vsub.s32 3, %v4125
        %v4127 = vrot.slane %v4104, %v4126
        %v4128 = vlaneseq
        %v4129 = vshrl.u32 %v4128, 7
        %v4130 = vsub.s32 4, %v4129
        %v4131 = vrot.slane %v4104, %v4130
        %v4132 = vlaneseq
        %v4133 = vshrl.u32 %v4132, 7
        %v4134 = vsub.s32 5, %v4133
        %v4135 = vrot.slane %v4104, %v4134
        %v4136 = vlaneseq
        %v4137 = vshrl.u32 %v4136, 7
        %v4138 = vsub.s32 6, %v4137
        %v4139 = vrot.slane %v4104, %v4138
        %v4140 = vlaneseq
        %v4141 = vshrl.u32 %v4140, 7
        %v4142 = vsub.s32 7, %v4141
        %v4143 = vrot.slane %v4104, %v4142
        %v4144 = vlaneseq
        %v4145 = vshrl.u32 %v4144, 7
        %v4146 = vsub.s32 0, %v4145
        %v4147 = vrot.slane %v4105, %v4146
        %v4148 = vlaneseq
        %v4149 = vshrl.u32 %v4148, 7
        %v4150 = vsub.s32 1, %v4149
        %v4151 = vrot.slane %v4105, %v4150
        %v4152 = vlaneseq
        %v4153 = vshrl.u32 %v4152, 7
        %v4154 = vsub.s32 2, %v4153
        %v4155 = vrot.slane %v4105, %v4154
        %v4156 = vlaneseq
        %v4157 = vshrl.u32 %v4156, 7
        %v4158 = vsub.s32 3, %v4157
        %v4159 = vrot.slane %v4105, %v4158
        %v4160 = vlaneseq
        %v4161 = vshrl.u32 %v4160, 7
        %v4162 = vsub.s32 4, %v4161
        %v4163 = vrot.slane %v4105, %v4162
        %v4164 = vlaneseq
        %v4165 = vshrl.u32 %v4164, 7
        %v4166 = vsub.s32 5, %v4165
        %v4167 = vrot.slane %v4105, %v4166
        %v4168 = vlaneseq
        %v4169 = vshrl.u32 %v4168, 7
        %v4170 = vsub.s32 6, %v4169
        %v4171 = vrot.slane %v4105, %v4170
        %v4172 = vlaneseq
        %v4173 = vshrl.u32 %v4172, 7
        %v4174 = vsub.s32 7, %v4173
        %v4175 = vrot.slane %v4105, %v4174
        %v4176 = vlaneseq
        %v4177 = vshrl.u32 %v4176, 7
        %v4178 = vsub.s32 0, %v4177
        %v4179 = vrot.slane %v4106, %v4178
        %v4180 = vlaneseq
        %v4181 = vshrl.u32 %v4180, 7
        %v4182 = vsub.s32 1, %v4181
        %v4183 = vrot.slane %v4106, %v4182
        %v4184 = vlaneseq
        %v4185 = vshrl.u32 %v4184, 7
        %v4186 = vsub.s32 2, %v4185
        %v4187 = vrot.slane %v4106, %v4186
        %v4188 = vlaneseq
        %v4189 = vshrl.u32 %v4188, 7
        %v4190 = vsub.s32 3, %v4189
        %v4191 = vrot.slane %v4106, %v4190
        %v4192 = vlaneseq
        %v4193 = vshrl.u32 %v4192, 7
        %v4194 = vsub.s32 4, %v4193
        %v4195 = vrot.slane %v4106, %v4194
        %v4196 = vlaneseq
        %v4197 = vshrl.u32 %v4196, 7
        %v4198 = vsub.s32 5, %v4197
        %v4199 = vrot.slane %v4106, %v4198
        %v4200 = vlaneseq
        %v4201 = vshrl.u32 %v4200, 7
        %v4202 = vsub.s32 6, %v4201
        %v4203 = vrot.slane %v4106, %v4202
        %v4204 = vlaneseq
        %v4205 = vshrl.u32 %v4204, 7
        %v4206 = vsub.s32 7, %v4205
        %v4207 = vrot.slane %v4106, %v4206
        %v4208 = vlaneseq
        %v4209 = vshrl.u32 %v4208, 7
        %v4210 = vsub.s32 0, %v4209
        %v4211 = vrot.slane %v4107, %v4210
        %v4237 = vpack.c.bf16 %v4115, %v4115
        %v4238 = vpack.c.bf16 %v4119, %v4119
        %v4239 = vpack.c.bf16 %v4123, %v4123
        %v4240 = vpack.c.bf16 %v4127, %v4127
        %v4241 = vpack.c.bf16 %v4131, %v4131
        %v4242 = vpack.c.bf16 %v4135, %v4135
        %v4243 = vpack.c.bf16 %v4139, %v4139
        %v4244 = vpack.c.bf16 %v4143, %v4143
        %v4245 = vpack.c.bf16 %v4147, %v4147
        %v4246 = vpack.c.bf16 %v4151, %v4151
        %v4247 = vpack.c.bf16 %v4155, %v4155
        %v4248 = vpack.c.bf16 %v4159, %v4159
        %v4249 = vpack.c.bf16 %v4163, %v4163
        %v4250 = vpack.c.bf16 %v4167, %v4167
        %v4251 = vpack.c.bf16 %v4171, %v4171
        %v4252 = vpack.c.bf16 %v4175, %v4175
        %v4253 = vpack.c.bf16 %v4179, %v4179
        %v4254 = vpack.c.bf16 %v4183, %v4183
        %v4255 = vpack.c.bf16 %v4187, %v4187
        %v4256 = vpack.c.bf16 %v4191, %v4191
        %v4257 = vpack.c.bf16 %v4195, %v4195
        %v4258 = vpack.c.bf16 %v4199, %v4199
        %v4259 = vpack.c.bf16 %v4203, %v4203
        %v4260 = vpack.c.bf16 %v4207, %v4207
        %v4261 = vpack.c.bf16 %v4211, %v4211
        %v4262 = vld [vmem:[%s7] sm:$0xf]
        %v4263 = vld [vmem:[%s7 + $0x4] sm:$0xf]
        %v4264 = vld [vmem:[%s7 + $0x8] sm:$0xf]
        %v4265 = vld [vmem:[%s7 + $0xc] sm:$0xf]
        %v4266 = vld [vmem:[%s7 + $0x10] sm:$0xf]
        %v4267 = vld [vmem:[%s7 + $0x14] sm:$0xf]
        %v4268 = vld [vmem:[%s7 + $0x18] sm:$0xf]
        %v4269 = vld [vmem:[%s7 + $0x1c] sm:$0xf]
        %v4270 = vld [vmem:[%s7 + $0x20] sm:$0xf]
        %v4271 = vld [vmem:[%s7 + $0x24] sm:$0xf]
        %v4272 = vld [vmem:[%s7 + $0x28] sm:$0xf]
        %v4273 = vld [vmem:[%s7 + $0x2c] sm:$0xf]
        %v4274 = vld [vmem:[%s7 + $0x30] sm:$0xf]
        %v4275 = vld [vmem:[%s7 + $0x34] sm:$0xf]
        %v4276 = vld [vmem:[%s7 + $0x38] sm:$0xf]
        %v4277 = vld [vmem:[%s7 + $0x3c] sm:$0xf]
        %v4278 = vld [vmem:[%s7 + $0x40] sm:$0xf]
        %v4279 = vld [vmem:[%s7 + $0x44] sm:$0xf]
        %v4280 = vld [vmem:[%s7 + $0x48] sm:$0xf]
        %v4281 = vld [vmem:[%s7 + $0x4c] sm:$0xf]
        %v4282 = vld [vmem:[%s7 + $0x50] sm:$0xf]
        %v4283 = vld [vmem:[%s7 + $0x54] sm:$0xf]
        %v4284 = vld [vmem:[%s7 + $0x58] sm:$0xf]
        %v4285 = vld [vmem:[%s7 + $0x5c] sm:$0xf]
        %v4286 = vld [vmem:[%s7 + $0x60] sm:$0xf]
        %v4287 = vld [vmem:[%s7 + $0x64] sm:$0xf]
        %v4288 = vld [vmem:[%s7 + $0x68] sm:$0xf]
        %v4289 = vld [vmem:[%s7 + $0x6c] sm:$0xf]
        %v4290 = vld [vmem:[%s7 + $0x70] sm:$0xf]
        %v4291 = vld [vmem:[%s7 + $0x74] sm:$0xf]
        %v4292 = vld [vmem:[%s7 + $0x78] sm:$0xf]
        %v4293 = vld [vmem:[%s7 + $0x7c] sm:$0xf]
        %v4294 = vld [vmem:[%s7 + $0x80] sm:$0xf]
        %v4295 = vld [vmem:[%s7 + $0x84] sm:$0xf]
        %v4296 = vld [vmem:[%s7 + $0x88] sm:$0xf]
        %v4297 = vld [vmem:[%s7 + $0x8c] sm:$0xf]
        %v4298 = vld [vmem:[%s7 + $0x90] sm:$0xf]
        %v4299 = vld [vmem:[%s7 + $0x94] sm:$0xf]
        %v4300 = vld [vmem:[%s7 + $0x98] sm:$0xf]
        %v4301 = vld [vmem:[%s7 + $0x9c] sm:$0xf]
        %v4302 = vld [vmem:[%s7 + $0xa0] sm:$0xf]
        %v4303 = vld [vmem:[%s7 + $0xa4] sm:$0xf]
        %v4304 = vld [vmem:[%s7 + $0xa8] sm:$0xf]
        %v4305 = vld [vmem:[%s7 + $0xac] sm:$0xf]
        %v4306 = vld [vmem:[%s7 + $0xb0] sm:$0xf]
        %v4307 = vld [vmem:[%s7 + $0xb4] sm:$0xf]
        %v4308 = vld [vmem:[%s7 + $0xb8] sm:$0xf]
        %v4309 = vld [vmem:[%s7 + $0xbc] sm:$0xf]
        %v4310 = vld [vmem:[%s7 + $0xc0] sm:$0xf]
        %v4311 = vld [vmem:[%s7 + $0xc4] sm:$0xf]
        %v4312 = vld [vmem:[%s7 + $0xc8] sm:$0xf]
        %v4313 = vld [vmem:[%s7 + $0xcc] sm:$0xf]
        %v4314 = vld [vmem:[%s7 + $0xd0] sm:$0xf]
        %v4315 = vld [vmem:[%s7 + $0xd4] sm:$0xf]
        %v4316 = vld [vmem:[%s7 + $0xd8] sm:$0xf]
        %v4317 = vld [vmem:[%s7 + $0xdc] sm:$0xf]
        %v4318 = vld [vmem:[%s7 + $0xe0] sm:$0xf]
        %v4319 = vld [vmem:[%s7 + $0xe4] sm:$0xf]
        %v4320 = vld [vmem:[%s7 + $0xe8] sm:$0xf]
        %v4321 = vld [vmem:[%s7 + $0xec] sm:$0xf]
        %v4322 = vld [vmem:[%s7 + $0xf0] sm:$0xf]
        %v4323 = vld [vmem:[%s7 + $0xf4] sm:$0xf]
        %v4324 = vld [vmem:[%s7 + $0xf8] sm:$0xf]
        %v4325 = vld [vmem:[%s7 + $0xfc] sm:$0xf]
        %v4326 = vld [vmem:[%s7 + $0x100] sm:$0xf]
        %v4327 = vld [vmem:[%s7 + $0x104] sm:$0xf]
        %v4328 = vld [vmem:[%s7 + $0x108] sm:$0xf]
        %v4329 = vld [vmem:[%s7 + $0x10c] sm:$0xf]
        %v4330 = vld [vmem:[%s7 + $0x110] sm:$0xf]
        %v4331 = vld [vmem:[%s7 + $0x114] sm:$0xf]
        %v4332 = vld [vmem:[%s7 + $0x118] sm:$0xf]
        %v4333 = vld [vmem:[%s7 + $0x11c] sm:$0xf]
        %v4334 = vld [vmem:[%s7 + $0x120] sm:$0xf]
        %v4335 = vld [vmem:[%s7 + $0x124] sm:$0xf]
        %v4336 = vld [vmem:[%s7 + $0x128] sm:$0xf]
        %v4337 = vld [vmem:[%s7 + $0x12c] sm:$0xf]
        %v4338 = vld [vmem:[%s7 + $0x130] sm:$0xf]
        %v4339 = vld [vmem:[%s7 + $0x134] sm:$0xf]
        %v4340 = vld [vmem:[%s7 + $0x138] sm:$0xf]
        %v4341 = vld [vmem:[%s7 + $0x13c] sm:$0xf]
        %v4342 = vld [vmem:[%s7 + $0x140] sm:$0xf]
        %v4343 = vld [vmem:[%s7 + $0x144] sm:$0xf]
        %v4344 = vld [vmem:[%s7 + $0x148] sm:$0xf]
        %v4345 = vld [vmem:[%s7 + $0x14c] sm:$0xf]
        %v4346 = vld [vmem:[%s7 + $0x150] sm:$0xf]
        %v4347 = vld [vmem:[%s7 + $0x154] sm:$0xf]
        %v4348 = vld [vmem:[%s7 + $0x158] sm:$0xf]
        %v4349 = vld [vmem:[%s7 + $0x15c] sm:$0xf]
        %v4350 = vld [vmem:[%s7 + $0x160] sm:$0xf]
        %v4351 = vld [vmem:[%s7 + $0x164] sm:$0xf]
        %v4352 = vld [vmem:[%s7 + $0x168] sm:$0xf]
        %v4353 = vld [vmem:[%s7 + $0x16c] sm:$0xf]
        %v4354 = vld [vmem:[%s7 + $0x170] sm:$0xf]
        %v4355 = vld [vmem:[%s7 + $0x174] sm:$0xf]
        %v4356 = vld [vmem:[%s7 + $0x178] sm:$0xf]
        %v4357 = vld [vmem:[%s7 + $0x17c] sm:$0xf]
        %v4358 = vld [vmem:[%s7 + $0x180] sm:$0xf]
        %v4359 = vld [vmem:[%s7 + $0x184] sm:$0xf]
        %v4360 = vld [vmem:[%s7 + $0x188] sm:$0xf]
        %v4361 = vld [vmem:[%s7 + $0x18c] sm:$0xf]
        %v4362 = vld [vmem:[%s7 + $0x190] sm:$0xf]
        %v4363 = vld [vmem:[%s7 + $0x194] sm:$0xf]
        %v4364 = vld [vmem:[%s7 + $0x198] sm:$0xf]
        %v4365 = vld [vmem:[%s7 + $0x19c] sm:$0xf]
        %v4366 = vld [vmem:[%s7 + $0x1a0] sm:$0xf]
        %v4367 = vld [vmem:[%s7 + $0x1a4] sm:$0xf]
        %v4368 = vld [vmem:[%s7 + $0x1a8] sm:$0xf]
        %v4369 = vld [vmem:[%s7 + $0x1ac] sm:$0xf]
        %v4370 = vld [vmem:[%s7 + $0x1b0] sm:$0xf]
        %v4371 = vld [vmem:[%s7 + $0x1b4] sm:$0xf]
        %v4372 = vld [vmem:[%s7 + $0x1b8] sm:$0xf]
        %v4373 = vld [vmem:[%s7 + $0x1bc] sm:$0xf]
        %v4374 = vld [vmem:[%s7 + $0x1c0] sm:$0xf]
        %v4375 = vld [vmem:[%s7 + $0x1c4] sm:$0xf]
        %v4376 = vld [vmem:[%s7 + $0x1c8] sm:$0xf]
        %v4377 = vld [vmem:[%s7 + $0x1cc] sm:$0xf]
        %v4378 = vld [vmem:[%s7 + $0x1d0] sm:$0xf]
        %v4379 = vld [vmem:[%s7 + $0x1d4] sm:$0xf]
        %v4380 = vld [vmem:[%s7 + $0x1d8] sm:$0xf]
        %v4381 = vld [vmem:[%s7 + $0x1dc] sm:$0xf]
        %v4382 = vld [vmem:[%s7 + $0x1e0] sm:$0xf]
        %v4383 = vld [vmem:[%s7 + $0x1e4] sm:$0xf]
        %v4384 = vld [vmem:[%s7 + $0x1e8] sm:$0xf]
        %v4385 = vld [vmem:[%s7 + $0x1ec] sm:$0xf]
        %v4386 = vld [vmem:[%s7 + $0x1f0] sm:$0xf]
        %v4387 = vld [vmem:[%s7 + $0x1f4] sm:$0xf]
        %v4388 = vld [vmem:[%s7 + $0x1f8] sm:$0xf]
        %v4389 = vld [vmem:[%s7 + $0x1fc] sm:$0xf]
        %v4390 = vld [vmem:[%s7 + $0x200] sm:$0xf]
        %v4391 = vld [vmem:[%s7 + $0x204] sm:$0xf]
        %v4392 = vld [vmem:[%s7 + $0x208] sm:$0xf]
        %v4393 = vld [vmem:[%s7 + $0x20c] sm:$0xf]
        %v4394 = vld [vmem:[%s7 + $0x210] sm:$0xf]
        %v4395 = vld [vmem:[%s7 + $0x214] sm:$0xf]
        %v4396 = vld [vmem:[%s7 + $0x218] sm:$0xf]
        %v4397 = vld [vmem:[%s7 + $0x21c] sm:$0xf]
        %v4398 = vld [vmem:[%s7 + $0x220] sm:$0xf]
        %v4399 = vld [vmem:[%s7 + $0x224] sm:$0xf]
        %v4400 = vld [vmem:[%s7 + $0x228] sm:$0xf]
        %v4401 = vld [vmem:[%s7 + $0x22c] sm:$0xf]
        %v4402 = vld [vmem:[%s7 + $0x230] sm:$0xf]
        %v4403 = vld [vmem:[%s7 + $0x234] sm:$0xf]
        %v4404 = vld [vmem:[%s7 + $0x238] sm:$0xf]
        %v4405 = vld [vmem:[%s7 + $0x23c] sm:$0xf]
        %v4406 = vld [vmem:[%s7 + $0x240] sm:$0xf]
        %v4407 = vld [vmem:[%s7 + $0x244] sm:$0xf]
        %v4408 = vld [vmem:[%s7 + $0x248] sm:$0xf]
        %v4409 = vld [vmem:[%s7 + $0x24c] sm:$0xf]
        %v4410 = vld [vmem:[%s7 + $0x250] sm:$0xf]
        %v4411 = vld [vmem:[%s7 + $0x254] sm:$0xf]
        %v4412 = vld [vmem:[%s7 + $0x258] sm:$0xf]
        %v4413 = vld [vmem:[%s7 + $0x25c] sm:$0xf]
        %v4414 = vld [vmem:[%s7 + $0x260] sm:$0xf]
        %v4415 = vld [vmem:[%s7 + $0x264] sm:$0xf]
        %v4416 = vld [vmem:[%s7 + $0x268] sm:$0xf]
        %v4417 = vld [vmem:[%s7 + $0x26c] sm:$0xf]
        %v4418 = vld [vmem:[%s7 + $0x270] sm:$0xf]
        %v4419 = vld [vmem:[%s7 + $0x274] sm:$0xf]
        %v4420 = vld [vmem:[%s7 + $0x278] sm:$0xf]
        %v4421 = vld [vmem:[%s7 + $0x27c] sm:$0xf]
        %v4422 = vld [vmem:[%s7 + $0x280] sm:$0xf]
        %v4423 = vld [vmem:[%s7 + $0x284] sm:$0xf]
        %v4424 = vld [vmem:[%s7 + $0x288] sm:$0xf]
        %v4425 = vld [vmem:[%s7 + $0x28c] sm:$0xf]
        %v4426 = vld [vmem:[%s7 + $0x290] sm:$0xf]
        %v4427 = vld [vmem:[%s7 + $0x294] sm:$0xf]
        %v4428 = vld [vmem:[%s7 + $0x298] sm:$0xf]
        %v4429 = vld [vmem:[%s7 + $0x29c] sm:$0xf]
        %v4430 = vld [vmem:[%s7 + $0x2a0] sm:$0xf]
        %v4431 = vld [vmem:[%s7 + $0x2a4] sm:$0xf]
        %v4432 = vld [vmem:[%s7 + $0x2a8] sm:$0xf]
        %v4433 = vld [vmem:[%s7 + $0x2ac] sm:$0xf]
        %v4434 = vld [vmem:[%s7 + $0x2b0] sm:$0xf]
        %v4435 = vld [vmem:[%s7 + $0x2b4] sm:$0xf]
        %v4436 = vld [vmem:[%s7 + $0x2b8] sm:$0xf]
        %v4437 = vld [vmem:[%s7 + $0x2bc] sm:$0xf]
        %v4438 = vld [vmem:[%s7 + $0x2c0] sm:$0xf]
        %v4439 = vld [vmem:[%s7 + $0x2c4] sm:$0xf]
        %v4440 = vld [vmem:[%s7 + $0x2c8] sm:$0xf]
        %v4441 = vld [vmem:[%s7 + $0x2cc] sm:$0xf]
        %v4442 = vld [vmem:[%s7 + $0x2d0] sm:$0xf]
        %v4443 = vld [vmem:[%s7 + $0x2d4] sm:$0xf]
        %v4444 = vld [vmem:[%s7 + $0x2d8] sm:$0xf]
        %v4445 = vld [vmem:[%s7 + $0x2dc] sm:$0xf]
        %v4446 = vld [vmem:[%s7 + $0x2e0] sm:$0xf]
        %v4447 = vld [vmem:[%s7 + $0x2e4] sm:$0xf]
        %v4448 = vld [vmem:[%s7 + $0x2e8] sm:$0xf]
        %v4449 = vld [vmem:[%s7 + $0x2ec] sm:$0xf]
        %v4450 = vld [vmem:[%s7 + $0x2f0] sm:$0xf]
        %v4451 = vld [vmem:[%s7 + $0x2f4] sm:$0xf]
        %v4452 = vld [vmem:[%s7 + $0x2f8] sm:$0xf]
        %v4453 = vld [vmem:[%s7 + $0x2fc] sm:$0xf]
        %v4454 = vld [vmem:[%s7 + $0x300] sm:$0xf]
        %v4455 = vld [vmem:[%s7 + $0x304] sm:$0xf]
        %v4456 = vld [vmem:[%s7 + $0x308] sm:$0xf]
        %v4457 = vld [vmem:[%s7 + $0x30c] sm:$0xf]
        %v4458 = vld [vmem:[%s7 + $0x310] sm:$0xf]
        %v4459 = vld [vmem:[%s7 + $0x314] sm:$0xf]
        %v4460 = vld [vmem:[%s7 + $0x318] sm:$0xf]
        %v4461 = vld [vmem:[%s7 + $0x31c] sm:$0xf]
        %v4462 = vld [vmem:[%s7 + $0x320] sm:$0xf]
        %v4463 = vld [vmem:[%s7 + $0x324] sm:$0xf]
        %v4464 = vld [vmem:[%s7 + $0x328] sm:$0xf]
        %v4465 = vld [vmem:[%s7 + $0x32c] sm:$0xf]
        %v4466 = vld [vmem:[%s7 + $0x330] sm:$0xf]
        %v4467 = vld [vmem:[%s7 + $0x334] sm:$0xf]
        %v4468 = vld [vmem:[%s7 + $0x338] sm:$0xf]
        %v4469 = vld [vmem:[%s7 + $0x33c] sm:$0xf]
        %v4470 = vld [vmem:[%s7 + $0x340] sm:$0xf]
        %v4471 = vld [vmem:[%s7 + $0x344] sm:$0xf]
        %v4472 = vld [vmem:[%s7 + $0x348] sm:$0xf]
        %v4473 = vld [vmem:[%s7 + $0x34c] sm:$0xf]
        %v4474 = vld [vmem:[%s7 + $0x350] sm:$0xf]
        %v4475 = vld [vmem:[%s7 + $0x354] sm:$0xf]
        %v4476 = vld [vmem:[%s7 + $0x358] sm:$0xf]
        %v4477 = vld [vmem:[%s7 + $0x35c] sm:$0xf]
        %v4478 = vld [vmem:[%s7 + $0x360] sm:$0xf]
        %v4479 = vld [vmem:[%s7 + $0x364] sm:$0xf]
        %v4480 = vld [vmem:[%s7 + $0x368] sm:$0xf]
        %v4481 = vld [vmem:[%s7 + $0x36c] sm:$0xf]
        %v4482 = vld [vmem:[%s7 + $0x370] sm:$0xf]
        %v4483 = vld [vmem:[%s7 + $0x374] sm:$0xf]
        %v4484 = vld [vmem:[%s7 + $0x378] sm:$0xf]
        %v4485 = vld [vmem:[%s7 + $0x37c] sm:$0xf]
        %v4486 = vld [vmem:[%s7 + $0x380] sm:$0xf]
        %v4487 = vld [vmem:[%s7 + $0x384] sm:$0xf]
        %v4488 = vld [vmem:[%s7 + $0x388] sm:$0xf]
        %v4489 = vld [vmem:[%s7 + $0x38c] sm:$0xf]
        %v4490 = vld [vmem:[%s7 + $0x390] sm:$0xf]
        %v4491 = vld [vmem:[%s7 + $0x394] sm:$0xf]
        %v4492 = vld [vmem:[%s7 + $0x398] sm:$0xf]
        %v4493 = vld [vmem:[%s7 + $0x39c] sm:$0xf]
        %v4494 = vld [vmem:[%s7 + $0x3a0] sm:$0xf]
        %v4495 = vld [vmem:[%s7 + $0x3a4] sm:$0xf]
        %v4496 = vld [vmem:[%s7 + $0x3a8] sm:$0xf]
        %v4497 = vld [vmem:[%s7 + $0x3ac] sm:$0xf]
        %v4498 = vld [vmem:[%s7 + $0x3b0] sm:$0xf]
        %v4499 = vld [vmem:[%s7 + $0x3b4] sm:$0xf]
        %v4500 = vld [vmem:[%s7 + $0x3b8] sm:$0xf]
        %v4501 = vld [vmem:[%s7 + $0x3bc] sm:$0xf]
        %v4502 = vld [vmem:[%s7 + $0x3c0] sm:$0xf]
        %v4503 = vld [vmem:[%s7 + $0x3c4] sm:$0xf]
        %v4504 = vld [vmem:[%s7 + $0x3c8] sm:$0xf]
        %v4505 = vld [vmem:[%s7 + $0x3cc] sm:$0xf]
        %v4506 = vld [vmem:[%s7 + $0x3d0] sm:$0xf]
        %v4507 = vld [vmem:[%s7 + $0x3d4] sm:$0xf]
        %v4508 = vld [vmem:[%s7 + $0x3d8] sm:$0xf]
        %v4509 = vld [vmem:[%s7 + $0x3dc] sm:$0xf]
        %v4510 = vld [vmem:[%s7 + $0x3e0] sm:$0xf]
        %v4511 = vld [vmem:[%s7 + $0x3e4] sm:$0xf]
        %v4512 = vld [vmem:[%s7 + $0x3e8] sm:$0xf]
        %v4513 = vld [vmem:[%s7 + $0x3ec] sm:$0xf]
        %v4514 = vld [vmem:[%s7 + $0x3f0] sm:$0xf]
        %v4515 = vld [vmem:[%s7 + $0x3f4] sm:$0xf]
        %v4516 = vld [vmem:[%s7 + $0x3f8] sm:$0xf]
        %v4517 = vld [vmem:[%s7 + $0x3fc] sm:$0xf]
        %v4518 = vld [vmem:[%s7 + $0x400] sm:$0xf]
        %v4519 = vld [vmem:[%s7 + $0x404] sm:$0xf]
        %v4520 = vld [vmem:[%s7 + $0x408] sm:$0xf]
        %v4521 = vld [vmem:[%s7 + $0x40c] sm:$0xf]
        %v4522 = vld [vmem:[%s7 + $0x410] sm:$0xf]
        %v4523 = vld [vmem:[%s7 + $0x414] sm:$0xf]
        %v4524 = vld [vmem:[%s7 + $0x418] sm:$0xf]
        %v4525 = vld [vmem:[%s7 + $0x41c] sm:$0xf]
        %v4526 = vld [vmem:[%s7 + $0x420] sm:$0xf]
        %v4527 = vld [vmem:[%s7 + $0x424] sm:$0xf]
        %v4528 = vld [vmem:[%s7 + $0x428] sm:$0xf]
        %v4529 = vld [vmem:[%s7 + $0x42c] sm:$0xf]
        %v4530 = vld [vmem:[%s7 + $0x430] sm:$0xf]
        %v4531 = vld [vmem:[%s7 + $0x434] sm:$0xf]
        %v4532 = vld [vmem:[%s7 + $0x438] sm:$0xf]
        %v4533 = vld [vmem:[%s7 + $0x43c] sm:$0xf]
        %v4534 = vld [vmem:[%s7 + $0x440] sm:$0xf]
        %v4535 = vld [vmem:[%s7 + $0x444] sm:$0xf]
        %v4536 = vld [vmem:[%s7 + $0x448] sm:$0xf]
        %v4537 = vld [vmem:[%s7 + $0x44c] sm:$0xf]
        %v4538 = vld [vmem:[%s7 + $0x450] sm:$0xf]
        %v4539 = vld [vmem:[%s7 + $0x454] sm:$0xf]
        %v4540 = vld [vmem:[%s7 + $0x458] sm:$0xf]
        %v4541 = vld [vmem:[%s7 + $0x45c] sm:$0xf]
        %v4542 = vld [vmem:[%s7 + $0x460] sm:$0xf]
        %v4543 = vld [vmem:[%s7 + $0x464] sm:$0xf]
        %v4544 = vld [vmem:[%s7 + $0x468] sm:$0xf]
        %v4545 = vld [vmem:[%s7 + $0x46c] sm:$0xf]
        %v4546 = vld [vmem:[%s7 + $0x470] sm:$0xf]
        %v4547 = vld [vmem:[%s7 + $0x474] sm:$0xf]
        %v4548 = vld [vmem:[%s7 + $0x478] sm:$0xf]
        %v4549 = vld [vmem:[%s7 + $0x47c] sm:$0xf]
        %v4550 = vld [vmem:[%s7 + $0x480] sm:$0xf]
        %v4551 = vld [vmem:[%s7 + $0x484] sm:$0xf]
        %v4552 = vld [vmem:[%s7 + $0x488] sm:$0xf]
        %v4553 = vld [vmem:[%s7 + $0x48c] sm:$0xf]
        %v4554 = vld [vmem:[%s7 + $0x490] sm:$0xf]
        %v4555 = vld [vmem:[%s7 + $0x494] sm:$0xf]
        %v4556 = vld [vmem:[%s7 + $0x498] sm:$0xf]
        %v4557 = vld [vmem:[%s7 + $0x49c] sm:$0xf]
        %v4558 = vld [vmem:[%s7 + $0x4a0] sm:$0xf]
        %v4559 = vld [vmem:[%s7 + $0x4a4] sm:$0xf]
        %v4560 = vld [vmem:[%s7 + $0x4a8] sm:$0xf]
        %v4561 = vld [vmem:[%s7 + $0x4ac] sm:$0xf]
        %v4562 = vld [vmem:[%s7 + $0x4b0] sm:$0xf]
        %v4563 = vld [vmem:[%s7 + $0x4b4] sm:$0xf]
        %v4564 = vld [vmem:[%s7 + $0x4b8] sm:$0xf]
        %v4565 = vld [vmem:[%s7 + $0x4bc] sm:$0xf]
        %v4566 = vld [vmem:[%s7 + $0x4c0] sm:$0xf]
        %v4567 = vld [vmem:[%s7 + $0x4c4] sm:$0xf]
        %v4568 = vld [vmem:[%s7 + $0x4c8] sm:$0xf]
        %v4569 = vld [vmem:[%s7 + $0x4cc] sm:$0xf]
        %v4570 = vld [vmem:[%s7 + $0x4d0] sm:$0xf]
        %v4571 = vld [vmem:[%s7 + $0x4d4] sm:$0xf]
        %v4572 = vld [vmem:[%s7 + $0x4d8] sm:$0xf]
        %v4573 = vld [vmem:[%s7 + $0x4dc] sm:$0xf]
        %v4574 = vld [vmem:[%s7 + $0x4e0] sm:$0xf]
        %v4575 = vld [vmem:[%s7 + $0x4e4] sm:$0xf]
        %v4576 = vld [vmem:[%s7 + $0x4e8] sm:$0xf]
        %v4577 = vld [vmem:[%s7 + $0x4ec] sm:$0xf]
        %v4578 = vld [vmem:[%s7 + $0x4f0] sm:$0xf]
        %v4579 = vld [vmem:[%s7 + $0x4f4] sm:$0xf]
        %v4580 = vld [vmem:[%s7 + $0x4f8] sm:$0xf]
        %v4581 = vld [vmem:[%s7 + $0x4fc] sm:$0xf]
        %v4582 = vld [vmem:[%s7 + $0x500] sm:$0xf]
        %v4583 = vld [vmem:[%s7 + $0x504] sm:$0xf]
        %v4584 = vld [vmem:[%s7 + $0x508] sm:$0xf]
        %v4585 = vld [vmem:[%s7 + $0x50c] sm:$0xf]
        %v4586 = vld [vmem:[%s7 + $0x510] sm:$0xf]
        %v4587 = vld [vmem:[%s7 + $0x514] sm:$0xf]
        %v4588 = vld [vmem:[%s7 + $0x518] sm:$0xf]
        %v4589 = vld [vmem:[%s7 + $0x51c] sm:$0xf]
        %v4590 = vld [vmem:[%s7 + $0x520] sm:$0xf]
        %v4591 = vld [vmem:[%s7 + $0x524] sm:$0xf]
        %v4592 = vld [vmem:[%s7 + $0x528] sm:$0xf]
        %v4593 = vld [vmem:[%s7 + $0x52c] sm:$0xf]
        %v4594 = vld [vmem:[%s7 + $0x530] sm:$0xf]
        %v4595 = vld [vmem:[%s7 + $0x534] sm:$0xf]
        %v4596 = vld [vmem:[%s7 + $0x538] sm:$0xf]
        %v4597 = vld [vmem:[%s7 + $0x53c] sm:$0xf]
        %v4598 = vld [vmem:[%s7 + $0x540] sm:$0xf]
        %v4599 = vld [vmem:[%s7 + $0x544] sm:$0xf]
        %v4600 = vld [vmem:[%s7 + $0x548] sm:$0xf]
        %v4601 = vld [vmem:[%s7 + $0x54c] sm:$0xf]
        %v4602 = vld [vmem:[%s7 + $0x550] sm:$0xf]
        %v4603 = vld [vmem:[%s7 + $0x554] sm:$0xf]
        %v4604 = vld [vmem:[%s7 + $0x558] sm:$0xf]
        %v4605 = vld [vmem:[%s7 + $0x55c] sm:$0xf]
        %v4606 = vld [vmem:[%s7 + $0x560] sm:$0xf]
        %v4607 = vld [vmem:[%s7 + $0x564] sm:$0xf]
        %v4608 = vld [vmem:[%s7 + $0x568] sm:$0xf]
        %v4609 = vld [vmem:[%s7 + $0x56c] sm:$0xf]
        %v4610 = vld [vmem:[%s7 + $0x570] sm:$0xf]
        %v4611 = vld [vmem:[%s7 + $0x574] sm:$0xf]
        %v4612 = vld [vmem:[%s7 + $0x578] sm:$0xf]
        %v4613 = vld [vmem:[%s7 + $0x57c] sm:$0xf]
        %v4614 = vld [vmem:[%s7 + $0x580] sm:$0xf]
        %v4615 = vld [vmem:[%s7 + $0x584] sm:$0xf]
        %v4616 = vld [vmem:[%s7 + $0x588] sm:$0xf]
        %v4617 = vld [vmem:[%s7 + $0x58c] sm:$0xf]
        %v4618 = vld [vmem:[%s7 + $0x590] sm:$0xf]
        %v4619 = vld [vmem:[%s7 + $0x594] sm:$0xf]
        %v4620 = vld [vmem:[%s7 + $0x598] sm:$0xf]
        %v4621 = vld [vmem:[%s7 + $0x59c] sm:$0xf]
        %v4622 = vld [vmem:[%s7 + $0x5a0] sm:$0xf]
        %v4623 = vld [vmem:[%s7 + $0x5a4] sm:$0xf]
        %v4624 = vld [vmem:[%s7 + $0x5a8] sm:$0xf]
        %v4625 = vld [vmem:[%s7 + $0x5ac] sm:$0xf]
        %v4626 = vld [vmem:[%s7 + $0x5b0] sm:$0xf]
        %v4627 = vld [vmem:[%s7 + $0x5b4] sm:$0xf]
        %v4628 = vld [vmem:[%s7 + $0x5b8] sm:$0xf]
        %v4629 = vld [vmem:[%s7 + $0x5bc] sm:$0xf]
        %v4630 = vld [vmem:[%s7 + $0x5c0] sm:$0xf]
        %v4631 = vld [vmem:[%s7 + $0x5c4] sm:$0xf]
        %v4632 = vld [vmem:[%s7 + $0x5c8] sm:$0xf]
        %v4633 = vld [vmem:[%s7 + $0x5cc] sm:$0xf]
        %v4634 = vld [vmem:[%s7 + $0x5d0] sm:$0xf]
        %v4635 = vld [vmem:[%s7 + $0x5d4] sm:$0xf]
        %v4636 = vld [vmem:[%s7 + $0x5d8] sm:$0xf]
        %v4637 = vld [vmem:[%s7 + $0x5dc] sm:$0xf]
        %v4638 = vld [vmem:[%s7 + $0x5e0] sm:$0xf]
        %v4639 = vld [vmem:[%s7 + $0x5e4] sm:$0xf]
        %v4640 = vld [vmem:[%s7 + $0x5e8] sm:$0xf]
        %v4641 = vld [vmem:[%s7 + $0x5ec] sm:$0xf]
        %v4642 = vld [vmem:[%s7 + $0x5f0] sm:$0xf]
        %v4643 = vld [vmem:[%s7 + $0x5f4] sm:$0xf]
        %v4644 = vld [vmem:[%s7 + $0x5f8] sm:$0xf]
        %v4645 = vld [vmem:[%s7 + $0x5fc] sm:$0xf]
        %v4646 = vld [vmem:[%s7 + $0x600] sm:$0xf]
        %v4647 = vld [vmem:[%s7 + $0x604] sm:$0xf]
        %v4648 = vld [vmem:[%s7 + $0x608] sm:$0xf]
        %v4649 = vld [vmem:[%s7 + $0x60c] sm:$0xf]
        %v4650 = vld [vmem:[%s7 + $0x610] sm:$0xf]
        %v4651 = vld [vmem:[%s7 + $0x614] sm:$0xf]
        %v4652 = vld [vmem:[%s7 + $0x618] sm:$0xf]
        %v4653 = vld [vmem:[%s7 + $0x61c] sm:$0xf]
        %v4654 = vld [vmem:[%s8] sm:$0x1]
        %v5047 = vunpack.c.l.b16 %v4262
        %v5048 = vunpack.c.l.b16 %v4263
        %v5049 = vunpack.c.l.b16 %v4264
        %v5050 = vunpack.c.l.b16 %v4265
        %v5051 = vunpack.c.l.b16 %v4266
        %v5052 = vunpack.c.l.b16 %v4267
        %v5053 = vunpack.c.l.b16 %v4268
        %v5054 = vunpack.c.l.b16 %v4269
        %v5055 = vunpack.c.l.b16 %v4270
        %v5056 = vunpack.c.l.b16 %v4271
        %v5057 = vunpack.c.l.b16 %v4272
        %v5058 = vunpack.c.l.b16 %v4273
        %v5059 = vunpack.c.l.b16 %v4274
        %v5060 = vunpack.c.l.b16 %v4275
        %v5061 = vunpack.c.l.b16 %v4276
        %v5062 = vunpack.c.l.b16 %v4277
        %v5063 = vunpack.c.l.b16 %v4278
        %v5064 = vunpack.c.l.b16 %v4279
        %v5065 = vunpack.c.l.b16 %v4280
        %v5066 = vunpack.c.l.b16 %v4281
        %v5067 = vunpack.c.l.b16 %v4282
        %v5068 = vunpack.c.l.b16 %v4283
        %v5069 = vunpack.c.l.b16 %v4284
        %v5070 = vunpack.c.l.b16 %v4285
        %v5071 = vunpack.c.l.b16 %v4286
        %v5072 = vunpack.c.l.b16 %v4287
        %v5073 = vunpack.c.l.b16 %v4288
        %v5074 = vunpack.c.l.b16 %v4289
        %v5075 = vunpack.c.l.b16 %v4290
        %v5076 = vunpack.c.l.b16 %v4291
        %v5077 = vunpack.c.l.b16 %v4292
        %v5078 = vunpack.c.l.b16 %v4293
        %v5079 = vunpack.c.l.b16 %v4294
        %v5080 = vunpack.c.l.b16 %v4295
        %v5081 = vunpack.c.l.b16 %v4296
        %v5082 = vunpack.c.l.b16 %v4297
        %v5083 = vunpack.c.l.b16 %v4298
        %v5084 = vunpack.c.l.b16 %v4299
        %v5085 = vunpack.c.l.b16 %v4300
        %v5086 = vunpack.c.l.b16 %v4301
        %v5087 = vunpack.c.l.b16 %v4302
        %v5088 = vunpack.c.l.b16 %v4303
        %v5089 = vunpack.c.l.b16 %v4304
        %v5090 = vunpack.c.l.b16 %v4305
        %v5091 = vunpack.c.l.b16 %v4306
        %v5092 = vunpack.c.l.b16 %v4307
        %v5093 = vunpack.c.l.b16 %v4308
        %v5094 = vunpack.c.l.b16 %v4309
        %v5095 = vunpack.c.l.b16 %v4310
        %v5096 = vunpack.c.l.b16 %v4311
        %v5097 = vunpack.c.l.b16 %v4312
        %v5098 = vunpack.c.l.b16 %v4313
        %v5099 = vunpack.c.l.b16 %v4314
        %v5100 = vunpack.c.l.b16 %v4315
        %v5101 = vunpack.c.l.b16 %v4316
        %v5102 = vunpack.c.l.b16 %v4317
        %v5103 = vunpack.c.l.b16 %v4318
        %v5104 = vunpack.c.l.b16 %v4319
        %v5105 = vunpack.c.l.b16 %v4320
        %v5106 = vunpack.c.l.b16 %v4321
        %v5107 = vunpack.c.l.b16 %v4322
        %v5108 = vunpack.c.l.b16 %v4323
        %v5109 = vunpack.c.l.b16 %v4324
        %v5110 = vunpack.c.l.b16 %v4325
        %v5111 = vunpack.c.l.b16 %v4326
        %v5112 = vunpack.c.l.b16 %v4327
        %v5113 = vunpack.c.l.b16 %v4328
        %v5114 = vunpack.c.l.b16 %v4329
        %v5115 = vunpack.c.l.b16 %v4330
        %v5116 = vunpack.c.l.b16 %v4331
        %v5117 = vunpack.c.l.b16 %v4332
        %v5118 = vunpack.c.l.b16 %v4333
        %v5119 = vunpack.c.l.b16 %v4334
        %v5120 = vunpack.c.l.b16 %v4335
        %v5121 = vunpack.c.l.b16 %v4336
        %v5122 = vunpack.c.l.b16 %v4337
        %v5123 = vunpack.c.l.b16 %v4338
        %v5124 = vunpack.c.l.b16 %v4339
        %v5125 = vunpack.c.l.b16 %v4340
        %v5126 = vunpack.c.l.b16 %v4341
        %v5127 = vunpack.c.l.b16 %v4342
        %v5128 = vunpack.c.l.b16 %v4343
        %v5129 = vunpack.c.l.b16 %v4344
        %v5130 = vunpack.c.l.b16 %v4345
        %v5131 = vunpack.c.l.b16 %v4346
        %v5132 = vunpack.c.l.b16 %v4347
        %v5133 = vunpack.c.l.b16 %v4348
        %v5134 = vunpack.c.l.b16 %v4349
        %v5135 = vunpack.c.l.b16 %v4350
        %v5136 = vunpack.c.l.b16 %v4351
        %v5137 = vunpack.c.l.b16 %v4352
        %v5138 = vunpack.c.l.b16 %v4353
        %v5139 = vunpack.c.l.b16 %v4354
        %v5140 = vunpack.c.l.b16 %v4355
        %v5141 = vunpack.c.l.b16 %v4356
        %v5142 = vunpack.c.l.b16 %v4357
        %v5143 = vunpack.c.l.b16 %v4358
        %v5144 = vunpack.c.l.b16 %v4359
        %v5145 = vunpack.c.l.b16 %v4360
        %v5146 = vunpack.c.l.b16 %v4361
        %v5147 = vunpack.c.l.b16 %v4362
        %v5148 = vunpack.c.l.b16 %v4363
        %v5149 = vunpack.c.l.b16 %v4364
        %v5150 = vunpack.c.l.b16 %v4365
        %v5151 = vunpack.c.l.b16 %v4366
        %v5152 = vunpack.c.l.b16 %v4367
        %v5153 = vunpack.c.l.b16 %v4368
        %v5154 = vunpack.c.l.b16 %v4369
        %v5155 = vunpack.c.l.b16 %v4370
        %v5156 = vunpack.c.l.b16 %v4371
        %v5157 = vunpack.c.l.b16 %v4372
        %v5158 = vunpack.c.l.b16 %v4373
        %v5159 = vunpack.c.l.b16 %v4374
        %v5160 = vunpack.c.l.b16 %v4375
        %v5161 = vunpack.c.l.b16 %v4376
        %v5162 = vunpack.c.l.b16 %v4377
        %v5163 = vunpack.c.l.b16 %v4378
        %v5164 = vunpack.c.l.b16 %v4379
        %v5165 = vunpack.c.l.b16 %v4380
        %v5166 = vunpack.c.l.b16 %v4381
        %v5167 = vunpack.c.l.b16 %v4382
        %v5168 = vunpack.c.l.b16 %v4383
        %v5169 = vunpack.c.l.b16 %v4384
        %v5170 = vunpack.c.l.b16 %v4385
        %v5171 = vunpack.c.l.b16 %v4386
        %v5172 = vunpack.c.l.b16 %v4387
        %v5173 = vunpack.c.l.b16 %v4388
        %v5174 = vunpack.c.l.b16 %v4389
        %v5175 = vunpack.c.l.b16 %v4390
        %v5176 = vunpack.c.l.b16 %v4391
        %v5177 = vunpack.c.l.b16 %v4392
        %v5178 = vunpack.c.l.b16 %v4393
        %v5179 = vunpack.c.l.b16 %v4394
        %v5180 = vunpack.c.l.b16 %v4395
        %v5181 = vunpack.c.l.b16 %v4396
        %v5182 = vunpack.c.l.b16 %v4397
        %v5183 = vunpack.c.l.b16 %v4398
        %v5184 = vunpack.c.l.b16 %v4399
        %v5185 = vunpack.c.l.b16 %v4400
        %v5186 = vunpack.c.l.b16 %v4401
        %v5187 = vunpack.c.l.b16 %v4402
        %v5188 = vunpack.c.l.b16 %v4403
        %v5189 = vunpack.c.l.b16 %v4404
        %v5190 = vunpack.c.l.b16 %v4405
        %v5191 = vunpack.c.l.b16 %v4406
        %v5192 = vunpack.c.l.b16 %v4407
        %v5193 = vunpack.c.l.b16 %v4408
        %v5194 = vunpack.c.l.b16 %v4409
        %v5195 = vunpack.c.l.b16 %v4410
        %v5196 = vunpack.c.l.b16 %v4411
        %v5197 = vunpack.c.l.b16 %v4412
        %v5198 = vunpack.c.l.b16 %v4413
        %v5199 = vunpack.c.l.b16 %v4414
        %v5200 = vunpack.c.l.b16 %v4415
        %v5201 = vunpack.c.l.b16 %v4416
        %v5202 = vunpack.c.l.b16 %v4417
        %v5203 = vunpack.c.l.b16 %v4418
        %v5204 = vunpack.c.l.b16 %v4419
        %v5205 = vunpack.c.l.b16 %v4420
        %v5206 = vunpack.c.l.b16 %v4421
        %v5207 = vunpack.c.l.b16 %v4422
        %v5208 = vunpack.c.l.b16 %v4423
        %v5209 = vunpack.c.l.b16 %v4424
        %v5210 = vunpack.c.l.b16 %v4425
        %v5211 = vunpack.c.l.b16 %v4426
        %v5212 = vunpack.c.l.b16 %v4427
        %v5213 = vunpack.c.l.b16 %v4428
        %v5214 = vunpack.c.l.b16 %v4429
        %v5215 = vunpack.c.l.b16 %v4430
        %v5216 = vunpack.c.l.b16 %v4431
        %v5217 = vunpack.c.l.b16 %v4432
        %v5218 = vunpack.c.l.b16 %v4433
        %v5219 = vunpack.c.l.b16 %v4434
        %v5220 = vunpack.c.l.b16 %v4435
        %v5221 = vunpack.c.l.b16 %v4436
        %v5222 = vunpack.c.l.b16 %v4437
        %v5223 = vunpack.c.l.b16 %v4438
        %v5224 = vunpack.c.l.b16 %v4439
        %v5225 = vunpack.c.l.b16 %v4440
        %v5226 = vunpack.c.l.b16 %v4441
        %v5227 = vunpack.c.l.b16 %v4442
        %v5228 = vunpack.c.l.b16 %v4443
        %v5229 = vunpack.c.l.b16 %v4444
        %v5230 = vunpack.c.l.b16 %v4445
        %v5231 = vunpack.c.l.b16 %v4446
        %v5232 = vunpack.c.l.b16 %v4447
        %v5233 = vunpack.c.l.b16 %v4448
        %v5234 = vunpack.c.l.b16 %v4449
        %v5235 = vunpack.c.l.b16 %v4450
        %v5236 = vunpack.c.l.b16 %v4451
        %v5237 = vunpack.c.l.b16 %v4452
        %v5238 = vunpack.c.l.b16 %v4453
        %v5239 = vunpack.c.l.b16 %v4454
        %v5240 = vunpack.c.l.b16 %v4455
        %v5241 = vunpack.c.l.b16 %v4456
        %v5242 = vunpack.c.l.b16 %v4457
        %v5243 = vunpack.c.l.b16 %v4458
        %v5244 = vunpack.c.l.b16 %v4459
        %v5245 = vunpack.c.l.b16 %v4460
        %v5246 = vunpack.c.l.b16 %v4461
        %v5247 = vunpack.c.l.b16 %v4462
        %v5248 = vunpack.c.l.b16 %v4463
        %v5249 = vunpack.c.l.b16 %v4464
        %v5250 = vunpack.c.l.b16 %v4465
        %v5251 = vunpack.c.l.b16 %v4466
        %v5252 = vunpack.c.l.b16 %v4467
        %v5253 = vunpack.c.l.b16 %v4468
        %v5254 = vunpack.c.l.b16 %v4469
        %v5255 = vunpack.c.l.b16 %v4470
        %v5256 = vunpack.c.l.b16 %v4471
        %v5257 = vunpack.c.l.b16 %v4472
        %v5258 = vunpack.c.l.b16 %v4473
        %v5259 = vunpack.c.l.b16 %v4474
        %v5260 = vunpack.c.l.b16 %v4475
        %v5261 = vunpack.c.l.b16 %v4476
        %v5262 = vunpack.c.l.b16 %v4477
        %v5263 = vunpack.c.l.b16 %v4478
        %v5264 = vunpack.c.l.b16 %v4479
        %v5265 = vunpack.c.l.b16 %v4480
        %v5266 = vunpack.c.l.b16 %v4481
        %v5267 = vunpack.c.l.b16 %v4482
        %v5268 = vunpack.c.l.b16 %v4483
        %v5269 = vunpack.c.l.b16 %v4484
        %v5270 = vunpack.c.l.b16 %v4485
        %v5271 = vunpack.c.l.b16 %v4486
        %v5272 = vunpack.c.l.b16 %v4487
        %v5273 = vunpack.c.l.b16 %v4488
        %v5274 = vunpack.c.l.b16 %v4489
        %v5275 = vunpack.c.l.b16 %v4490
        %v5276 = vunpack.c.l.b16 %v4491
        %v5277 = vunpack.c.l.b16 %v4492
        %v5278 = vunpack.c.l.b16 %v4493
        %v5279 = vunpack.c.l.b16 %v4494
        %v5280 = vunpack.c.l.b16 %v4495
        %v5281 = vunpack.c.l.b16 %v4496
        %v5282 = vunpack.c.l.b16 %v4497
        %v5283 = vunpack.c.l.b16 %v4498
        %v5284 = vunpack.c.l.b16 %v4499
        %v5285 = vunpack.c.l.b16 %v4500
        %v5286 = vunpack.c.l.b16 %v4501
        %v5287 = vunpack.c.l.b16 %v4502
        %v5288 = vunpack.c.l.b16 %v4503
        %v5289 = vunpack.c.l.b16 %v4504
        %v5290 = vunpack.c.l.b16 %v4505
        %v5291 = vunpack.c.l.b16 %v4506
        %v5292 = vunpack.c.l.b16 %v4507
        %v5293 = vunpack.c.l.b16 %v4508
        %v5294 = vunpack.c.l.b16 %v4509
        %v5295 = vunpack.c.l.b16 %v4510
        %v5296 = vunpack.c.l.b16 %v4511
        %v5297 = vunpack.c.l.b16 %v4512
        %v5298 = vunpack.c.l.b16 %v4513
        %v5299 = vunpack.c.l.b16 %v4514
        %v5300 = vunpack.c.l.b16 %v4515
        %v5301 = vunpack.c.l.b16 %v4516
        %v5302 = vunpack.c.l.b16 %v4517
        %v5303 = vunpack.c.l.b16 %v4518
        %v5304 = vunpack.c.l.b16 %v4519
        %v5305 = vunpack.c.l.b16 %v4520
        %v5306 = vunpack.c.l.b16 %v4521
        %v5307 = vunpack.c.l.b16 %v4522
        %v5308 = vunpack.c.l.b16 %v4523
        %v5309 = vunpack.c.l.b16 %v4524
        %v5310 = vunpack.c.l.b16 %v4525
        %v5311 = vunpack.c.l.b16 %v4526
        %v5312 = vunpack.c.l.b16 %v4527
        %v5313 = vunpack.c.l.b16 %v4528
        %v5314 = vunpack.c.l.b16 %v4529
        %v5315 = vunpack.c.l.b16 %v4530
        %v5316 = vunpack.c.l.b16 %v4531
        %v5317 = vunpack.c.l.b16 %v4532
        %v5318 = vunpack.c.l.b16 %v4533
        %v5319 = vunpack.c.l.b16 %v4534
        %v5320 = vunpack.c.l.b16 %v4535
        %v5321 = vunpack.c.l.b16 %v4536
        %v5322 = vunpack.c.l.b16 %v4537
        %v5323 = vunpack.c.l.b16 %v4538
        %v5324 = vunpack.c.l.b16 %v4539
        %v5325 = vunpack.c.l.b16 %v4540
        %v5326 = vunpack.c.l.b16 %v4541
        %v5327 = vunpack.c.l.b16 %v4542
        %v5328 = vunpack.c.l.b16 %v4543
        %v5329 = vunpack.c.l.b16 %v4544
        %v5330 = vunpack.c.l.b16 %v4545
        %v5331 = vunpack.c.l.b16 %v4546
        %v5332 = vunpack.c.l.b16 %v4547
        %v5333 = vunpack.c.l.b16 %v4548
        %v5334 = vunpack.c.l.b16 %v4549
        %v5335 = vunpack.c.l.b16 %v4550
        %v5336 = vunpack.c.l.b16 %v4551
        %v5337 = vunpack.c.l.b16 %v4552
        %v5338 = vunpack.c.l.b16 %v4553
        %v5339 = vunpack.c.l.b16 %v4554
        %v5340 = vunpack.c.l.b16 %v4555
        %v5341 = vunpack.c.l.b16 %v4556
        %v5342 = vunpack.c.l.b16 %v4557
        %v5343 = vunpack.c.l.b16 %v4558
        %v5344 = vunpack.c.l.b16 %v4559
        %v5345 = vunpack.c.l.b16 %v4560
        %v5346 = vunpack.c.l.b16 %v4561
        %v5347 = vunpack.c.l.b16 %v4562
        %v5348 = vunpack.c.l.b16 %v4563
        %v5349 = vunpack.c.l.b16 %v4564
        %v5350 = vunpack.c.l.b16 %v4565
        %v5351 = vunpack.c.l.b16 %v4566
        %v5352 = vunpack.c.l.b16 %v4567
        %v5353 = vunpack.c.l.b16 %v4568
        %v5354 = vunpack.c.l.b16 %v4569
        %v5355 = vunpack.c.l.b16 %v4570
        %v5356 = vunpack.c.l.b16 %v4571
        %v5357 = vunpack.c.l.b16 %v4572
        %v5358 = vunpack.c.l.b16 %v4573
        %v5359 = vunpack.c.l.b16 %v4574
        %v5360 = vunpack.c.l.b16 %v4575
        %v5361 = vunpack.c.l.b16 %v4576
        %v5362 = vunpack.c.l.b16 %v4577
        %v5363 = vunpack.c.l.b16 %v4578
        %v5364 = vunpack.c.l.b16 %v4579
        %v5365 = vunpack.c.l.b16 %v4580
        %v5366 = vunpack.c.l.b16 %v4581
        %v5367 = vunpack.c.l.b16 %v4582
        %v5368 = vunpack.c.l.b16 %v4583
        %v5369 = vunpack.c.l.b16 %v4584
        %v5370 = vunpack.c.l.b16 %v4585
        %v5371 = vunpack.c.l.b16 %v4586
        %v5372 = vunpack.c.l.b16 %v4587
        %v5373 = vunpack.c.l.b16 %v4588
        %v5374 = vunpack.c.l.b16 %v4589
        %v5375 = vunpack.c.l.b16 %v4590
        %v5376 = vunpack.c.l.b16 %v4591
        %v5377 = vunpack.c.l.b16 %v4592
        %v5378 = vunpack.c.l.b16 %v4593
        %v5379 = vunpack.c.l.b16 %v4594
        %v5380 = vunpack.c.l.b16 %v4595
        %v5381 = vunpack.c.l.b16 %v4596
        %v5382 = vunpack.c.l.b16 %v4597
        %v5383 = vunpack.c.l.b16 %v4598
        %v5384 = vunpack.c.l.b16 %v4599
        %v5385 = vunpack.c.l.b16 %v4600
        %v5386 = vunpack.c.l.b16 %v4601
        %v5387 = vunpack.c.l.b16 %v4602
        %v5388 = vunpack.c.l.b16 %v4603
        %v5389 = vunpack.c.l.b16 %v4604
        %v5390 = vunpack.c.l.b16 %v4605
        %v5391 = vunpack.c.l.b16 %v4606
        %v5392 = vunpack.c.l.b16 %v4607
        %v5393 = vunpack.c.l.b16 %v4608
        %v5394 = vunpack.c.l.b16 %v4609
        %v5395 = vunpack.c.l.b16 %v4610
        %v5396 = vunpack.c.l.b16 %v4611
        %v5397 = vunpack.c.l.b16 %v4612
        %v5398 = vunpack.c.l.b16 %v4613
        %v5399 = vunpack.c.l.b16 %v4614
        %v5400 = vunpack.c.l.b16 %v4615
        %v5401 = vunpack.c.l.b16 %v4616
        %v5402 = vunpack.c.l.b16 %v4617
        %v5403 = vunpack.c.l.b16 %v4618
        %v5404 = vunpack.c.l.b16 %v4619
        %v5405 = vunpack.c.l.b16 %v4620
        %v5406 = vunpack.c.l.b16 %v4621
        %v5407 = vunpack.c.l.b16 %v4622
        %v5408 = vunpack.c.l.b16 %v4623
        %v5409 = vunpack.c.l.b16 %v4624
        %v5410 = vunpack.c.l.b16 %v4625
        %v5411 = vunpack.c.l.b16 %v4626
        %v5412 = vunpack.c.l.b16 %v4627
        %v5413 = vunpack.c.l.b16 %v4628
        %v5414 = vunpack.c.l.b16 %v4629
        %v5415 = vunpack.c.l.b16 %v4630
        %v5416 = vunpack.c.l.b16 %v4631
        %v5417 = vunpack.c.l.b16 %v4632
        %v5418 = vunpack.c.l.b16 %v4633
        %v5419 = vunpack.c.l.b16 %v4634
        %v5420 = vunpack.c.l.b16 %v4635
        %v5421 = vunpack.c.l.b16 %v4636
        %v5422 = vunpack.c.l.b16 %v4637
        %v5423 = vunpack.c.l.b16 %v4638
        %v5424 = vunpack.c.l.b16 %v4639
        %v5425 = vunpack.c.l.b16 %v4640
        %v5426 = vunpack.c.l.b16 %v4641
        %v5427 = vunpack.c.l.b16 %v4642
        %v5428 = vunpack.c.l.b16 %v4643
        %v5429 = vunpack.c.l.b16 %v4644
        %v5430 = vunpack.c.l.b16 %v4645
        %v5431 = vunpack.c.l.b16 %v4646
        %v5432 = vunpack.c.l.b16 %v4647
        %v5433 = vunpack.c.l.b16 %v4648
        %v5434 = vunpack.c.l.b16 %v4649
        %v5435 = vunpack.c.l.b16 %v4650
        %v5436 = vunpack.c.l.b16 %v4651
        %v5437 = vunpack.c.l.b16 %v4652
        %v5438 = vunpack.c.l.b16 %v4653
        %v5439 = vpack.c.b16 %v5048, %v5047
        %v5440 = vpack.c.b16 %v5050, %v5049
        %v5441 = vpack.c.b16 %v5052, %v5051
        %v5442 = vpack.c.b16 %v5054, %v5053
        %v5443 = vpack.c.b16 %v5056, %v5055
        %v5444 = vpack.c.b16 %v5058, %v5057
        %v5445 = vpack.c.b16 %v5060, %v5059
        %v5446 = vpack.c.b16 %v5062, %v5061
        %v5447 = vpack.c.b16 %v5064, %v5063
        %v5448 = vpack.c.b16 %v5066, %v5065
        %v5449 = vpack.c.b16 %v5068, %v5067
        %v5450 = vpack.c.b16 %v5070, %v5069
        %v5451 = vpack.c.b16 %v5072, %v5071
        %v5452 = vpack.c.b16 %v5074, %v5073
        %v5453 = vpack.c.b16 %v5076, %v5075
        %v5454 = vpack.c.b16 %v5078, %v5077
        %v5455 = vpack.c.b16 %v5080, %v5079
        %v5456 = vpack.c.b16 %v5082, %v5081
        %v5457 = vpack.c.b16 %v5084, %v5083
        %v5458 = vpack.c.b16 %v5086, %v5085
        %v5459 = vpack.c.b16 %v5088, %v5087
        %v5460 = vpack.c.b16 %v5090, %v5089
        %v5461 = vpack.c.b16 %v5092, %v5091
        %v5462 = vpack.c.b16 %v5094, %v5093
        %v5463 = vpack.c.b16 %v5096, %v5095
        %v5464 = vpack.c.b16 %v5098, %v5097
        %v5465 = vpack.c.b16 %v5100, %v5099
        %v5466 = vpack.c.b16 %v5102, %v5101
        %v5467 = vpack.c.b16 %v5104, %v5103
        %v5468 = vpack.c.b16 %v5106, %v5105
        %v5469 = vpack.c.b16 %v5108, %v5107
        %v5470 = vpack.c.b16 %v5110, %v5109
        %v5471 = vpack.c.b16 %v5112, %v5111
        %v5472 = vpack.c.b16 %v5114, %v5113
        %v5473 = vpack.c.b16 %v5116, %v5115
        %v5474 = vpack.c.b16 %v5118, %v5117
        %v5475 = vpack.c.b16 %v5120, %v5119
        %v5476 = vpack.c.b16 %v5122, %v5121
        %v5477 = vpack.c.b16 %v5124, %v5123
        %v5478 = vpack.c.b16 %v5126, %v5125
        %v5479 = vpack.c.b16 %v5128, %v5127
        %v5480 = vpack.c.b16 %v5130, %v5129
        %v5481 = vpack.c.b16 %v5132, %v5131
        %v5482 = vpack.c.b16 %v5134, %v5133
        %v5483 = vpack.c.b16 %v5136, %v5135
        %v5484 = vpack.c.b16 %v5138, %v5137
        %v5485 = vpack.c.b16 %v5140, %v5139
        %v5486 = vpack.c.b16 %v5142, %v5141
        %v5487 = vpack.c.b16 %v5144, %v5143
        %v5488 = vpack.c.b16 %v5146, %v5145
        %v5489 = vpack.c.b16 %v5148, %v5147
        %v5490 = vpack.c.b16 %v5150, %v5149
        %v5491 = vpack.c.b16 %v5152, %v5151
        %v5492 = vpack.c.b16 %v5154, %v5153
        %v5493 = vpack.c.b16 %v5156, %v5155
        %v5494 = vpack.c.b16 %v5158, %v5157
        %v5495 = vpack.c.b16 %v5160, %v5159
        %v5496 = vpack.c.b16 %v5162, %v5161
        %v5497 = vpack.c.b16 %v5164, %v5163
        %v5498 = vpack.c.b16 %v5166, %v5165
        %v5499 = vpack.c.b16 %v5168, %v5167
        %v5500 = vpack.c.b16 %v5170, %v5169
        %v5501 = vpack.c.b16 %v5172, %v5171
        %v5502 = vpack.c.b16 %v5174, %v5173
        %v5503 = vpack.c.b16 %v5176, %v5175
        %v5504 = vpack.c.b16 %v5178, %v5177
        %v5505 = vpack.c.b16 %v5180, %v5179
        %v5506 = vpack.c.b16 %v5182, %v5181
        %v5507 = vpack.c.b16 %v5184, %v5183
        %v5508 = vpack.c.b16 %v5186, %v5185
        %v5509 = vpack.c.b16 %v5188, %v5187
        %v5510 = vpack.c.b16 %v5190, %v5189
        %v5511 = vpack.c.b16 %v5192, %v5191
        %v5512 = vpack.c.b16 %v5194, %v5193
        %v5513 = vpack.c.b16 %v5196, %v5195
        %v5514 = vpack.c.b16 %v5198, %v5197
        %v5515 = vpack.c.b16 %v5200, %v5199
        %v5516 = vpack.c.b16 %v5202, %v5201
        %v5517 = vpack.c.b16 %v5204, %v5203
        %v5518 = vpack.c.b16 %v5206, %v5205
        %v5519 = vpack.c.b16 %v5208, %v5207
        %v5520 = vpack.c.b16 %v5210, %v5209
        %v5521 = vpack.c.b16 %v5212, %v5211
        %v5522 = vpack.c.b16 %v5214, %v5213
        %v5523 = vpack.c.b16 %v5216, %v5215
        %v5524 = vpack.c.b16 %v5218, %v5217
        %v5525 = vpack.c.b16 %v5220, %v5219
        %v5526 = vpack.c.b16 %v5222, %v5221
        %v5527 = vpack.c.b16 %v5224, %v5223
        %v5528 = vpack.c.b16 %v5226, %v5225
        %v5529 = vpack.c.b16 %v5228, %v5227
        %v5530 = vpack.c.b16 %v5230, %v5229
        %v5531 = vpack.c.b16 %v5232, %v5231
        %v5532 = vpack.c.b16 %v5234, %v5233
        %v5533 = vpack.c.b16 %v5236, %v5235
        %v5534 = vpack.c.b16 %v5238, %v5237
        %v5535 = vpack.c.b16 %v5240, %v5239
        %v5536 = vpack.c.b16 %v5242, %v5241
        %v5537 = vpack.c.b16 %v5244, %v5243
        %v5538 = vpack.c.b16 %v5246, %v5245
        %v5539 = vpack.c.b16 %v5248, %v5247
        %v5540 = vpack.c.b16 %v5250, %v5249
        %v5541 = vpack.c.b16 %v5252, %v5251
        %v5542 = vpack.c.b16 %v5254, %v5253
        %v5543 = vpack.c.b16 %v5256, %v5255
        %v5544 = vpack.c.b16 %v5258, %v5257
        %v5545 = vpack.c.b16 %v5260, %v5259
        %v5546 = vpack.c.b16 %v5262, %v5261
        %v5547 = vpack.c.b16 %v5264, %v5263
        %v5548 = vpack.c.b16 %v5266, %v5265
        %v5549 = vpack.c.b16 %v5268, %v5267
        %v5550 = vpack.c.b16 %v5270, %v5269
        %v5551 = vpack.c.b16 %v5272, %v5271
        %v5552 = vpack.c.b16 %v5274, %v5273
        %v5553 = vpack.c.b16 %v5276, %v5275
        %v5554 = vpack.c.b16 %v5278, %v5277
        %v5555 = vpack.c.b16 %v5280, %v5279
        %v5556 = vpack.c.b16 %v5282, %v5281
        %v5557 = vpack.c.b16 %v5284, %v5283
        %v5558 = vpack.c.b16 %v5286, %v5285
        %v5559 = vpack.c.b16 %v5288, %v5287
        %v5560 = vpack.c.b16 %v5290, %v5289
        %v5561 = vpack.c.b16 %v5292, %v5291
        %v5562 = vpack.c.b16 %v5294, %v5293
        %v5563 = vpack.c.b16 %v5296, %v5295
        %v5564 = vpack.c.b16 %v5298, %v5297
        %v5565 = vpack.c.b16 %v5300, %v5299
        %v5566 = vpack.c.b16 %v5302, %v5301
        %v5567 = vpack.c.b16 %v5304, %v5303
        %v5568 = vpack.c.b16 %v5306, %v5305
        %v5569 = vpack.c.b16 %v5308, %v5307
        %v5570 = vpack.c.b16 %v5310, %v5309
        %v5571 = vpack.c.b16 %v5312, %v5311
        %v5572 = vpack.c.b16 %v5314, %v5313
        %v5573 = vpack.c.b16 %v5316, %v5315
        %v5574 = vpack.c.b16 %v5318, %v5317
        %v5575 = vpack.c.b16 %v5320, %v5319
        %v5576 = vpack.c.b16 %v5322, %v5321
        %v5577 = vpack.c.b16 %v5324, %v5323
        %v5578 = vpack.c.b16 %v5326, %v5325
        %v5579 = vpack.c.b16 %v5328, %v5327
        %v5580 = vpack.c.b16 %v5330, %v5329
        %v5581 = vpack.c.b16 %v5332, %v5331
        %v5582 = vpack.c.b16 %v5334, %v5333
        %v5583 = vpack.c.b16 %v5336, %v5335
        %v5584 = vpack.c.b16 %v5338, %v5337
        %v5585 = vpack.c.b16 %v5340, %v5339
        %v5586 = vpack.c.b16 %v5342, %v5341
        %v5587 = vpack.c.b16 %v5344, %v5343
        %v5588 = vpack.c.b16 %v5346, %v5345
        %v5589 = vpack.c.b16 %v5348, %v5347
        %v5590 = vpack.c.b16 %v5350, %v5349
        %v5591 = vpack.c.b16 %v5352, %v5351
        %v5592 = vpack.c.b16 %v5354, %v5353
        %v5593 = vpack.c.b16 %v5356, %v5355
        %v5594 = vpack.c.b16 %v5358, %v5357
        %v5595 = vpack.c.b16 %v5360, %v5359
        %v5596 = vpack.c.b16 %v5362, %v5361
        %v5597 = vpack.c.b16 %v5364, %v5363
        %v5598 = vpack.c.b16 %v5366, %v5365
        %v5599 = vpack.c.b16 %v5368, %v5367
        %v5600 = vpack.c.b16 %v5370, %v5369
        %v5601 = vpack.c.b16 %v5372, %v5371
        %v5602 = vpack.c.b16 %v5374, %v5373
        %v5603 = vpack.c.b16 %v5376, %v5375
        %v5604 = vpack.c.b16 %v5378, %v5377
        %v5605 = vpack.c.b16 %v5380, %v5379
        %v5606 = vpack.c.b16 %v5382, %v5381
        %v5607 = vpack.c.b16 %v5384, %v5383
        %v5608 = vpack.c.b16 %v5386, %v5385
        %v5609 = vpack.c.b16 %v5388, %v5387
        %v5610 = vpack.c.b16 %v5390, %v5389
        %v5611 = vpack.c.b16 %v5392, %v5391
        %v5612 = vpack.c.b16 %v5394, %v5393
        %v5613 = vpack.c.b16 %v5396, %v5395
        %v5614 = vpack.c.b16 %v5398, %v5397
        %v5615 = vpack.c.b16 %v5400, %v5399
        %v5616 = vpack.c.b16 %v5402, %v5401
        %v5617 = vpack.c.b16 %v5404, %v5403
        %v5618 = vpack.c.b16 %v5406, %v5405
        %v5619 = vpack.c.b16 %v5408, %v5407
        %v5620 = vpack.c.b16 %v5410, %v5409
        %v5621 = vpack.c.b16 %v5412, %v5411
        %v5622 = vpack.c.b16 %v5414, %v5413
        %v5623 = vpack.c.b16 %v5416, %v5415
        %v5624 = vpack.c.b16 %v5418, %v5417
        %v5625 = vpack.c.b16 %v5420, %v5419
        %v5626 = vpack.c.b16 %v5422, %v5421
        %v5627 = vpack.c.b16 %v5424, %v5423
        %v5628 = vpack.c.b16 %v5426, %v5425
        %v5629 = vpack.c.b16 %v5428, %v5427
        %v5630 = vpack.c.b16 %v5430, %v5429
        %v5631 = vpack.c.b16 %v5432, %v5431
        %v5632 = vpack.c.b16 %v5434, %v5433
        %v5633 = vpack.c.b16 %v5436, %v5435
        %v5634 = vpack.c.b16 %v5438, %v5437
        %v5832 = vsel %vm2630, %v4261, 0
        %5834 = vmatprep.subr.bf16.mxu0 0
        %5835 = vmatpush1.bf16.msra.mxu0 %v5439
        %5836 = vmatprep.subr.bf16.mxu0 0
        %5837 = vmatpush1.bf16.msra.mxu0 %v5440
        %5838 = vmatprep.subr.bf16.mxu0 0
        %5839 = vmatpush1.bf16.msra.mxu0 %v5441
        %5840 = vmatprep.subr.bf16.mxu0 0
        %5841 = vmatpush1.bf16.msra.mxu0 %v5442
        %5842 = vmatprep.subr.bf16.mxu0 0
        %5843 = vmatpush1.bf16.msra.mxu0 %v5443
        %5844 = vmatprep.subr.bf16.mxu0 0
        %5845 = vmatpush1.bf16.msra.mxu0 %v5444
        %5846 = vmatprep.subr.bf16.mxu0 0
        %5847 = vmatpush1.bf16.msra.mxu0 %v5445
        %5848 = vmatprep.subr.bf16.mxu0 0
        %5849 = vmatpush1.bf16.msra.mxu0 %v5446
        %5850 = vmatprep.subr.bf16.mxu0 0
        %5851 = vmatpush1.bf16.msra.mxu0 %v5447
        %5852 = vmatprep.subr.bf16.mxu0 0
        %5853 = vmatpush1.bf16.msra.mxu0 %v5448
        %5854 = vmatprep.subr.bf16.mxu0 0
        %5855 = vmatpush1.bf16.msra.mxu0 %v5449
        %5856 = vmatprep.subr.bf16.mxu0 0
        %5857 = vmatpush1.bf16.msra.mxu0 %v5450
        %5858 = vmatprep.subr.bf16.mxu0 0
        %5859 = vmatpush1.bf16.msra.mxu0 %v5451
        %5860 = vmatprep.subr.bf16.mxu0 0
        %5861 = vmatpush1.bf16.msra.mxu0 %v5452
        %5862 = vmatprep.subr.bf16.mxu0 0
        %5863 = vmatpush1.bf16.msra.mxu0 %v5453
        %5864 = vmatprep.subr.bf16.mxu0 0
        %5865 = vmatpush1.bf16.msra.mxu0 %v5454
        %5866 = vmatprep.mubr.bf16.mxu0 %v4238
        %5867 = vmatmul.mubr.bf16.gmra.mrb[0].mxu0 %v4237
        %v5868 = vpop.f32.mrb[0].mxu0
        %v5869 = vadd.f32 %v4654, %v5868
        %v5870 = vpop.f32.mrb[0].mxu0
        %v5871 = vpop.f32.mrb[0].mxu0
        %v5872 = vpop.f32.mrb[0].mxu0
        %5873 = vdwg.mxu0
        %5874 = vmatprep.subr.bf16.mxu0 0
        %5875 = vmatpush1.bf16.msra.mxu0 %v5455
        %5876 = vmatprep.subr.bf16.mxu0 0
        %5877 = vmatpush1.bf16.msra.mxu0 %v5456
        %5878 = vmatprep.subr.bf16.mxu0 0
        %5879 = vmatpush1.bf16.msra.mxu0 %v5457
        %5880 = vmatprep.subr.bf16.mxu0 0
        %5881 = vmatpush1.bf16.msra.mxu0 %v5458
        %5882 = vmatprep.subr.bf16.mxu0 0
        %5883 = vmatpush1.bf16.msra.mxu0 %v5459
        %5884 = vmatprep.subr.bf16.mxu0 0
        %5885 = vmatpush1.bf16.msra.mxu0 %v5460
        %5886 = vmatprep.subr.bf16.mxu0 0
        %5887 = vmatpush1.bf16.msra.mxu0 %v5461
        %5888 = vmatprep.subr.bf16.mxu0 0
        %5889 = vmatpush1.bf16.msra.mxu0 %v5462
        %5890 = vmatprep.subr.bf16.mxu0 0
        %5891 = vmatpush1.bf16.msra.mxu0 %v5463
        %5892 = vmatprep.subr.bf16.mxu0 0
        %5893 = vmatpush1.bf16.msra.mxu0 %v5464
        %5894 = vmatprep.subr.bf16.mxu0 0
        %5895 = vmatpush1.bf16.msra.mxu0 %v5465
        %5896 = vmatprep.subr.bf16.mxu0 0
        %5897 = vmatpush1.bf16.msra.mxu0 %v5466
        %5898 = vmatprep.subr.bf16.mxu0 0
        %5899 = vmatpush1.bf16.msra.mxu0 %v5467
        %5900 = vmatprep.subr.bf16.mxu0 0
        %5901 = vmatpush1.bf16.msra.mxu0 %v5468
        %5902 = vmatprep.subr.bf16.mxu0 0
        %5903 = vmatpush1.bf16.msra.mxu0 %v5469
        %5904 = vmatprep.subr.bf16.mxu0 0
        %5905 = vmatpush1.bf16.msra.mxu0 %v5470
        %5906 = vmatprep.mubr.bf16.mxu0 %v4240
        %5907 = vmatmul.mubr.bf16.gmra.mrb[0].mxu0 %v4239
        %v5908 = vpop.f32.mrb[0].mxu0
        %v5909 = vadd.f32 %v5869, %v5908
        %v5910 = vpop.f32.mrb[0].mxu0
        %v5911 = vpop.f32.mrb[0].mxu0
        %v5912 = vpop.f32.mrb[0].mxu0
        %5913 = vdwg.mxu0
        %5914 = vmatprep.subr.bf16.mxu0 0
        %5915 = vmatpush1.bf16.msra.mxu0 %v5471
        %5916 = vmatprep.subr.bf16.mxu0 0
        %5917 = vmatpush1.bf16.msra.mxu0 %v5472
        %5918 = vmatprep.subr.bf16.mxu0 0
        %5919 = vmatpush1.bf16.msra.mxu0 %v5473
        %5920 = vmatprep.subr.bf16.mxu0 0
        %5921 = vmatpush1.bf16.msra.mxu0 %v5474
        %5922 = vmatprep.subr.bf16.mxu0 0
        %5923 = vmatpush1.bf16.msra.mxu0 %v5475
        %5924 = vmatprep.subr.bf16.mxu0 0
        %5925 = vmatpush1.bf16.msra.mxu0 %v5476
        %5926 = vmatprep.subr.bf16.mxu0 0
        %5927 = vmatpush1.bf16.msra.mxu0 %v5477
        %5928 = vmatprep.subr.bf16.mxu0 0
        %5929 = vmatpush1.bf16.msra.mxu0 %v5478
        %5930 = vmatprep.subr.bf16.mxu0 0
        %5931 = vmatpush1.bf16.msra.mxu0 %v5479
        %5932 = vmatprep.subr.bf16.mxu0 0
        %5933 = vmatpush1.bf16.msra.mxu0 %v5480
        %5934 = vmatprep.subr.bf16.mxu0 0
        %5935 = vmatpush1.bf16.msra.mxu0 %v5481
        %5936 = vmatprep.subr.bf16.mxu0 0
        %5937 = vmatpush1.bf16.msra.mxu0 %v5482
        %5938 = vmatprep.subr.bf16.mxu0 0
        %5939 = vmatpush1.bf16.msra.mxu0 %v5483
        %5940 = vmatprep.subr.bf16.mxu0 0
        %5941 = vmatpush1.bf16.msra.mxu0 %v5484
        %5942 = vmatprep.subr.bf16.mxu0 0
        %5943 = vmatpush1.bf16.msra.mxu0 %v5485
        %5944 = vmatprep.subr.bf16.mxu0 0
        %5945 = vmatpush1.bf16.msra.mxu0 %v5486
        %5946 = vmatprep.mubr.bf16.mxu0 %v4242
        %5947 = vmatmul.mubr.bf16.gmra.mrb[0].mxu0 %v4241
        %v5948 = vpop.f32.mrb[0].mxu0
        %v5949 = vadd.f32 %v5909, %v5948
        %v5950 = vpop.f32.mrb[0].mxu0
        %v5951 = vpop.f32.mrb[0].mxu0
        %v5952 = vpop.f32.mrb[0].mxu0
        %5953 = vdwg.mxu0
        %5954 = vmatprep.subr.bf16.mxu0 0
        %5955 = vmatpush1.bf16.msra.mxu0 %v5487
        %5956 = vmatprep.subr.bf16.mxu0 0
        %5957 = vmatpush1.bf16.msra.mxu0 %v5488
        %5958 = vmatprep.subr.bf16.mxu0 0
        %5959 = vmatpush1.bf16.msra.mxu0 %v5489
        %5960 = vmatprep.subr.bf16.mxu0 0
        %5961 = vmatpush1.bf16.msra.mxu0 %v5490
        %5962 = vmatprep.subr.bf16.mxu0 0
        %5963 = vmatpush1.bf16.msra.mxu0 %v5491
        %5964 = vmatprep.subr.bf16.mxu0 0
        %5965 = vmatpush1.bf16.msra.mxu0 %v5492
        %5966 = vmatprep.subr.bf16.mxu0 0
        %5967 = vmatpush1.bf16.msra.mxu0 %v5493
        %5968 = vmatprep.subr.bf16.mxu0 0
        %5969 = vmatpush1.bf16.msra.mxu0 %v5494
        %5970 = vmatprep.subr.bf16.mxu0 0
        %5971 = vmatpush1.bf16.msra.mxu0 %v5495
        %5972 = vmatprep.subr.bf16.mxu0 0
        %5973 = vmatpush1.bf16.msra.mxu0 %v5496
        %5974 = vmatprep.subr.bf16.mxu0 0
        %5975 = vmatpush1.bf16.msra.mxu0 %v5497
        %5976 = vmatprep.subr.bf16.mxu0 0
        %5977 = vmatpush1.bf16.msra.mxu0 %v5498
        %5978 = vmatprep.subr.bf16.mxu0 0
        %5979 = vmatpush1.bf16.msra.mxu0 %v5499
        %5980 = vmatprep.subr.bf16.mxu0 0
        %5981 = vmatpush1.bf16.msra.mxu0 %v5500
        %5982 = vmatprep.subr.bf16.mxu0 0
        %5983 = vmatpush1.bf16.msra.mxu0 %v5501
        %5984 = vmatprep.subr.bf16.mxu0 0
        %5985 = vmatpush1.bf16.msra.mxu0 %v5502
        %5986 = vmatprep.mubr.bf16.mxu0 %v4244
        %5987 = vmatmul.mubr.bf16.gmra.mrb[0].mxu0 %v4243
        %v5988 = vpop.f32.mrb[0].mxu0
        %v5989 = vadd.f32 %v5949, %v5988
        %v5990 = vpop.f32.mrb[0].mxu0
        %v5991 = vpop.f32.mrb[0].mxu0
        %v5992 = vpop.f32.mrb[0].mxu0
        %5993 = vdwg.mxu0
        %5994 = vmatprep.subr.bf16.mxu0 0
        %5995 = vmatpush1.bf16.msra.mxu0 %v5503
        %5996 = vmatprep.subr.bf16.mxu0 0
        %5997 = vmatpush1.bf16.msra.mxu0 %v5504
        %5998 = vmatprep.subr.bf16.mxu0 0
        %5999 = vmatpush1.bf16.msra.mxu0 %v5505
        %6000 = vmatprep.subr.bf16.mxu0 0
        %6001 = vmatpush1.bf16.msra.mxu0 %v5506
        %6002 = vmatprep.subr.bf16.mxu0 0
        %6003 = vmatpush1.bf16.msra.mxu0 %v5507
        %6004 = vmatprep.subr.bf16.mxu0 0
        %6005 = vmatpush1.bf16.msra.mxu0 %v5508
        %6006 = vmatprep.subr.bf16.mxu0 0
        %6007 = vmatpush1.bf16.msra.mxu0 %v5509
        %6008 = vmatprep.subr.bf16.mxu0 0
        %6009 = vmatpush1.bf16.msra.mxu0 %v5510
        %6010 = vmatprep.subr.bf16.mxu0 0
        %6011 = vmatpush1.bf16.msra.mxu0 %v5511
        %6012 = vmatprep.subr.bf16.mxu0 0
        %6013 = vmatpush1.bf16.msra.mxu0 %v5512
        %6014 = vmatprep.subr.bf16.mxu0 0
        %6015 = vmatpush1.bf16.msra.mxu0 %v5513
        %6016 = vmatprep.subr.bf16.mxu0 0
        %6017 = vmatpush1.bf16.msra.mxu0 %v5514
        %6018 = vmatprep.subr.bf16.mxu0 0
        %6019 = vmatpush1.bf16.msra.mxu0 %v5515
        %6020 = vmatprep.subr.bf16.mxu0 0
        %6021 = vmatpush1.bf16.msra.mxu0 %v5516
        %6022 = vmatprep.subr.bf16.mxu0 0
        %6023 = vmatpush1.bf16.msra.mxu0 %v5517
        %6024 = vmatprep.subr.bf16.mxu0 0
        %6025 = vmatpush1.bf16.msra.mxu0 %v5518
        %6026 = vmatprep.mubr.bf16.mxu0 %v4246
        %6027 = vmatmul.mubr.bf16.gmra.mrb[0].mxu0 %v4245
        %v6028 = vpop.f32.mrb[0].mxu0
        %v6029 = vadd.f32 %v5989, %v6028
        %v6030 = vpop.f32.mrb[0].mxu0
        %v6031 = vpop.f32.mrb[0].mxu0
        %v6032 = vpop.f32.mrb[0].mxu0
        %6033 = vdwg.mxu0
        %6034 = vmatprep.subr.bf16.mxu0 0
        %6035 = vmatpush1.bf16.msra.mxu0 %v5519
        %6036 = vmatprep.subr.bf16.mxu0 0
        %6037 = vmatpush1.bf16.msra.mxu0 %v5520
        %6038 = vmatprep.subr.bf16.mxu0 0
        %6039 = vmatpush1.bf16.msra.mxu0 %v5521
        %6040 = vmatprep.subr.bf16.mxu0 0
        %6041 = vmatpush1.bf16.msra.mxu0 %v5522
        %6042 = vmatprep.subr.bf16.mxu0 0
        %6043 = vmatpush1.bf16.msra.mxu0 %v5523
        %6044 = vmatprep.subr.bf16.mxu0 0
        %6045 = vmatpush1.bf16.msra.mxu0 %v5524
        %6046 = vmatprep.subr.bf16.mxu0 0
        %6047 = vmatpush1.bf16.msra.mxu0 %v5525
        %6048 = vmatprep.subr.bf16.mxu0 0
        %6049 = vmatpush1.bf16.msra.mxu0 %v5526
        %6050 = vmatprep.subr.bf16.mxu0 0
        %6051 = vmatpush1.bf16.msra.mxu0 %v5527
        %6052 = vmatprep.subr.bf16.mxu0 0
        %6053 = vmatpush1.bf16.msra.mxu0 %v5528
        %6054 = vmatprep.subr.bf16.mxu0 0
        %6055 = vmatpush1.bf16.msra.mxu0 %v5529
        %6056 = vmatprep.subr.bf16.mxu0 0
        %6057 = vmatpush1.bf16.msra.mxu0 %v5530
        %6058 = vmatprep.subr.bf16.mxu0 0
        %6059 = vmatpush1.bf16.msra.mxu0 %v5531
        %6060 = vmatprep.subr.bf16.mxu0 0
        %6061 = vmatpush1.bf16.msra.mxu0 %v5532
        %6062 = vmatprep.subr.bf16.mxu0 0
        %6063 = vmatpush1.bf16.msra.mxu0 %v5533
        %6064 = vmatprep.subr.bf16.mxu0 0
        %6065 = vmatpush1.bf16.msra.mxu0 %v5534
        %6066 = vmatprep.mubr.bf16.mxu0 %v4248
        %6067 = vmatmul.mubr.bf16.gmra.mrb[0].mxu0 %v4247
        %v6068 = vpop.f32.mrb[0].mxu0
        %v6069 = vadd.f32 %v6029, %v6068
        %v6070 = vpop.f32.mrb[0].mxu0
        %v6071 = vpop.f32.mrb[0].mxu0
        %v6072 = vpop.f32.mrb[0].mxu0
        %6073 = vdwg.mxu0
        %6074 = vmatprep.subr.bf16.mxu0 0
        %6075 = vmatpush1.bf16.msra.mxu0 %v5535
        %6076 = vmatprep.subr.bf16.mxu0 0
        %6077 = vmatpush1.bf16.msra.mxu0 %v5536
        %6078 = vmatprep.subr.bf16.mxu0 0
        %6079 = vmatpush1.bf16.msra.mxu0 %v5537
        %6080 = vmatprep.subr.bf16.mxu0 0
        %6081 = vmatpush1.bf16.msra.mxu0 %v5538
        %6082 = vmatprep.subr.bf16.mxu0 0
        %6083 = vmatpush1.bf16.msra.mxu0 %v5539
        %6084 = vmatprep.subr.bf16.mxu0 0
        %6085 = vmatpush1.bf16.msra.mxu0 %v5540
        %6086 = vmatprep.subr.bf16.mxu0 0
        %6087 = vmatpush1.bf16.msra.mxu0 %v5541
        %6088 = vmatprep.subr.bf16.mxu0 0
        %6089 = vmatpush1.bf16.msra.mxu0 %v5542
        %6090 = vmatprep.subr.bf16.mxu0 0
        %6091 = vmatpush1.bf16.msra.mxu0 %v5543
        %6092 = vmatprep.subr.bf16.mxu0 0
        %6093 = vmatpush1.bf16.msra.mxu0 %v5544
        %6094 = vmatprep.subr.bf16.mxu0 0
        %6095 = vmatpush1.bf16.msra.mxu0 %v5545
        %6096 = vmatprep.subr.bf16.mxu0 0
        %6097 = vmatpush1.bf16.msra.mxu0 %v5546
        %6098 = vmatprep.subr.bf16.mxu0 0
        %6099 = vmatpush1.bf16.msra.mxu0 %v5547
        %6100 = vmatprep.subr.bf16.mxu0 0
        %6101 = vmatpush1.bf16.msra.mxu0 %v5548
        %6102 = vmatprep.subr.bf16.mxu0 0
        %6103 = vmatpush1.bf16.msra.mxu0 %v5549
        %6104 = vmatprep.subr.bf16.mxu0 0
        %6105 = vmatpush1.bf16.msra.mxu0 %v5550
        %6106 = vmatprep.mubr.bf16.mxu0 %v4250
        %6107 = vmatmul.mubr.bf16.gmra.mrb[0].mxu0 %v4249
        %v6108 = vpop.f32.mrb[0].mxu0
        %v6109 = vadd.f32 %v6069, %v6108
        %v6110 = vpop.f32.mrb[0].mxu0
        %v6111 = vpop.f32.mrb[0].mxu0
        %v6112 = vpop.f32.mrb[0].mxu0
        %6113 = vdwg.mxu0
        %6114 = vmatprep.subr.bf16.mxu0 0
        %6115 = vmatpush1.bf16.msra.mxu0 %v5551
        %6116 = vmatprep.subr.bf16.mxu0 0
        %6117 = vmatpush1.bf16.msra.mxu0 %v5552
        %6118 = vmatprep.subr.bf16.mxu0 0
        %6119 = vmatpush1.bf16.msra.mxu0 %v5553
        %6120 = vmatprep.subr.bf16.mxu0 0
        %6121 = vmatpush1.bf16.msra.mxu0 %v5554
        %6122 = vmatprep.subr.bf16.mxu0 0
        %6123 = vmatpush1.bf16.msra.mxu0 %v5555
        %6124 = vmatprep.subr.bf16.mxu0 0
        %6125 = vmatpush1.bf16.msra.mxu0 %v5556
        %6126 = vmatprep.subr.bf16.mxu0 0
        %6127 = vmatpush1.bf16.msra.mxu0 %v5557
        %6128 = vmatprep.subr.bf16.mxu0 0
        %6129 = vmatpush1.bf16.msra.mxu0 %v5558
        %6130 = vmatprep.subr.bf16.mxu0 0
        %6131 = vmatpush1.bf16.msra.mxu0 %v5559
        %6132 = vmatprep.subr.bf16.mxu0 0
        %6133 = vmatpush1.bf16.msra.mxu0 %v5560
        %6134 = vmatprep.subr.bf16.mxu0 0
        %6135 = vmatpush1.bf16.msra.mxu0 %v5561
        %6136 = vmatprep.subr.bf16.mxu0 0
        %6137 = vmatpush1.bf16.msra.mxu0 %v5562
        %6138 = vmatprep.subr.bf16.mxu0 0
        %6139 = vmatpush1.bf16.msra.mxu0 %v5563
        %6140 = vmatprep.subr.bf16.mxu0 0
        %6141 = vmatpush1.bf16.msra.mxu0 %v5564
        %6142 = vmatprep.subr.bf16.mxu0 0
        %6143 = vmatpush1.bf16.msra.mxu0 %v5565
        %6144 = vmatprep.subr.bf16.mxu0 0
        %6145 = vmatpush1.bf16.msra.mxu0 %v5566
        %6146 = vmatprep.mubr.bf16.mxu0 %v4252
        %6147 = vmatmul.mubr.bf16.gmra.mrb[0].mxu0 %v4251
        %v6148 = vpop.f32.mrb[0].mxu0
        %v6149 = vadd.f32 %v6109, %v6148
        %v6150 = vpop.f32.mrb[0].mxu0
        %v6151 = vpop.f32.mrb[0].mxu0
        %v6152 = vpop.f32.mrb[0].mxu0
        %6153 = vdwg.mxu0
        %6154 = vmatprep.subr.bf16.mxu0 0
        %6155 = vmatpush1.bf16.msra.mxu0 %v5567
        %6156 = vmatprep.subr.bf16.mxu0 0
        %6157 = vmatpush1.bf16.msra.mxu0 %v5568
        %6158 = vmatprep.subr.bf16.mxu0 0
        %6159 = vmatpush1.bf16.msra.mxu0 %v5569
        %6160 = vmatprep.subr.bf16.mxu0 0
        %6161 = vmatpush1.bf16.msra.mxu0 %v5570
        %6162 = vmatprep.subr.bf16.mxu0 0
        %6163 = vmatpush1.bf16.msra.mxu0 %v5571
        %6164 = vmatprep.subr.bf16.mxu0 0
        %6165 = vmatpush1.bf16.msra.mxu0 %v5572
        %6166 = vmatprep.subr.bf16.mxu0 0
        %6167 = vmatpush1.bf16.msra.mxu0 %v5573
        %6168 = vmatprep.subr.bf16.mxu0 0
        %6169 = vmatpush1.bf16.msra.mxu0 %v5574
        %6170 = vmatprep.subr.bf16.mxu0 0
        %6171 = vmatpush1.bf16.msra.mxu0 %v5575
        %6172 = vmatprep.subr.bf16.mxu0 0
        %6173 = vmatpush1.bf16.msra.mxu0 %v5576
        %6174 = vmatprep.subr.bf16.mxu0 0
        %6175 = vmatpush1.bf16.msra.mxu0 %v5577
        %6176 = vmatprep.subr.bf16.mxu0 0
        %6177 = vmatpush1.bf16.msra.mxu0 %v5578
        %6178 = vmatprep.subr.bf16.mxu0 0
        %6179 = vmatpush1.bf16.msra.mxu0 %v5579
        %6180 = vmatprep.subr.bf16.mxu0 0
        %6181 = vmatpush1.bf16.msra.mxu0 %v5580
        %6182 = vmatprep.subr.bf16.mxu0 0
        %6183 = vmatpush1.bf16.msra.mxu0 %v5581
        %6184 = vmatprep.subr.bf16.mxu0 0
        %6185 = vmatpush1.bf16.msra.mxu0 %v5582
        %6186 = vmatprep.mubr.bf16.mxu0 %v4254
        %6187 = vmatmul.mubr.bf16.gmra.mrb[0].mxu0 %v4253
        %v6188 = vpop.f32.mrb[0].mxu0
        %v6189 = vadd.f32 %v6149, %v6188
        %v6190 = vpop.f32.mrb[0].mxu0
        %v6191 = vpop.f32.mrb[0].mxu0
        %v6192 = vpop.f32.mrb[0].mxu0
        %6193 = vdwg.mxu0
        %6194 = vmatprep.subr.bf16.mxu0 0
        %6195 = vmatpush1.bf16.msra.mxu0 %v5583
        %6196 = vmatprep.subr.bf16.mxu0 0
        %6197 = vmatpush1.bf16.msra.mxu0 %v5584
        %6198 = vmatprep.subr.bf16.mxu0 0
        %6199 = vmatpush1.bf16.msra.mxu0 %v5585
        %6200 = vmatprep.subr.bf16.mxu0 0
        %6201 = vmatpush1.bf16.msra.mxu0 %v5586
        %6202 = vmatprep.subr.bf16.mxu0 0
        %6203 = vmatpush1.bf16.msra.mxu0 %v5587
        %6204 = vmatprep.subr.bf16.mxu0 0
        %6205 = vmatpush1.bf16.msra.mxu0 %v5588
        %6206 = vmatprep.subr.bf16.mxu0 0
        %6207 = vmatpush1.bf16.msra.mxu0 %v5589
        %6208 = vmatprep.subr.bf16.mxu0 0
        %6209 = vmatpush1.bf16.msra.mxu0 %v5590
        %6210 = vmatprep.subr.bf16.mxu0 0
        %6211 = vmatpush1.bf16.msra.mxu0 %v5591
        %6212 = vmatprep.subr.bf16.mxu0 0
        %6213 = vmatpush1.bf16.msra.mxu0 %v5592
        %6214 = vmatprep.subr.bf16.mxu0 0
        %6215 = vmatpush1.bf16.msra.mxu0 %v5593
        %6216 = vmatprep.subr.bf16.mxu0 0
        %6217 = vmatpush1.bf16.msra.mxu0 %v5594
        %6218 = vmatprep.subr.bf16.mxu0 0
        %6219 = vmatpush1.bf16.msra.mxu0 %v5595
        %6220 = vmatprep.subr.bf16.mxu0 0
        %6221 = vmatpush1.bf16.msra.mxu0 %v5596
        %6222 = vmatprep.subr.bf16.mxu0 0
        %6223 = vmatpush1.bf16.msra.mxu0 %v5597
        %6224 = vmatprep.subr.bf16.mxu0 0
        %6225 = vmatpush1.bf16.msra.mxu0 %v5598
        %6226 = vmatprep.mubr.bf16.mxu0 %v4256
        %6227 = vmatmul.mubr.bf16.gmra.mrb[0].mxu0 %v4255
        %v6228 = vpop.f32.mrb[0].mxu0
        %v6229 = vadd.f32 %v6189, %v6228
        %v6230 = vpop.f32.mrb[0].mxu0
        %v6231 = vpop.f32.mrb[0].mxu0
        %v6232 = vpop.f32.mrb[0].mxu0
        %6233 = vdwg.mxu0
        %6234 = vmatprep.subr.bf16.mxu0 0
        %6235 = vmatpush1.bf16.msra.mxu0 %v5599
        %6236 = vmatprep.subr.bf16.mxu0 0
        %6237 = vmatpush1.bf16.msra.mxu0 %v5600
        %6238 = vmatprep.subr.bf16.mxu0 0
        %6239 = vmatpush1.bf16.msra.mxu0 %v5601
        %6240 = vmatprep.subr.bf16.mxu0 0
        %6241 = vmatpush1.bf16.msra.mxu0 %v5602
        %6242 = vmatprep.subr.bf16.mxu0 0
        %6243 = vmatpush1.bf16.msra.mxu0 %v5603
        %6244 = vmatprep.subr.bf16.mxu0 0
        %6245 = vmatpush1.bf16.msra.mxu0 %v5604
        %6246 = vmatprep.subr.bf16.mxu0 0
        %6247 = vmatpush1.bf16.msra.mxu0 %v5605
        %6248 = vmatprep.subr.bf16.mxu0 0
        %6249 = vmatpush1.bf16.msra.mxu0 %v5606
        %6250 = vmatprep.subr.bf16.mxu0 0
        %6251 = vmatpush1.bf16.msra.mxu0 %v5607
        %6252 = vmatprep.subr.bf16.mxu0 0
        %6253 = vmatpush1.bf16.msra.mxu0 %v5608
        %6254 = vmatprep.subr.bf16.mxu0 0
        %6255 = vmatpush1.bf16.msra.mxu0 %v5609
        %6256 = vmatprep.subr.bf16.mxu0 0
        %6257 = vmatpush1.bf16.msra.mxu0 %v5610
        %6258 = vmatprep.subr.bf16.mxu0 0
        %6259 = vmatpush1.bf16.msra.mxu0 %v5611
        %6260 = vmatprep.subr.bf16.mxu0 0
        %6261 = vmatpush1.bf16.msra.mxu0 %v5612
        %6262 = vmatprep.subr.bf16.mxu0 0
        %6263 = vmatpush1.bf16.msra.mxu0 %v5613
        %6264 = vmatprep.subr.bf16.mxu0 0
        %6265 = vmatpush1.bf16.msra.mxu0 %v5614
        %6266 = vmatprep.mubr.bf16.mxu0 %v4258
        %6267 = vmatmul.mubr.bf16.gmra.mrb[0].mxu0 %v4257
        %v6268 = vpop.f32.mrb[0].mxu0
        %v6269 = vadd.f32 %v6229, %v6268
        %v6270 = vpop.f32.mrb[0].mxu0
        %v6271 = vpop.f32.mrb[0].mxu0
        %v6272 = vpop.f32.mrb[0].mxu0
        %6273 = vdwg.mxu0
        %6274 = vmatprep.subr.bf16.mxu0 0
        %6275 = vmatpush1.bf16.msra.mxu0 %v5615
        %6276 = vmatprep.subr.bf16.mxu0 0
        %6277 = vmatpush1.bf16.msra.mxu0 %v5616
        %6278 = vmatprep.subr.bf16.mxu0 0
        %6279 = vmatpush1.bf16.msra.mxu0 %v5617
        %6280 = vmatprep.subr.bf16.mxu0 0
        %6281 = vmatpush1.bf16.msra.mxu0 %v5618
        %6282 = vmatprep.subr.bf16.mxu0 0
        %6283 = vmatpush1.bf16.msra.mxu0 %v5619
        %6284 = vmatprep.subr.bf16.mxu0 0
        %6285 = vmatpush1.bf16.msra.mxu0 %v5620
        %6286 = vmatprep.subr.bf16.mxu0 0
        %6287 = vmatpush1.bf16.msra.mxu0 %v5621
        %6288 = vmatprep.subr.bf16.mxu0 0
        %6289 = vmatpush1.bf16.msra.mxu0 %v5622
        %6290 = vmatprep.subr.bf16.mxu0 0
        %6291 = vmatpush1.bf16.msra.mxu0 %v5623
        %6292 = vmatprep.subr.bf16.mxu0 0
        %6293 = vmatpush1.bf16.msra.mxu0 %v5624
        %6294 = vmatprep.subr.bf16.mxu0 0
        %6295 = vmatpush1.bf16.msra.mxu0 %v5625
        %6296 = vmatprep.subr.bf16.mxu0 0
        %6297 = vmatpush1.bf16.msra.mxu0 %v5626
        %6298 = vmatprep.subr.bf16.mxu0 0
        %6299 = vmatpush1.bf16.msra.mxu0 %v5627
        %6300 = vmatprep.subr.bf16.mxu0 0
        %6301 = vmatpush1.bf16.msra.mxu0 %v5628
        %6302 = vmatprep.subr.bf16.mxu0 0
        %6303 = vmatpush1.bf16.msra.mxu0 %v5629
        %6304 = vmatprep.subr.bf16.mxu0 0
        %6305 = vmatpush1.bf16.msra.mxu0 %v5630
        %6306 = vmatprep.mubr.bf16.mxu0 %v4260
        %6307 = vmatmul.mubr.bf16.gmra.mrb[0].mxu0 %v4259
        %v6308 = vpop.f32.mrb[0].mxu0
        %v6309 = vadd.f32 %v6269, %v6308
        %v6310 = vpop.f32.mrb[0].mxu0
        %v6311 = vpop.f32.mrb[0].mxu0
        %v6312 = vpop.f32.mrb[0].mxu0
        %6313 = vdwg.mxu0
        %6314 = vmatprep.subr.bf16.mxu0 0
        %6315 = vmatpush1.bf16.msra.mxu0 %v5631
        %6316 = vmatprep.subr.bf16.mxu0 0
        %6317 = vmatpush1.bf16.msra.mxu0 %v5632
        %6318 = vmatprep.subr.bf16.mxu0 0
        %6319 = vmatpush1.bf16.msra.mxu0 %v5633
        %6320 = vmatprep.subr.bf16.mxu0 0
        %6321 = vmatpush1.bf16.msra.mxu0 %v5634
        %6322 = vmatprep.subr.bf16.mxu0 0
        %6323 = vmatpush1.bf16.msra.mxu0 0
        %6324 = vmatprep.subr.bf16.mxu0 0
        %6325 = vmatpush1.bf16.msra.mxu0 0
        %6326 = vmatprep.subr.bf16.mxu0 0
        %6327 = vmatpush1.bf16.msra.mxu0 0
        %6328 = vmatprep.subr.bf16.mxu0 0
        %6329 = vmatpush1.bf16.msra.mxu0 0
        %6330 = vmatprep.subr.bf16.mxu0 0
        %6331 = vmatpush1.bf16.msra.mxu0 0
        %6332 = vmatprep.subr.bf16.mxu0 0
        %6333 = vmatpush1.bf16.msra.mxu0 0
        %6334 = vmatprep.subr.bf16.mxu0 0
        %6335 = vmatpush1.bf16.msra.mxu0 0
        %6336 = vmatprep.subr.bf16.mxu0 0
        %6337 = vmatpush1.bf16.msra.mxu0 0
        %6338 = vmatprep.subr.bf16.mxu0 0
        %6339 = vmatpush1.bf16.msra.mxu0 0
        %6340 = vmatprep.subr.bf16.mxu0 0
        %6341 = vmatpush1.bf16.msra.mxu0 0
        %6342 = vmatprep.subr.bf16.mxu0 0
        %6343 = vmatpush1.bf16.msra.mxu0 0
        %6344 = vmatprep.subr.bf16.mxu0 0
        %6345 = vmatpush1.bf16.msra.mxu0 0
        %6346 = vmatprep.mubr.bf16.mxu0 0
        %6347 = vmatmul.mubr.bf16.gmra.mrb[0].mxu0 %v5832
        %v6348 = vpop.f32.mrb[0].mxu0
        %v6349 = vadd.f32 %v6309, %v6348
        %v6350 = vpop.f32.mrb[0].mxu0
        %v6351 = vpop.f32.mrb[0].mxu0
        %v6352 = vpop.f32.mrb[0].mxu0
        %6353 = vdwg.mxu0
        %v6354 = vmax.f32 %v6349, 0.0
        %v6355 = vpack.c.bf16 %v6354, %v6354
        %v6356 = vld [vmem:[%s9] sm:$0xf]
        %v6357 = vld [vmem:[%s9 + $0x4] sm:$0xf]
        %v6358 = vld [vmem:[%s9 + $0x8] sm:$0xf]
        %v6359 = vld [vmem:[%s9 + $0xc] sm:$0xf]
        %v6360 = vld [vmem:[%s9 + $0x10] sm:$0xf]
        %v6361 = vld [vmem:[%s9 + $0x14] sm:$0xf]
        %v6362 = vld [vmem:[%s9 + $0x18] sm:$0xf]
        %v6363 = vld [vmem:[%s9 + $0x1c] sm:$0xf]
        %v6364 = vld [vmem:[%s9 + $0x20] sm:$0xf]
        %v6365 = vld [vmem:[%s9 + $0x24] sm:$0xf]
        %v6366 = vld [vmem:[%s9 + $0x28] sm:$0xf]
        %v6367 = vld [vmem:[%s9 + $0x2c] sm:$0xf]
        %v6368 = vld [vmem:[%s9 + $0x30] sm:$0xf]
        %v6369 = vld [vmem:[%s9 + $0x34] sm:$0xf]
        %v6370 = vld [vmem:[%s9 + $0x38] sm:$0xf]
        %v6371 = vld [vmem:[%s9 + $0x3c] sm:$0xf]
        %v6372 = vld [vmem:[%s10] sm:$0x1]
        %v6389 = vunpack.c.l.b16 %v6356
        %v6390 = vunpack.c.l.b16 %v6357
        %v6391 = vunpack.c.l.b16 %v6358
        %v6392 = vunpack.c.l.b16 %v6359
        %v6393 = vunpack.c.l.b16 %v6360
        %v6394 = vunpack.c.l.b16 %v6361
        %v6395 = vunpack.c.l.b16 %v6362
        %v6396 = vunpack.c.l.b16 %v6363
        %v6397 = vunpack.c.l.b16 %v6364
        %v6398 = vunpack.c.l.b16 %v6365
        %v6399 = vunpack.c.l.b16 %v6366
        %v6400 = vunpack.c.l.b16 %v6367
        %v6401 = vunpack.c.l.b16 %v6368
        %v6402 = vunpack.c.l.b16 %v6369
        %v6403 = vunpack.c.l.b16 %v6370
        %v6404 = vunpack.c.l.b16 %v6371
        %v6405 = vpack.c.b16 %v6390, %v6389
        %v6406 = vpack.c.b16 %v6392, %v6391
        %v6407 = vpack.c.b16 %v6394, %v6393
        %v6408 = vpack.c.b16 %v6396, %v6395
        %v6409 = vpack.c.b16 %v6398, %v6397
        %v6410 = vpack.c.b16 %v6400, %v6399
        %v6411 = vpack.c.b16 %v6402, %v6401
        %v6412 = vpack.c.b16 %v6404, %v6403
        %6421 = vmatprep.subr.bf16.mxu0 0
        %6422 = vmatpush1.bf16.msra.mxu0 %v6405
        %6423 = vmatprep.subr.bf16.mxu0 0
        %6424 = vmatpush1.bf16.msra.mxu0 %v6406
        %6425 = vmatprep.subr.bf16.mxu0 0
        %6426 = vmatpush1.bf16.msra.mxu0 %v6407
        %6427 = vmatprep.subr.bf16.mxu0 0
        %6428 = vmatpush1.bf16.msra.mxu0 %v6408
        %6429 = vmatprep.subr.bf16.mxu0 0
        %6430 = vmatpush1.bf16.msra.mxu0 %v6409
        %6431 = vmatprep.subr.bf16.mxu0 0
        %6432 = vmatpush1.bf16.msra.mxu0 %v6410
        %6433 = vmatprep.subr.bf16.mxu0 0
        %6434 = vmatpush1.bf16.msra.mxu0 %v6411
        %6435 = vmatprep.subr.bf16.mxu0 0
        %6436 = vmatpush1.bf16.msra.mxu0 %v6412
        %6437 = vmatprep.subr.bf16.mxu0 0
        %6438 = vmatpush1.bf16.msra.mxu0 0
        %6439 = vmatprep.subr.bf16.mxu0 0
        %6440 = vmatpush1.bf16.msra.mxu0 0
        %6441 = vmatprep.subr.bf16.mxu0 0
        %6442 = vmatpush1.bf16.msra.mxu0 0
        %6443 = vmatprep.subr.bf16.mxu0 0
        %6444 = vmatpush1.bf16.msra.mxu0 0
        %6445 = vmatprep.subr.bf16.mxu0 0
        %6446 = vmatpush1.bf16.msra.mxu0 0
        %6447 = vmatprep.subr.bf16.mxu0 0
        %6448 = vmatpush1.bf16.msra.mxu0 0
        %6449 = vmatprep.subr.bf16.mxu0 0
        %6450 = vmatpush1.bf16.msra.mxu0 0
        %6451 = vmatprep.subr.bf16.mxu0 0
        %6452 = vmatpush1.bf16.msra.mxu0 0
        %6453 = vmatprep.mubr.bf16.mxu0 0
        %6454 = vmatmul.mubr.bf16.gmra.mrb[0].mxu0 %v6355
        %v6455 = vpop.f32.mrb[0].mxu0
        %v6456 = vadd.f32 %v6372, %v6455
        %v6457 = vpop.f32.mrb[0].mxu0
        %v6458 = vpop.f32.mrb[0].mxu0
        %v6459 = vpop.f32.mrb[0].mxu0
        %6460 = vdwg.mxu0
        %vm6461 = vcmask 40960
        %v6462 = vsel %vm6461, %v6456, -inf
        %6463 = vmax.xlane.f32.xlu0 %v6462
        %v6464 = vpop.xlane.xlu0 %6463
        %v6465 = vsub.f32 %v6456, %v6464
        %v6466 = vmul.f32 %v6465, 1.442695
        %v6467 = vpow.pop %v6466
        %v6468 = vsel %vm6461, %v6467, 0.0
        %6469 = vadd.xlane.f32.xlu0 %v6468
        %v6470 = vpop.xlane.xlu0 %6469
        %v6471 = vrcp.pop %v6470
        %v6472 = vmul.f32 %v6467, %v6471
        %6473 = vst.msk [vmem:[%s378] sm:$0x1] %vm6461, %v6472
        %s6474 = sand.u32 %s269, 1
        %s6475 = scalar_lea.sflag [#allocation9], %s6474
        %s6476 = sand.u32 %s269, 1
        %s6477 = scalar_lea.vmem [#allocation8], %s6476
        // Predicated region
        $region65: #{policy_network_cnn_forward.1} parent=63 // pred_check
          %p6478 = pneg %p279
        $region66: #{policy_network_cnn_forward.1} parent=63 // pred_check_branch
          %6480 = sbr.rel (%p6478) target = $region68
        $region67: #{policy_network_cnn_forward.1} parent=63 // pred_region
          %s6482 = ssub.s32 16, 16
          %6483 = vsyncadd %s6475, %s6482
          %s6484 = smul.addr %s25, 16
          %s6485 = scalar_lea.hbm %s11, %s6484
          %s6487 = sshll.u32 %s6477, 4
          %s6488 = int_to_ptr.vmem [resolvable:$true] %s6487
          %6490 = dma.vmem_to_hbm [thread:$0]  %s6488, 16, %s6485, %s6475
        $region68: #{policy_network_cnn_forward.1} parent=63 // pred_fallthru
          _
      $region64: #{policy_network_cnn_forward.1} parent=5 // pred_fallthru
        _
      %p6491 = scmp.le.s32.totalorder 2, %s20
      // Predicated region
      $region69: #{policy_network_cnn_forward.1} parent=5 // pred_check
        %p6492 = pneg %p6491
      $region70: #{policy_network_cnn_forward.1} parent=5 // pred_check_branch
        %6494 = sbr.rel (%p6492) target = $region72
      $region71: #{policy_network_cnn_forward.1} parent=5 // pred_region
        %s6495 = ssub.s32 %s20, 2
        // Predicated region
        $region73: #{policy_network_cnn_forward.1} parent=71 // pred_check
          %p6496 = pneg %p285
        $region74: #{policy_network_cnn_forward.1} parent=71 // pred_check_branch
          %6498 = sbr.rel (%p6496) target = $region76
        $region75: #{policy_network_cnn_forward.1} parent=71 // pred_region
          %s6499 = sand.u32 %s270, 1
          %s6500 = scalar_lea.sflag [#allocation9], %s6499
          %s6501 = sand.u32 %s270, 1
          %s6502 = scalar_lea.vmem [#allocation8], %s6501
          %6503 = dma.done %s6500, 16
        $region76: #{policy_network_cnn_forward.1} parent=71 // pred_fallthru
          _
      $region72: #{policy_network_cnn_forward.1} parent=5 // pred_fallthru
        _
    $region6: #{policy_network_cnn_forward.1} parent=1 // loop_footer
      %s24 = sadd.s32 1, %s20
    $region7: #{policy_network_cnn_forward.1} parent=1 // loop_footer_branch
      %19 = sbr.rel target = $region3
    $region8: #{policy_network_cnn_forward.1} parent=1 // loop_exit
      _
    %6504 = vsyncpa [#allocation9], 1
    %s6505 = scalar_lea.sflag [#allocation9], 1
    %6506 = vsyncpa %s6505, 1

</llo_original>
